<compile_context>
chip_gen: v7x
topology: tpu7x:2x2x1
jax: 0.10.0
libtpu: 0.0.40
codegen_flags: <defaults>
</compile_context>

<pallas_src>
import functools

import jax
import jax.numpy as jnp
from jax.experimental import pallas as pl
from jax.experimental.pallas import tpu as pltpu

EPS = 1e-5
LANE = 128                       # channel dims are padded to a multiple of this
VMEM_LIMIT = 32 * 1024 * 1024    # explicit scoped-VMEM budget (safe on v5e/v6e/v7x)


def _round_up(v, m):
    return ((v + m - 1) // m) * m


def _conv_plan(H, W, stride):
    """Spatial plan for a 3x3 'same' conv.

    Returns output dims, the (possibly padded) full-res width W_pad (kept a
    multiple of 8 so the in-kernel (H, W_pad, C) -> (H*W_pad, C) collapse is a
    layout no-op for f32), and -- when subsampling is needed (stride > 1 or
    padded columns) -- a tiny one-hot row-selection matrix that implements the
    subsample as an MXU matmul inside the kernel (keeps everything in VMEM).
    """
    Ho = (H - 1) // stride + 1
    Wo = (W - 1) // stride + 1
    W_pad = max(8, _round_up(W, 8))
    use_sel = (stride != 1) or (W_pad != W)
    sel = None
    if use_sel:
        rows = jnp.arange(Ho * Wo, dtype=jnp.int32)
        src = (rows // Wo) * (stride * W_pad) + (rows % Wo) * stride
        sel = (jnp.arange(H * W_pad, dtype=jnp.int32)[None, :] == src[:, None])
        sel = sel.astype(jnp.float32)                 # (Ho*Wo, H*W_pad)
    return Ho, Wo, W_pad, use_sel, sel


# ----------------------------------------------------------------------------
# Kernel 1: head 3x3 conv (no im2col in HBM) + BN(eval) + ReLU
#   per-tap (H*W, Cin) x (Cin, Cout) bf16 MXU matmuls accumulated in f32.
# ----------------------------------------------------------------------------
def _head_kernel(H, W_pad, use_sel, *refs):
    if use_sel:
        x_ref, w_ref, s_ref, b_ref, sel_ref, o_ref = refs
    else:
        x_ref, w_ref, s_ref, b_ref, o_ref = refs
    cp_in = x_ref.shape[-1]
    xv = x_ref[...].astype(jnp.float32)               # (1, H+2, W_pad+2, Cin)
    acc = None
    for kh in range(3):
        for kw in range(3):
            xs = xv[0, kh:kh + H, kw:kw + W_pad, :].reshape(H * W_pad, cp_in)
            t = jnp.dot(xs.astype(jnp.bfloat16), w_ref[kh * 3 + kw],
                        preferred_element_type=jnp.float32)
            acc = t if acc is None else acc + t
    if use_sel:                                       # drop padded columns
        acc = jnp.dot(sel_ref[...], acc, preferred_element_type=jnp.float32)
    y = jnp.maximum(acc * s_ref[...] + b_ref[...], 0.0)
    o_ref[...] = y[None].astype(o_ref.dtype)


def head_conv_bn_relu(x_nhwc, w9, scale, shift):
    """3x3 stride-1 'same' conv + BN(eval) + ReLU. Returns (N, H*W, Cp) bf16."""
    N, H, W, Cin = x_nhwc.shape
    cp_in, cp_out = w9.shape[1], w9.shape[2]
    Ho, Wo, W_pad, use_sel, sel = _conv_plan(H, W, 1)

    # halo + width alignment + channel padding in a single pad pass, then bf16
    xp = jnp.pad(x_nhwc, ((0, 0), (1, 1), (1, 1 + W_pad - W), (0, cp_in - Cin)))
    xp = xp.astype(jnp.bfloat16)
    Hp, Wp = H + 2, W_pad + 2
    P_out = Ho * Wo

    in_specs = [
        pl.BlockSpec((1, Hp, Wp, cp_in), lambda n: (n, 0, 0, 0)),
        pl.BlockSpec((9, cp_in, cp_out), lambda n: (0, 0, 0)),
        pl.BlockSpec((1, cp_out), lambda n: (0, 0)),
        pl.BlockSpec((1, cp_out), lambda n: (0, 0)),
    ]
    args = [xp, w9, scale, shift]
    if use_sel:
        in_specs.append(pl.BlockSpec((P_out, H * W_pad), lambda n: (0, 0)))
        args.append(sel)

    flops = N * (2 * 9 * H * W_pad * cp_in * cp_out
                 + (2 * P_out * H * W_pad * cp_out if use_sel else 0))
    bytes_accessed = (sum(int(a.size) * a.dtype.itemsize for a in args)
                      + N * P_out * cp_out * 2)

    out = pl.pallas_call(
        functools.partial(_head_kernel, H, W_pad, use_sel),
        out_shape=jax.ShapeDtypeStruct((N, P_out, cp_out), jnp.bfloat16),
        grid=(N,),
        in_specs=in_specs,
        out_specs=pl.BlockSpec((1, P_out, cp_out), lambda n: (n, 0, 0)),
        compiler_params=pltpu.CompilerParams(
            dimension_semantics=("parallel",),
            vmem_limit_bytes=VMEM_LIMIT),
        cost_estimate=pl.CostEstimate(flops=int(flops), transcendentals=0,
                                      bytes_accessed=int(bytes_accessed)),
    )(*args)
    return out, Ho, Wo


# ----------------------------------------------------------------------------
# Kernel 2: fused MobileNet Block
#   depthwise 3x3 (stride s) + BN + ReLU + pointwise 1x1 (bf16 MXU) + BN + ReLU
#   The dw result never leaves VMEM; stride handled by a one-hot select matmul.
# ----------------------------------------------------------------------------
def _block_kernel(H, W_pad, use_sel, *refs):
    if use_sel:
        (x_ref, dw_ref, s1_ref, b1_ref, sel_ref,
         pw_ref, s2_ref, b2_ref, o_ref) = refs
    else:
        (x_ref, dw_ref, s1_ref, b1_ref,
         pw_ref, s2_ref, b2_ref, o_ref) = refs
    cp_in = x_ref.shape[-1]
    xv = x_ref[...].astype(jnp.float32)               # (1, H+2, W_pad+2, C)
    wv = dw_ref[...]                                  # (9, C) f32
    acc = None                                        # depthwise 3x3, f32 accum
    for kh in range(3):
        for kw in range(3):
            t = xv[0, kh:kh + H, kw:kw + W_pad, :] * wv[kh * 3 + kw]
            acc = t if acc is None else acc + t
    acc = acc.reshape(H * W_pad, cp_in)               # W_pad % 8 == 0 -> no-op
    if use_sel:                                       # strided / padded-col subsample in VMEM
        acc = jnp.dot(sel_ref[...], acc, preferred_element_type=jnp.float32)
    h = jnp.maximum(acc * s1_ref[...] + b1_ref[...], 0.0)       # BN1 + ReLU (f32)
    y = jnp.dot(h.astype(jnp.bfloat16), pw_ref[...],            # pointwise 1x1 (MXU, bf16)
                preferred_element_type=jnp.float32)
    y = jnp.maximum(y * s2_ref[...] + b2_ref[...], 0.0)         # BN2 + ReLU (f32)
    o_ref[...] = y[None].astype(o_ref.dtype)          # single lane-dense store


def block_dw_pw_bn_relu(x_flat, H, W, blk):
    """One MobileNet Block fused into a single Pallas kernel.

    x_flat: (N, H*W, cp_in) bf16 with channels zero-padded to cp_in.
    Returns ((N, Ho*Wo, cp_out) bf16, Ho, Wo).
    """
    N = x_flat.shape[0]
    cp_in = blk["dw_w"].shape[1]
    cp_out = blk["pw_w"].shape[1]
    stride = blk["stride"]
    Ho, Wo, W_pad, use_sel, sel = _conv_plan(H, W, stride)

    x4 = x_flat.reshape(N, H, W, cp_in)
    # TODO(synk): handle the 1-px halo inside the kernel (Element-offset index
    # maps + border masking) to avoid this extra jnp.pad pass over HBM.
    xp = jnp.pad(x4, ((0, 0), (1, 1), (1, 1 + W_pad - W), (0, 0)))
    Hp, Wp = H + 2, W_pad + 2
    P_out = Ho * Wo

    in_specs = [
        pl.BlockSpec((1, Hp, Wp, cp_in), lambda n: (n, 0, 0, 0)),
        pl.BlockSpec((9, cp_in), lambda n: (0, 0)),
        pl.BlockSpec((1, cp_in), lambda n: (0, 0)),
        pl.BlockSpec((1, cp_in), lambda n: (0, 0)),
    ]
    args = [xp, blk["dw_w"], blk["bn1_scale"], blk["bn1_shift"]]
    if use_sel:
        in_specs.append(pl.BlockSpec((P_out, H * W_pad), lambda n: (0, 0)))
        args.append(sel)
    in_specs += [
        pl.BlockSpec((cp_in, cp_out), lambda n: (0, 0)),
        pl.BlockSpec((1, cp_out), lambda n: (0, 0)),
        pl.BlockSpec((1, cp_out), lambda n: (0, 0)),
    ]
    args += [blk["pw_w"], blk["bn2_scale"], blk["bn2_shift"]]

    flops = N * (2 * 9 * H * W_pad * cp_in
                 + (2 * P_out * H * W_pad * cp_in if use_sel else 0)
                 + 2 * P_out * cp_in * cp_out)
    bytes_accessed = (sum(int(a.size) * a.dtype.itemsize for a in args)
                      + N * P_out * cp_out * 2)

    out = pl.pallas_call(
        functools.partial(_block_kernel, H, W_pad, use_sel),
        out_shape=jax.ShapeDtypeStruct((N, P_out, cp_out), jnp.bfloat16),
        grid=(N,),
        in_specs=in_specs,
        out_specs=pl.BlockSpec((1, P_out, cp_out), lambda n: (n, 0, 0)),
        compiler_params=pltpu.CompilerParams(
            dimension_semantics=("parallel",),
            vmem_limit_bytes=VMEM_LIMIT),
        cost_estimate=pl.CostEstimate(flops=int(flops), transcendentals=0,
                                      bytes_accessed=int(bytes_accessed)),
    )(*args)
    return out, Ho, Wo


# ----------------------------------------------------------------------------
# Kernel 3: AdaptiveAvgPool2d(1) + Flatten + Linear (classes padded to 128)
# ----------------------------------------------------------------------------
def _pool_linear_kernel(x_ref, w_ref, b_ref, o_ref):
    xv = x_ref[...].astype(jnp.float32)               # (N, P, C)
    pooled = jnp.mean(xv, axis=1)                     # avg-pool + flatten
    y = jnp.dot(pooled.astype(jnp.bfloat16), w_ref[...],
                preferred_element_type=jnp.float32)
    o_ref[...] = y + b_ref[...]


def pool_linear(x_flat, w, b):
    N, P, C = x_flat.shape
    Kp = w.shape[1]
    flops = N * (P * C + 2 * C * Kp)
    bytes_accessed = (int(x_flat.size) * x_flat.dtype.itemsize
                      + int(w.size) * w.dtype.itemsize
                      + int(b.size) * 4 + N * Kp * 4)
    return pl.pallas_call(
        _pool_linear_kernel,
        out_shape=jax.ShapeDtypeStruct((N, Kp), jnp.float32),
        grid=(1,),
        in_specs=[
            pl.BlockSpec((N, P, C), lambda i: (0, 0, 0)),
            pl.BlockSpec((C, Kp), lambda i: (0, 0)),
            pl.BlockSpec((1, Kp), lambda i: (0, 0)),
        ],
        out_specs=pl.BlockSpec((N, Kp), lambda i: (0, 0)),
        compiler_params=pltpu.CompilerParams(
            dimension_semantics=("arbitrary",),
            vmem_limit_bytes=VMEM_LIMIT),
        cost_estimate=pl.CostEstimate(flops=int(flops), transcendentals=0,
                                      bytes_accessed=int(bytes_accessed)),
    )(x_flat, w, b)


# ----------------------------------------------------------------------------
# Parameter construction (deterministic, pre-padded to kernel layouts)
# ----------------------------------------------------------------------------
def _bn_scale_shift(C, Cp):
    # nn.BatchNorm2d eval mode with fresh-module defaults:
    # gamma=1, beta=0, running_mean=0, running_var=1.
    gamma = jnp.ones((C,), jnp.float32)
    beta = jnp.zeros((C,), jnp.float32)
    running_mean = jnp.zeros((C,), jnp.float32)
    running_var = jnp.ones((C,), jnp.float32)
    scale = gamma / jnp.sqrt(running_var + EPS)
    shift = beta - running_mean * scale
    # padded channels get scale=shift=0 so they stay exactly zero downstream
    scale = jnp.pad(scale, (0, Cp - C)).reshape(1, Cp)
    shift = jnp.pad(shift, (0, Cp - C)).reshape(1, Cp)
    return scale, shift


def init_mobilenet_params(key, cfg, num_classes=10):
    params = {"num_classes": num_classes}
    in_C = cfg["C"][0]
    cp_img = _round_up(3, LANE)
    cp0 = _round_up(in_C, LANE)

    key, k = jax.random.split(key)
    head_w = 0.1 * jax.random.normal(k, (3, 3, 3, in_C), jnp.float32)
    head_w = jnp.pad(head_w, ((0, 0), (0, 0), (0, cp_img - 3), (0, cp0 - in_C)))
    params["head_w"] = head_w.reshape(9, cp_img, cp0).astype(jnp.bfloat16)
    params["head_scale"], params["head_shift"] = _bn_scale_shift(in_C, cp0)

    blocks = []
    for layer_idx, (C, nb) in enumerate(zip(cfg["C"], cfg["num_blocks"])):
        layer_stride = 1 if layer_idx == 0 else 2
        strides = [layer_stride] + [1] * (nb - 1)
        for st in strides:
            cp_i = _round_up(in_C, LANE)
            cp_o = _round_up(C, LANE)
            key, k1, k2 = jax.random.split(key, 3)
            dw = 0.1 * jax.random.normal(k1, (3, 3, in_C), jnp.float32)
            pw = 0.1 * jax.random.normal(k2, (in_C, C), jnp.float32)
            s1, b1 = _bn_scale_shift(in_C, cp_i)
            s2, b2 = _bn_scale_shift(C, cp_o)
            blocks.append({
                "stride": st,
                "dw_w": jnp.pad(dw, ((0, 0), (0, 0), (0, cp_i - in_C))
                                ).reshape(9, cp_i).astype(jnp.float32),
                "bn1_scale": s1, "bn1_shift": b1,
                "pw_w": jnp.pad(pw, ((0, cp_i - in_C), (0, cp_o - C))
                                ).astype(jnp.bfloat16),
                "bn2_scale": s2, "bn2_shift": b2,
            })
            in_C = C
    params["blocks"] = blocks

    cp_last = _round_up(in_C, LANE)
    kp = _round_up(num_classes, LANE)
    key, k1, k2 = jax.random.split(key, 3)
    fc_w = 0.1 * jax.random.normal(k1, (in_C, num_classes), jnp.float32)
    fc_b = 0.1 * jax.random.normal(k2, (num_classes,), jnp.float32)
    params["fc_w"] = jnp.pad(fc_w, ((0, cp_last - in_C), (0, kp - num_classes))
                             ).astype(jnp.bfloat16)
    params["fc_b"] = jnp.pad(fc_b, (0, kp - num_classes)
                             ).reshape(1, kp).astype(jnp.float32)
    return params


def mobilenet_forward(x_nchw, params):
    x = jnp.transpose(x_nchw, (0, 2, 3, 1))           # NCHW -> NHWC (glue)
    x, H, W = head_conv_bn_relu(x, params["head_w"],
                                params["head_scale"], params["head_shift"])
    for blk in params["blocks"]:
        x, H, W = block_dw_pw_bn_relu(x, H, W, blk)
    logits = pool_linear(x, params["fc_w"], params["fc_b"])
    return logits[:, :params["num_classes"]]          # drop class padding (glue)


if __name__ == "__main__":
    cfg = {"C": [8, 16, 32, 64], "num_blocks": [1, 1, 1, 1]}     # small config
    num_classes = 10

    key = jax.random.PRNGKey(0)
    key, kx = jax.random.split(key)
    x = jax.random.normal(kx, (2, 3, 16, 16), jnp.float32)       # NCHW input

    params = init_mobilenet_params(key, cfg, num_classes)

    fwd = jax.jit(lambda inp: mobilenet_forward(inp, params))
    logits = jax.block_until_ready(fwd(x))
    assert logits.shape == (2, num_classes), logits.shape
    assert jnp.all(jnp.isfinite(logits))
    print("KERNEL_OK")
</pallas_src>

<mosaic_0001>
module attributes {stable_mosaic.version = 11 : i64} {
  func.func @_head_kernel(%arg0: i32, %arg1: memref<1x18x18x128xbf16, #tpu.memory_space<vmem>>, %arg2: memref<9x128x128xbf16, #tpu.memory_space<vmem>>, %arg3: memref<1x128xf32, #tpu.memory_space<vmem>>, %arg4: memref<1x128xf32, #tpu.memory_space<vmem>>, %arg5: memref<1x256x128xbf16, #tpu.memory_space<vmem>>) attributes {dimension_semantics = [#tpu.dimension_semantics<parallel>], iteration_bounds = array<i64: 2>, scalar_prefetch = 0 : i64, scratch_operands = 0 : i64, tpu.core_type = #tpu.core_type<tc>, window_params = [{transform_indices = @transform_0, window_bounds = array<i64: 1, 18, 18, 128>}, {pipeline_mode = #tpu.pipeline_mode<synchronous>, transform_indices = @transform_1, window_bounds = array<i64: 9, 128, 128>}, {pipeline_mode = #tpu.pipeline_mode<synchronous>, transform_indices = @transform_2, window_bounds = array<i64: 1, 128>}, {pipeline_mode = #tpu.pipeline_mode<synchronous>, transform_indices = @transform_3, window_bounds = array<i64: 1, 128>}, {transform_indices = @transform_4, window_bounds = array<i64: 1, 256, 128>}]} {
    %c0 = arith.constant 0 : index
    %c0_0 = arith.constant 0 : index
    %c0_1 = arith.constant 0 : index
    %c0_2 = arith.constant 0 : index
    %0 = vector.load %arg1[%c0, %c0_0, %c0_1, %c0_2] : memref<1x18x18x128xbf16, #tpu.memory_space<vmem>>, vector<1x18x18x128xbf16>
    %1 = arith.extf %0 : vector<1x18x18x128xbf16> to vector<1x18x18x128xf32>
    %2 = vector.extract_strided_slice %1 {offsets = [0, 0, 0, 0], sizes = [1, 16, 16, 128], strides = [1, 1, 1, 1]} : vector<1x18x18x128xf32> to vector<1x16x16x128xf32>
    %3 = vector.shape_cast %2 : vector<1x16x16x128xf32> to vector<16x16x128xf32>
    %4 = vector.shape_cast %3 : vector<16x16x128xf32> to vector<256x128xf32>
    %5 = arith.truncf %4 : vector<256x128xf32> to vector<256x128xbf16>
    %c0_3 = arith.constant 0 : index
    %c0_4 = arith.constant 0 : index
    %c0_5 = arith.constant 0 : index
    %6 = vector.load %arg2[%c0_3, %c0_4, %c0_5] : memref<9x128x128xbf16, #tpu.memory_space<vmem>>, vector<1x128x128xbf16>
    %7 = vector.shape_cast %6 : vector<1x128x128xbf16> to vector<128x128xbf16>
    %cst = arith.constant dense<0.000000e+00> : vector<256x128xf32>
    %8 = tpu.matmul %5, %7, %cst {dimension_numbers = #tpu.dot_dimension_numbers<[1], [0], [0], [1], [0, 0, 1, 1], [], []>} : vector<256x128xbf16>, vector<128x128xbf16>, vector<256x128xf32> -> vector<256x128xf32>
    %9 = vector.extract_strided_slice %1 {offsets = [0, 0, 1, 0], sizes = [1, 16, 16, 128], strides = [1, 1, 1, 1]} : vector<1x18x18x128xf32> to vector<1x16x16x128xf32>
    %10 = vector.shape_cast %9 : vector<1x16x16x128xf32> to vector<16x16x128xf32>
    %11 = vector.shape_cast %10 : vector<16x16x128xf32> to vector<256x128xf32>
    %12 = arith.truncf %11 : vector<256x128xf32> to vector<256x128xbf16>
    %c1 = arith.constant 1 : index
    %c0_6 = arith.constant 0 : index
    %c0_7 = arith.constant 0 : index
    %13 = vector.load %arg2[%c1, %c0_6, %c0_7] : memref<9x128x128xbf16, #tpu.memory_space<vmem>>, vector<1x128x128xbf16>
    %14 = vector.shape_cast %13 : vector<1x128x128xbf16> to vector<128x128xbf16>
    %cst_8 = arith.constant dense<0.000000e+00> : vector<256x128xf32>
    %15 = tpu.matmul %12, %14, %cst_8 {dimension_numbers = #tpu.dot_dimension_numbers<[1], [0], [0], [1], [0, 0, 1, 1], [], []>} : vector<256x128xbf16>, vector<128x128xbf16>, vector<256x128xf32> -> vector<256x128xf32>
    %16 = arith.addf %8, %15 : vector<256x128xf32>
    %17 = vector.extract_strided_slice %1 {offsets = [0, 0, 2, 0], sizes = [1, 16, 16, 128], strides = [1, 1, 1, 1]} : vector<1x18x18x128xf32> to vector<1x16x16x128xf32>
    %18 = vector.shape_cast %17 : vector<1x16x16x128xf32> to vector<16x16x128xf32>
    %19 = vector.shape_cast %18 : vector<16x16x128xf32> to vector<256x128xf32>
    %20 = arith.truncf %19 : vector<256x128xf32> to vector<256x128xbf16>
    %c2 = arith.constant 2 : index
    %c0_9 = arith.constant 0 : index
    %c0_10 = arith.constant 0 : index
    %21 = vector.load %arg2[%c2, %c0_9, %c0_10] : memref<9x128x128xbf16, #tpu.memory_space<vmem>>, vector<1x128x128xbf16>
    %22 = vector.shape_cast %21 : vector<1x128x128xbf16> to vector<128x128xbf16>
    %cst_11 = arith.constant dense<0.000000e+00> : vector<256x128xf32>
    %23 = tpu.matmul %20, %22, %cst_11 {dimension_numbers = #tpu.dot_dimension_numbers<[1], [0], [0], [1], [0, 0, 1, 1], [], []>} : vector<256x128xbf16>, vector<128x128xbf16>, vector<256x128xf32> -> vector<256x128xf32>
    %24 = arith.addf %16, %23 : vector<256x128xf32>
    %25 = vector.extract_strided_slice %1 {offsets = [0, 1, 0, 0], sizes = [1, 16, 16, 128], strides = [1, 1, 1, 1]} : vector<1x18x18x128xf32> to vector<1x16x16x128xf32>
    %26 = vector.shape_cast %25 : vector<1x16x16x128xf32> to vector<16x16x128xf32>
    %27 = vector.shape_cast %26 : vector<16x16x128xf32> to vector<256x128xf32>
    %28 = arith.truncf %27 : vector<256x128xf32> to vector<256x128xbf16>
    %c3 = arith.constant 3 : index
    %c0_12 = arith.constant 0 : index
    %c0_13 = arith.constant 0 : index
    %29 = vector.load %arg2[%c3, %c0_12, %c0_13] : memref<9x128x128xbf16, #tpu.memory_space<vmem>>, vector<1x128x128xbf16>
    %30 = vector.shape_cast %29 : vector<1x128x128xbf16> to vector<128x128xbf16>
    %cst_14 = arith.constant dense<0.000000e+00> : vector<256x128xf32>
    %31 = tpu.matmul %28, %30, %cst_14 {dimension_numbers = #tpu.dot_dimension_numbers<[1], [0], [0], [1], [0, 0, 1, 1], [], []>} : vector<256x128xbf16>, vector<128x128xbf16>, vector<256x128xf32> -> vector<256x128xf32>
    %32 = arith.addf %24, %31 : vector<256x128xf32>
    %33 = vector.extract_strided_slice %1 {offsets = [0, 1, 1, 0], sizes = [1, 16, 16, 128], strides = [1, 1, 1, 1]} : vector<1x18x18x128xf32> to vector<1x16x16x128xf32>
    %34 = vector.shape_cast %33 : vector<1x16x16x128xf32> to vector<16x16x128xf32>
    %35 = vector.shape_cast %34 : vector<16x16x128xf32> to vector<256x128xf32>
    %36 = arith.truncf %35 : vector<256x128xf32> to vector<256x128xbf16>
    %c4 = arith.constant 4 : index
    %c0_15 = arith.constant 0 : index
    %c0_16 = arith.constant 0 : index
    %37 = vector.load %arg2[%c4, %c0_15, %c0_16] : memref<9x128x128xbf16, #tpu.memory_space<vmem>>, vector<1x128x128xbf16>
    %38 = vector.shape_cast %37 : vector<1x128x128xbf16> to vector<128x128xbf16>
    %cst_17 = arith.constant dense<0.000000e+00> : vector<256x128xf32>
    %39 = tpu.matmul %36, %38, %cst_17 {dimension_numbers = #tpu.dot_dimension_numbers<[1], [0], [0], [1], [0, 0, 1, 1], [], []>} : vector<256x128xbf16>, vector<128x128xbf16>, vector<256x128xf32> -> vector<256x128xf32>
    %40 = arith.addf %32, %39 : vector<256x128xf32>
    %41 = vector.extract_strided_slice %1 {offsets = [0, 1, 2, 0], sizes = [1, 16, 16, 128], strides = [1, 1, 1, 1]} : vector<1x18x18x128xf32> to vector<1x16x16x128xf32>
    %42 = vector.shape_cast %41 : vector<1x16x16x128xf32> to vector<16x16x128xf32>
    %43 = vector.shape_cast %42 : vector<16x16x128xf32> to vector<256x128xf32>
    %44 = arith.truncf %43 : vector<256x128xf32> to vector<256x128xbf16>
    %c5 = arith.constant 5 : index
    %c0_18 = arith.constant 0 : index
    %c0_19 = arith.constant 0 : index
    %45 = vector.load %arg2[%c5, %c0_18, %c0_19] : memref<9x128x128xbf16, #tpu.memory_space<vmem>>, vector<1x128x128xbf16>
    %46 = vector.shape_cast %45 : vector<1x128x128xbf16> to vector<128x128xbf16>
    %cst_20 = arith.constant dense<0.000000e+00> : vector<256x128xf32>
    %47 = tpu.matmul %44, %46, %cst_20 {dimension_numbers = #tpu.dot_dimension_numbers<[1], [0], [0], [1], [0, 0, 1, 1], [], []>} : vector<256x128xbf16>, vector<128x128xbf16>, vector<256x128xf32> -> vector<256x128xf32>
    %48 = arith.addf %40, %47 : vector<256x128xf32>
    %49 = vector.extract_strided_slice %1 {offsets = [0, 2, 0, 0], sizes = [1, 16, 16, 128], strides = [1, 1, 1, 1]} : vector<1x18x18x128xf32> to vector<1x16x16x128xf32>
    %50 = vector.shape_cast %49 : vector<1x16x16x128xf32> to vector<16x16x128xf32>
    %51 = vector.shape_cast %50 : vector<16x16x128xf32> to vector<256x128xf32>
    %52 = arith.truncf %51 : vector<256x128xf32> to vector<256x128xbf16>
    %c6 = arith.constant 6 : index
    %c0_21 = arith.constant 0 : index
    %c0_22 = arith.constant 0 : index
    %53 = vector.load %arg2[%c6, %c0_21, %c0_22] : memref<9x128x128xbf16, #tpu.memory_space<vmem>>, vector<1x128x128xbf16>
    %54 = vector.shape_cast %53 : vector<1x128x128xbf16> to vector<128x128xbf16>
    %cst_23 = arith.constant dense<0.000000e+00> : vector<256x128xf32>
    %55 = tpu.matmul %52, %54, %cst_23 {dimension_numbers = #tpu.dot_dimension_numbers<[1], [0], [0], [1], [0, 0, 1, 1], [], []>} : vector<256x128xbf16>, vector<128x128xbf16>, vector<256x128xf32> -> vector<256x128xf32>
    %56 = arith.addf %48, %55 : vector<256x128xf32>
    %57 = vector.extract_strided_slice %1 {offsets = [0, 2, 1, 0], sizes = [1, 16, 16, 128], strides = [1, 1, 1, 1]} : vector<1x18x18x128xf32> to vector<1x16x16x128xf32>
    %58 = vector.shape_cast %57 : vector<1x16x16x128xf32> to vector<16x16x128xf32>
    %59 = vector.shape_cast %58 : vector<16x16x128xf32> to vector<256x128xf32>
    %60 = arith.truncf %59 : vector<256x128xf32> to vector<256x128xbf16>
    %c7 = arith.constant 7 : index
    %c0_24 = arith.constant 0 : index
    %c0_25 = arith.constant 0 : index
    %61 = vector.load %arg2[%c7, %c0_24, %c0_25] : memref<9x128x128xbf16, #tpu.memory_space<vmem>>, vector<1x128x128xbf16>
    %62 = vector.shape_cast %61 : vector<1x128x128xbf16> to vector<128x128xbf16>
    %cst_26 = arith.constant dense<0.000000e+00> : vector<256x128xf32>
    %63 = tpu.matmul %60, %62, %cst_26 {dimension_numbers = #tpu.dot_dimension_numbers<[1], [0], [0], [1], [0, 0, 1, 1], [], []>} : vector<256x128xbf16>, vector<128x128xbf16>, vector<256x128xf32> -> vector<256x128xf32>
    %64 = arith.addf %56, %63 : vector<256x128xf32>
    %65 = vector.extract_strided_slice %1 {offsets = [0, 2, 2, 0], sizes = [1, 16, 16, 128], strides = [1, 1, 1, 1]} : vector<1x18x18x128xf32> to vector<1x16x16x128xf32>
    %66 = vector.shape_cast %65 : vector<1x16x16x128xf32> to vector<16x16x128xf32>
    %67 = vector.shape_cast %66 : vector<16x16x128xf32> to vector<256x128xf32>
    %68 = arith.truncf %67 : vector<256x128xf32> to vector<256x128xbf16>
    %c8 = arith.constant 8 : index
    %c0_27 = arith.constant 0 : index
    %c0_28 = arith.constant 0 : index
    %69 = vector.load %arg2[%c8, %c0_27, %c0_28] : memref<9x128x128xbf16, #tpu.memory_space<vmem>>, vector<1x128x128xbf16>
    %70 = vector.shape_cast %69 : vector<1x128x128xbf16> to vector<128x128xbf16>
    %cst_29 = arith.constant dense<0.000000e+00> : vector<256x128xf32>
    %71 = tpu.matmul %68, %70, %cst_29 {dimension_numbers = #tpu.dot_dimension_numbers<[1], [0], [0], [1], [0, 0, 1, 1], [], []>} : vector<256x128xbf16>, vector<128x128xbf16>, vector<256x128xf32> -> vector<256x128xf32>
    %72 = arith.addf %64, %71 : vector<256x128xf32>
    %c0_30 = arith.constant 0 : index
    %c0_31 = arith.constant 0 : index
    %73 = vector.load %arg3[%c0_30, %c0_31] : memref<1x128xf32, #tpu.memory_space<vmem>>, vector<1x128xf32>
    %74 = vector.broadcast %73 : vector<1x128xf32> to vector<256x128xf32>
    %75 = arith.mulf %72, %74 : vector<256x128xf32>
    %c0_32 = arith.constant 0 : index
    %c0_33 = arith.constant 0 : index
    %76 = vector.load %arg4[%c0_32, %c0_33] : memref<1x128xf32, #tpu.memory_space<vmem>>, vector<1x128xf32>
    %77 = vector.broadcast %76 : vector<1x128xf32> to vector<256x128xf32>
    %78 = arith.addf %75, %77 : vector<256x128xf32>
    %cst_34 = arith.constant 0.000000e+00 : f32
    %79 = vector.broadcast %cst_34 : f32 to vector<256x128xf32>
    %80 = arith.maximumf %78, %79 : vector<256x128xf32>
    %81 = vector.shape_cast %80 : vector<256x128xf32> to vector<1x256x128xf32>
    %82 = arith.truncf %81 : vector<1x256x128xf32> to vector<1x256x128xbf16>
    %c0_35 = arith.constant 0 : index
    %c0_36 = arith.constant 0 : index
    %c0_37 = arith.constant 0 : index
    %83 = vector.load %arg5[%c0_35, %c0_36, %c0_37] : memref<1x256x128xbf16, #tpu.memory_space<vmem>>, vector<1x256x128xbf16>
    tpu.vector_store %arg5[%c0_35, %c0_36, %c0_37], %82 {strides = array<i32>} : memref<1x256x128xbf16, #tpu.memory_space<vmem>>, vector<1x256x128xbf16>,
    return
  }
  func.func @transform_0(%arg0: i32) -> (i32, i32, i32, i32) {
    %c0_i32 = arith.constant 0 : i32
    %c0_i32_0 = arith.constant 0 : i32
    %c0_i32_1 = arith.constant 0 : i32
    %c0_i32_2 = arith.constant 0 : i32
    return %arg0, %c0_i32, %c0_i32_0, %c0_i32_1 : i32, i32, i32, i32
  }
  func.func @transform_1(%arg0: i32) -> (i32, i32, i32) {
    %c0_i32 = arith.constant 0 : i32
    %c0_i32_0 = arith.constant 0 : i32
    %c0_i32_1 = arith.constant 0 : i32
    %c0_i32_2 = arith.constant 0 : i32
    return %c0_i32, %c0_i32_0, %c0_i32_1 : i32, i32, i32
  }
  func.func @transform_2(%arg0: i32) -> (i32, i32) {
    %c0_i32 = arith.constant 0 : i32
    %c0_i32_0 = arith.constant 0 : i32
    %c0_i32_1 = arith.constant 0 : i32
    return %c0_i32, %c0_i32_0 : i32, i32
  }
  func.func @transform_3(%arg0: i32) -> (i32, i32) {
    %c0_i32 = arith.constant 0 : i32
    %c0_i32_0 = arith.constant 0 : i32
    %c0_i32_1 = arith.constant 0 : i32
    return %c0_i32, %c0_i32_0 : i32, i32
  }
  func.func @transform_4(%arg0: i32) -> (i32, i32, i32) {
    %c0_i32 = arith.constant 0 : i32
    %c0_i32_0 = arith.constant 0 : i32
    %c0_i32_1 = arith.constant 0 : i32
    return %arg0, %c0_i32, %c0_i32_0 : i32, i32, i32
  }
}

module attributes {stable_mosaic.version = 11 : i64} {
  func.func @_block_kernel(%arg0: i32, %arg1: memref<1x18x18x128xbf16, #tpu.memory_space<vmem>>, %arg2: memref<9x128xf32, #tpu.memory_space<vmem>>, %arg3: memref<1x128xf32, #tpu.memory_space<vmem>>, %arg4: memref<1x128xf32, #tpu.memory_space<vmem>>, %arg5: memref<128x128xbf16, #tpu.memory_space<vmem>>, %arg6: memref<1x128xf32, #tpu.memory_space<vmem>>, %arg7: memref<1x128xf32, #tpu.memory_space<vmem>>, %arg8: memref<1x256x128xbf16, #tpu.memory_space<vmem>>) attributes {dimension_semantics = [#tpu.dimension_semantics<parallel>], iteration_bounds = array<i64: 2>, scalar_prefetch = 0 : i64, scratch_operands = 0 : i64, tpu.core_type = #tpu.core_type<tc>, window_params = [{transform_indices = @transform_0, window_bounds = array<i64: 1, 18, 18, 128>}, {pipeline_mode = #tpu.pipeline_mode<synchronous>, transform_indices = @transform_1, window_bounds = array<i64: 9, 128>}, {pipeline_mode = #tpu.pipeline_mode<synchronous>, transform_indices = @transform_2, window_bounds = array<i64: 1, 128>}, {pipeline_mode = #tpu.pipeline_mode<synchronous>, transform_indices = @transform_3, window_bounds = array<i64: 1, 128>}, {pipeline_mode = #tpu.pipeline_mode<synchronous>, transform_indices = @transform_4, window_bounds = array<i64: 128, 128>}, {pipeline_mode = #tpu.pipeline_mode<synchronous>, transform_indices = @transform_5, window_bounds = array<i64: 1, 128>}, {pipeline_mode = #tpu.pipeline_mode<synchronous>, transform_indices = @transform_6, window_bounds = array<i64: 1, 128>}, {transform_indices = @transform_7, window_bounds = array<i64: 1, 256, 128>}]} {
    %c0 = arith.constant 0 : index
    %c0_0 = arith.constant 0 : index
    %c0_1 = arith.constant 0 : index
    %c0_2 = arith.constant 0 : index
    %0 = vector.load %arg1[%c0, %c0_0, %c0_1, %c0_2] : memref<1x18x18x128xbf16, #tpu.memory_space<vmem>>, vector<1x18x18x128xbf16>
    %1 = arith.extf %0 : vector<1x18x18x128xbf16> to vector<1x18x18x128xf32>
    %c0_3 = arith.constant 0 : index
    %c0_4 = arith.constant 0 : index
    %2 = vector.load %arg2[%c0_3, %c0_4] : memref<9x128xf32, #tpu.memory_space<vmem>>, vector<9x128xf32>
    %3 = vector.extract_strided_slice %1 {offsets = [0, 0, 0, 0], sizes = [1, 16, 16, 128], strides = [1, 1, 1, 1]} : vector<1x18x18x128xf32> to vector<1x16x16x128xf32>
    %4 = vector.shape_cast %3 : vector<1x16x16x128xf32> to vector<16x16x128xf32>
    %5 = vector.extract_strided_slice %2 {offsets = [0, 0], sizes = [1, 128], strides = [1, 1]} : vector<9x128xf32> to vector<1x128xf32>
    %6 = vector.shape_cast %5 : vector<1x128xf32> to vector<128xf32>
    %7 = vector.shape_cast %6 : vector<128xf32> to vector<1x1x128xf32>
    %8 = vector.broadcast %7 : vector<1x1x128xf32> to vector<16x16x128xf32>
    %9 = arith.mulf %4, %8 : vector<16x16x128xf32>
    %10 = vector.extract_strided_slice %1 {offsets = [0, 0, 1, 0], sizes = [1, 16, 16, 128], strides = [1, 1, 1, 1]} : vector<1x18x18x128xf32> to vector<1x16x16x128xf32>
    %11 = vector.shape_cast %10 : vector<1x16x16x128xf32> to vector<16x16x128xf32>
    %12 = vector.extract_strided_slice %2 {offsets = [1, 0], sizes = [1, 128], strides = [1, 1]} : vector<9x128xf32> to vector<1x128xf32>
    %13 = vector.shape_cast %12 : vector<1x128xf32> to vector<128xf32>
    %14 = vector.shape_cast %13 : vector<128xf32> to vector<1x1x128xf32>
    %15 = vector.broadcast %14 : vector<1x1x128xf32> to vector<16x16x128xf32>
    %16 = arith.mulf %11, %15 : vector<16x16x128xf32>
    %17 = arith.addf %9, %16 : vector<16x16x128xf32>
    %18 = vector.extract_strided_slice %1 {offsets = [0, 0, 2, 0], sizes = [1, 16, 16, 128], strides = [1, 1, 1, 1]} : vector<1x18x18x128xf32> to vector<1x16x16x128xf32>
    %19 = vector.shape_cast %18 : vector<1x16x16x128xf32> to vector<16x16x128xf32>
    %20 = vector.extract_strided_slice %2 {offsets = [2, 0], sizes = [1, 128], strides = [1, 1]} : vector<9x128xf32> to vector<1x128xf32>
    %21 = vector.shape_cast %20 : vector<1x128xf32> to vector<128xf32>
    %22 = vector.shape_cast %21 : vector<128xf32> to vector<1x1x128xf32>
    %23 = vector.broadcast %22 : vector<1x1x128xf32> to vector<16x16x128xf32>
    %24 = arith.mulf %19, %23 : vector<16x16x128xf32>
    %25 = arith.addf %17, %24 : vector<16x16x128xf32>
    %26 = vector.extract_strided_slice %1 {offsets = [0, 1, 0, 0], sizes = [1, 16, 16, 128], strides = [1, 1, 1, 1]} : vector<1x18x18x128xf32> to vector<1x16x16x128xf32>
    %27 = vector.shape_cast %26 : vector<1x16x16x128xf32> to vector<16x16x128xf32>
    %28 = vector.extract_strided_slice %2 {offsets = [3, 0], sizes = [1, 128], strides = [1, 1]} : vector<9x128xf32> to vector<1x128xf32>
    %29 = vector.shape_cast %28 : vector<1x128xf32> to vector<128xf32>
    %30 = vector.shape_cast %29 : vector<128xf32> to vector<1x1x128xf32>
    %31 = vector.broadcast %30 : vector<1x1x128xf32> to vector<16x16x128xf32>
    %32 = arith.mulf %27, %31 : vector<16x16x128xf32>
    %33 = arith.addf %25, %32 : vector<16x16x128xf32>
    %34 = vector.extract_strided_slice %1 {offsets = [0, 1, 1, 0], sizes = [1, 16, 16, 128], strides = [1, 1, 1, 1]} : vector<1x18x18x128xf32> to vector<1x16x16x128xf32>
    %35 = vector.shape_cast %34 : vector<1x16x16x128xf32> to vector<16x16x128xf32>
    %36 = vector.extract_strided_slice %2 {offsets = [4, 0], sizes = [1, 128], strides = [1, 1]} : vector<9x128xf32> to vector<1x128xf32>
    %37 = vector.shape_cast %36 : vector<1x128xf32> to vector<128xf32>
    %38 = vector.shape_cast %37 : vector<128xf32> to vector<1x1x128xf32>
    %39 = vector.broadcast %38 : vector<1x1x128xf32> to vector<16x16x128xf32>
    %40 = arith.mulf %35, %39 : vector<16x16x128xf32>
    %41 = arith.addf %33, %40 : vector<16x16x128xf32>
    %42 = vector.extract_strided_slice %1 {offsets = [0, 1, 2, 0], sizes = [1, 16, 16, 128], strides = [1, 1, 1, 1]} : vector<1x18x18x128xf32> to vector<1x16x16x128xf32>
    %43 = vector.shape_cast %42 : vector<1x16x16x128xf32> to vector<16x16x128xf32>
    %44 = vector.extract_strided_slice %2 {offsets = [5, 0], sizes = [1, 128], strides = [1, 1]} : vector<9x128xf32> to vector<1x128xf32>
    %45 = vector.shape_cast %44 : vector<1x128xf32> to vector<128xf32>
    %46 = vector.shape_cast %45 : vector<128xf32> to vector<1x1x128xf32>
    %47 = vector.broadcast %46 : vector<1x1x128xf32> to vector<16x16x128xf32>
    %48 = arith.mulf %43, %47 : vector<16x16x128xf32>
    %49 = arith.addf %41, %48 : vector<16x16x128xf32>
    %50 = vector.extract_strided_slice %1 {offsets = [0, 2, 0, 0], sizes = [1, 16, 16, 128], strides = [1, 1, 1, 1]} : vector<1x18x18x128xf32> to vector<1x16x16x128xf32>
    %51 = vector.shape_cast %50 : vector<1x16x16x128xf32> to vector<16x16x128xf32>
    %52 = vector.extract_strided_slice %2 {offsets = [6, 0], sizes = [1, 128], strides = [1, 1]} : vector<9x128xf32> to vector<1x128xf32>
    %53 = vector.shape_cast %52 : vector<1x128xf32> to vector<128xf32>
    %54 = vector.shape_cast %53 : vector<128xf32> to vector<1x1x128xf32>
    %55 = vector.broadcast %54 : vector<1x1x128xf32> to vector<16x16x128xf32>
    %56 = arith.mulf %51, %55 : vector<16x16x128xf32>
    %57 = arith.addf %49, %56 : vector<16x16x128xf32>
    %58 = vector.extract_strided_slice %1 {offsets = [0, 2, 1, 0], sizes = [1, 16, 16, 128], strides = [1, 1, 1, 1]} : vector<1x18x18x128xf32> to vector<1x16x16x128xf32>
    %59 = vector.shape_cast %58 : vector<1x16x16x128xf32> to vector<16x16x128xf32>
    %60 = vector.extract_strided_slice %2 {offsets = [7, 0], sizes = [1, 128], strides = [1, 1]} : vector<9x128xf32> to vector<1x128xf32>
    %61 = vector.shape_cast %60 : vector<1x128xf32> to vector<128xf32>
    %62 = vector.shape_cast %61 : vector<128xf32> to vector<1x1x128xf32>
    %63 = vector.broadcast %62 : vector<1x1x128xf32> to vector<16x16x128xf32>
    %64 = arith.mulf %59, %63 : vector<16x16x128xf32>
    %65 = arith.addf %57, %64 : vector<16x16x128xf32>
    %66 = vector.extract_strided_slice %1 {offsets = [0, 2, 2, 0], sizes = [1, 16, 16, 128], strides = [1, 1, 1, 1]} : vector<1x18x18x128xf32> to vector<1x16x16x128xf32>
    %67 = vector.shape_cast %66 : vector<1x16x16x128xf32> to vector<16x16x128xf32>
    %68 = vector.extract_strided_slice %2 {offsets = [8, 0], sizes = [1, 128], strides = [1, 1]} : vector<9x128xf32> to vector<1x128xf32>
    %69 = vector.shape_cast %68 : vector<1x128xf32> to vector<128xf32>
    %70 = vector.shape_cast %69 : vector<128xf32> to vector<1x1x128xf32>
    %71 = vector.broadcast %70 : vector<1x1x128xf32> to vector<16x16x128xf32>
    %72 = arith.mulf %67, %71 : vector<16x16x128xf32>
    %73 = arith.addf %65, %72 : vector<16x16x128xf32>
    %74 = vector.shape_cast %73 : vector<16x16x128xf32> to vector<256x128xf32>
    %c0_5 = arith.constant 0 : index
    %c0_6 = arith.constant 0 : index
    %75 = vector.load %arg3[%c0_5, %c0_6] : memref<1x128xf32, #tpu.memory_space<vmem>>, vector<1x128xf32>
    %76 = vector.broadcast %75 : vector<1x128xf32> to vector<256x128xf32>
    %77 = arith.mulf %74, %76 : vector<256x128xf32>
    %c0_7 = arith.constant 0 : index
    %c0_8 = arith.constant 0 : index
    %78 = vector.load %arg4[%c0_7, %c0_8] : memref<1x128xf32, #tpu.memory_space<vmem>>, vector<1x128xf32>
    %79 = vector.broadcast %78 : vector<1x128xf32> to vector<256x128xf32>
    %80 = arith.addf %77, %79 : vector<256x128xf32>
    %cst = arith.constant 0.000000e+00 : f32
    %81 = vector.broadcast %cst : f32 to vector<256x128xf32>
    %82 = arith.maximumf %80, %81 : vector<256x128xf32>
    %83 = arith.truncf %82 : vector<256x128xf32> to vector<256x128xbf16>
    %c0_9 = arith.constant 0 : index
    %c0_10 = arith.constant 0 : index
    %84 = vector.load %arg5[%c0_9, %c0_10] : memref<128x128xbf16, #tpu.memory_space<vmem>>, vector<128x128xbf16>
    %cst_11 = arith.constant dense<0.000000e+00> : vector<256x128xf32>
    %85 = tpu.matmul %83, %84, %cst_11 {dimension_numbers = #tpu.dot_dimension_numbers<[1], [0], [0], [1], [0, 0, 1, 1], [], []>} : vector<256x128xbf16>, vector<128x128xbf16>, vector<256x128xf32> -> vector<256x128xf32>
    %c0_12 = arith.constant 0 : index
    %c0_13 = arith.constant 0 : index
    %86 = vector.load %arg6[%c0_12, %c0_13] : memref<1x128xf32, #tpu.memory_space<vmem>>, vector<1x128xf32>
    %87 = vector.broadcast %86 : vector<1x128xf32> to vector<256x128xf32>
    %88 = arith.mulf %85, %87 : vector<256x128xf32>
    %c0_14 = arith.constant 0 : index
    %c0_15 = arith.constant 0 : index
    %89 = vector.load %arg7[%c0_14, %c0_15] : memref<1x128xf32, #tpu.memory_space<vmem>>, vector<1x128xf32>
    %90 = vector.broadcast %89 : vector<1x128xf32> to vector<256x128xf32>
    %91 = arith.addf %88, %90 : vector<256x128xf32>
    %cst_16 = arith.constant 0.000000e+00 : f32
    %92 = vector.broadcast %cst_16 : f32 to vector<256x128xf32>
    %93 = arith.maximumf %91, %92 : vector<256x128xf32>
    %94 = vector.shape_cast %93 : vector<256x128xf32> to vector<1x256x128xf32>
    %95 = arith.truncf %94 : vector<1x256x128xf32> to vector<1x256x128xbf16>
    %c0_17 = arith.constant 0 : index
    %c0_18 = arith.constant 0 : index
    %c0_19 = arith.constant 0 : index
    %96 = vector.load %arg8[%c0_17, %c0_18, %c0_19] : memref<1x256x128xbf16, #tpu.memory_space<vmem>>, vector<1x256x128xbf16>
    tpu.vector_store %arg8[%c0_17, %c0_18, %c0_19], %95 {strides = array<i32>} : memref<1x256x128xbf16, #tpu.memory_space<vmem>>, vector<1x256x128xbf16>,
    return
  }
  func.func @transform_0(%arg0: i32) -> (i32, i32, i32, i32) {
    %c0_i32 = arith.constant 0 : i32
    %c0_i32_0 = arith.constant 0 : i32
    %c0_i32_1 = arith.constant 0 : i32
    %c0_i32_2 = arith.constant 0 : i32
    return %arg0, %c0_i32, %c0_i32_0, %c0_i32_1 : i32, i32, i32, i32
  }
  func.func @transform_1(%arg0: i32) -> (i32, i32) {
    %c0_i32 = arith.constant 0 : i32
    %c0_i32_0 = arith.constant 0 : i32
    %c0_i32_1 = arith.constant 0 : i32
    return %c0_i32, %c0_i32_0 : i32, i32
  }
  func.func @transform_2(%arg0: i32) -> (i32, i32) {
    %c0_i32 = arith.constant 0 : i32
    %c0_i32_0 = arith.constant 0 : i32
    %c0_i32_1 = arith.constant 0 : i32
    return %c0_i32, %c0_i32_0 : i32, i32
  }
  func.func @transform_3(%arg0: i32) -> (i32, i32) {
    %c0_i32 = arith.constant 0 : i32
    %c0_i32_0 = arith.constant 0 : i32
    %c0_i32_1 = arith.constant 0 : i32
    return %c0_i32, %c0_i32_0 : i32, i32
  }
  func.func @transform_4(%arg0: i32) -> (i32, i32) {
    %c0_i32 = arith.constant 0 : i32
    %c0_i32_0 = arith.constant 0 : i32
    %c0_i32_1 = arith.constant 0 : i32
    return %c0_i32, %c0_i32_0 : i32, i32
  }
  func.func @transform_5(%arg0: i32) -> (i32, i32) {
    %c0_i32 = arith.constant 0 : i32
    %c0_i32_0 = arith.constant 0 : i32
    %c0_i32_1 = arith.constant 0 : i32
    return %c0_i32, %c0_i32_0 : i32, i32
  }
  func.func @transform_6(%arg0: i32) -> (i32, i32) {
    %c0_i32 = arith.constant 0 : i32
    %c0_i32_0 = arith.constant 0 : i32
    %c0_i32_1 = arith.constant 0 : i32
    return %c0_i32, %c0_i32_0 : i32, i32
  }
  func.func @transform_7(%arg0: i32) -> (i32, i32, i32) {
    %c0_i32 = arith.constant 0 : i32
    %c0_i32_0 = arith.constant 0 : i32
    %c0_i32_1 = arith.constant 0 : i32
    return %arg0, %c0_i32, %c0_i32_0 : i32, i32, i32
  }
}

module attributes {stable_mosaic.version = 11 : i64} {
  func.func @_block_kernel(%arg0: i32, %arg1: memref<1x18x18x128xbf16, #tpu.memory_space<vmem>>, %arg2: memref<9x128xf32, #tpu.memory_space<vmem>>, %arg3: memref<1x128xf32, #tpu.memory_space<vmem>>, %arg4: memref<1x128xf32, #tpu.memory_space<vmem>>, %arg5: memref<64x256xf32, #tpu.memory_space<vmem>>, %arg6: memref<128x128xbf16, #tpu.memory_space<vmem>>, %arg7: memref<1x128xf32, #tpu.memory_space<vmem>>, %arg8: memref<1x128xf32, #tpu.memory_space<vmem>>, %arg9: memref<1x64x128xbf16, #tpu.memory_space<vmem>>) attributes {dimension_semantics = [#tpu.dimension_semantics<parallel>], iteration_bounds = array<i64: 2>, scalar_prefetch = 0 : i64, scratch_operands = 0 : i64, tpu.core_type = #tpu.core_type<tc>, window_params = [{transform_indices = @transform_0, window_bounds = array<i64: 1, 18, 18, 128>}, {pipeline_mode = #tpu.pipeline_mode<synchronous>, transform_indices = @transform_1, window_bounds = array<i64: 9, 128>}, {pipeline_mode = #tpu.pipeline_mode<synchronous>, transform_indices = @transform_2, window_bounds = array<i64: 1, 128>}, {pipeline_mode = #tpu.pipeline_mode<synchronous>, transform_indices = @transform_3, window_bounds = array<i64: 1, 128>}, {pipeline_mode = #tpu.pipeline_mode<synchronous>, transform_indices = @transform_4, window_bounds = array<i64: 64, 256>}, {pipeline_mode = #tpu.pipeline_mode<synchronous>, transform_indices = @transform_5, window_bounds = array<i64: 128, 128>}, {pipeline_mode = #tpu.pipeline_mode<synchronous>, transform_indices = @transform_6, window_bounds = array<i64: 1, 128>}, {pipeline_mode = #tpu.pipeline_mode<synchronous>, transform_indices = @transform_7, window_bounds = array<i64: 1, 128>}, {transform_indices = @transform_8, window_bounds = array<i64: 1, 64, 128>}]} {
    %c0 = arith.constant 0 : index
    %c0_0 = arith.constant 0 : index
    %c0_1 = arith.constant 0 : index
    %c0_2 = arith.constant 0 : index
    %0 = vector.load %arg1[%c0, %c0_0, %c0_1, %c0_2] : memref<1x18x18x128xbf16, #tpu.memory_space<vmem>>, vector<1x18x18x128xbf16>
    %1 = arith.extf %0 : vector<1x18x18x128xbf16> to vector<1x18x18x128xf32>
    %c0_3 = arith.constant 0 : index
    %c0_4 = arith.constant 0 : index
    %2 = vector.load %arg2[%c0_3, %c0_4] : memref<9x128xf32, #tpu.memory_space<vmem>>, vector<9x128xf32>
    %3 = vector.extract_strided_slice %1 {offsets = [0, 0, 0, 0], sizes = [1, 16, 16, 128], strides = [1, 1, 1, 1]} : vector<1x18x18x128xf32> to vector<1x16x16x128xf32>
    %4 = vector.shape_cast %3 : vector<1x16x16x128xf32> to vector<16x16x128xf32>
    %5 = vector.extract_strided_slice %2 {offsets = [0, 0], sizes = [1, 128], strides = [1, 1]} : vector<9x128xf32> to vector<1x128xf32>
    %6 = vector.shape_cast %5 : vector<1x128xf32> to vector<128xf32>
    %7 = vector.shape_cast %6 : vector<128xf32> to vector<1x1x128xf32>
    %8 = vector.broadcast %7 : vector<1x1x128xf32> to vector<16x16x128xf32>
    %9 = arith.mulf %4, %8 : vector<16x16x128xf32>
    %10 = vector.extract_strided_slice %1 {offsets = [0, 0, 1, 0], sizes = [1, 16, 16, 128], strides = [1, 1, 1, 1]} : vector<1x18x18x128xf32> to vector<1x16x16x128xf32>
    %11 = vector.shape_cast %10 : vector<1x16x16x128xf32> to vector<16x16x128xf32>
    %12 = vector.extract_strided_slice %2 {offsets = [1, 0], sizes = [1, 128], strides = [1, 1]} : vector<9x128xf32> to vector<1x128xf32>
    %13 = vector.shape_cast %12 : vector<1x128xf32> to vector<128xf32>
    %14 = vector.shape_cast %13 : vector<128xf32> to vector<1x1x128xf32>
    %15 = vector.broadcast %14 : vector<1x1x128xf32> to vector<16x16x128xf32>
    %16 = arith.mulf %11, %15 : vector<16x16x128xf32>
    %17 = arith.addf %9, %16 : vector<16x16x128xf32>
    %18 = vector.extract_strided_slice %1 {offsets = [0, 0, 2, 0], sizes = [1, 16, 16, 128], strides = [1, 1, 1, 1]} : vector<1x18x18x128xf32> to vector<1x16x16x128xf32>
    %19 = vector.shape_cast %18 : vector<1x16x16x128xf32> to vector<16x16x128xf32>
    %20 = vector.extract_strided_slice %2 {offsets = [2, 0], sizes = [1, 128], strides = [1, 1]} : vector<9x128xf32> to vector<1x128xf32>
    %21 = vector.shape_cast %20 : vector<1x128xf32> to vector<128xf32>
    %22 = vector.shape_cast %21 : vector<128xf32> to vector<1x1x128xf32>
    %23 = vector.broadcast %22 : vector<1x1x128xf32> to vector<16x16x128xf32>
    %24 = arith.mulf %19, %23 : vector<16x16x128xf32>
    %25 = arith.addf %17, %24 : vector<16x16x128xf32>
    %26 = vector.extract_strided_slice %1 {offsets = [0, 1, 0, 0], sizes = [1, 16, 16, 128], strides = [1, 1, 1, 1]} : vector<1x18x18x128xf32> to vector<1x16x16x128xf32>
    %27 = vector.shape_cast %26 : vector<1x16x16x128xf32> to vector<16x16x128xf32>
    %28 = vector.extract_strided_slice %2 {offsets = [3, 0], sizes = [1, 128], strides = [1, 1]} : vector<9x128xf32> to vector<1x128xf32>
    %29 = vector.shape_cast %28 : vector<1x128xf32> to vector<128xf32>
    %30 = vector.shape_cast %29 : vector<128xf32> to vector<1x1x128xf32>
    %31 = vector.broadcast %30 : vector<1x1x128xf32> to vector<16x16x128xf32>
    %32 = arith.mulf %27, %31 : vector<16x16x128xf32>
    %33 = arith.addf %25, %32 : vector<16x16x128xf32>
    %34 = vector.extract_strided_slice %1 {offsets = [0, 1, 1, 0], sizes = [1, 16, 16, 128], strides = [1, 1, 1, 1]} : vector<1x18x18x128xf32> to vector<1x16x16x128xf32>
    %35 = vector.shape_cast %34 : vector<1x16x16x128xf32> to vector<16x16x128xf32>
    %36 = vector.extract_strided_slice %2 {offsets = [4, 0], sizes = [1, 128], strides = [1, 1]} : vector<9x128xf32> to vector<1x128xf32>
    %37 = vector.shape_cast %36 : vector<1x128xf32> to vector<128xf32>
    %38 = vector.shape_cast %37 : vector<128xf32> to vector<1x1x128xf32>
    %39 = vector.broadcast %38 : vector<1x1x128xf32> to vector<16x16x128xf32>
    %40 = arith.mulf %35, %39 : vector<16x16x128xf32>
    %41 = arith.addf %33, %40 : vector<16x16x128xf32>
    %42 = vector.extract_strided_slice %1 {offsets = [0, 1, 2, 0], sizes = [1, 16, 16, 128], strides = [1, 1, 1, 1]} : vector<1x18x18x128xf32> to vector<1x16x16x128xf32>
    %43 = vector.shape_cast %42 : vector<1x16x16x128xf32> to vector<16x16x128xf32>
    %44 = vector.extract_strided_slice %2 {offsets = [5, 0], sizes = [1, 128], strides = [1, 1]} : vector<9x128xf32> to vector<1x128xf32>
    %45 = vector.shape_cast %44 : vector<1x128xf32> to vector<128xf32>
    %46 = vector.shape_cast %45 : vector<128xf32> to vector<1x1x128xf32>
    %47 = vector.broadcast %46 : vector<1x1x128xf32> to vector<16x16x128xf32>
    %48 = arith.mulf %43, %47 : vector<16x16x128xf32>
    %49 = arith.addf %41, %48 : vector<16x16x128xf32>
    %50 = vector.extract_strided_slice %1 {offsets = [0, 2, 0, 0], sizes = [1, 16, 16, 128], strides = [1, 1, 1, 1]} : vector<1x18x18x128xf32> to vector<1x16x16x128xf32>
    %51 = vector.shape_cast %50 : vector<1x16x16x128xf32> to vector<16x16x128xf32>
    %52 = vector.extract_strided_slice %2 {offsets = [6, 0], sizes = [1, 128], strides = [1, 1]} : vector<9x128xf32> to vector<1x128xf32>
    %53 = vector.shape_cast %52 : vector<1x128xf32> to vector<128xf32>
    %54 = vector.shape_cast %53 : vector<128xf32> to vector<1x1x128xf32>
    %55 = vector.broadcast %54 : vector<1x1x128xf32> to vector<16x16x128xf32>
    %56 = arith.mulf %51, %55 : vector<16x16x128xf32>
    %57 = arith.addf %49, %56 : vector<16x16x128xf32>
    %58 = vector.extract_strided_slice %1 {offsets = [0, 2, 1, 0], sizes = [1, 16, 16, 128], strides = [1, 1, 1, 1]} : vector<1x18x18x128xf32> to vector<1x16x16x128xf32>
    %59 = vector.shape_cast %58 : vector<1x16x16x128xf32> to vector<16x16x128xf32>
    %60 = vector.extract_strided_slice %2 {offsets = [7, 0], sizes = [1, 128], strides = [1, 1]} : vector<9x128xf32> to vector<1x128xf32>
    %61 = vector.shape_cast %60 : vector<1x128xf32> to vector<128xf32>
    %62 = vector.shape_cast %61 : vector<128xf32> to vector<1x1x128xf32>
    %63 = vector.broadcast %62 : vector<1x1x128xf32> to vector<16x16x128xf32>
    %64 = arith.mulf %59, %63 : vector<16x16x128xf32>
    %65 = arith.addf %57, %64 : vector<16x16x128xf32>
    %66 = vector.extract_strided_slice %1 {offsets = [0, 2, 2, 0], sizes = [1, 16, 16, 128], strides = [1, 1, 1, 1]} : vector<1x18x18x128xf32> to vector<1x16x16x128xf32>
    %67 = vector.shape_cast %66 : vector<1x16x16x128xf32> to vector<16x16x128xf32>
    %68 = vector.extract_strided_slice %2 {offsets = [8, 0], sizes = [1, 128], strides = [1, 1]} : vector<9x128xf32> to vector<1x128xf32>
    %69 = vector.shape_cast %68 : vector<1x128xf32> to vector<128xf32>
    %70 = vector.shape_cast %69 : vector<128xf32> to vector<1x1x128xf32>
    %71 = vector.broadcast %70 : vector<1x1x128xf32> to vector<16x16x128xf32>
    %72 = arith.mulf %67, %71 : vector<16x16x128xf32>
    %73 = arith.addf %65, %72 : vector<16x16x128xf32>
    %74 = vector.shape_cast %73 : vector<16x16x128xf32> to vector<256x128xf32>
    %c0_5 = arith.constant 0 : index
    %c0_6 = arith.constant 0 : index
    %75 = vector.load %arg5[%c0_5, %c0_6] : memref<64x256xf32, #tpu.memory_space<vmem>>, vector<64x256xf32>
    %cst = arith.constant dense<0.000000e+00> : vector<64x128xf32>
    %76 = tpu.matmul %75, %74, %cst {dimension_numbers = #tpu.dot_dimension_numbers<[1], [0], [0], [1], [0, 0, 1, 1], [], []>} : vector<64x256xf32>, vector<256x128xf32>, vector<64x128xf32> -> vector<64x128xf32>
    %c0_7 = arith.constant 0 : index
    %c0_8 = arith.constant 0 : index
    %77 = vector.load %arg3[%c0_7, %c0_8] : memref<1x128xf32, #tpu.memory_space<vmem>>, vector<1x128xf32>
    %78 = vector.broadcast %77 : vector<1x128xf32> to vector<64x128xf32>
    %79 = arith.mulf %76, %78 : vector<64x128xf32>
    %c0_9 = arith.constant 0 : index
    %c0_10 = arith.constant 0 : index
    %80 = vector.load %arg4[%c0_9, %c0_10] : memref<1x128xf32, #tpu.memory_space<vmem>>, vector<1x128xf32>
    %81 = vector.broadcast %80 : vector<1x128xf32> to vector<64x128xf32>
    %82 = arith.addf %79, %81 : vector<64x128xf32>
    %cst_11 = arith.constant 0.000000e+00 : f32
    %83 = vector.broadcast %cst_11 : f32 to vector<64x128xf32>
    %84 = arith.maximumf %82, %83 : vector<64x128xf32>
    %85 = arith.truncf %84 : vector<64x128xf32> to vector<64x128xbf16>
    %c0_12 = arith.constant 0 : index
    %c0_13 = arith.constant 0 : index
    %86 = vector.load %arg6[%c0_12, %c0_13] : memref<128x128xbf16, #tpu.memory_space<vmem>>, vector<128x128xbf16>
    %cst_14 = arith.constant dense<0.000000e+00> : vector<64x128xf32>
    %87 = tpu.matmul %85, %86, %cst_14 {dimension_numbers = #tpu.dot_dimension_numbers<[1], [0], [0], [1], [0, 0, 1, 1], [], []>} : vector<64x128xbf16>, vector<128x128xbf16>, vector<64x128xf32> -> vector<64x128xf32>
    %c0_15 = arith.constant 0 : index
    %c0_16 = arith.constant 0 : index
    %88 = vector.load %arg7[%c0_15, %c0_16] : memref<1x128xf32, #tpu.memory_space<vmem>>, vector<1x128xf32>
    %89 = vector.broadcast %88 : vector<1x128xf32> to vector<64x128xf32>
    %90 = arith.mulf %87, %89 : vector<64x128xf32>
    %c0_17 = arith.constant 0 : index
    %c0_18 = arith.constant 0 : index
    %91 = vector.load %arg8[%c0_17, %c0_18] : memref<1x128xf32, #tpu.memory_space<vmem>>, vector<1x128xf32>
    %92 = vector.broadcast %91 : vector<1x128xf32> to vector<64x128xf32>
    %93 = arith.addf %90, %92 : vector<64x128xf32>
    %cst_19 = arith.constant 0.000000e+00 : f32
    %94 = vector.broadcast %cst_19 : f32 to vector<64x128xf32>
    %95 = arith.maximumf %93, %94 : vector<64x128xf32>
    %96 = vector.shape_cast %95 : vector<64x128xf32> to vector<1x64x128xf32>
    %97 = arith.truncf %96 : vector<1x64x128xf32> to vector<1x64x128xbf16>
    %c0_20 = arith.constant 0 : index
    %c0_21 = arith.constant 0 : index
    %c0_22 = arith.constant 0 : index
    %98 = vector.load %arg9[%c0_20, %c0_21, %c0_22] : memref<1x64x128xbf16, #tpu.memory_space<vmem>>, vector<1x64x128xbf16>
    tpu.vector_store %arg9[%c0_20, %c0_21, %c0_22], %97 {strides = array<i32>} : memref<1x64x128xbf16, #tpu.memory_space<vmem>>, vector<1x64x128xbf16>,
    return
  }
  func.func @transform_0(%arg0: i32) -> (i32, i32, i32, i32) {
    %c0_i32 = arith.constant 0 : i32
    %c0_i32_0 = arith.constant 0 : i32
    %c0_i32_1 = arith.constant 0 : i32
    %c0_i32_2 = arith.constant 0 : i32
    return %arg0, %c0_i32, %c0_i32_0, %c0_i32_1 : i32, i32, i32, i32
  }
  func.func @transform_1(%arg0: i32) -> (i32, i32) {
    %c0_i32 = arith.constant 0 : i32
    %c0_i32_0 = arith.constant 0 : i32
    %c0_i32_1 = arith.constant 0 : i32
    return %c0_i32, %c0_i32_0 : i32, i32
  }
  func.func @transform_2(%arg0: i32) -> (i32, i32) {
    %c0_i32 = arith.constant 0 : i32
    %c0_i32_0 = arith.constant 0 : i32
    %c0_i32_1 = arith.constant 0 : i32
    return %c0_i32, %c0_i32_0 : i32, i32
  }
  func.func @transform_3(%arg0: i32) -> (i32, i32) {
    %c0_i32 = arith.constant 0 : i32
    %c0_i32_0 = arith.constant 0 : i32
    %c0_i32_1 = arith.constant 0 : i32
    return %c0_i32, %c0_i32_0 : i32, i32
  }
  func.func @transform_4(%arg0: i32) -> (i32, i32) {
    %c0_i32 = arith.constant 0 : i32
    %c0_i32_0 = arith.constant 0 : i32
    %c0_i32_1 = arith.constant 0 : i32
    return %c0_i32, %c0_i32_0 : i32, i32
  }
  func.func @transform_5(%arg0: i32) -> (i32, i32) {
    %c0_i32 = arith.constant 0 : i32
    %c0_i32_0 = arith.constant 0 : i32
    %c0_i32_1 = arith.constant 0 : i32
    return %c0_i32, %c0_i32_0 : i32, i32
  }
  func.func @transform_6(%arg0: i32) -> (i32, i32) {
    %c0_i32 = arith.constant 0 : i32
    %c0_i32_0 = arith.constant 0 : i32
    %c0_i32_1 = arith.constant 0 : i32
    return %c0_i32, %c0_i32_0 : i32, i32
  }
  func.func @transform_7(%arg0: i32) -> (i32, i32) {
    %c0_i32 = arith.constant 0 : i32
    %c0_i32_0 = arith.constant 0 : i32
    %c0_i32_1 = arith.constant 0 : i32
    return %c0_i32, %c0_i32_0 : i32, i32
  }
  func.func @transform_8(%arg0: i32) -> (i32, i32, i32) {
    %c0_i32 = arith.constant 0 : i32
    %c0_i32_0 = arith.constant 0 : i32
    %c0_i32_1 = arith.constant 0 : i32
    return %arg0, %c0_i32, %c0_i32_0 : i32, i32, i32
  }
}

module attributes {stable_mosaic.version = 11 : i64} {
  func.func @_block_kernel(%arg0: i32, %arg1: memref<1x10x10x128xbf16, #tpu.memory_space<vmem>>, %arg2: memref<9x128xf32, #tpu.memory_space<vmem>>, %arg3: memref<1x128xf32, #tpu.memory_space<vmem>>, %arg4: memref<1x128xf32, #tpu.memory_space<vmem>>, %arg5: memref<16x64xf32, #tpu.memory_space<vmem>>, %arg6: memref<128x128xbf16, #tpu.memory_space<vmem>>, %arg7: memref<1x128xf32, #tpu.memory_space<vmem>>, %arg8: memref<1x128xf32, #tpu.memory_space<vmem>>, %arg9: memref<1x16x128xbf16, #tpu.memory_space<vmem>>) attributes {dimension_semantics = [#tpu.dimension_semantics<parallel>], iteration_bounds = array<i64: 2>, scalar_prefetch = 0 : i64, scratch_operands = 0 : i64, tpu.core_type = #tpu.core_type<tc>, window_params = [{transform_indices = @transform_0, window_bounds = array<i64: 1, 10, 10, 128>}, {pipeline_mode = #tpu.pipeline_mode<synchronous>, transform_indices = @transform_1, window_bounds = array<i64: 9, 128>}, {pipeline_mode = #tpu.pipeline_mode<synchronous>, transform_indices = @transform_2, window_bounds = array<i64: 1, 128>}, {pipeline_mode = #tpu.pipeline_mode<synchronous>, transform_indices = @transform_3, window_bounds = array<i64: 1, 128>}, {pipeline_mode = #tpu.pipeline_mode<synchronous>, transform_indices = @transform_4, window_bounds = array<i64: 16, 64>}, {pipeline_mode = #tpu.pipeline_mode<synchronous>, transform_indices = @transform_5, window_bounds = array<i64: 128, 128>}, {pipeline_mode = #tpu.pipeline_mode<synchronous>, transform_indices = @transform_6, window_bounds = array<i64: 1, 128>}, {pipeline_mode = #tpu.pipeline_mode<synchronous>, transform_indices = @transform_7, window_bounds = array<i64: 1, 128>}, {transform_indices = @transform_8, window_bounds = array<i64: 1, 16, 128>}]} {
    %c0 = arith.constant 0 : index
    %c0_0 = arith.constant 0 : index
    %c0_1 = arith.constant 0 : index
    %c0_2 = arith.constant 0 : index
    %0 = vector.load %arg1[%c0, %c0_0, %c0_1, %c0_2] : memref<1x10x10x128xbf16, #tpu.memory_space<vmem>>, vector<1x10x10x128xbf16>
    %1 = arith.extf %0 : vector<1x10x10x128xbf16> to vector<1x10x10x128xf32>
    %c0_3 = arith.constant 0 : index
    %c0_4 = arith.constant 0 : index
    %2 = vector.load %arg2[%c0_3, %c0_4] : memref<9x128xf32, #tpu.memory_space<vmem>>, vector<9x128xf32>
    %3 = vector.extract_strided_slice %1 {offsets = [0, 0, 0, 0], sizes = [1, 8, 8, 128], strides = [1, 1, 1, 1]} : vector<1x10x10x128xf32> to vector<1x8x8x128xf32>
    %4 = vector.shape_cast %3 : vector<1x8x8x128xf32> to vector<8x8x128xf32>
    %5 = vector.extract_strided_slice %2 {offsets = [0, 0], sizes = [1, 128], strides = [1, 1]} : vector<9x128xf32> to vector<1x128xf32>
    %6 = vector.shape_cast %5 : vector<1x128xf32> to vector<128xf32>
    %7 = vector.shape_cast %6 : vector<128xf32> to vector<1x1x128xf32>
    %8 = vector.broadcast %7 : vector<1x1x128xf32> to vector<8x8x128xf32>
    %9 = arith.mulf %4, %8 : vector<8x8x128xf32>
    %10 = vector.extract_strided_slice %1 {offsets = [0, 0, 1, 0], sizes = [1, 8, 8, 128], strides = [1, 1, 1, 1]} : vector<1x10x10x128xf32> to vector<1x8x8x128xf32>
    %11 = vector.shape_cast %10 : vector<1x8x8x128xf32> to vector<8x8x128xf32>
    %12 = vector.extract_strided_slice %2 {offsets = [1, 0], sizes = [1, 128], strides = [1, 1]} : vector<9x128xf32> to vector<1x128xf32>
    %13 = vector.shape_cast %12 : vector<1x128xf32> to vector<128xf32>
    %14 = vector.shape_cast %13 : vector<128xf32> to vector<1x1x128xf32>
    %15 = vector.broadcast %14 : vector<1x1x128xf32> to vector<8x8x128xf32>
    %16 = arith.mulf %11, %15 : vector<8x8x128xf32>
    %17 = arith.addf %9, %16 : vector<8x8x128xf32>
    %18 = vector.extract_strided_slice %1 {offsets = [0, 0, 2, 0], sizes = [1, 8, 8, 128], strides = [1, 1, 1, 1]} : vector<1x10x10x128xf32> to vector<1x8x8x128xf32>
    %19 = vector.shape_cast %18 : vector<1x8x8x128xf32> to vector<8x8x128xf32>
    %20 = vector.extract_strided_slice %2 {offsets = [2, 0], sizes = [1, 128], strides = [1, 1]} : vector<9x128xf32> to vector<1x128xf32>
    %21 = vector.shape_cast %20 : vector<1x128xf32> to vector<128xf32>
    %22 = vector.shape_cast %21 : vector<128xf32> to vector<1x1x128xf32>
    %23 = vector.broadcast %22 : vector<1x1x128xf32> to vector<8x8x128xf32>
    %24 = arith.mulf %19, %23 : vector<8x8x128xf32>
    %25 = arith.addf %17, %24 : vector<8x8x128xf32>
    %26 = vector.extract_strided_slice %1 {offsets = [0, 1, 0, 0], sizes = [1, 8, 8, 128], strides = [1, 1, 1, 1]} : vector<1x10x10x128xf32> to vector<1x8x8x128xf32>
    %27 = vector.shape_cast %26 : vector<1x8x8x128xf32> to vector<8x8x128xf32>
    %28 = vector.extract_strided_slice %2 {offsets = [3, 0], sizes = [1, 128], strides = [1, 1]} : vector<9x128xf32> to vector<1x128xf32>
    %29 = vector.shape_cast %28 : vector<1x128xf32> to vector<128xf32>
    %30 = vector.shape_cast %29 : vector<128xf32> to vector<1x1x128xf32>
    %31 = vector.broadcast %30 : vector<1x1x128xf32> to vector<8x8x128xf32>
    %32 = arith.mulf %27, %31 : vector<8x8x128xf32>
    %33 = arith.addf %25, %32 : vector<8x8x128xf32>
    %34 = vector.extract_strided_slice %1 {offsets = [0, 1, 1, 0], sizes = [1, 8, 8, 128], strides = [1, 1, 1, 1]} : vector<1x10x10x128xf32> to vector<1x8x8x128xf32>
    %35 = vector.shape_cast %34 : vector<1x8x8x128xf32> to vector<8x8x128xf32>
    %36 = vector.extract_strided_slice %2 {offsets = [4, 0], sizes = [1, 128], strides = [1, 1]} : vector<9x128xf32> to vector<1x128xf32>
    %37 = vector.shape_cast %36 : vector<1x128xf32> to vector<128xf32>
    %38 = vector.shape_cast %37 : vector<128xf32> to vector<1x1x128xf32>
    %39 = vector.broadcast %38 : vector<1x1x128xf32> to vector<8x8x128xf32>
    %40 = arith.mulf %35, %39 : vector<8x8x128xf32>
    %41 = arith.addf %33, %40 : vector<8x8x128xf32>
    %42 = vector.extract_strided_slice %1 {offsets = [0, 1, 2, 0], sizes = [1, 8, 8, 128], strides = [1, 1, 1, 1]} : vector<1x10x10x128xf32> to vector<1x8x8x128xf32>
    %43 = vector.shape_cast %42 : vector<1x8x8x128xf32> to vector<8x8x128xf32>
    %44 = vector.extract_strided_slice %2 {offsets = [5, 0], sizes = [1, 128], strides = [1, 1]} : vector<9x128xf32> to vector<1x128xf32>
    %45 = vector.shape_cast %44 : vector<1x128xf32> to vector<128xf32>
    %46 = vector.shape_cast %45 : vector<128xf32> to vector<1x1x128xf32>
    %47 = vector.broadcast %46 : vector<1x1x128xf32> to vector<8x8x128xf32>
    %48 = arith.mulf %43, %47 : vector<8x8x128xf32>
    %49 = arith.addf %41, %48 : vector<8x8x128xf32>
    %50 = vector.extract_strided_slice %1 {offsets = [0, 2, 0, 0], sizes = [1, 8, 8, 128], strides = [1, 1, 1, 1]} : vector<1x10x10x128xf32> to vector<1x8x8x128xf32>
    %51 = vector.shape_cast %50 : vector<1x8x8x128xf32> to vector<8x8x128xf32>
    %52 = vector.extract_strided_slice %2 {offsets = [6, 0], sizes = [1, 128], strides = [1, 1]} : vector<9x128xf32> to vector<1x128xf32>
    %53 = vector.shape_cast %52 : vector<1x128xf32> to vector<128xf32>
    %54 = vector.shape_cast %53 : vector<128xf32> to vector<1x1x128xf32>
    %55 = vector.broadcast %54 : vector<1x1x128xf32> to vector<8x8x128xf32>
    %56 = arith.mulf %51, %55 : vector<8x8x128xf32>
    %57 = arith.addf %49, %56 : vector<8x8x128xf32>
    %58 = vector.extract_strided_slice %1 {offsets = [0, 2, 1, 0], sizes = [1, 8, 8, 128], strides = [1, 1, 1, 1]} : vector<1x10x10x128xf32> to vector<1x8x8x128xf32>
    %59 = vector.shape_cast %58 : vector<1x8x8x128xf32> to vector<8x8x128xf32>
    %60 = vector.extract_strided_slice %2 {offsets = [7, 0], sizes = [1, 128], strides = [1, 1]} : vector<9x128xf32> to vector<1x128xf32>
    %61 = vector.shape_cast %60 : vector<1x128xf32> to vector<128xf32>
    %62 = vector.shape_cast %61 : vector<128xf32> to vector<1x1x128xf32>
    %63 = vector.broadcast %62 : vector<1x1x128xf32> to vector<8x8x128xf32>
    %64 = arith.mulf %59, %63 : vector<8x8x128xf32>
    %65 = arith.addf %57, %64 : vector<8x8x128xf32>
    %66 = vector.extract_strided_slice %1 {offsets = [0, 2, 2, 0], sizes = [1, 8, 8, 128], strides = [1, 1, 1, 1]} : vector<1x10x10x128xf32> to vector<1x8x8x128xf32>
    %67 = vector.shape_cast %66 : vector<1x8x8x128xf32> to vector<8x8x128xf32>
    %68 = vector.extract_strided_slice %2 {offsets = [8, 0], sizes = [1, 128], strides = [1, 1]} : vector<9x128xf32> to vector<1x128xf32>
    %69 = vector.shape_cast %68 : vector<1x128xf32> to vector<128xf32>
    %70 = vector.shape_cast %69 : vector<128xf32> to vector<1x1x128xf32>
    %71 = vector.broadcast %70 : vector<1x1x128xf32> to vector<8x8x128xf32>
    %72 = arith.mulf %67, %71 : vector<8x8x128xf32>
    %73 = arith.addf %65, %72 : vector<8x8x128xf32>
    %74 = vector.shape_cast %73 : vector<8x8x128xf32> to vector<64x128xf32>
    %c0_5 = arith.constant 0 : index
    %c0_6 = arith.constant 0 : index
    %75 = vector.load %arg5[%c0_5, %c0_6] : memref<16x64xf32, #tpu.memory_space<vmem>>, vector<16x64xf32>
    %cst = arith.constant dense<0.000000e+00> : vector<16x128xf32>
    %76 = tpu.matmul %75, %74, %cst {dimension_numbers = #tpu.dot_dimension_numbers<[1], [0], [0], [1], [0, 0, 1, 1], [], []>} : vector<16x64xf32>, vector<64x128xf32>, vector<16x128xf32> -> vector<16x128xf32>
    %c0_7 = arith.constant 0 : index
    %c0_8 = arith.constant 0 : index
    %77 = vector.load %arg3[%c0_7, %c0_8] : memref<1x128xf32, #tpu.memory_space<vmem>>, vector<1x128xf32>
    %78 = vector.broadcast %77 : vector<1x128xf32> to vector<16x128xf32>
    %79 = arith.mulf %76, %78 : vector<16x128xf32>
    %c0_9 = arith.constant 0 : index
    %c0_10 = arith.constant 0 : index
    %80 = vector.load %arg4[%c0_9, %c0_10] : memref<1x128xf32, #tpu.memory_space<vmem>>, vector<1x128xf32>
    %81 = vector.broadcast %80 : vector<1x128xf32> to vector<16x128xf32>
    %82 = arith.addf %79, %81 : vector<16x128xf32>
    %cst_11 = arith.constant 0.000000e+00 : f32
    %83 = vector.broadcast %cst_11 : f32 to vector<16x128xf32>
    %84 = arith.maximumf %82, %83 : vector<16x128xf32>
    %85 = arith.truncf %84 : vector<16x128xf32> to vector<16x128xbf16>
    %c0_12 = arith.constant 0 : index
    %c0_13 = arith.constant 0 : index
    %86 = vector.load %arg6[%c0_12, %c0_13] : memref<128x128xbf16, #tpu.memory_space<vmem>>, vector<128x128xbf16>
    %cst_14 = arith.constant dense<0.000000e+00> : vector<16x128xf32>
    %87 = tpu.matmul %85, %86, %cst_14 {dimension_numbers = #tpu.dot_dimension_numbers<[1], [0], [0], [1], [0, 0, 1, 1], [], []>} : vector<16x128xbf16>, vector<128x128xbf16>, vector<16x128xf32> -> vector<16x128xf32>
    %c0_15 = arith.constant 0 : index
    %c0_16 = arith.constant 0 : index
    %88 = vector.load %arg7[%c0_15, %c0_16] : memref<1x128xf32, #tpu.memory_space<vmem>>, vector<1x128xf32>
    %89 = vector.broadcast %88 : vector<1x128xf32> to vector<16x128xf32>
    %90 = arith.mulf %87, %89 : vector<16x128xf32>
    %c0_17 = arith.constant 0 : index
    %c0_18 = arith.constant 0 : index
    %91 = vector.load %arg8[%c0_17, %c0_18] : memref<1x128xf32, #tpu.memory_space<vmem>>, vector<1x128xf32>
    %92 = vector.broadcast %91 : vector<1x128xf32> to vector<16x128xf32>
    %93 = arith.addf %90, %92 : vector<16x128xf32>
    %cst_19 = arith.constant 0.000000e+00 : f32
    %94 = vector.broadcast %cst_19 : f32 to vector<16x128xf32>
    %95 = arith.maximumf %93, %94 : vector<16x128xf32>
    %96 = vector.shape_cast %95 : vector<16x128xf32> to vector<1x16x128xf32>
    %97 = arith.truncf %96 : vector<1x16x128xf32> to vector<1x16x128xbf16>
    %c0_20 = arith.constant 0 : index
    %c0_21 = arith.constant 0 : index
    %c0_22 = arith.constant 0 : index
    %98 = vector.load %arg9[%c0_20, %c0_21, %c0_22] : memref<1x16x128xbf16, #tpu.memory_space<vmem>>, vector<1x16x128xbf16>
    tpu.vector_store %arg9[%c0_20, %c0_21, %c0_22], %97 {strides = array<i32>} : memref<1x16x128xbf16, #tpu.memory_space<vmem>>, vector<1x16x128xbf16>,
    return
  }
  func.func @transform_0(%arg0: i32) -> (i32, i32, i32, i32) {
    %c0_i32 = arith.constant 0 : i32
    %c0_i32_0 = arith.constant 0 : i32
    %c0_i32_1 = arith.constant 0 : i32
    %c0_i32_2 = arith.constant 0 : i32
    return %arg0, %c0_i32, %c0_i32_0, %c0_i32_1 : i32, i32, i32, i32
  }
  func.func @transform_1(%arg0: i32) -> (i32, i32) {
    %c0_i32 = arith.constant 0 : i32
    %c0_i32_0 = arith.constant 0 : i32
    %c0_i32_1 = arith.constant 0 : i32
    return %c0_i32, %c0_i32_0 : i32, i32
  }
  func.func @transform_2(%arg0: i32) -> (i32, i32) {
    %c0_i32 = arith.constant 0 : i32
    %c0_i32_0 = arith.constant 0 : i32
    %c0_i32_1 = arith.constant 0 : i32
    return %c0_i32, %c0_i32_0 : i32, i32
  }
  func.func @transform_3(%arg0: i32) -> (i32, i32) {
    %c0_i32 = arith.constant 0 : i32
    %c0_i32_0 = arith.constant 0 : i32
    %c0_i32_1 = arith.constant 0 : i32
    return %c0_i32, %c0_i32_0 : i32, i32
  }
  func.func @transform_4(%arg0: i32) -> (i32, i32) {
    %c0_i32 = arith.constant 0 : i32
    %c0_i32_0 = arith.constant 0 : i32
    %c0_i32_1 = arith.constant 0 : i32
    return %c0_i32, %c0_i32_0 : i32, i32
  }
  func.func @transform_5(%arg0: i32) -> (i32, i32) {
    %c0_i32 = arith.constant 0 : i32
    %c0_i32_0 = arith.constant 0 : i32
    %c0_i32_1 = arith.constant 0 : i32
    return %c0_i32, %c0_i32_0 : i32, i32
  }
  func.func @transform_6(%arg0: i32) -> (i32, i32) {
    %c0_i32 = arith.constant 0 : i32
    %c0_i32_0 = arith.constant 0 : i32
    %c0_i32_1 = arith.constant 0 : i32
    return %c0_i32, %c0_i32_0 : i32, i32
  }
  func.func @transform_7(%arg0: i32) -> (i32, i32) {
    %c0_i32 = arith.constant 0 : i32
    %c0_i32_0 = arith.constant 0 : i32
    %c0_i32_1 = arith.constant 0 : i32
    return %c0_i32, %c0_i32_0 : i32, i32
  }
  func.func @transform_8(%arg0: i32) -> (i32, i32, i32) {
    %c0_i32 = arith.constant 0 : i32
    %c0_i32_0 = arith.constant 0 : i32
    %c0_i32_1 = arith.constant 0 : i32
    return %arg0, %c0_i32, %c0_i32_0 : i32, i32, i32
  }
}

module attributes {stable_mosaic.version = 11 : i64} {
  func.func @_pool_linear_kernel(%arg0: i32, %arg1: memref<2x4x128xbf16, #tpu.memory_space<vmem>>, %arg2: memref<128x128xbf16, #tpu.memory_space<vmem>>, %arg3: memref<1x128xf32, #tpu.memory_space<vmem>>, %arg4: memref<2x128xf32, #tpu.memory_space<vmem>>) attributes {dimension_semantics = [#tpu.dimension_semantics<arbitrary>], iteration_bounds = array<i64: 1>, scalar_prefetch = 0 : i64, scratch_operands = 0 : i64, tpu.core_type = #tpu.core_type<tc>, window_params = [{pipeline_mode = #tpu.pipeline_mode<synchronous>, transform_indices = @transform_0, window_bounds = array<i64: 2, 4, 128>}, {pipeline_mode = #tpu.pipeline_mode<synchronous>, transform_indices = @transform_1, window_bounds = array<i64: 128, 128>}, {pipeline_mode = #tpu.pipeline_mode<synchronous>, transform_indices = @transform_2, window_bounds = array<i64: 1, 128>}, {pipeline_mode = #tpu.pipeline_mode<synchronous>, transform_indices = @transform_3, window_bounds = array<i64: 2, 128>}]} {
    %c0 = arith.constant 0 : index
    %c0_0 = arith.constant 0 : index
    %c0_1 = arith.constant 0 : index
    %0 = vector.load %arg1[%c0, %c0_0, %c0_1] : memref<2x4x128xbf16, #tpu.memory_space<vmem>>, vector<2x4x128xbf16>
    %1 = arith.extf %0 : vector<2x4x128xbf16> to vector<2x4x128xf32>
    %cst = arith.constant dense<0.000000e+00> : vector<2x128xf32>
    %2 = vector.multi_reduction <add>, %1, %cst [1] : vector<2x4x128xf32> to vector<2x128xf32>
    %cst_2 = arith.constant 4.000000e+00 : f32
    %3 = vector.broadcast %cst_2 : f32 to vector<2x128xf32>
    %4 = arith.divf %2, %3 : vector<2x128xf32>
    %5 = arith.truncf %4 : vector<2x128xf32> to vector<2x128xbf16>
    %c0_3 = arith.constant 0 : index
    %c0_4 = arith.constant 0 : index
    %6 = vector.load %arg2[%c0_3, %c0_4] : memref<128x128xbf16, #tpu.memory_space<vmem>>, vector<128x128xbf16>
    %cst_5 = arith.constant dense<0.000000e+00> : vector<2x128xf32>
    %7 = tpu.matmul %5, %6, %cst_5 {dimension_numbers = #tpu.dot_dimension_numbers<[1], [0], [0], [1], [0, 0, 1, 1], [], []>} : vector<2x128xbf16>, vector<128x128xbf16>, vector<2x128xf32> -> vector<2x128xf32>
    %c0_6 = arith.constant 0 : index
    %c0_7 = arith.constant 0 : index
    %8 = vector.load %arg3[%c0_6, %c0_7] : memref<1x128xf32, #tpu.memory_space<vmem>>, vector<1x128xf32>
    %9 = vector.broadcast %8 : vector<1x128xf32> to vector<2x128xf32>
    %10 = arith.addf %7, %9 : vector<2x128xf32>
    %c0_8 = arith.constant 0 : index
    %c0_9 = arith.constant 0 : index
    %11 = vector.load %arg4[%c0_8, %c0_9] : memref<2x128xf32, #tpu.memory_space<vmem>>, vector<2x128xf32>
    tpu.vector_store %arg4[%c0_8, %c0_9], %10 {strides = array<i32>} : memref<2x128xf32, #tpu.memory_space<vmem>>, vector<2x128xf32>,
    return
  }
  func.func @transform_0(%arg0: i32) -> (i32, i32, i32) {
    %c0_i32 = arith.constant 0 : i32
    %c0_i32_0 = arith.constant 0 : i32
    %c0_i32_1 = arith.constant 0 : i32
    %c0_i32_2 = arith.constant 0 : i32
    return %c0_i32, %c0_i32_0, %c0_i32_1 : i32, i32, i32
  }
  func.func @transform_1(%arg0: i32) -> (i32, i32) {
    %c0_i32 = arith.constant 0 : i32
    %c0_i32_0 = arith.constant 0 : i32
    %c0_i32_1 = arith.constant 0 : i32
    return %c0_i32, %c0_i32_0 : i32, i32
  }
  func.func @transform_2(%arg0: i32) -> (i32, i32) {
    %c0_i32 = arith.constant 0 : i32
    %c0_i32_0 = arith.constant 0 : i32
    %c0_i32_1 = arith.constant 0 : i32
    return %c0_i32, %c0_i32_0 : i32, i32
  }
  func.func @transform_3(%arg0: i32) -> (i32, i32) {
    %c0_i32 = arith.constant 0 : i32
    %c0_i32_0 = arith.constant 0 : i32
    %c0_i32_1 = arith.constant 0 : i32
    return %c0_i32, %c0_i32_0 : i32, i32
  }
}

module attributes {stable_mosaic.version = 11 : i64} {
  func.func @_block_kernel(%arg0: i32, %arg1: memref<1x6x10x128xbf16, #tpu.memory_space<vmem>>, %arg2: memref<9x128xf32, #tpu.memory_space<vmem>>, %arg3: memref<1x128xf32, #tpu.memory_space<vmem>>, %arg4: memref<1x128xf32, #tpu.memory_space<vmem>>, %arg5: memref<4x32xf32, #tpu.memory_space<vmem>>, %arg6: memref<128x128xbf16, #tpu.memory_space<vmem>>, %arg7: memref<1x128xf32, #tpu.memory_space<vmem>>, %arg8: memref<1x128xf32, #tpu.memory_space<vmem>>, %arg9: memref<1x4x128xbf16, #tpu.memory_space<vmem>>) attributes {dimension_semantics = [#tpu.dimension_semantics<parallel>], iteration_bounds = array<i64: 2>, scalar_prefetch = 0 : i64, scratch_operands = 0 : i64, tpu.core_type = #tpu.core_type<tc>, window_params = [{transform_indices = @transform_0, window_bounds = array<i64: 1, 6, 10, 128>}, {pipeline_mode = #tpu.pipeline_mode<synchronous>, transform_indices = @transform_1, window_bounds = array<i64: 9, 128>}, {pipeline_mode = #tpu.pipeline_mode<synchronous>, transform_indices = @transform_2, window_bounds = array<i64: 1, 128>}, {pipeline_mode = #tpu.pipeline_mode<synchronous>, transform_indices = @transform_3, window_bounds = array<i64: 1, 128>}, {pipeline_mode = #tpu.pipeline_mode<synchronous>, transform_indices = @transform_4, window_bounds = array<i64: 4, 32>}, {pipeline_mode = #tpu.pipeline_mode<synchronous>, transform_indices = @transform_5, window_bounds = array<i64: 128, 128>}, {pipeline_mode = #tpu.pipeline_mode<synchronous>, transform_indices = @transform_6, window_bounds = array<i64: 1, 128>}, {pipeline_mode = #tpu.pipeline_mode<synchronous>, transform_indices = @transform_7, window_bounds = array<i64: 1, 128>}, {transform_indices = @transform_8, window_bounds = array<i64: 1, 4, 128>}]} {
    %c0 = arith.constant 0 : index
    %c0_0 = arith.constant 0 : index
    %c0_1 = arith.constant 0 : index
    %c0_2 = arith.constant 0 : index
    %0 = vector.load %arg1[%c0, %c0_0, %c0_1, %c0_2] : memref<1x6x10x128xbf16, #tpu.memory_space<vmem>>, vector<1x6x10x128xbf16>
    %1 = arith.extf %0 : vector<1x6x10x128xbf16> to vector<1x6x10x128xf32>
    %c0_3 = arith.constant 0 : index
    %c0_4 = arith.constant 0 : index
    %2 = vector.load %arg2[%c0_3, %c0_4] : memref<9x128xf32, #tpu.memory_space<vmem>>, vector<9x128xf32>
    %3 = vector.extract_strided_slice %1 {offsets = [0, 0, 0, 0], sizes = [1, 4, 8, 128], strides = [1, 1, 1, 1]} : vector<1x6x10x128xf32> to vector<1x4x8x128xf32>
    %4 = vector.shape_cast %3 : vector<1x4x8x128xf32> to vector<4x8x128xf32>
    %5 = vector.extract_strided_slice %2 {offsets = [0, 0], sizes = [1, 128], strides = [1, 1]} : vector<9x128xf32> to vector<1x128xf32>
    %6 = vector.shape_cast %5 : vector<1x128xf32> to vector<128xf32>
    %7 = vector.shape_cast %6 : vector<128xf32> to vector<1x1x128xf32>
    %8 = vector.broadcast %7 : vector<1x1x128xf32> to vector<4x8x128xf32>
    %9 = arith.mulf %4, %8 : vector<4x8x128xf32>
    %10 = vector.extract_strided_slice %1 {offsets = [0, 0, 1, 0], sizes = [1, 4, 8, 128], strides = [1, 1, 1, 1]} : vector<1x6x10x128xf32> to vector<1x4x8x128xf32>
    %11 = vector.shape_cast %10 : vector<1x4x8x128xf32> to vector<4x8x128xf32>
    %12 = vector.extract_strided_slice %2 {offsets = [1, 0], sizes = [1, 128], strides = [1, 1]} : vector<9x128xf32> to vector<1x128xf32>
    %13 = vector.shape_cast %12 : vector<1x128xf32> to vector<128xf32>
    %14 = vector.shape_cast %13 : vector<128xf32> to vector<1x1x128xf32>
    %15 = vector.broadcast %14 : vector<1x1x128xf32> to vector<4x8x128xf32>
    %16 = arith.mulf %11, %15 : vector<4x8x128xf32>
    %17 = arith.addf %9, %16 : vector<4x8x128xf32>
    %18 = vector.extract_strided_slice %1 {offsets = [0, 0, 2, 0], sizes = [1, 4, 8, 128], strides = [1, 1, 1, 1]} : vector<1x6x10x128xf32> to vector<1x4x8x128xf32>
    %19 = vector.shape_cast %18 : vector<1x4x8x128xf32> to vector<4x8x128xf32>
    %20 = vector.extract_strided_slice %2 {offsets = [2, 0], sizes = [1, 128], strides = [1, 1]} : vector<9x128xf32> to vector<1x128xf32>
    %21 = vector.shape_cast %20 : vector<1x128xf32> to vector<128xf32>
    %22 = vector.shape_cast %21 : vector<128xf32> to vector<1x1x128xf32>
    %23 = vector.broadcast %22 : vector<1x1x128xf32> to vector<4x8x128xf32>
    %24 = arith.mulf %19, %23 : vector<4x8x128xf32>
    %25 = arith.addf %17, %24 : vector<4x8x128xf32>
    %26 = vector.extract_strided_slice %1 {offsets = [0, 1, 0, 0], sizes = [1, 4, 8, 128], strides = [1, 1, 1, 1]} : vector<1x6x10x128xf32> to vector<1x4x8x128xf32>
    %27 = vector.shape_cast %26 : vector<1x4x8x128xf32> to vector<4x8x128xf32>
    %28 = vector.extract_strided_slice %2 {offsets = [3, 0], sizes = [1, 128], strides = [1, 1]} : vector<9x128xf32> to vector<1x128xf32>
    %29 = vector.shape_cast %28 : vector<1x128xf32> to vector<128xf32>
    %30 = vector.shape_cast %29 : vector<128xf32> to vector<1x1x128xf32>
    %31 = vector.broadcast %30 : vector<1x1x128xf32> to vector<4x8x128xf32>
    %32 = arith.mulf %27, %31 : vector<4x8x128xf32>
    %33 = arith.addf %25, %32 : vector<4x8x128xf32>
    %34 = vector.extract_strided_slice %1 {offsets = [0, 1, 1, 0], sizes = [1, 4, 8, 128], strides = [1, 1, 1, 1]} : vector<1x6x10x128xf32> to vector<1x4x8x128xf32>
    %35 = vector.shape_cast %34 : vector<1x4x8x128xf32> to vector<4x8x128xf32>
    %36 = vector.extract_strided_slice %2 {offsets = [4, 0], sizes = [1, 128], strides = [1, 1]} : vector<9x128xf32> to vector<1x128xf32>
    %37 = vector.shape_cast %36 : vector<1x128xf32> to vector<128xf32>
    %38 = vector.shape_cast %37 : vector<128xf32> to vector<1x1x128xf32>
    %39 = vector.broadcast %38 : vector<1x1x128xf32> to vector<4x8x128xf32>
    %40 = arith.mulf %35, %39 : vector<4x8x128xf32>
    %41 = arith.addf %33, %40 : vector<4x8x128xf32>
    %42 = vector.extract_strided_slice %1 {offsets = [0, 1, 2, 0], sizes = [1, 4, 8, 128], strides = [1, 1, 1, 1]} : vector<1x6x10x128xf32> to vector<1x4x8x128xf32>
    %43 = vector.shape_cast %42 : vector<1x4x8x128xf32> to vector<4x8x128xf32>
    %44 = vector.extract_strided_slice %2 {offsets = [5, 0], sizes = [1, 128], strides = [1, 1]} : vector<9x128xf32> to vector<1x128xf32>
    %45 = vector.shape_cast %44 : vector<1x128xf32> to vector<128xf32>
    %46 = vector.shape_cast %45 : vector<128xf32> to vector<1x1x128xf32>
    %47 = vector.broadcast %46 : vector<1x1x128xf32> to vector<4x8x128xf32>
    %48 = arith.mulf %43, %47 : vector<4x8x128xf32>
    %49 = arith.addf %41, %48 : vector<4x8x128xf32>
    %50 = vector.extract_strided_slice %1 {offsets = [0, 2, 0, 0], sizes = [1, 4, 8, 128], strides = [1, 1, 1, 1]} : vector<1x6x10x128xf32> to vector<1x4x8x128xf32>
    %51 = vector.shape_cast %50 : vector<1x4x8x128xf32> to vector<4x8x128xf32>
    %52 = vector.extract_strided_slice %2 {offsets = [6, 0], sizes = [1, 128], strides = [1, 1]} : vector<9x128xf32> to vector<1x128xf32>
    %53 = vector.shape_cast %52 : vector<1x128xf32> to vector<128xf32>
    %54 = vector.shape_cast %53 : vector<128xf32> to vector<1x1x128xf32>
    %55 = vector.broadcast %54 : vector<1x1x128xf32> to vector<4x8x128xf32>
    %56 = arith.mulf %51, %55 : vector<4x8x128xf32>
    %57 = arith.addf %49, %56 : vector<4x8x128xf32>
    %58 = vector.extract_strided_slice %1 {offsets = [0, 2, 1, 0], sizes = [1, 4, 8, 128], strides = [1, 1, 1, 1]} : vector<1x6x10x128xf32> to vector<1x4x8x128xf32>
    %59 = vector.shape_cast %58 : vector<1x4x8x128xf32> to vector<4x8x128xf32>
    %60 = vector.extract_strided_slice %2 {offsets = [7, 0], sizes = [1, 128], strides = [1, 1]} : vector<9x128xf32> to vector<1x128xf32>
    %61 = vector.shape_cast %60 : vector<1x128xf32> to vector<128xf32>
    %62 = vector.shape_cast %61 : vector<128xf32> to vector<1x1x128xf32>
    %63 = vector.broadcast %62 : vector<1x1x128xf32> to vector<4x8x128xf32>
    %64 = arith.mulf %59, %63 : vector<4x8x128xf32>
    %65 = arith.addf %57, %64 : vector<4x8x128xf32>
    %66 = vector.extract_strided_slice %1 {offsets = [0, 2, 2, 0], sizes = [1, 4, 8, 128], strides = [1, 1, 1, 1]} : vector<1x6x10x128xf32> to vector<1x4x8x128xf32>
    %67 = vector.shape_cast %66 : vector<1x4x8x128xf32> to vector<4x8x128xf32>
    %68 = vector.extract_strided_slice %2 {offsets = [8, 0], sizes = [1, 128], strides = [1, 1]} : vector<9x128xf32> to vector<1x128xf32>
    %69 = vector.shape_cast %68 : vector<1x128xf32> to vector<128xf32>
    %70 = vector.shape_cast %69 : vector<128xf32> to vector<1x1x128xf32>
    %71 = vector.broadcast %70 : vector<1x1x128xf32> to vector<4x8x128xf32>
    %72 = arith.mulf %67, %71 : vector<4x8x128xf32>
    %73 = arith.addf %65, %72 : vector<4x8x128xf32>
    %74 = vector.shape_cast %73 : vector<4x8x128xf32> to vector<32x128xf32>
    %c0_5 = arith.constant 0 : index
    %c0_6 = arith.constant 0 : index
    %75 = vector.load %arg5[%c0_5, %c0_6] : memref<4x32xf32, #tpu.memory_space<vmem>>, vector<4x32xf32>
    %cst = arith.constant dense<0.000000e+00> : vector<4x128xf32>
    %76 = tpu.matmul %75, %74, %cst {dimension_numbers = #tpu.dot_dimension_numbers<[1], [0], [0], [1], [0, 0, 1, 1], [], []>} : vector<4x32xf32>, vector<32x128xf32>, vector<4x128xf32> -> vector<4x128xf32>
    %c0_7 = arith.constant 0 : index
    %c0_8 = arith.constant 0 : index
    %77 = vector.load %arg3[%c0_7, %c0_8] : memref<1x128xf32, #tpu.memory_space<vmem>>, vector<1x128xf32>
    %78 = vector.broadcast %77 : vector<1x128xf32> to vector<4x128xf32>
    %79 = arith.mulf %76, %78 : vector<4x128xf32>
    %c0_9 = arith.constant 0 : index
    %c0_10 = arith.constant 0 : index
    %80 = vector.load %arg4[%c0_9, %c0_10] : memref<1x128xf32, #tpu.memory_space<vmem>>, vector<1x128xf32>
    %81 = vector.broadcast %80 : vector<1x128xf32> to vector<4x128xf32>
    %82 = arith.addf %79, %81 : vector<4x128xf32>
    %cst_11 = arith.constant 0.000000e+00 : f32
    %83 = vector.broadcast %cst_11 : f32 to vector<4x128xf32>
    %84 = arith.maximumf %82, %83 : vector<4x128xf32>
    %85 = arith.truncf %84 : vector<4x128xf32> to vector<4x128xbf16>
    %c0_12 = arith.constant 0 : index
    %c0_13 = arith.constant 0 : index
    %86 = vector.load %arg6[%c0_12, %c0_13] : memref<128x128xbf16, #tpu.memory_space<vmem>>, vector<128x128xbf16>
    %cst_14 = arith.constant dense<0.000000e+00> : vector<4x128xf32>
    %87 = tpu.matmul %85, %86, %cst_14 {dimension_numbers = #tpu.dot_dimension_numbers<[1], [0], [0], [1], [0, 0, 1, 1], [], []>} : vector<4x128xbf16>, vector<128x128xbf16>, vector<4x128xf32> -> vector<4x128xf32>
    %c0_15 = arith.constant 0 : index
    %c0_16 = arith.constant 0 : index
    %88 = vector.load %arg7[%c0_15, %c0_16] : memref<1x128xf32, #tpu.memory_space<vmem>>, vector<1x128xf32>
    %89 = vector.broadcast %88 : vector<1x128xf32> to vector<4x128xf32>
    %90 = arith.mulf %87, %89 : vector<4x128xf32>
    %c0_17 = arith.constant 0 : index
    %c0_18 = arith.constant 0 : index
    %91 = vector.load %arg8[%c0_17, %c0_18] : memref<1x128xf32, #tpu.memory_space<vmem>>, vector<1x128xf32>
    %92 = vector.broadcast %91 : vector<1x128xf32> to vector<4x128xf32>
    %93 = arith.addf %90, %92 : vector<4x128xf32>
    %cst_19 = arith.constant 0.000000e+00 : f32
    %94 = vector.broadcast %cst_19 : f32 to vector<4x128xf32>
    %95 = arith.maximumf %93, %94 : vector<4x128xf32>
    %96 = vector.shape_cast %95 : vector<4x128xf32> to vector<1x4x128xf32>
    %97 = arith.truncf %96 : vector<1x4x128xf32> to vector<1x4x128xbf16>
    %c0_20 = arith.constant 0 : index
    %c0_21 = arith.constant 0 : index
    %c0_22 = arith.constant 0 : index
    %98 = vector.load %arg9[%c0_20, %c0_21, %c0_22] : memref<1x4x128xbf16, #tpu.memory_space<vmem>>, vector<1x4x128xbf16>
    tpu.vector_store %arg9[%c0_20, %c0_21, %c0_22], %97 {strides = array<i32>} : memref<1x4x128xbf16, #tpu.memory_space<vmem>>, vector<1x4x128xbf16>,
    return
  }
  func.func @transform_0(%arg0: i32) -> (i32, i32, i32, i32) {
    %c0_i32 = arith.constant 0 : i32
    %c0_i32_0 = arith.constant 0 : i32
    %c0_i32_1 = arith.constant 0 : i32
    %c0_i32_2 = arith.constant 0 : i32
    return %arg0, %c0_i32, %c0_i32_0, %c0_i32_1 : i32, i32, i32, i32
  }
  func.func @transform_1(%arg0: i32) -> (i32, i32) {
    %c0_i32 = arith.constant 0 : i32
    %c0_i32_0 = arith.constant 0 : i32
    %c0_i32_1 = arith.constant 0 : i32
    return %c0_i32, %c0_i32_0 : i32, i32
  }
  func.func @transform_2(%arg0: i32) -> (i32, i32) {
    %c0_i32 = arith.constant 0 : i32
    %c0_i32_0 = arith.constant 0 : i32
    %c0_i32_1 = arith.constant 0 : i32
    return %c0_i32, %c0_i32_0 : i32, i32
  }
  func.func @transform_3(%arg0: i32) -> (i32, i32) {
    %c0_i32 = arith.constant 0 : i32
    %c0_i32_0 = arith.constant 0 : i32
    %c0_i32_1 = arith.constant 0 : i32
    return %c0_i32, %c0_i32_0 : i32, i32
  }
  func.func @transform_4(%arg0: i32) -> (i32, i32) {
    %c0_i32 = arith.constant 0 : i32
    %c0_i32_0 = arith.constant 0 : i32
    %c0_i32_1 = arith.constant 0 : i32
    return %c0_i32, %c0_i32_0 : i32, i32
  }
  func.func @transform_5(%arg0: i32) -> (i32, i32) {
    %c0_i32 = arith.constant 0 : i32
    %c0_i32_0 = arith.constant 0 : i32
    %c0_i32_1 = arith.constant 0 : i32
    return %c0_i32, %c0_i32_0 : i32, i32
  }
  func.func @transform_6(%arg0: i32) -> (i32, i32) {
    %c0_i32 = arith.constant 0 : i32
    %c0_i32_0 = arith.constant 0 : i32
    %c0_i32_1 = arith.constant 0 : i32
    return %c0_i32, %c0_i32_0 : i32, i32
  }
  func.func @transform_7(%arg0: i32) -> (i32, i32) {
    %c0_i32 = arith.constant 0 : i32
    %c0_i32_0 = arith.constant 0 : i32
    %c0_i32_1 = arith.constant 0 : i32
    return %c0_i32, %c0_i32_0 : i32, i32
  }
  func.func @transform_8(%arg0: i32) -> (i32, i32, i32) {
    %c0_i32 = arith.constant 0 : i32
    %c0_i32_0 = arith.constant 0 : i32
    %c0_i32_1 = arith.constant 0 : i32
    return %arg0, %c0_i32, %c0_i32_0 : i32, i32, i32
  }
}

</mosaic_0001>

<llo_original>
// kernel: _lambda_.9
$region0: #{_lambda_.9}
  #allocation0 [shape = 'u32[]', space=smem, size = 0x4, offset = 0x4, fixed_abs, tag = 'smem constant byte address 0x4 - core index']
  #allocation1 [shape = 'u32[144,128]{1,0:T(1,128)}', space=vmem, size = 0x12000, scoped, tag = 'internal scratch']
  %s0 = inlined_call_operand.vmem [shape: bf16[2,10,10,128], index: 0, kind: input, shape index: {}]
  %s1 = inlined_call_operand.vmem [shape: f32[9,128], index: 1, kind: input, shape index: {}]
  %s2 = inlined_call_operand.vmem [shape: f32[1,128], index: 2, kind: input, shape index: {}]
  %s3 = inlined_call_operand.vmem [shape: f32[1,128], index: 3, kind: input, shape index: {}, may-alias: {3,7}]
  %s4 = inlined_call_operand.vmem [shape: f32[16,64], index: 4, kind: input, shape index: {}]
  %s5 = inlined_call_operand.vmem [shape: bf16[128,128], index: 5, kind: input, shape index: {}]
  %s6 = inlined_call_operand.vmem [shape: f32[1,128], index: 6, kind: input, shape index: {}]
  %s7 = inlined_call_operand.vmem [shape: f32[1,128], index: 7, kind: input, shape index: {}, may-alias: {3,7}]
  %s8 = inlined_call_operand.vmem [shape: bf16[2,16,128], index: 8, kind: output, shape index: {}]
  %s9 = sld [smem:[#allocation0]]
  $region65: #{_lambda_.9} parent=0
    _
  %s11 = ssub.s32 1, %s9
  %s12 = scalar_select 0, %s11, %s9
  loop: start=0, step=1, limit=4
  $region2: #{_lambda_.9} parent=0 // loop_pre_header
    _
  $region3: #{_lambda_.9} parent=0 // loop_header
    %s14 = sphi 0, %s18
    %p15 = scmp.ge.s32.totalorder %s14, 4
    %s24 = sphi 0, %s26
    %s27 = sphi 0, %s24
    %s28 = sphi 0, %s27
    %s44 = sphi 0, %s28
    %s48 = sphi 0, %s48
    %s50 = sphi 0, %s48
    %s51 = sphi 0, %s50
    %s65 = sphi 0, %s51
    %s69 = sphi 0, %s69
    %s71 = sphi 0, %s69
    %s72 = sphi 0, %s71
    %s86 = sphi 0, %s72
    %s90 = sphi 0, %s90
    %s92 = sphi 0, %s90
    %s93 = sphi 0, %s92
    %s107 = sphi 0, %s93
    %s111 = sphi 0, %s111
    %s113 = sphi 0, %s111
    %s114 = sphi 0, %s113
    %s128 = sphi 0, %s114
    %s132 = sphi 0, %s132
    %s134 = sphi 0, %s132
    %s135 = sphi 0, %s134
    %s149 = sphi 0, %s135
    %s153 = sphi 0, %s153
    %s155 = sphi 0, %s153
    %s156 = sphi 0, %s155
    %s170 = sphi 0, %s156
    %s174 = sphi 0, %s174
    %s176 = sphi 0, %s174
    %s177 = sphi 0, %s176
    %s191 = sphi 0, %s177
    %s197 = sphi 0, %s199
    %s200 = sphi 0, %s197
    %s201 = sphi 0, %s200
    %s217 = sphi 0, %s201
  $region4: #{_lambda_.9} parent=0 // loop_header_branch
    %17 = sbr.rel (%p15) target = $region8
  $region5: #{_lambda_.9} parent=0 // loop_body
    %s19 = ssub.s32 %s14, 1
    %s20 = ssub.s32 %s14, 2
    %s21 = sadd.s32 %s14, 1
    %s22 = ssub.s32 %s14, %s21
    %p23 = scmp.eq.s32.totalorder %s22, 0
    %s25 = sadd.s32 %s24, 1
    %s26 = scalar_select %p23, %s24, %s25
    %p29 = pneg %p23
    %p30 = scmp.eq.s32.totalorder %s14, 1
    %p31 = por %p29, %p30
    %p32 = scmp.ne.s32.totalorder %s24, %s27
    %p33 = scmp.eq.s32.totalorder %s14, 0
    %p34 = por %p32, %p33
    %p35 = scmp.ne.s32.totalorder %s24, %s27
    %p36 = scmp.eq.s32.totalorder %s19, 1
    %p37 = por %p35, %p36
    %p38 = scmp.ne.s32.totalorder %s27, %s28
    %p39 = scmp.eq.s32.totalorder %s19, 0
    %p40 = por %p38, %p39
    %p41 = scmp.ne.s32.totalorder %s27, %s28
    %p42 = scmp.eq.s32.totalorder %s20, 1
    %p43 = por %p41, %p42
    %p45 = scmp.ne.s32.totalorder %s28, %s44
    %p46 = scmp.eq.s32.totalorder %s20, 0
    %p47 = por %p45, %p46
    %s49 = sadd.s32 %s48, 1
    %p52 = scmp.eq.s32.totalorder %s14, 1
    %p53 = scmp.ne.s32.totalorder %s48, %s50
    %p54 = scmp.eq.s32.totalorder %s14, 0
    %p55 = por %p53, %p54
    %p56 = scmp.ne.s32.totalorder %s48, %s50
    %p57 = scmp.eq.s32.totalorder %s19, 1
    %p58 = por %p56, %p57
    %p59 = scmp.ne.s32.totalorder %s50, %s51
    %p60 = scmp.eq.s32.totalorder %s19, 0
    %p61 = por %p59, %p60
    %p62 = scmp.ne.s32.totalorder %s50, %s51
    %p63 = scmp.eq.s32.totalorder %s20, 1
    %p64 = por %p62, %p63
    %p66 = scmp.ne.s32.totalorder %s51, %s65
    %p67 = scmp.eq.s32.totalorder %s20, 0
    %p68 = por %p66, %p67
    %s70 = sadd.s32 %s69, 1
    %p73 = scmp.eq.s32.totalorder %s14, 1
    %p74 = scmp.ne.s32.totalorder %s69, %s71
    %p75 = scmp.eq.s32.totalorder %s14, 0
    %p76 = por %p74, %p75
    %p77 = scmp.ne.s32.totalorder %s69, %s71
    %p78 = scmp.eq.s32.totalorder %s19, 1
    %p79 = por %p77, %p78
    %p80 = scmp.ne.s32.totalorder %s71, %s72
    %p81 = scmp.eq.s32.totalorder %s19, 0
    %p82 = por %p80, %p81
    %p83 = scmp.ne.s32.totalorder %s71, %s72
    %p84 = scmp.eq.s32.totalorder %s20, 1
    %p85 = por %p83, %p84
    %p87 = scmp.ne.s32.totalorder %s72, %s86
    %p88 = scmp.eq.s32.totalorder %s20, 0
    %p89 = por %p87, %p88
    %s91 = sadd.s32 %s90, 1
    %p94 = scmp.eq.s32.totalorder %s14, 1
    %p95 = scmp.ne.s32.totalorder %s90, %s92
    %p96 = scmp.eq.s32.totalorder %s14, 0
    %p97 = por %p95, %p96
    %p98 = scmp.ne.s32.totalorder %s90, %s92
    %p99 = scmp.eq.s32.totalorder %s19, 1
    %p100 = por %p98, %p99
    %p101 = scmp.ne.s32.totalorder %s92, %s93
    %p102 = scmp.eq.s32.totalorder %s19, 0
    %p103 = por %p101, %p102
    %p104 = scmp.ne.s32.totalorder %s92, %s93
    %p105 = scmp.eq.s32.totalorder %s20, 1
    %p106 = por %p104, %p105
    %p108 = scmp.ne.s32.totalorder %s93, %s107
    %p109 = scmp.eq.s32.totalorder %s20, 0
    %p110 = por %p108, %p109
    %s112 = sadd.s32 %s111, 1
    %p115 = scmp.eq.s32.totalorder %s14, 1
    %p116 = scmp.ne.s32.totalorder %s111, %s113
    %p117 = scmp.eq.s32.totalorder %s14, 0
    %p118 = por %p116, %p117
    %p119 = scmp.ne.s32.totalorder %s111, %s113
    %p120 = scmp.eq.s32.totalorder %s19, 1
    %p121 = por %p119, %p120
    %p122 = scmp.ne.s32.totalorder %s113, %s114
    %p123 = scmp.eq.s32.totalorder %s19, 0
    %p124 = por %p122, %p123
    %p125 = scmp.ne.s32.totalorder %s113, %s114
    %p126 = scmp.eq.s32.totalorder %s20, 1
    %p127 = por %p125, %p126
    %p129 = scmp.ne.s32.totalorder %s114, %s128
    %p130 = scmp.eq.s32.totalorder %s20, 0
    %p131 = por %p129, %p130
    %s133 = sadd.s32 %s132, 1
    %p136 = scmp.eq.s32.totalorder %s14, 1
    %p137 = scmp.ne.s32.totalorder %s132, %s134
    %p138 = scmp.eq.s32.totalorder %s14, 0
    %p139 = por %p137, %p138
    %p140 = scmp.ne.s32.totalorder %s132, %s134
    %p141 = scmp.eq.s32.totalorder %s19, 1
    %p142 = por %p140, %p141
    %p143 = scmp.ne.s32.totalorder %s134, %s135
    %p144 = scmp.eq.s32.totalorder %s19, 0
    %p145 = por %p143, %p144
    %p146 = scmp.ne.s32.totalorder %s134, %s135
    %p147 = scmp.eq.s32.totalorder %s20, 1
    %p148 = por %p146, %p147
    %p150 = scmp.ne.s32.totalorder %s135, %s149
    %p151 = scmp.eq.s32.totalorder %s20, 0
    %p152 = por %p150, %p151
    %s154 = sadd.s32 %s153, 1
    %p157 = scmp.eq.s32.totalorder %s14, 1
    %p158 = scmp.ne.s32.totalorder %s153, %s155
    %p159 = scmp.eq.s32.totalorder %s14, 0
    %p160 = por %p158, %p159
    %p161 = scmp.ne.s32.totalorder %s153, %s155
    %p162 = scmp.eq.s32.totalorder %s19, 1
    %p163 = por %p161, %p162
    %p164 = scmp.ne.s32.totalorder %s155, %s156
    %p165 = scmp.eq.s32.totalorder %s19, 0
    %p166 = por %p164, %p165
    %p167 = scmp.ne.s32.totalorder %s155, %s156
    %p168 = scmp.eq.s32.totalorder %s20, 1
    %p169 = por %p167, %p168
    %p171 = scmp.ne.s32.totalorder %s156, %s170
    %p172 = scmp.eq.s32.totalorder %s20, 0
    %p173 = por %p171, %p172
    %s175 = sadd.s32 %s174, 1
    %p178 = scmp.eq.s32.totalorder %s14, 1
    %p179 = scmp.ne.s32.totalorder %s174, %s176
    %p180 = scmp.eq.s32.totalorder %s14, 0
    %p181 = por %p179, %p180
    %p182 = scmp.ne.s32.totalorder %s174, %s176
    %p183 = scmp.eq.s32.totalorder %s19, 1
    %p184 = por %p182, %p183
    %p185 = scmp.ne.s32.totalorder %s176, %s177
    %p186 = scmp.eq.s32.totalorder %s19, 0
    %p187 = por %p185, %p186
    %p188 = scmp.ne.s32.totalorder %s176, %s177
    %p189 = scmp.eq.s32.totalorder %s20, 1
    %p190 = por %p188, %p189
    %p192 = scmp.ne.s32.totalorder %s177, %s191
    %p193 = scmp.eq.s32.totalorder %s20, 0
    %p194 = por %p192, %p193
    %s195 = ssub.s32 %s14, %s21
    %p196 = scmp.eq.s32.totalorder %s195, 0
    %s198 = sadd.s32 %s197, 1
    %s199 = scalar_select %p196, %s197, %s198
    %p202 = pneg %p196
    %p203 = scmp.eq.s32.totalorder %s14, 1
    %p204 = por %p202, %p203
    %p205 = scmp.ne.s32.totalorder %s197, %s200
    %p206 = scmp.eq.s32.totalorder %s14, 0
    %p207 = por %p205, %p206
    %p208 = scmp.ne.s32.totalorder %s197, %s200
    %p209 = scmp.eq.s32.totalorder %s19, 1
    %p210 = por %p208, %p209
    %p211 = scmp.ne.s32.totalorder %s200, %s201
    %p212 = scmp.eq.s32.totalorder %s19, 0
    %p213 = por %p211, %p212
    %p214 = scmp.ne.s32.totalorder %s200, %s201
    %p215 = scmp.eq.s32.totalorder %s20, 1
    %p216 = por %p214, %p215
    %p218 = scmp.ne.s32.totalorder %s201, %s217
    %p219 = scmp.eq.s32.totalorder %s20, 0
    %p220 = por %p218, %p219
    %p221 = scmp.le.s32.totalorder 1, %s14
    %p222 = scmp.lt.s32.totalorder %s14, 3
    %p223 = pnand %p221, %p222
    %p224 = pneg %p223
    // Predicated region
    $region9: #{_lambda_.9} parent=5 // pred_check
      _
    $region10: #{_lambda_.9} parent=5 // pred_check_branch
      %226 = sbr.rel (%p223) target = $region12
    $region11: #{_lambda_.9} parent=5 // pred_region
      %s227 = ssub.s32 %s14, 1
      // Predicated region
      $region13: #{_lambda_.9} parent=11 // pred_check
        %p228 = pneg %p61
      $region14: #{_lambda_.9} parent=11 // pred_check_branch
        %230 = sbr.rel (%p228) target = $region16
      $region15: #{_lambda_.9} parent=11 // pred_region
        _
      $region16: #{_lambda_.9} parent=11 // pred_fallthru
        _
      // Predicated region
      $region17: #{_lambda_.9} parent=11 // pred_check
        %p231 = pneg %p82
      $region18: #{_lambda_.9} parent=11 // pred_check_branch
        %233 = sbr.rel (%p231) target = $region20
      $region19: #{_lambda_.9} parent=11 // pred_region
        _
      $region20: #{_lambda_.9} parent=11 // pred_fallthru
        _
      // Predicated region
      $region21: #{_lambda_.9} parent=11 // pred_check
        %p234 = pneg %p103
      $region22: #{_lambda_.9} parent=11 // pred_check_branch
        %236 = sbr.rel (%p234) target = $region24
      $region23: #{_lambda_.9} parent=11 // pred_region
        _
      $region24: #{_lambda_.9} parent=11 // pred_fallthru
        _
      // Predicated region
      $region25: #{_lambda_.9} parent=11 // pred_check
        %p237 = pneg %p124
      $region26: #{_lambda_.9} parent=11 // pred_check_branch
        %239 = sbr.rel (%p237) target = $region28
      $region27: #{_lambda_.9} parent=11 // pred_region
        _
      $region28: #{_lambda_.9} parent=11 // pred_fallthru
        _
      // Predicated region
      $region29: #{_lambda_.9} parent=11 // pred_check
        %p240 = pneg %p145
      $region30: #{_lambda_.9} parent=11 // pred_check_branch
        %242 = sbr.rel (%p240) target = $region32
      $region31: #{_lambda_.9} parent=11 // pred_region
        _
      $region32: #{_lambda_.9} parent=11 // pred_fallthru
        _
      // Predicated region
      $region33: #{_lambda_.9} parent=11 // pred_check
        %p243 = pneg %p166
      $region34: #{_lambda_.9} parent=11 // pred_check_branch
        %245 = sbr.rel (%p243) target = $region36
      $region35: #{_lambda_.9} parent=11 // pred_region
        _
      $region36: #{_lambda_.9} parent=11 // pred_fallthru
        _
      // Predicated region
      $region37: #{_lambda_.9} parent=11 // pred_check
        %p246 = pneg %p187
      $region38: #{_lambda_.9} parent=11 // pred_check_branch
        %248 = sbr.rel (%p246) target = $region40
      $region39: #{_lambda_.9} parent=11 // pred_region
        _
      $region40: #{_lambda_.9} parent=11 // pred_fallthru
        _
    $region12: #{_lambda_.9} parent=5 // pred_fallthru
      _
    %p249 = scmp.lt.s32.totalorder %s14, 2
    // Predicated region
    $region41: #{_lambda_.9} parent=5 // pred_check
      %p250 = pneg %p249
    $region42: #{_lambda_.9} parent=5 // pred_check_branch
      %252 = sbr.rel (%p250) target = $region44
    $region43: #{_lambda_.9} parent=5 // pred_region
      // Predicated region
      $region45: #{_lambda_.9} parent=43 // pred_check
        %p253 = pneg %p34
      $region46: #{_lambda_.9} parent=43 // pred_check_branch
        %255 = sbr.rel (%p253) target = $region48
      $region47: #{_lambda_.9} parent=43 // pred_region
        %p256 = scmp.lt.s32.totalorder %s14, 1
        %s257 = scalar_select %p256, %s14, 1
        %s258 = smul.addr %s257, 20
        %s259 = smul.addr %s258, 4
        %s260 = scalar_lea.vmem %s0, %s259
      $region48: #{_lambda_.9} parent=43 // pred_fallthru
        _
    $region44: #{_lambda_.9} parent=5 // pred_fallthru
      _
    %p261 = scmp.le.s32.totalorder 1, %s14
    %p262 = scmp.lt.s32.totalorder %s14, 3
    %p263 = pnand %p261, %p262
    %p264 = pneg %p263
    // Predicated region
    $region49: #{_lambda_.9} parent=5 // pred_check
      _
    $region50: #{_lambda_.9} parent=5 // pred_check_branch
      %266 = sbr.rel (%p263) target = $region52
    $region51: #{_lambda_.9} parent=5 // pred_region
      %s267 = ssub.s32 %s14, 1
      %p268 = scmp.lt.s32.totalorder %s19, 1
      %s269 = scalar_select %p268, %s19, 1
      %s270 = smul.addr %s269, 20
      %s271 = smul.addr %s270, 4
      %s272 = scalar_lea.vmem %s0, %s271
      %p273 = pneg %p40
      %p274 = pneg %p37
      %p275 = pneg %p61
      %p276 = pneg %p58
      %p277 = pneg %p82
      %p278 = pneg %p79
      %p279 = pneg %p103
      %p280 = pneg %p100
      %p281 = pneg %p124
      %p282 = pneg %p121
      %p283 = pneg %p145
      %p284 = pneg %p142
      %p285 = pneg %p166
      %p286 = pneg %p163
      %p287 = pneg %p187
      %p288 = pneg %p184
      %p289 = pneg %p213
      %p290 = pneg %p210
      %p291 = scmp.lt.s32.totalorder %s19, 1
      %s292 = scalar_select %p291, %s19, 1
      %s293 = smul.addr %s292, 2
      %s294 = smul.addr %s293, 4
      %s295 = scalar_lea.vmem %s8, %s294
      %p296 = scmp.lt.s32.totalorder %s19, 1
      %s297 = scalar_select %p296, %s19, 1
      %s298 = smul.addr %s297, 20
      %s299 = smul.addr %s298, 4
      %s300 = scalar_lea.vmem %s0, %s299
      %p301 = scmp.lt.s32.totalorder %s19, 1
      %s302 = scalar_select %p301, %s19, 1
      %s303 = smul.addr %s302, 2
      %s304 = smul.addr %s303, 4
      %s305 = scalar_lea.vmem %s8, %s304
      %v307 = vld [vmem:[%s300] sm:$0xf]
      %v308 = vld [vmem:[%s300 + $0x4] sm:$0x1]
      %v309 = vld [vmem:[%s300 + $0x8] sm:$0xf]
      %v310 = vld [vmem:[%s300 + $0xc] sm:$0x1]
      %v311 = vld [vmem:[%s300 + $0x10] sm:$0xf]
      %v312 = vld [vmem:[%s300 + $0x14] sm:$0x1]
      %v313 = vld [vmem:[%s300 + $0x18] sm:$0xf]
      %v314 = vld [vmem:[%s300 + $0x1c] sm:$0x1]
      %v315 = vld [vmem:[%s300 + $0x20] sm:$0xf]
      %v316 = vld [vmem:[%s300 + $0x24] sm:$0x1]
      %v317 = vld [vmem:[%s300 + $0x28] sm:$0xf]
      %v318 = vld [vmem:[%s300 + $0x2c] sm:$0x1]
      %v319 = vld [vmem:[%s300 + $0x30] sm:$0xf]
      %v320 = vld [vmem:[%s300 + $0x34] sm:$0x1]
      %v321 = vld [vmem:[%s300 + $0x38] sm:$0xf]
      %v322 = vld [vmem:[%s300 + $0x3c] sm:$0x1]
      %v323 = vld [vmem:[%s300 + $0x40] sm:$0xf]
      %v324 = vld [vmem:[%s300 + $0x44] sm:$0x1]
      %v325 = vld [vmem:[%s300 + $0x48] sm:$0xf]
      %v326 = vld [vmem:[%s300 + $0x4c] sm:$0x1]
      %v327 = vunpack.c.l.bf16 %v307
      %v328 = vunpack.c.l.bf16 %v308
      %v329 = vunpack.c.l.bf16 %v309
      %v330 = vunpack.c.l.bf16 %v310
      %v331 = vunpack.c.l.bf16 %v311
      %v332 = vunpack.c.l.bf16 %v312
      %v333 = vunpack.c.l.bf16 %v313
      %v334 = vunpack.c.l.bf16 %v314
      %v335 = vunpack.c.l.bf16 %v315
      %v336 = vunpack.c.l.bf16 %v316
      %v337 = vunpack.c.l.bf16 %v317
      %v338 = vunpack.c.l.bf16 %v318
      %v339 = vunpack.c.l.bf16 %v319
      %v340 = vunpack.c.l.bf16 %v320
      %v341 = vunpack.c.l.bf16 %v321
      %v342 = vunpack.c.l.bf16 %v322
      %v343 = vunpack.c.l.bf16 %v323
      %v344 = vunpack.c.l.bf16 %v324
      %v345 = vunpack.c.l.bf16 %v325
      %v346 = vunpack.c.l.bf16 %v326
      %v347 = vld [vmem:[%s1] sm:$0xff]
      %v348 = vld [vmem:[%s1 + $0x8] sm:$0x1]
      %v349 = vlaneseq
      %v350 = vshrl.u32 %v349, 7
      %v351 = vsub.s32 0, %v350
      %v352 = vrot.slane %v347, %v351
      %v353 = vmul.f32 %v327, %v352
      %v354 = vmul.f32 %v329, %v352
      %v355 = vmul.f32 %v331, %v352
      %v356 = vmul.f32 %v333, %v352
      %v357 = vmul.f32 %v335, %v352
      %v358 = vmul.f32 %v337, %v352
      %v359 = vmul.f32 %v339, %v352
      %v360 = vmul.f32 %v341, %v352
      %v361 = vlaneseq
      %v362 = vshrl.u32 %v361, 7
      %v363 = vsub.s32 1, %v362
      %v364 = vrot.slane %v347, %v363
      %v365 = vmul.f32 %v327, %v364
      %v366 = vmul.f32 %v328, %v364
      %v367 = vmul.f32 %v329, %v364
      %v368 = vmul.f32 %v330, %v364
      %v369 = vmul.f32 %v331, %v364
      %v370 = vmul.f32 %v332, %v364
      %v371 = vmul.f32 %v333, %v364
      %v372 = vmul.f32 %v334, %v364
      %v373 = vmul.f32 %v335, %v364
      %v374 = vmul.f32 %v336, %v364
      %v375 = vmul.f32 %v337, %v364
      %v376 = vmul.f32 %v338, %v364
      %v377 = vmul.f32 %v339, %v364
      %v378 = vmul.f32 %v340, %v364
      %v379 = vmul.f32 %v341, %v364
      %v380 = vmul.f32 %v342, %v364
      %vm397 = vcmask 1046528
      %v398 = vrot.slane %v365, 1
      %v399 = vrot.slane %v366, 1
      %v400 = vsel %vm397, %v398, %v399
      %v401 = vrot.slane %v367, 1
      %v402 = vrot.slane %v368, 1
      %v403 = vsel %vm397, %v401, %v402
      %v404 = vrot.slane %v369, 1
      %v405 = vrot.slane %v370, 1
      %v406 = vsel %vm397, %v404, %v405
      %v407 = vrot.slane %v371, 1
      %v408 = vrot.slane %v372, 1
      %v409 = vsel %vm397, %v407, %v408
      %v410 = vrot.slane %v373, 1
      %v411 = vrot.slane %v374, 1
      %v412 = vsel %vm397, %v410, %v411
      %v413 = vrot.slane %v375, 1
      %v414 = vrot.slane %v376, 1
      %v415 = vsel %vm397, %v413, %v414
      %v416 = vrot.slane %v377, 1
      %v417 = vrot.slane %v378, 1
      %v418 = vsel %vm397, %v416, %v417
      %v419 = vrot.slane %v379, 1
      %v420 = vrot.slane %v380, 1
      %v421 = vsel %vm397, %v419, %v420
      %v430 = vadd.f32 %v353, %v400
      %v431 = vadd.f32 %v354, %v403
      %v432 = vadd.f32 %v355, %v406
      %v433 = vadd.f32 %v356, %v409
      %v434 = vadd.f32 %v357, %v412
      %v435 = vadd.f32 %v358, %v415
      %v436 = vadd.f32 %v359, %v418
      %v437 = vadd.f32 %v360, %v421
      %v438 = vlaneseq
      %v439 = vshrl.u32 %v438, 7
      %v440 = vsub.s32 2, %v439
      %v441 = vrot.slane %v347, %v440
      %v442 = vmul.f32 %v327, %v441
      %v443 = vmul.f32 %v328, %v441
      %v444 = vmul.f32 %v329, %v441
      %v445 = vmul.f32 %v330, %v441
      %v446 = vmul.f32 %v331, %v441
      %v447 = vmul.f32 %v332, %v441
      %v448 = vmul.f32 %v333, %v441
      %v449 = vmul.f32 %v334, %v441
      %v450 = vmul.f32 %v335, %v441
      %v451 = vmul.f32 %v336, %v441
      %v452 = vmul.f32 %v337, %v441
      %v453 = vmul.f32 %v338, %v441
      %v454 = vmul.f32 %v339, %v441
      %v455 = vmul.f32 %v340, %v441
      %v456 = vmul.f32 %v341, %v441
      %v457 = vmul.f32 %v342, %v441
      %vm474 = vcmask 1045504
      %v475 = vrot.slane %v442, 2
      %v476 = vrot.slane %v443, 2
      %v477 = vsel %vm474, %v475, %v476
      %v478 = vrot.slane %v444, 2
      %v479 = vrot.slane %v445, 2
      %v480 = vsel %vm474, %v478, %v479
      %v481 = vrot.slane %v446, 2
      %v482 = vrot.slane %v447, 2
      %v483 = vsel %vm474, %v481, %v482
      %v484 = vrot.slane %v448, 2
      %v485 = vrot.slane %v449, 2
      %v486 = vsel %vm474, %v484, %v485
      %v487 = vrot.slane %v450, 2
      %v488 = vrot.slane %v451, 2
      %v489 = vsel %vm474, %v487, %v488
      %v490 = vrot.slane %v452, 2
      %v491 = vrot.slane %v453, 2
      %v492 = vsel %vm474, %v490, %v491
      %v493 = vrot.slane %v454, 2
      %v494 = vrot.slane %v455, 2
      %v495 = vsel %vm474, %v493, %v494
      %v496 = vrot.slane %v456, 2
      %v497 = vrot.slane %v457, 2
      %v498 = vsel %vm474, %v496, %v497
      %v507 = vadd.f32 %v430, %v477
      %v508 = vadd.f32 %v431, %v480
      %v509 = vadd.f32 %v432, %v483
      %v510 = vadd.f32 %v433, %v486
      %v511 = vadd.f32 %v434, %v489
      %v512 = vadd.f32 %v435, %v492
      %v513 = vadd.f32 %v436, %v495
      %v514 = vadd.f32 %v437, %v498
      %v515 = vlaneseq
      %v516 = vshrl.u32 %v515, 7
      %v517 = vsub.s32 3, %v516
      %v518 = vrot.slane %v347, %v517
      %v519 = vmul.f32 %v329, %v518
      %v520 = vmul.f32 %v331, %v518
      %v521 = vmul.f32 %v333, %v518
      %v522 = vmul.f32 %v335, %v518
      %v523 = vmul.f32 %v337, %v518
      %v524 = vmul.f32 %v339, %v518
      %v525 = vmul.f32 %v341, %v518
      %v526 = vmul.f32 %v343, %v518
      %v527 = vadd.f32 %v507, %v519
      %v528 = vadd.f32 %v508, %v520
      %v529 = vadd.f32 %v509, %v521
      %v530 = vadd.f32 %v510, %v522
      %v531 = vadd.f32 %v511, %v523
      %v532 = vadd.f32 %v512, %v524
      %v533 = vadd.f32 %v513, %v525
      %v534 = vadd.f32 %v514, %v526
      %v535 = vlaneseq
      %v536 = vshrl.u32 %v535, 7
      %v537 = vsub.s32 4, %v536
      %v538 = vrot.slane %v347, %v537
      %v539 = vmul.f32 %v329, %v538
      %v540 = vmul.f32 %v330, %v538
      %v541 = vmul.f32 %v331, %v538
      %v542 = vmul.f32 %v332, %v538
      %v543 = vmul.f32 %v333, %v538
      %v544 = vmul.f32 %v334, %v538
      %v545 = vmul.f32 %v335, %v538
      %v546 = vmul.f32 %v336, %v538
      %v547 = vmul.f32 %v337, %v538
      %v548 = vmul.f32 %v338, %v538
      %v549 = vmul.f32 %v339, %v538
      %v550 = vmul.f32 %v340, %v538
      %v551 = vmul.f32 %v341, %v538
      %v552 = vmul.f32 %v342, %v538
      %v553 = vmul.f32 %v343, %v538
      %v554 = vmul.f32 %v344, %v538
      %v571 = vrot.slane %v539, 1
      %v572 = vrot.slane %v540, 1
      %v573 = vsel %vm397, %v571, %v572
      %v574 = vrot.slane %v541, 1
      %v575 = vrot.slane %v542, 1
      %v576 = vsel %vm397, %v574, %v575
      %v577 = vrot.slane %v543, 1
      %v578 = vrot.slane %v544, 1
      %v579 = vsel %vm397, %v577, %v578
      %v580 = vrot.slane %v545, 1
      %v581 = vrot.slane %v546, 1
      %v582 = vsel %vm397, %v580, %v581
      %v583 = vrot.slane %v547, 1
      %v584 = vrot.slane %v548, 1
      %v585 = vsel %vm397, %v583, %v584
      %v586 = vrot.slane %v549, 1
      %v587 = vrot.slane %v550, 1
      %v588 = vsel %vm397, %v586, %v587
      %v589 = vrot.slane %v551, 1
      %v590 = vrot.slane %v552, 1
      %v591 = vsel %vm397, %v589, %v590
      %v592 = vrot.slane %v553, 1
      %v593 = vrot.slane %v554, 1
      %v594 = vsel %vm397, %v592, %v593
      %v603 = vadd.f32 %v527, %v573
      %v604 = vadd.f32 %v528, %v576
      %v605 = vadd.f32 %v529, %v579
      %v606 = vadd.f32 %v530, %v582
      %v607 = vadd.f32 %v531, %v585
      %v608 = vadd.f32 %v532, %v588
      %v609 = vadd.f32 %v533, %v591
      %v610 = vadd.f32 %v534, %v594
      %v611 = vlaneseq
      %v612 = vshrl.u32 %v611, 7
      %v613 = vsub.s32 5, %v612
      %v614 = vrot.slane %v347, %v613
      %v615 = vmul.f32 %v329, %v614
      %v616 = vmul.f32 %v330, %v614
      %v617 = vmul.f32 %v331, %v614
      %v618 = vmul.f32 %v332, %v614
      %v619 = vmul.f32 %v333, %v614
      %v620 = vmul.f32 %v334, %v614
      %v621 = vmul.f32 %v335, %v614
      %v622 = vmul.f32 %v336, %v614
      %v623 = vmul.f32 %v337, %v614
      %v624 = vmul.f32 %v338, %v614
      %v625 = vmul.f32 %v339, %v614
      %v626 = vmul.f32 %v340, %v614
      %v627 = vmul.f32 %v341, %v614
      %v628 = vmul.f32 %v342, %v614
      %v629 = vmul.f32 %v343, %v614
      %v630 = vmul.f32 %v344, %v614
      %v647 = vrot.slane %v615, 2
      %v648 = vrot.slane %v616, 2
      %v649 = vsel %vm474, %v647, %v648
      %v650 = vrot.slane %v617, 2
      %v651 = vrot.slane %v618, 2
      %v652 = vsel %vm474, %v650, %v651
      %v653 = vrot.slane %v619, 2
      %v654 = vrot.slane %v620, 2
      %v655 = vsel %vm474, %v653, %v654
      %v656 = vrot.slane %v621, 2
      %v657 = vrot.slane %v622, 2
      %v658 = vsel %vm474, %v656, %v657
      %v659 = vrot.slane %v623, 2
      %v660 = vrot.slane %v624, 2
      %v661 = vsel %vm474, %v659, %v660
      %v662 = vrot.slane %v625, 2
      %v663 = vrot.slane %v626, 2
      %v664 = vsel %vm474, %v662, %v663
      %v665 = vrot.slane %v627, 2
      %v666 = vrot.slane %v628, 2
      %v667 = vsel %vm474, %v665, %v666
      %v668 = vrot.slane %v629, 2
      %v669 = vrot.slane %v630, 2
      %v670 = vsel %vm474, %v668, %v669
      %v679 = vadd.f32 %v603, %v649
      %v680 = vadd.f32 %v604, %v652
      %v681 = vadd.f32 %v605, %v655
      %v682 = vadd.f32 %v606, %v658
      %v683 = vadd.f32 %v607, %v661
      %v684 = vadd.f32 %v608, %v664
      %v685 = vadd.f32 %v609, %v667
      %v686 = vadd.f32 %v610, %v670
      %v687 = vlaneseq
      %v688 = vshrl.u32 %v687, 7
      %v689 = vsub.s32 6, %v688
      %v690 = vrot.slane %v347, %v689
      %v691 = vmul.f32 %v331, %v690
      %v692 = vmul.f32 %v333, %v690
      %v693 = vmul.f32 %v335, %v690
      %v694 = vmul.f32 %v337, %v690
      %v695 = vmul.f32 %v339, %v690
      %v696 = vmul.f32 %v341, %v690
      %v697 = vmul.f32 %v343, %v690
      %v698 = vmul.f32 %v345, %v690
      %v699 = vadd.f32 %v679, %v691
      %v700 = vadd.f32 %v680, %v692
      %v701 = vadd.f32 %v681, %v693
      %v702 = vadd.f32 %v682, %v694
      %v703 = vadd.f32 %v683, %v695
      %v704 = vadd.f32 %v684, %v696
      %v705 = vadd.f32 %v685, %v697
      %v706 = vadd.f32 %v686, %v698
      %v707 = vlaneseq
      %v708 = vshrl.u32 %v707, 7
      %v709 = vsub.s32 7, %v708
      %v710 = vrot.slane %v347, %v709
      %v711 = vmul.f32 %v331, %v710
      %v712 = vmul.f32 %v332, %v710
      %v713 = vmul.f32 %v333, %v710
      %v714 = vmul.f32 %v334, %v710
      %v715 = vmul.f32 %v335, %v710
      %v716 = vmul.f32 %v336, %v710
      %v717 = vmul.f32 %v337, %v710
      %v718 = vmul.f32 %v338, %v710
      %v719 = vmul.f32 %v339, %v710
      %v720 = vmul.f32 %v340, %v710
      %v721 = vmul.f32 %v341, %v710
      %v722 = vmul.f32 %v342, %v710
      %v723 = vmul.f32 %v343, %v710
      %v724 = vmul.f32 %v344, %v710
      %v725 = vmul.f32 %v345, %v710
      %v726 = vmul.f32 %v346, %v710
      %v743 = vrot.slane %v711, 1
      %v744 = vrot.slane %v712, 1
      %v745 = vsel %vm397, %v743, %v744
      %v746 = vrot.slane %v713, 1
      %v747 = vrot.slane %v714, 1
      %v748 = vsel %vm397, %v746, %v747
      %v749 = vrot.slane %v715, 1
      %v750 = vrot.slane %v716, 1
      %v751 = vsel %vm397, %v749, %v750
      %v752 = vrot.slane %v717, 1
      %v753 = vrot.slane %v718, 1
      %v754 = vsel %vm397, %v752, %v753
      %v755 = vrot.slane %v719, 1
      %v756 = vrot.slane %v720, 1
      %v757 = vsel %vm397, %v755, %v756
      %v758 = vrot.slane %v721, 1
      %v759 = vrot.slane %v722, 1
      %v760 = vsel %vm397, %v758, %v759
      %v761 = vrot.slane %v723, 1
      %v762 = vrot.slane %v724, 1
      %v763 = vsel %vm397, %v761, %v762
      %v764 = vrot.slane %v725, 1
      %v765 = vrot.slane %v726, 1
      %v766 = vsel %vm397, %v764, %v765
      %v775 = vadd.f32 %v699, %v745
      %v776 = vadd.f32 %v700, %v748
      %v777 = vadd.f32 %v701, %v751
      %v778 = vadd.f32 %v702, %v754
      %v779 = vadd.f32 %v703, %v757
      %v780 = vadd.f32 %v704, %v760
      %v781 = vadd.f32 %v705, %v763
      %v782 = vadd.f32 %v706, %v766
      %v783 = vlaneseq
      %v784 = vshrl.u32 %v783, 7
      %v785 = vsub.s32 0, %v784
      %v786 = vrot.slane %v348, %v785
      %v787 = vmul.f32 %v331, %v786
      %v788 = vmul.f32 %v332, %v786
      %v789 = vmul.f32 %v333, %v786
      %v790 = vmul.f32 %v334, %v786
      %v791 = vmul.f32 %v335, %v786
      %v792 = vmul.f32 %v336, %v786
      %v793 = vmul.f32 %v337, %v786
      %v794 = vmul.f32 %v338, %v786
      %v795 = vmul.f32 %v339, %v786
      %v796 = vmul.f32 %v340, %v786
      %v797 = vmul.f32 %v341, %v786
      %v798 = vmul.f32 %v342, %v786
      %v799 = vmul.f32 %v343, %v786
      %v800 = vmul.f32 %v344, %v786
      %v801 = vmul.f32 %v345, %v786
      %v802 = vmul.f32 %v346, %v786
      %v819 = vrot.slane %v787, 2
      %v820 = vrot.slane %v788, 2
      %v821 = vsel %vm474, %v819, %v820
      %v822 = vrot.slane %v789, 2
      %v823 = vrot.slane %v790, 2
      %v824 = vsel %vm474, %v822, %v823
      %v825 = vrot.slane %v791, 2
      %v826 = vrot.slane %v792, 2
      %v827 = vsel %vm474, %v825, %v826
      %v828 = vrot.slane %v793, 2
      %v829 = vrot.slane %v794, 2
      %v830 = vsel %vm474, %v828, %v829
      %v831 = vrot.slane %v795, 2
      %v832 = vrot.slane %v796, 2
      %v833 = vsel %vm474, %v831, %v832
      %v834 = vrot.slane %v797, 2
      %v835 = vrot.slane %v798, 2
      %v836 = vsel %vm474, %v834, %v835
      %v837 = vrot.slane %v799, 2
      %v838 = vrot.slane %v800, 2
      %v839 = vsel %vm474, %v837, %v838
      %v840 = vrot.slane %v801, 2
      %v841 = vrot.slane %v802, 2
      %v842 = vsel %vm474, %v840, %v841
      %v851 = vadd.f32 %v775, %v821
      %v852 = vadd.f32 %v776, %v824
      %v853 = vadd.f32 %v777, %v827
      %v854 = vadd.f32 %v778, %v830
      %v855 = vadd.f32 %v779, %v833
      %v856 = vadd.f32 %v780, %v836
      %v857 = vadd.f32 %v781, %v839
      %v858 = vadd.f32 %v782, %v842
      %v859 = vld [vmem:[%s4] sm:$0xff]
      %v860 = vld [vmem:[%s4 + $0x8] sm:$0xff]
      %vm861 = vcmask 523264
      %v863 = vsel %vm861, %v859, 0
      %v866 = vsel %vm861, %v860, 0
      %868 = vmatprep.subr.mxu0 0.0
      %869 = vmatpush1.msra.mxu0 %v851
      %870 = vmatprep.subr.mxu0 0.0
      %871 = vmatpush1.msra.mxu0 %v852
      %872 = vmatprep.subr.mxu0 0.0
      %873 = vmatpush1.msra.mxu0 %v853
      %874 = vmatprep.subr.mxu0 0.0
      %875 = vmatpush1.msra.mxu0 %v854
      %876 = vmatprep.subr.mxu0 0.0
      %877 = vmatpush1.msra.mxu0 %v855
      %878 = vmatprep.subr.mxu0 0.0
      %879 = vmatpush1.msra.mxu0 %v856
      %880 = vmatprep.subr.mxu0 0.0
      %881 = vmatpush1.msra.mxu0 %v857
      %882 = vmatprep.subr.mxu0 0.0
      %883 = vmatpush1.msra.mxu0 %v858
      %884 = vmatprep.subr.mxu0 0.0
      %885 = vmatpush1.msra.mxu0 0.0
      %886 = vmatprep.subr.mxu0 0.0
      %887 = vmatpush1.msra.mxu0 0.0
      %888 = vmatprep.subr.mxu0 0.0
      %889 = vmatpush1.msra.mxu0 0.0
      %890 = vmatprep.subr.mxu0 0.0
      %891 = vmatpush1.msra.mxu0 0.0
      %892 = vmatprep.subr.mxu0 0.0
      %893 = vmatpush1.msra.mxu0 0.0
      %894 = vmatprep.subr.mxu0 0.0
      %895 = vmatpush1.msra.mxu0 0.0
      %896 = vmatprep.subr.mxu0 0.0
      %897 = vmatpush1.msra.mxu0 0.0
      %898 = vmatprep.subr.mxu0 0.0
      %899 = vmatpush1.msra.mxu0 0.0
      %900 = vmatprep.subr.mxu0 0.0
      %901 = vmatpush1.msra.mxu0 0.0
      %902 = vmatprep.subr.mxu0 0.0
      %903 = vmatpush1.msra.mxu0 0.0
      %904 = vmatprep.subr.mxu0 0.0
      %905 = vmatpush1.msra.mxu0 0.0
      %906 = vmatprep.subr.mxu0 0.0
      %907 = vmatpush1.msra.mxu0 0.0
      %908 = vmatprep.subr.mxu0 0.0
      %909 = vmatpush1.msra.mxu0 0.0
      %910 = vmatprep.subr.mxu0 0.0
      %911 = vmatpush1.msra.mxu0 0.0
      %912 = vmatprep.subr.mxu0 0.0
      %913 = vmatpush1.msra.mxu0 0.0
      %914 = vmatprep.subr.mxu0 0.0
      %915 = vmatpush1.msra.mxu0 0.0
      %916 = vmatprep.subr.mxu0 0.0
      %917 = vmatpush1.msra.mxu0 0.0
      %918 = vmatprep.subr.mxu0 0.0
      %919 = vmatpush1.msra.mxu0 0.0
      %920 = vmatprep.subr.mxu0 0.0
      %921 = vmatpush1.msra.mxu0 0.0
      %922 = vmatprep.subr.mxu0 0.0
      %923 = vmatpush1.msra.mxu0 0.0
      %924 = vmatprep.subr.mxu0 0.0
      %925 = vmatpush1.msra.mxu0 0.0
      %926 = vmatprep.subr.mxu0 0.0
      %927 = vmatpush1.msra.mxu0 0.0
      %928 = vmatprep.subr.mxu0 0.0
      %929 = vmatpush1.msra.mxu0 0.0
      %930 = vmatprep.subr.mxu0 0.0
      %931 = vmatpush1.msra.mxu0 0.0
      %932 = vmatprep.mubr.f32.mxu0 0.0
      %933 = vmatmul.mubr.f32.gmra.mrb[0].mxu0 %v863
      %v934 = vpop.f32.mrb[0].mxu0
      %v935 = vadd.f32 0.0, %v934
      %v936 = vpop.f32.mrb[0].mxu0
      %937 = vmatprep.mubr.f32.mxu0 0.0
      %938 = vmatmul.mubr.f32.gmra.mrb[0].mxu0 %v866
      %v939 = vpop.f32.mrb[0].mxu0
      %v940 = vadd.f32 0.0, %v939
      %v941 = vpop.f32.mrb[0].mxu0
      %942 = vdwg.mxu0
      %v943 = vld [vmem:[%s2] sm:$0x1]
      %v945 = vlaneseq
      %v946 = vshrl.u32 %v945, 7
      %v947 = vsub.s32 0, %v946
      %v948 = vrot.slane %v943, %v947
      %v950 = vmul.f32 %v935, %v948
      %v951 = vmul.f32 %v940, %v948
      %v952 = vld [vmem:[%s3] sm:$0x1]
      %v954 = vlaneseq
      %v955 = vshrl.u32 %v954, 7
      %v956 = vsub.s32 0, %v955
      %v957 = vrot.slane %v952, %v956
      %v959 = vadd.f32 %v950, %v957
      %v960 = vadd.f32 %v951, %v957
      %v961 = vmax.f32 %v959, 0.0
      %v962 = vmax.f32 %v960, 0.0
      %v963 = vpack.c.bf16 %v962, %v961
      %v964 = vld [vmem:[%s5] sm:$0xf]
      %v965 = vld [vmem:[%s5 + $0x4] sm:$0xf]
      %v966 = vld [vmem:[%s5 + $0x8] sm:$0xf]
      %v967 = vld [vmem:[%s5 + $0xc] sm:$0xf]
      %v968 = vld [vmem:[%s5 + $0x10] sm:$0xf]
      %v969 = vld [vmem:[%s5 + $0x14] sm:$0xf]
      %v970 = vld [vmem:[%s5 + $0x18] sm:$0xf]
      %v971 = vld [vmem:[%s5 + $0x1c] sm:$0xf]
      %v972 = vld [vmem:[%s5 + $0x20] sm:$0xf]
      %v973 = vld [vmem:[%s5 + $0x24] sm:$0xf]
      %v974 = vld [vmem:[%s5 + $0x28] sm:$0xf]
      %v975 = vld [vmem:[%s5 + $0x2c] sm:$0xf]
      %v976 = vld [vmem:[%s5 + $0x30] sm:$0xf]
      %v977 = vld [vmem:[%s5 + $0x34] sm:$0xf]
      %v978 = vld [vmem:[%s5 + $0x38] sm:$0xf]
      %v979 = vld [vmem:[%s5 + $0x3c] sm:$0xf]
      %v996 = vunpack.c.l.b16 %v964
      %v997 = vunpack.c.l.b16 %v965
      %v998 = vunpack.c.l.b16 %v966
      %v999 = vunpack.c.l.b16 %v967
      %v1000 = vunpack.c.l.b16 %v968
      %v1001 = vunpack.c.l.b16 %v969
      %v1002 = vunpack.c.l.b16 %v970
      %v1003 = vunpack.c.l.b16 %v971
      %v1004 = vunpack.c.l.b16 %v972
      %v1005 = vunpack.c.l.b16 %v973
      %v1006 = vunpack.c.l.b16 %v974
      %v1007 = vunpack.c.l.b16 %v975
      %v1008 = vunpack.c.l.b16 %v976
      %v1009 = vunpack.c.l.b16 %v977
      %v1010 = vunpack.c.l.b16 %v978
      %v1011 = vunpack.c.l.b16 %v979
      %v1012 = vpack.c.b16 %v997, %v996
      %v1013 = vpack.c.b16 %v999, %v998
      %v1014 = vpack.c.b16 %v1001, %v1000
      %v1015 = vpack.c.b16 %v1003, %v1002
      %v1016 = vpack.c.b16 %v1005, %v1004
      %v1017 = vpack.c.b16 %v1007, %v1006
      %v1018 = vpack.c.b16 %v1009, %v1008
      %v1019 = vpack.c.b16 %v1011, %v1010
      %1028 = vmatprep.subr.bf16.mxu0 0
      %1029 = vmatpush1.bf16.msra.mxu0 %v1012
      %1030 = vmatprep.subr.bf16.mxu0 0
      %1031 = vmatpush1.bf16.msra.mxu0 %v1013
      %1032 = vmatprep.subr.bf16.mxu0 0
      %1033 = vmatpush1.bf16.msra.mxu0 %v1014
      %1034 = vmatprep.subr.bf16.mxu0 0
      %1035 = vmatpush1.bf16.msra.mxu0 %v1015
      %1036 = vmatprep.subr.bf16.mxu0 0
      %1037 = vmatpush1.bf16.msra.mxu0 %v1016
      %1038 = vmatprep.subr.bf16.mxu0 0
      %1039 = vmatpush1.bf16.msra.mxu0 %v1017
      %1040 = vmatprep.subr.bf16.mxu0 0
      %1041 = vmatpush1.bf16.msra.mxu0 %v1018
      %1042 = vmatprep.subr.bf16.mxu0 0
      %1043 = vmatpush1.bf16.msra.mxu0 %v1019
      %1044 = vmatprep.subr.bf16.mxu0 0
      %1045 = vmatpush1.bf16.msra.mxu0 0
      %1046 = vmatprep.subr.bf16.mxu0 0
      %1047 = vmatpush1.bf16.msra.mxu0 0
      %1048 = vmatprep.subr.bf16.mxu0 0
      %1049 = vmatpush1.bf16.msra.mxu0 0
      %1050 = vmatprep.subr.bf16.mxu0 0
      %1051 = vmatpush1.bf16.msra.mxu0 0
      %1052 = vmatprep.subr.bf16.mxu0 0
      %1053 = vmatpush1.bf16.msra.mxu0 0
      %1054 = vmatprep.subr.bf16.mxu0 0
      %1055 = vmatpush1.bf16.msra.mxu0 0
      %1056 = vmatprep.subr.bf16.mxu0 0
      %1057 = vmatpush1.bf16.msra.mxu0 0
      %1058 = vmatprep.subr.bf16.mxu0 0
      %1059 = vmatpush1.bf16.msra.mxu0 0
      %1060 = vmatprep.mubr.bf16.mxu0 0
      %1061 = vmatmul.mubr.bf16.gmra.mrb[0].mxu0 %v963
      %v1062 = vpop.f32.mrb[0].mxu0
      %v1063 = vadd.f32 0.0, %v1062
      %v1064 = vpop.f32.mrb[0].mxu0
      %v1065 = vpop.f32.mrb[0].mxu0
      %v1066 = vadd.f32 0.0, %v1065
      %v1067 = vpop.f32.mrb[0].mxu0
      %1068 = vdwg.mxu0
      %v1069 = vld [vmem:[%s6] sm:$0x1]
      %v1071 = vlaneseq
      %v1072 = vshrl.u32 %v1071, 7
      %v1073 = vsub.s32 0, %v1072
      %v1074 = vrot.slane %v1069, %v1073
      %v1076 = vmul.f32 %v1063, %v1074
      %v1077 = vmul.f32 %v1066, %v1074
      %v1078 = vld [vmem:[%s7] sm:$0x1]
      %v1080 = vlaneseq
      %v1081 = vshrl.u32 %v1080, 7
      %v1082 = vsub.s32 0, %v1081
      %v1083 = vrot.slane %v1078, %v1082
      %v1085 = vadd.f32 %v1076, %v1083
      %v1086 = vadd.f32 %v1077, %v1083
      %v1087 = vmax.f32 %v1085, 0.0
      %v1088 = vmax.f32 %v1086, 0.0
      %v1089 = vpack.c.bf16 %v1088, %v1087
      %v1091 = vunpack.c.l.b16 %v1089
      %v1092 = vunpack.c.h.b16 %v1089
      %v1093 = vpack.c.b16 %v1091, %v1091
      %v1094 = vpack.c.b16 %v1092, %v1092
      %1097 = vst [vmem:[%s305] sm:$0xf] %v1093
      %1098 = vst [vmem:[%s305 + $0x4] sm:$0xf] %v1094
      %p1099 = scmp.lt.s32.totalorder %s19, 1
      %s1100 = scalar_select %p1099, %s19, 1
      %s1101 = smul.addr %s1100, 2
      %s1102 = smul.addr %s1101, 4
      %s1103 = scalar_lea.vmem %s8, %s1102
      // Predicated region
      $region53: #{_lambda_.9} parent=51 // pred_check
        %p1104 = pneg %p210
      $region54: #{_lambda_.9} parent=51 // pred_check_branch
        %1106 = sbr.rel (%p1104) target = $region56
      $region55: #{_lambda_.9} parent=51 // pred_region
        _
      $region56: #{_lambda_.9} parent=51 // pred_fallthru
        _
    $region52: #{_lambda_.9} parent=5 // pred_fallthru
      _
    %p1107 = scmp.le.s32.totalorder 2, %s14
    // Predicated region
    $region57: #{_lambda_.9} parent=5 // pred_check
      %p1108 = pneg %p1107
    $region58: #{_lambda_.9} parent=5 // pred_check_branch
      %1110 = sbr.rel (%p1108) target = $region60
    $region59: #{_lambda_.9} parent=5 // pred_region
      %s1111 = ssub.s32 %s14, 2
      // Predicated region
      $region61: #{_lambda_.9} parent=59 // pred_check
        %p1112 = pneg %p216
      $region62: #{_lambda_.9} parent=59 // pred_check_branch
        %1114 = sbr.rel (%p1112) target = $region64
      $region63: #{_lambda_.9} parent=59 // pred_region
        %p1115 = scmp.lt.s32.totalorder %s20, 1
        %s1116 = scalar_select %p1115, %s20, 1
        %s1117 = smul.addr %s1116, 2
        %s1118 = smul.addr %s1117, 4
        %s1119 = scalar_lea.vmem %s8, %s1118
      $region64: #{_lambda_.9} parent=59 // pred_fallthru
        _
    $region60: #{_lambda_.9} parent=5 // pred_fallthru
      _
  $region6: #{_lambda_.9} parent=0 // loop_footer
    %s18 = sadd.s32 1, %s14
  $region7: #{_lambda_.9} parent=0 // loop_footer_branch
    %13 = sbr.rel target = $region3
  $region8: #{_lambda_.9} parent=0 // loop_exit
    _

// kernel: _lambda_.8
$region0: #{_lambda_.8}
  #allocation0 [shape = 'u32[]', space=smem, size = 0x4, offset = 0x4, fixed_abs, tag = 'smem constant byte address 0x4 - core index']
  #allocation1 [shape = 'u32[144,128]{1,0:T(1,128)}', space=vmem, size = 0x12000, scoped, tag = 'internal scratch']
  %s0 = inlined_call_operand.vmem [shape: bf16[2,18,18,128], index: 0, kind: input, shape index: {}]
  %s1 = inlined_call_operand.vmem [shape: f32[9,128], index: 1, kind: input, shape index: {}]
  %s2 = inlined_call_operand.vmem [shape: f32[1,128], index: 2, kind: input, shape index: {}]
  %s3 = inlined_call_operand.vmem [shape: f32[1,128], index: 3, kind: input, shape index: {}, may-alias: {3,7}]
  %s4 = inlined_call_operand.vmem [shape: f32[64,256], index: 4, kind: input, shape index: {}]
  %s5 = inlined_call_operand.vmem [shape: bf16[128,128], index: 5, kind: input, shape index: {}]
  %s6 = inlined_call_operand.vmem [shape: f32[1,128], index: 6, kind: input, shape index: {}]
  %s7 = inlined_call_operand.vmem [shape: f32[1,128], index: 7, kind: input, shape index: {}, may-alias: {3,7}]
  %s8 = inlined_call_operand.vmem [shape: bf16[2,64,128], index: 8, kind: output, shape index: {}]
  %s9 = sld [smem:[#allocation0]]
  $region65: #{_lambda_.8} parent=0
    _
  %s11 = ssub.s32 1, %s9
  %s12 = scalar_select 0, %s11, %s9
  loop: start=0, step=1, limit=4
  $region2: #{_lambda_.8} parent=0 // loop_pre_header
    _
  $region3: #{_lambda_.8} parent=0 // loop_header
    %s14 = sphi 0, %s18
    %p15 = scmp.ge.s32.totalorder %s14, 4
    %s24 = sphi 0, %s26
    %s27 = sphi 0, %s24
    %s28 = sphi 0, %s27
    %s44 = sphi 0, %s28
    %s48 = sphi 0, %s48
    %s50 = sphi 0, %s48
    %s51 = sphi 0, %s50
    %s65 = sphi 0, %s51
    %s69 = sphi 0, %s69
    %s71 = sphi 0, %s69
    %s72 = sphi 0, %s71
    %s86 = sphi 0, %s72
    %s90 = sphi 0, %s90
    %s92 = sphi 0, %s90
    %s93 = sphi 0, %s92
    %s107 = sphi 0, %s93
    %s111 = sphi 0, %s111
    %s113 = sphi 0, %s111
    %s114 = sphi 0, %s113
    %s128 = sphi 0, %s114
    %s132 = sphi 0, %s132
    %s134 = sphi 0, %s132
    %s135 = sphi 0, %s134
    %s149 = sphi 0, %s135
    %s153 = sphi 0, %s153
    %s155 = sphi 0, %s153
    %s156 = sphi 0, %s155
    %s170 = sphi 0, %s156
    %s174 = sphi 0, %s174
    %s176 = sphi 0, %s174
    %s177 = sphi 0, %s176
    %s191 = sphi 0, %s177
    %s197 = sphi 0, %s199
    %s200 = sphi 0, %s197
    %s201 = sphi 0, %s200
    %s217 = sphi 0, %s201
  $region4: #{_lambda_.8} parent=0 // loop_header_branch
    %17 = sbr.rel (%p15) target = $region8
  $region5: #{_lambda_.8} parent=0 // loop_body
    %s19 = ssub.s32 %s14, 1
    %s20 = ssub.s32 %s14, 2
    %s21 = sadd.s32 %s14, 1
    %s22 = ssub.s32 %s14, %s21
    %p23 = scmp.eq.s32.totalorder %s22, 0
    %s25 = sadd.s32 %s24, 1
    %s26 = scalar_select %p23, %s24, %s25
    %p29 = pneg %p23
    %p30 = scmp.eq.s32.totalorder %s14, 1
    %p31 = por %p29, %p30
    %p32 = scmp.ne.s32.totalorder %s24, %s27
    %p33 = scmp.eq.s32.totalorder %s14, 0
    %p34 = por %p32, %p33
    %p35 = scmp.ne.s32.totalorder %s24, %s27
    %p36 = scmp.eq.s32.totalorder %s19, 1
    %p37 = por %p35, %p36
    %p38 = scmp.ne.s32.totalorder %s27, %s28
    %p39 = scmp.eq.s32.totalorder %s19, 0
    %p40 = por %p38, %p39
    %p41 = scmp.ne.s32.totalorder %s27, %s28
    %p42 = scmp.eq.s32.totalorder %s20, 1
    %p43 = por %p41, %p42
    %p45 = scmp.ne.s32.totalorder %s28, %s44
    %p46 = scmp.eq.s32.totalorder %s20, 0
    %p47 = por %p45, %p46
    %s49 = sadd.s32 %s48, 1
    %p52 = scmp.eq.s32.totalorder %s14, 1
    %p53 = scmp.ne.s32.totalorder %s48, %s50
    %p54 = scmp.eq.s32.totalorder %s14, 0
    %p55 = por %p53, %p54
    %p56 = scmp.ne.s32.totalorder %s48, %s50
    %p57 = scmp.eq.s32.totalorder %s19, 1
    %p58 = por %p56, %p57
    %p59 = scmp.ne.s32.totalorder %s50, %s51
    %p60 = scmp.eq.s32.totalorder %s19, 0
    %p61 = por %p59, %p60
    %p62 = scmp.ne.s32.totalorder %s50, %s51
    %p63 = scmp.eq.s32.totalorder %s20, 1
    %p64 = por %p62, %p63
    %p66 = scmp.ne.s32.totalorder %s51, %s65
    %p67 = scmp.eq.s32.totalorder %s20, 0
    %p68 = por %p66, %p67
    %s70 = sadd.s32 %s69, 1
    %p73 = scmp.eq.s32.totalorder %s14, 1
    %p74 = scmp.ne.s32.totalorder %s69, %s71
    %p75 = scmp.eq.s32.totalorder %s14, 0
    %p76 = por %p74, %p75
    %p77 = scmp.ne.s32.totalorder %s69, %s71
    %p78 = scmp.eq.s32.totalorder %s19, 1
    %p79 = por %p77, %p78
    %p80 = scmp.ne.s32.totalorder %s71, %s72
    %p81 = scmp.eq.s32.totalorder %s19, 0
    %p82 = por %p80, %p81
    %p83 = scmp.ne.s32.totalorder %s71, %s72
    %p84 = scmp.eq.s32.totalorder %s20, 1
    %p85 = por %p83, %p84
    %p87 = scmp.ne.s32.totalorder %s72, %s86
    %p88 = scmp.eq.s32.totalorder %s20, 0
    %p89 = por %p87, %p88
    %s91 = sadd.s32 %s90, 1
    %p94 = scmp.eq.s32.totalorder %s14, 1
    %p95 = scmp.ne.s32.totalorder %s90, %s92
    %p96 = scmp.eq.s32.totalorder %s14, 0
    %p97 = por %p95, %p96
    %p98 = scmp.ne.s32.totalorder %s90, %s92
    %p99 = scmp.eq.s32.totalorder %s19, 1
    %p100 = por %p98, %p99
    %p101 = scmp.ne.s32.totalorder %s92, %s93
    %p102 = scmp.eq.s32.totalorder %s19, 0
    %p103 = por %p101, %p102
    %p104 = scmp.ne.s32.totalorder %s92, %s93
    %p105 = scmp.eq.s32.totalorder %s20, 1
    %p106 = por %p104, %p105
    %p108 = scmp.ne.s32.totalorder %s93, %s107
    %p109 = scmp.eq.s32.totalorder %s20, 0
    %p110 = por %p108, %p109
    %s112 = sadd.s32 %s111, 1
    %p115 = scmp.eq.s32.totalorder %s14, 1
    %p116 = scmp.ne.s32.totalorder %s111, %s113
    %p117 = scmp.eq.s32.totalorder %s14, 0
    %p118 = por %p116, %p117
    %p119 = scmp.ne.s32.totalorder %s111, %s113
    %p120 = scmp.eq.s32.totalorder %s19, 1
    %p121 = por %p119, %p120
    %p122 = scmp.ne.s32.totalorder %s113, %s114
    %p123 = scmp.eq.s32.totalorder %s19, 0
    %p124 = por %p122, %p123
    %p125 = scmp.ne.s32.totalorder %s113, %s114
    %p126 = scmp.eq.s32.totalorder %s20, 1
    %p127 = por %p125, %p126
    %p129 = scmp.ne.s32.totalorder %s114, %s128
    %p130 = scmp.eq.s32.totalorder %s20, 0
    %p131 = por %p129, %p130
    %s133 = sadd.s32 %s132, 1
    %p136 = scmp.eq.s32.totalorder %s14, 1
    %p137 = scmp.ne.s32.totalorder %s132, %s134
    %p138 = scmp.eq.s32.totalorder %s14, 0
    %p139 = por %p137, %p138
    %p140 = scmp.ne.s32.totalorder %s132, %s134
    %p141 = scmp.eq.s32.totalorder %s19, 1
    %p142 = por %p140, %p141
    %p143 = scmp.ne.s32.totalorder %s134, %s135
    %p144 = scmp.eq.s32.totalorder %s19, 0
    %p145 = por %p143, %p144
    %p146 = scmp.ne.s32.totalorder %s134, %s135
    %p147 = scmp.eq.s32.totalorder %s20, 1
    %p148 = por %p146, %p147
    %p150 = scmp.ne.s32.totalorder %s135, %s149
    %p151 = scmp.eq.s32.totalorder %s20, 0
    %p152 = por %p150, %p151
    %s154 = sadd.s32 %s153, 1
    %p157 = scmp.eq.s32.totalorder %s14, 1
    %p158 = scmp.ne.s32.totalorder %s153, %s155
    %p159 = scmp.eq.s32.totalorder %s14, 0
    %p160 = por %p158, %p159
    %p161 = scmp.ne.s32.totalorder %s153, %s155
    %p162 = scmp.eq.s32.totalorder %s19, 1
    %p163 = por %p161, %p162
    %p164 = scmp.ne.s32.totalorder %s155, %s156
    %p165 = scmp.eq.s32.totalorder %s19, 0
    %p166 = por %p164, %p165
    %p167 = scmp.ne.s32.totalorder %s155, %s156
    %p168 = scmp.eq.s32.totalorder %s20, 1
    %p169 = por %p167, %p168
    %p171 = scmp.ne.s32.totalorder %s156, %s170
    %p172 = scmp.eq.s32.totalorder %s20, 0
    %p173 = por %p171, %p172
    %s175 = sadd.s32 %s174, 1
    %p178 = scmp.eq.s32.totalorder %s14, 1
    %p179 = scmp.ne.s32.totalorder %s174, %s176
    %p180 = scmp.eq.s32.totalorder %s14, 0
    %p181 = por %p179, %p180
    %p182 = scmp.ne.s32.totalorder %s174, %s176
    %p183 = scmp.eq.s32.totalorder %s19, 1
    %p184 = por %p182, %p183
    %p185 = scmp.ne.s32.totalorder %s176, %s177
    %p186 = scmp.eq.s32.totalorder %s19, 0
    %p187 = por %p185, %p186
    %p188 = scmp.ne.s32.totalorder %s176, %s177
    %p189 = scmp.eq.s32.totalorder %s20, 1
    %p190 = por %p188, %p189
    %p192 = scmp.ne.s32.totalorder %s177, %s191
    %p193 = scmp.eq.s32.totalorder %s20, 0
    %p194 = por %p192, %p193
    %s195 = ssub.s32 %s14, %s21
    %p196 = scmp.eq.s32.totalorder %s195, 0
    %s198 = sadd.s32 %s197, 1
    %s199 = scalar_select %p196, %s197, %s198
    %p202 = pneg %p196
    %p203 = scmp.eq.s32.totalorder %s14, 1
    %p204 = por %p202, %p203
    %p205 = scmp.ne.s32.totalorder %s197, %s200
    %p206 = scmp.eq.s32.totalorder %s14, 0
    %p207 = por %p205, %p206
    %p208 = scmp.ne.s32.totalorder %s197, %s200
    %p209 = scmp.eq.s32.totalorder %s19, 1
    %p210 = por %p208, %p209
    %p211 = scmp.ne.s32.totalorder %s200, %s201
    %p212 = scmp.eq.s32.totalorder %s19, 0
    %p213 = por %p211, %p212
    %p214 = scmp.ne.s32.totalorder %s200, %s201
    %p215 = scmp.eq.s32.totalorder %s20, 1
    %p216 = por %p214, %p215
    %p218 = scmp.ne.s32.totalorder %s201, %s217
    %p219 = scmp.eq.s32.totalorder %s20, 0
    %p220 = por %p218, %p219
    %p221 = scmp.le.s32.totalorder 1, %s14
    %p222 = scmp.lt.s32.totalorder %s14, 3
    %p223 = pnand %p221, %p222
    %p224 = pneg %p223
    // Predicated region
    $region9: #{_lambda_.8} parent=5 // pred_check
      _
    $region10: #{_lambda_.8} parent=5 // pred_check_branch
      %226 = sbr.rel (%p223) target = $region12
    $region11: #{_lambda_.8} parent=5 // pred_region
      %s227 = ssub.s32 %s14, 1
      // Predicated region
      $region13: #{_lambda_.8} parent=11 // pred_check
        %p228 = pneg %p61
      $region14: #{_lambda_.8} parent=11 // pred_check_branch
        %230 = sbr.rel (%p228) target = $region16
      $region15: #{_lambda_.8} parent=11 // pred_region
        _
      $region16: #{_lambda_.8} parent=11 // pred_fallthru
        _
      // Predicated region
      $region17: #{_lambda_.8} parent=11 // pred_check
        %p231 = pneg %p82
      $region18: #{_lambda_.8} parent=11 // pred_check_branch
        %233 = sbr.rel (%p231) target = $region20
      $region19: #{_lambda_.8} parent=11 // pred_region
        _
      $region20: #{_lambda_.8} parent=11 // pred_fallthru
        _
      // Predicated region
      $region21: #{_lambda_.8} parent=11 // pred_check
        %p234 = pneg %p103
      $region22: #{_lambda_.8} parent=11 // pred_check_branch
        %236 = sbr.rel (%p234) target = $region24
      $region23: #{_lambda_.8} parent=11 // pred_region
        _
      $region24: #{_lambda_.8} parent=11 // pred_fallthru
        _
      // Predicated region
      $region25: #{_lambda_.8} parent=11 // pred_check
        %p237 = pneg %p124
      $region26: #{_lambda_.8} parent=11 // pred_check_branch
        %239 = sbr.rel (%p237) target = $region28
      $region27: #{_lambda_.8} parent=11 // pred_region
        _
      $region28: #{_lambda_.8} parent=11 // pred_fallthru
        _
      // Predicated region
      $region29: #{_lambda_.8} parent=11 // pred_check
        %p240 = pneg %p145
      $region30: #{_lambda_.8} parent=11 // pred_check_branch
        %242 = sbr.rel (%p240) target = $region32
      $region31: #{_lambda_.8} parent=11 // pred_region
        _
      $region32: #{_lambda_.8} parent=11 // pred_fallthru
        _
      // Predicated region
      $region33: #{_lambda_.8} parent=11 // pred_check
        %p243 = pneg %p166
      $region34: #{_lambda_.8} parent=11 // pred_check_branch
        %245 = sbr.rel (%p243) target = $region36
      $region35: #{_lambda_.8} parent=11 // pred_region
        _
      $region36: #{_lambda_.8} parent=11 // pred_fallthru
        _
      // Predicated region
      $region37: #{_lambda_.8} parent=11 // pred_check
        %p246 = pneg %p187
      $region38: #{_lambda_.8} parent=11 // pred_check_branch
        %248 = sbr.rel (%p246) target = $region40
      $region39: #{_lambda_.8} parent=11 // pred_region
        _
      $region40: #{_lambda_.8} parent=11 // pred_fallthru
        _
    $region12: #{_lambda_.8} parent=5 // pred_fallthru
      _
    %p249 = scmp.lt.s32.totalorder %s14, 2
    // Predicated region
    $region41: #{_lambda_.8} parent=5 // pred_check
      %p250 = pneg %p249
    $region42: #{_lambda_.8} parent=5 // pred_check_branch
      %252 = sbr.rel (%p250) target = $region44
    $region43: #{_lambda_.8} parent=5 // pred_region
      // Predicated region
      $region45: #{_lambda_.8} parent=43 // pred_check
        %p253 = pneg %p34
      $region46: #{_lambda_.8} parent=43 // pred_check_branch
        %255 = sbr.rel (%p253) target = $region48
      $region47: #{_lambda_.8} parent=43 // pred_region
        %p256 = scmp.lt.s32.totalorder %s14, 1
        %s257 = scalar_select %p256, %s14, 1
        %s258 = smul.addr %s257, 54
        %s259 = smul.addr %s258, 4
        %s260 = scalar_lea.vmem %s0, %s259
      $region48: #{_lambda_.8} parent=43 // pred_fallthru
        _
    $region44: #{_lambda_.8} parent=5 // pred_fallthru
      _
    %p261 = scmp.le.s32.totalorder 1, %s14
    %p262 = scmp.lt.s32.totalorder %s14, 3
    %p263 = pnand %p261, %p262
    %p264 = pneg %p263
    // Predicated region
    $region49: #{_lambda_.8} parent=5 // pred_check
      _
    $region50: #{_lambda_.8} parent=5 // pred_check_branch
      %266 = sbr.rel (%p263) target = $region52
    $region51: #{_lambda_.8} parent=5 // pred_region
      %s267 = ssub.s32 %s14, 1
      %p268 = scmp.lt.s32.totalorder %s19, 1
      %s269 = scalar_select %p268, %s19, 1
      %s270 = smul.addr %s269, 54
      %s271 = smul.addr %s270, 4
      %s272 = scalar_lea.vmem %s0, %s271
      %p273 = pneg %p40
      %p274 = pneg %p37
      %p275 = pneg %p61
      %p276 = pneg %p58
      %p277 = pneg %p82
      %p278 = pneg %p79
      %p279 = pneg %p103
      %p280 = pneg %p100
      %p281 = pneg %p124
      %p282 = pneg %p121
      %p283 = pneg %p145
      %p284 = pneg %p142
      %p285 = pneg %p166
      %p286 = pneg %p163
      %p287 = pneg %p187
      %p288 = pneg %p184
      %p289 = pneg %p213
      %p290 = pneg %p210
      %p291 = scmp.lt.s32.totalorder %s19, 1
      %s292 = scalar_select %p291, %s19, 1
      %s293 = smul.addr %s292, 8
      %s294 = smul.addr %s293, 4
      %s295 = scalar_lea.vmem %s8, %s294
      %p296 = scmp.lt.s32.totalorder %s19, 1
      %s297 = scalar_select %p296, %s19, 1
      %s298 = smul.addr %s297, 54
      %s299 = smul.addr %s298, 4
      %s300 = scalar_lea.vmem %s0, %s299
      %p301 = scmp.lt.s32.totalorder %s19, 1
      %s302 = scalar_select %p301, %s19, 1
      %s303 = smul.addr %s302, 8
      %s304 = smul.addr %s303, 4
      %s305 = scalar_lea.vmem %s8, %s304
      %v307 = vld [vmem:[%s300] sm:$0xf]
      %v308 = vld [vmem:[%s300 + $0x4] sm:$0xf]
      %v309 = vld [vmem:[%s300 + $0x8] sm:$0x1]
      %v310 = vld [vmem:[%s300 + $0xc] sm:$0xf]
      %v311 = vld [vmem:[%s300 + $0x10] sm:$0xf]
      %v312 = vld [vmem:[%s300 + $0x14] sm:$0x1]
      %v313 = vld [vmem:[%s300 + $0x18] sm:$0xf]
      %v314 = vld [vmem:[%s300 + $0x1c] sm:$0xf]
      %v315 = vld [vmem:[%s300 + $0x20] sm:$0x1]
      %v316 = vld [vmem:[%s300 + $0x24] sm:$0xf]
      %v317 = vld [vmem:[%s300 + $0x28] sm:$0xf]
      %v318 = vld [vmem:[%s300 + $0x2c] sm:$0x1]
      %v319 = vld [vmem:[%s300 + $0x30] sm:$0xf]
      %v320 = vld [vmem:[%s300 + $0x34] sm:$0xf]
      %v321 = vld [vmem:[%s300 + $0x38] sm:$0x1]
      %v322 = vld [vmem:[%s300 + $0x3c] sm:$0xf]
      %v323 = vld [vmem:[%s300 + $0x40] sm:$0xf]
      %v324 = vld [vmem:[%s300 + $0x44] sm:$0x1]
      %v325 = vld [vmem:[%s300 + $0x48] sm:$0xf]
      %v326 = vld [vmem:[%s300 + $0x4c] sm:$0xf]
      %v327 = vld [vmem:[%s300 + $0x50] sm:$0x1]
      %v328 = vld [vmem:[%s300 + $0x54] sm:$0xf]
      %v329 = vld [vmem:[%s300 + $0x58] sm:$0xf]
      %v330 = vld [vmem:[%s300 + $0x5c] sm:$0x1]
      %v331 = vld [vmem:[%s300 + $0x60] sm:$0xf]
      %v332 = vld [vmem:[%s300 + $0x64] sm:$0xf]
      %v333 = vld [vmem:[%s300 + $0x68] sm:$0x1]
      %v334 = vld [vmem:[%s300 + $0x6c] sm:$0xf]
      %v335 = vld [vmem:[%s300 + $0x70] sm:$0xf]
      %v336 = vld [vmem:[%s300 + $0x74] sm:$0x1]
      %v337 = vld [vmem:[%s300 + $0x78] sm:$0xf]
      %v338 = vld [vmem:[%s300 + $0x7c] sm:$0xf]
      %v339 = vld [vmem:[%s300 + $0x80] sm:$0x1]
      %v340 = vld [vmem:[%s300 + $0x84] sm:$0xf]
      %v341 = vld [vmem:[%s300 + $0x88] sm:$0xf]
      %v342 = vld [vmem:[%s300 + $0x8c] sm:$0x1]
      %v343 = vld [vmem:[%s300 + $0x90] sm:$0xf]
      %v344 = vld [vmem:[%s300 + $0x94] sm:$0xf]
      %v345 = vld [vmem:[%s300 + $0x98] sm:$0x1]
      %v346 = vld [vmem:[%s300 + $0x9c] sm:$0xf]
      %v347 = vld [vmem:[%s300 + $0xa0] sm:$0xf]
      %v348 = vld [vmem:[%s300 + $0xa4] sm:$0x1]
      %v349 = vld [vmem:[%s300 + $0xa8] sm:$0xf]
      %v350 = vld [vmem:[%s300 + $0xac] sm:$0xf]
      %v351 = vld [vmem:[%s300 + $0xb0] sm:$0x1]
      %v352 = vld [vmem:[%s300 + $0xb4] sm:$0xf]
      %v353 = vld [vmem:[%s300 + $0xb8] sm:$0xf]
      %v354 = vld [vmem:[%s300 + $0xbc] sm:$0x1]
      %v355 = vld [vmem:[%s300 + $0xc0] sm:$0xf]
      %v356 = vld [vmem:[%s300 + $0xc4] sm:$0xf]
      %v357 = vld [vmem:[%s300 + $0xc8] sm:$0x1]
      %v358 = vld [vmem:[%s300 + $0xcc] sm:$0xf]
      %v359 = vld [vmem:[%s300 + $0xd0] sm:$0xf]
      %v360 = vld [vmem:[%s300 + $0xd4] sm:$0x1]
      %v361 = vunpack.c.l.bf16 %v307
      %v362 = vunpack.c.l.bf16 %v308
      %v363 = vunpack.c.l.bf16 %v309
      %v364 = vunpack.c.l.bf16 %v310
      %v365 = vunpack.c.l.bf16 %v311
      %v366 = vunpack.c.l.bf16 %v312
      %v367 = vunpack.c.l.bf16 %v313
      %v368 = vunpack.c.l.bf16 %v314
      %v369 = vunpack.c.l.bf16 %v315
      %v370 = vunpack.c.l.bf16 %v316
      %v371 = vunpack.c.l.bf16 %v317
      %v372 = vunpack.c.l.bf16 %v318
      %v373 = vunpack.c.l.bf16 %v319
      %v374 = vunpack.c.l.bf16 %v320
      %v375 = vunpack.c.l.bf16 %v321
      %v376 = vunpack.c.l.bf16 %v322
      %v377 = vunpack.c.l.bf16 %v323
      %v378 = vunpack.c.l.bf16 %v324
      %v379 = vunpack.c.l.bf16 %v325
      %v380 = vunpack.c.l.bf16 %v326
      %v381 = vunpack.c.l.bf16 %v327
      %v382 = vunpack.c.l.bf16 %v328
      %v383 = vunpack.c.l.bf16 %v329
      %v384 = vunpack.c.l.bf16 %v330
      %v385 = vunpack.c.l.bf16 %v331
      %v386 = vunpack.c.l.bf16 %v332
      %v387 = vunpack.c.l.bf16 %v333
      %v388 = vunpack.c.l.bf16 %v334
      %v389 = vunpack.c.l.bf16 %v335
      %v390 = vunpack.c.l.bf16 %v336
      %v391 = vunpack.c.l.bf16 %v337
      %v392 = vunpack.c.l.bf16 %v338
      %v393 = vunpack.c.l.bf16 %v339
      %v394 = vunpack.c.l.bf16 %v340
      %v395 = vunpack.c.l.bf16 %v341
      %v396 = vunpack.c.l.bf16 %v342
      %v397 = vunpack.c.l.bf16 %v343
      %v398 = vunpack.c.l.bf16 %v344
      %v399 = vunpack.c.l.bf16 %v345
      %v400 = vunpack.c.l.bf16 %v346
      %v401 = vunpack.c.l.bf16 %v347
      %v402 = vunpack.c.l.bf16 %v348
      %v403 = vunpack.c.l.bf16 %v349
      %v404 = vunpack.c.l.bf16 %v350
      %v405 = vunpack.c.l.bf16 %v351
      %v406 = vunpack.c.l.bf16 %v352
      %v407 = vunpack.c.l.bf16 %v353
      %v408 = vunpack.c.l.bf16 %v354
      %v409 = vunpack.c.l.bf16 %v355
      %v410 = vunpack.c.l.bf16 %v356
      %v411 = vunpack.c.l.bf16 %v357
      %v412 = vunpack.c.l.bf16 %v358
      %v413 = vunpack.c.l.bf16 %v359
      %v414 = vunpack.c.l.bf16 %v360
      %v415 = vld [vmem:[%s1] sm:$0xff]
      %v416 = vld [vmem:[%s1 + $0x8] sm:$0x1]
      %v417 = vlaneseq
      %v418 = vshrl.u32 %v417, 7
      %v419 = vsub.s32 0, %v418
      %v420 = vrot.slane %v415, %v419
      %v421 = vmul.f32 %v361, %v420
      %v422 = vmul.f32 %v362, %v420
      %v423 = vmul.f32 %v364, %v420
      %v424 = vmul.f32 %v365, %v420
      %v425 = vmul.f32 %v367, %v420
      %v426 = vmul.f32 %v368, %v420
      %v427 = vmul.f32 %v370, %v420
      %v428 = vmul.f32 %v371, %v420
      %v429 = vmul.f32 %v373, %v420
      %v430 = vmul.f32 %v374, %v420
      %v431 = vmul.f32 %v376, %v420
      %v432 = vmul.f32 %v377, %v420
      %v433 = vmul.f32 %v379, %v420
      %v434 = vmul.f32 %v380, %v420
      %v435 = vmul.f32 %v382, %v420
      %v436 = vmul.f32 %v383, %v420
      %v437 = vmul.f32 %v385, %v420
      %v438 = vmul.f32 %v386, %v420
      %v439 = vmul.f32 %v388, %v420
      %v440 = vmul.f32 %v389, %v420
      %v441 = vmul.f32 %v391, %v420
      %v442 = vmul.f32 %v392, %v420
      %v443 = vmul.f32 %v394, %v420
      %v444 = vmul.f32 %v395, %v420
      %v445 = vmul.f32 %v397, %v420
      %v446 = vmul.f32 %v398, %v420
      %v447 = vmul.f32 %v400, %v420
      %v448 = vmul.f32 %v401, %v420
      %v449 = vmul.f32 %v403, %v420
      %v450 = vmul.f32 %v404, %v420
      %v451 = vmul.f32 %v406, %v420
      %v452 = vmul.f32 %v407, %v420
      %v453 = vlaneseq
      %v454 = vshrl.u32 %v453, 7
      %v455 = vsub.s32 1, %v454
      %v456 = vrot.slane %v415, %v455
      %v457 = vmul.f32 %v361, %v456
      %v458 = vmul.f32 %v362, %v456
      %v459 = vmul.f32 %v363, %v456
      %v460 = vmul.f32 %v364, %v456
      %v461 = vmul.f32 %v365, %v456
      %v462 = vmul.f32 %v366, %v456
      %v463 = vmul.f32 %v367, %v456
      %v464 = vmul.f32 %v368, %v456
      %v465 = vmul.f32 %v369, %v456
      %v466 = vmul.f32 %v370, %v456
      %v467 = vmul.f32 %v371, %v456
      %v468 = vmul.f32 %v372, %v456
      %v469 = vmul.f32 %v373, %v456
      %v470 = vmul.f32 %v374, %v456
      %v471 = vmul.f32 %v375, %v456
      %v472 = vmul.f32 %v376, %v456
      %v473 = vmul.f32 %v377, %v456
      %v474 = vmul.f32 %v378, %v456
      %v475 = vmul.f32 %v379, %v456
      %v476 = vmul.f32 %v380, %v456
      %v477 = vmul.f32 %v381, %v456
      %v478 = vmul.f32 %v382, %v456
      %v479 = vmul.f32 %v383, %v456
      %v480 = vmul.f32 %v384, %v456
      %v481 = vmul.f32 %v385, %v456
      %v482 = vmul.f32 %v386, %v456
      %v483 = vmul.f32 %v387, %v456
      %v484 = vmul.f32 %v388, %v456
      %v485 = vmul.f32 %v389, %v456
      %v486 = vmul.f32 %v390, %v456
      %v487 = vmul.f32 %v391, %v456
      %v488 = vmul.f32 %v392, %v456
      %v489 = vmul.f32 %v393, %v456
      %v490 = vmul.f32 %v394, %v456
      %v491 = vmul.f32 %v395, %v456
      %v492 = vmul.f32 %v396, %v456
      %v493 = vmul.f32 %v397, %v456
      %v494 = vmul.f32 %v398, %v456
      %v495 = vmul.f32 %v399, %v456
      %v496 = vmul.f32 %v400, %v456
      %v497 = vmul.f32 %v401, %v456
      %v498 = vmul.f32 %v402, %v456
      %v499 = vmul.f32 %v403, %v456
      %v500 = vmul.f32 %v404, %v456
      %v501 = vmul.f32 %v405, %v456
      %v502 = vmul.f32 %v406, %v456
      %v503 = vmul.f32 %v407, %v456
      %v504 = vmul.f32 %v408, %v456
      %vm553 = vcmask 1046528
      %v554 = vrot.slane %v457, 1
      %v555 = vrot.slane %v458, 1
      %v556 = vsel %vm553, %v554, %v555
      %v557 = vrot.slane %v459, 1
      %v558 = vsel %vm553, %v555, %v557
      %v559 = vrot.slane %v460, 1
      %v560 = vrot.slane %v461, 1
      %v561 = vsel %vm553, %v559, %v560
      %v562 = vrot.slane %v462, 1
      %v563 = vsel %vm553, %v560, %v562
      %v564 = vrot.slane %v463, 1
      %v565 = vrot.slane %v464, 1
      %v566 = vsel %vm553, %v564, %v565
      %v567 = vrot.slane %v465, 1
      %v568 = vsel %vm553, %v565, %v567
      %v569 = vrot.slane %v466, 1
      %v570 = vrot.slane %v467, 1
      %v571 = vsel %vm553, %v569, %v570
      %v572 = vrot.slane %v468, 1
      %v573 = vsel %vm553, %v570, %v572
      %v574 = vrot.slane %v469, 1
      %v575 = vrot.slane %v470, 1
      %v576 = vsel %vm553, %v574, %v575
      %v577 = vrot.slane %v471, 1
      %v578 = vsel %vm553, %v575, %v577
      %v579 = vrot.slane %v472, 1
      %v580 = vrot.slane %v473, 1
      %v581 = vsel %vm553, %v579, %v580
      %v582 = vrot.slane %v474, 1
      %v583 = vsel %vm553, %v580, %v582
      %v584 = vrot.slane %v475, 1
      %v585 = vrot.slane %v476, 1
      %v586 = vsel %vm553, %v584, %v585
      %v587 = vrot.slane %v477, 1
      %v588 = vsel %vm553, %v585, %v587
      %v589 = vrot.slane %v478, 1
      %v590 = vrot.slane %v479, 1
      %v591 = vsel %vm553, %v589, %v590
      %v592 = vrot.slane %v480, 1
      %v593 = vsel %vm553, %v590, %v592
      %v594 = vrot.slane %v481, 1
      %v595 = vrot.slane %v482, 1
      %v596 = vsel %vm553, %v594, %v595
      %v597 = vrot.slane %v483, 1
      %v598 = vsel %vm553, %v595, %v597
      %v599 = vrot.slane %v484, 1
      %v600 = vrot.slane %v485, 1
      %v601 = vsel %vm553, %v599, %v600
      %v602 = vrot.slane %v486, 1
      %v603 = vsel %vm553, %v600, %v602
      %v604 = vrot.slane %v487, 1
      %v605 = vrot.slane %v488, 1
      %v606 = vsel %vm553, %v604, %v605
      %v607 = vrot.slane %v489, 1
      %v608 = vsel %vm553, %v605, %v607
      %v609 = vrot.slane %v490, 1
      %v610 = vrot.slane %v491, 1
      %v611 = vsel %vm553, %v609, %v610
      %v612 = vrot.slane %v492, 1
      %v613 = vsel %vm553, %v610, %v612
      %v614 = vrot.slane %v493, 1
      %v615 = vrot.slane %v494, 1
      %v616 = vsel %vm553, %v614, %v615
      %v617 = vrot.slane %v495, 1
      %v618 = vsel %vm553, %v615, %v617
      %v619 = vrot.slane %v496, 1
      %v620 = vrot.slane %v497, 1
      %v621 = vsel %vm553, %v619, %v620
      %v622 = vrot.slane %v498, 1
      %v623 = vsel %vm553, %v620, %v622
      %v624 = vrot.slane %v499, 1
      %v625 = vrot.slane %v500, 1
      %v626 = vsel %vm553, %v624, %v625
      %v627 = vrot.slane %v501, 1
      %v628 = vsel %vm553, %v625, %v627
      %v629 = vrot.slane %v502, 1
      %v630 = vrot.slane %v503, 1
      %v631 = vsel %vm553, %v629, %v630
      %v632 = vrot.slane %v504, 1
      %v633 = vsel %vm553, %v630, %v632
      %v666 = vadd.f32 %v421, %v556
      %v667 = vadd.f32 %v422, %v558
      %v668 = vadd.f32 %v423, %v561
      %v669 = vadd.f32 %v424, %v563
      %v670 = vadd.f32 %v425, %v566
      %v671 = vadd.f32 %v426, %v568
      %v672 = vadd.f32 %v427, %v571
      %v673 = vadd.f32 %v428, %v573
      %v674 = vadd.f32 %v429, %v576
      %v675 = vadd.f32 %v430, %v578
      %v676 = vadd.f32 %v431, %v581
      %v677 = vadd.f32 %v432, %v583
      %v678 = vadd.f32 %v433, %v586
      %v679 = vadd.f32 %v434, %v588
      %v680 = vadd.f32 %v435, %v591
      %v681 = vadd.f32 %v436, %v593
      %v682 = vadd.f32 %v437, %v596
      %v683 = vadd.f32 %v438, %v598
      %v684 = vadd.f32 %v439, %v601
      %v685 = vadd.f32 %v440, %v603
      %v686 = vadd.f32 %v441, %v606
      %v687 = vadd.f32 %v442, %v608
      %v688 = vadd.f32 %v443, %v611
      %v689 = vadd.f32 %v444, %v613
      %v690 = vadd.f32 %v445, %v616
      %v691 = vadd.f32 %v446, %v618
      %v692 = vadd.f32 %v447, %v621
      %v693 = vadd.f32 %v448, %v623
      %v694 = vadd.f32 %v449, %v626
      %v695 = vadd.f32 %v450, %v628
      %v696 = vadd.f32 %v451, %v631
      %v697 = vadd.f32 %v452, %v633
      %v698 = vlaneseq
      %v699 = vshrl.u32 %v698, 7
      %v700 = vsub.s32 2, %v699
      %v701 = vrot.slane %v415, %v700
      %v702 = vmul.f32 %v361, %v701
      %v703 = vmul.f32 %v362, %v701
      %v704 = vmul.f32 %v363, %v701
      %v705 = vmul.f32 %v364, %v701
      %v706 = vmul.f32 %v365, %v701
      %v707 = vmul.f32 %v366, %v701
      %v708 = vmul.f32 %v367, %v701
      %v709 = vmul.f32 %v368, %v701
      %v710 = vmul.f32 %v369, %v701
      %v711 = vmul.f32 %v370, %v701
      %v712 = vmul.f32 %v371, %v701
      %v713 = vmul.f32 %v372, %v701
      %v714 = vmul.f32 %v373, %v701
      %v715 = vmul.f32 %v374, %v701
      %v716 = vmul.f32 %v375, %v701
      %v717 = vmul.f32 %v376, %v701
      %v718 = vmul.f32 %v377, %v701
      %v719 = vmul.f32 %v378, %v701
      %v720 = vmul.f32 %v379, %v701
      %v721 = vmul.f32 %v380, %v701
      %v722 = vmul.f32 %v381, %v701
      %v723 = vmul.f32 %v382, %v701
      %v724 = vmul.f32 %v383, %v701
      %v725 = vmul.f32 %v384, %v701
      %v726 = vmul.f32 %v385, %v701
      %v727 = vmul.f32 %v386, %v701
      %v728 = vmul.f32 %v387, %v701
      %v729 = vmul.f32 %v388, %v701
      %v730 = vmul.f32 %v389, %v701
      %v731 = vmul.f32 %v390, %v701
      %v732 = vmul.f32 %v391, %v701
      %v733 = vmul.f32 %v392, %v701
      %v734 = vmul.f32 %v393, %v701
      %v735 = vmul.f32 %v394, %v701
      %v736 = vmul.f32 %v395, %v701
      %v737 = vmul.f32 %v396, %v701
      %v738 = vmul.f32 %v397, %v701
      %v739 = vmul.f32 %v398, %v701
      %v740 = vmul.f32 %v399, %v701
      %v741 = vmul.f32 %v400, %v701
      %v742 = vmul.f32 %v401, %v701
      %v743 = vmul.f32 %v402, %v701
      %v744 = vmul.f32 %v403, %v701
      %v745 = vmul.f32 %v404, %v701
      %v746 = vmul.f32 %v405, %v701
      %v747 = vmul.f32 %v406, %v701
      %v748 = vmul.f32 %v407, %v701
      %v749 = vmul.f32 %v408, %v701
      %vm798 = vcmask 1045504
      %v799 = vrot.slane %v702, 2
      %v800 = vrot.slane %v703, 2
      %v801 = vsel %vm798, %v799, %v800
      %v802 = vrot.slane %v704, 2
      %v803 = vsel %vm798, %v800, %v802
      %v804 = vrot.slane %v705, 2
      %v805 = vrot.slane %v706, 2
      %v806 = vsel %vm798, %v804, %v805
      %v807 = vrot.slane %v707, 2
      %v808 = vsel %vm798, %v805, %v807
      %v809 = vrot.slane %v708, 2
      %v810 = vrot.slane %v709, 2
      %v811 = vsel %vm798, %v809, %v810
      %v812 = vrot.slane %v710, 2
      %v813 = vsel %vm798, %v810, %v812
      %v814 = vrot.slane %v711, 2
      %v815 = vrot.slane %v712, 2
      %v816 = vsel %vm798, %v814, %v815
      %v817 = vrot.slane %v713, 2
      %v818 = vsel %vm798, %v815, %v817
      %v819 = vrot.slane %v714, 2
      %v820 = vrot.slane %v715, 2
      %v821 = vsel %vm798, %v819, %v820
      %v822 = vrot.slane %v716, 2
      %v823 = vsel %vm798, %v820, %v822
      %v824 = vrot.slane %v717, 2
      %v825 = vrot.slane %v718, 2
      %v826 = vsel %vm798, %v824, %v825
      %v827 = vrot.slane %v719, 2
      %v828 = vsel %vm798, %v825, %v827
      %v829 = vrot.slane %v720, 2
      %v830 = vrot.slane %v721, 2
      %v831 = vsel %vm798, %v829, %v830
      %v832 = vrot.slane %v722, 2
      %v833 = vsel %vm798, %v830, %v832
      %v834 = vrot.slane %v723, 2
      %v835 = vrot.slane %v724, 2
      %v836 = vsel %vm798, %v834, %v835
      %v837 = vrot.slane %v725, 2
      %v838 = vsel %vm798, %v835, %v837
      %v839 = vrot.slane %v726, 2
      %v840 = vrot.slane %v727, 2
      %v841 = vsel %vm798, %v839, %v840
      %v842 = vrot.slane %v728, 2
      %v843 = vsel %vm798, %v840, %v842
      %v844 = vrot.slane %v729, 2
      %v845 = vrot.slane %v730, 2
      %v846 = vsel %vm798, %v844, %v845
      %v847 = vrot.slane %v731, 2
      %v848 = vsel %vm798, %v845, %v847
      %v849 = vrot.slane %v732, 2
      %v850 = vrot.slane %v733, 2
      %v851 = vsel %vm798, %v849, %v850
      %v852 = vrot.slane %v734, 2
      %v853 = vsel %vm798, %v850, %v852
      %v854 = vrot.slane %v735, 2
      %v855 = vrot.slane %v736, 2
      %v856 = vsel %vm798, %v854, %v855
      %v857 = vrot.slane %v737, 2
      %v858 = vsel %vm798, %v855, %v857
      %v859 = vrot.slane %v738, 2
      %v860 = vrot.slane %v739, 2
      %v861 = vsel %vm798, %v859, %v860
      %v862 = vrot.slane %v740, 2
      %v863 = vsel %vm798, %v860, %v862
      %v864 = vrot.slane %v741, 2
      %v865 = vrot.slane %v742, 2
      %v866 = vsel %vm798, %v864, %v865
      %v867 = vrot.slane %v743, 2
      %v868 = vsel %vm798, %v865, %v867
      %v869 = vrot.slane %v744, 2
      %v870 = vrot.slane %v745, 2
      %v871 = vsel %vm798, %v869, %v870
      %v872 = vrot.slane %v746, 2
      %v873 = vsel %vm798, %v870, %v872
      %v874 = vrot.slane %v747, 2
      %v875 = vrot.slane %v748, 2
      %v876 = vsel %vm798, %v874, %v875
      %v877 = vrot.slane %v749, 2
      %v878 = vsel %vm798, %v875, %v877
      %v911 = vadd.f32 %v666, %v801
      %v912 = vadd.f32 %v667, %v803
      %v913 = vadd.f32 %v668, %v806
      %v914 = vadd.f32 %v669, %v808
      %v915 = vadd.f32 %v670, %v811
      %v916 = vadd.f32 %v671, %v813
      %v917 = vadd.f32 %v672, %v816
      %v918 = vadd.f32 %v673, %v818
      %v919 = vadd.f32 %v674, %v821
      %v920 = vadd.f32 %v675, %v823
      %v921 = vadd.f32 %v676, %v826
      %v922 = vadd.f32 %v677, %v828
      %v923 = vadd.f32 %v678, %v831
      %v924 = vadd.f32 %v679, %v833
      %v925 = vadd.f32 %v680, %v836
      %v926 = vadd.f32 %v681, %v838
      %v927 = vadd.f32 %v682, %v841
      %v928 = vadd.f32 %v683, %v843
      %v929 = vadd.f32 %v684, %v846
      %v930 = vadd.f32 %v685, %v848
      %v931 = vadd.f32 %v686, %v851
      %v932 = vadd.f32 %v687, %v853
      %v933 = vadd.f32 %v688, %v856
      %v934 = vadd.f32 %v689, %v858
      %v935 = vadd.f32 %v690, %v861
      %v936 = vadd.f32 %v691, %v863
      %v937 = vadd.f32 %v692, %v866
      %v938 = vadd.f32 %v693, %v868
      %v939 = vadd.f32 %v694, %v871
      %v940 = vadd.f32 %v695, %v873
      %v941 = vadd.f32 %v696, %v876
      %v942 = vadd.f32 %v697, %v878
      %v943 = vlaneseq
      %v944 = vshrl.u32 %v943, 7
      %v945 = vsub.s32 3, %v944
      %v946 = vrot.slane %v415, %v945
      %v947 = vmul.f32 %v364, %v946
      %v948 = vmul.f32 %v365, %v946
      %v949 = vmul.f32 %v367, %v946
      %v950 = vmul.f32 %v368, %v946
      %v951 = vmul.f32 %v370, %v946
      %v952 = vmul.f32 %v371, %v946
      %v953 = vmul.f32 %v373, %v946
      %v954 = vmul.f32 %v374, %v946
      %v955 = vmul.f32 %v376, %v946
      %v956 = vmul.f32 %v377, %v946
      %v957 = vmul.f32 %v379, %v946
      %v958 = vmul.f32 %v380, %v946
      %v959 = vmul.f32 %v382, %v946
      %v960 = vmul.f32 %v383, %v946
      %v961 = vmul.f32 %v385, %v946
      %v962 = vmul.f32 %v386, %v946
      %v963 = vmul.f32 %v388, %v946
      %v964 = vmul.f32 %v389, %v946
      %v965 = vmul.f32 %v391, %v946
      %v966 = vmul.f32 %v392, %v946
      %v967 = vmul.f32 %v394, %v946
      %v968 = vmul.f32 %v395, %v946
      %v969 = vmul.f32 %v397, %v946
      %v970 = vmul.f32 %v398, %v946
      %v971 = vmul.f32 %v400, %v946
      %v972 = vmul.f32 %v401, %v946
      %v973 = vmul.f32 %v403, %v946
      %v974 = vmul.f32 %v404, %v946
      %v975 = vmul.f32 %v406, %v946
      %v976 = vmul.f32 %v407, %v946
      %v977 = vmul.f32 %v409, %v946
      %v978 = vmul.f32 %v410, %v946
      %v979 = vadd.f32 %v911, %v947
      %v980 = vadd.f32 %v912, %v948
      %v981 = vadd.f32 %v913, %v949
      %v982 = vadd.f32 %v914, %v950
      %v983 = vadd.f32 %v915, %v951
      %v984 = vadd.f32 %v916, %v952
      %v985 = vadd.f32 %v917, %v953
      %v986 = vadd.f32 %v918, %v954
      %v987 = vadd.f32 %v919, %v955
      %v988 = vadd.f32 %v920, %v956
      %v989 = vadd.f32 %v921, %v957
      %v990 = vadd.f32 %v922, %v958
      %v991 = vadd.f32 %v923, %v959
      %v992 = vadd.f32 %v924, %v960
      %v993 = vadd.f32 %v925, %v961
      %v994 = vadd.f32 %v926, %v962
      %v995 = vadd.f32 %v927, %v963
      %v996 = vadd.f32 %v928, %v964
      %v997 = vadd.f32 %v929, %v965
      %v998 = vadd.f32 %v930, %v966
      %v999 = vadd.f32 %v931, %v967
      %v1000 = vadd.f32 %v932, %v968
      %v1001 = vadd.f32 %v933, %v969
      %v1002 = vadd.f32 %v934, %v970
      %v1003 = vadd.f32 %v935, %v971
      %v1004 = vadd.f32 %v936, %v972
      %v1005 = vadd.f32 %v937, %v973
      %v1006 = vadd.f32 %v938, %v974
      %v1007 = vadd.f32 %v939, %v975
      %v1008 = vadd.f32 %v940, %v976
      %v1009 = vadd.f32 %v941, %v977
      %v1010 = vadd.f32 %v942, %v978
      %v1011 = vlaneseq
      %v1012 = vshrl.u32 %v1011, 7
      %v1013 = vsub.s32 4, %v1012
      %v1014 = vrot.slane %v415, %v1013
      %v1015 = vmul.f32 %v364, %v1014
      %v1016 = vmul.f32 %v365, %v1014
      %v1017 = vmul.f32 %v366, %v1014
      %v1018 = vmul.f32 %v367, %v1014
      %v1019 = vmul.f32 %v368, %v1014
      %v1020 = vmul.f32 %v369, %v1014
      %v1021 = vmul.f32 %v370, %v1014
      %v1022 = vmul.f32 %v371, %v1014
      %v1023 = vmul.f32 %v372, %v1014
      %v1024 = vmul.f32 %v373, %v1014
      %v1025 = vmul.f32 %v374, %v1014
      %v1026 = vmul.f32 %v375, %v1014
      %v1027 = vmul.f32 %v376, %v1014
      %v1028 = vmul.f32 %v377, %v1014
      %v1029 = vmul.f32 %v378, %v1014
      %v1030 = vmul.f32 %v379, %v1014
      %v1031 = vmul.f32 %v380, %v1014
      %v1032 = vmul.f32 %v381, %v1014
      %v1033 = vmul.f32 %v382, %v1014
      %v1034 = vmul.f32 %v383, %v1014
      %v1035 = vmul.f32 %v384, %v1014
      %v1036 = vmul.f32 %v385, %v1014
      %v1037 = vmul.f32 %v386, %v1014
      %v1038 = vmul.f32 %v387, %v1014
      %v1039 = vmul.f32 %v388, %v1014
      %v1040 = vmul.f32 %v389, %v1014
      %v1041 = vmul.f32 %v390, %v1014
      %v1042 = vmul.f32 %v391, %v1014
      %v1043 = vmul.f32 %v392, %v1014
      %v1044 = vmul.f32 %v393, %v1014
      %v1045 = vmul.f32 %v394, %v1014
      %v1046 = vmul.f32 %v395, %v1014
      %v1047 = vmul.f32 %v396, %v1014
      %v1048 = vmul.f32 %v397, %v1014
      %v1049 = vmul.f32 %v398, %v1014
      %v1050 = vmul.f32 %v399, %v1014
      %v1051 = vmul.f32 %v400, %v1014
      %v1052 = vmul.f32 %v401, %v1014
      %v1053 = vmul.f32 %v402, %v1014
      %v1054 = vmul.f32 %v403, %v1014
      %v1055 = vmul.f32 %v404, %v1014
      %v1056 = vmul.f32 %v405, %v1014
      %v1057 = vmul.f32 %v406, %v1014
      %v1058 = vmul.f32 %v407, %v1014
      %v1059 = vmul.f32 %v408, %v1014
      %v1060 = vmul.f32 %v409, %v1014
      %v1061 = vmul.f32 %v410, %v1014
      %v1062 = vmul.f32 %v411, %v1014
      %v1111 = vrot.slane %v1015, 1
      %v1112 = vrot.slane %v1016, 1
      %v1113 = vsel %vm553, %v1111, %v1112
      %v1114 = vrot.slane %v1017, 1
      %v1115 = vsel %vm553, %v1112, %v1114
      %v1116 = vrot.slane %v1018, 1
      %v1117 = vrot.slane %v1019, 1
      %v1118 = vsel %vm553, %v1116, %v1117
      %v1119 = vrot.slane %v1020, 1
      %v1120 = vsel %vm553, %v1117, %v1119
      %v1121 = vrot.slane %v1021, 1
      %v1122 = vrot.slane %v1022, 1
      %v1123 = vsel %vm553, %v1121, %v1122
      %v1124 = vrot.slane %v1023, 1
      %v1125 = vsel %vm553, %v1122, %v1124
      %v1126 = vrot.slane %v1024, 1
      %v1127 = vrot.slane %v1025, 1
      %v1128 = vsel %vm553, %v1126, %v1127
      %v1129 = vrot.slane %v1026, 1
      %v1130 = vsel %vm553, %v1127, %v1129
      %v1131 = vrot.slane %v1027, 1
      %v1132 = vrot.slane %v1028, 1
      %v1133 = vsel %vm553, %v1131, %v1132
      %v1134 = vrot.slane %v1029, 1
      %v1135 = vsel %vm553, %v1132, %v1134
      %v1136 = vrot.slane %v1030, 1
      %v1137 = vrot.slane %v1031, 1
      %v1138 = vsel %vm553, %v1136, %v1137
      %v1139 = vrot.slane %v1032, 1
      %v1140 = vsel %vm553, %v1137, %v1139
      %v1141 = vrot.slane %v1033, 1
      %v1142 = vrot.slane %v1034, 1
      %v1143 = vsel %vm553, %v1141, %v1142
      %v1144 = vrot.slane %v1035, 1
      %v1145 = vsel %vm553, %v1142, %v1144
      %v1146 = vrot.slane %v1036, 1
      %v1147 = vrot.slane %v1037, 1
      %v1148 = vsel %vm553, %v1146, %v1147
      %v1149 = vrot.slane %v1038, 1
      %v1150 = vsel %vm553, %v1147, %v1149
      %v1151 = vrot.slane %v1039, 1
      %v1152 = vrot.slane %v1040, 1
      %v1153 = vsel %vm553, %v1151, %v1152
      %v1154 = vrot.slane %v1041, 1
      %v1155 = vsel %vm553, %v1152, %v1154
      %v1156 = vrot.slane %v1042, 1
      %v1157 = vrot.slane %v1043, 1
      %v1158 = vsel %vm553, %v1156, %v1157
      %v1159 = vrot.slane %v1044, 1
      %v1160 = vsel %vm553, %v1157, %v1159
      %v1161 = vrot.slane %v1045, 1
      %v1162 = vrot.slane %v1046, 1
      %v1163 = vsel %vm553, %v1161, %v1162
      %v1164 = vrot.slane %v1047, 1
      %v1165 = vsel %vm553, %v1162, %v1164
      %v1166 = vrot.slane %v1048, 1
      %v1167 = vrot.slane %v1049, 1
      %v1168 = vsel %vm553, %v1166, %v1167
      %v1169 = vrot.slane %v1050, 1
      %v1170 = vsel %vm553, %v1167, %v1169
      %v1171 = vrot.slane %v1051, 1
      %v1172 = vrot.slane %v1052, 1
      %v1173 = vsel %vm553, %v1171, %v1172
      %v1174 = vrot.slane %v1053, 1
      %v1175 = vsel %vm553, %v1172, %v1174
      %v1176 = vrot.slane %v1054, 1
      %v1177 = vrot.slane %v1055, 1
      %v1178 = vsel %vm553, %v1176, %v1177
      %v1179 = vrot.slane %v1056, 1
      %v1180 = vsel %vm553, %v1177, %v1179
      %v1181 = vrot.slane %v1057, 1
      %v1182 = vrot.slane %v1058, 1
      %v1183 = vsel %vm553, %v1181, %v1182
      %v1184 = vrot.slane %v1059, 1
      %v1185 = vsel %vm553, %v1182, %v1184
      %v1186 = vrot.slane %v1060, 1
      %v1187 = vrot.slane %v1061, 1
      %v1188 = vsel %vm553, %v1186, %v1187
      %v1189 = vrot.slane %v1062, 1
      %v1190 = vsel %vm553, %v1187, %v1189
      %v1223 = vadd.f32 %v979, %v1113
      %v1224 = vadd.f32 %v980, %v1115
      %v1225 = vadd.f32 %v981, %v1118
      %v1226 = vadd.f32 %v982, %v1120
      %v1227 = vadd.f32 %v983, %v1123
      %v1228 = vadd.f32 %v984, %v1125
      %v1229 = vadd.f32 %v985, %v1128
      %v1230 = vadd.f32 %v986, %v1130
      %v1231 = vadd.f32 %v987, %v1133
      %v1232 = vadd.f32 %v988, %v1135
      %v1233 = vadd.f32 %v989, %v1138
      %v1234 = vadd.f32 %v990, %v1140
      %v1235 = vadd.f32 %v991, %v1143
      %v1236 = vadd.f32 %v992, %v1145
      %v1237 = vadd.f32 %v993, %v1148
      %v1238 = vadd.f32 %v994, %v1150
      %v1239 = vadd.f32 %v995, %v1153
      %v1240 = vadd.f32 %v996, %v1155
      %v1241 = vadd.f32 %v997, %v1158
      %v1242 = vadd.f32 %v998, %v1160
      %v1243 = vadd.f32 %v999, %v1163
      %v1244 = vadd.f32 %v1000, %v1165
      %v1245 = vadd.f32 %v1001, %v1168
      %v1246 = vadd.f32 %v1002, %v1170
      %v1247 = vadd.f32 %v1003, %v1173
      %v1248 = vadd.f32 %v1004, %v1175
      %v1249 = vadd.f32 %v1005, %v1178
      %v1250 = vadd.f32 %v1006, %v1180
      %v1251 = vadd.f32 %v1007, %v1183
      %v1252 = vadd.f32 %v1008, %v1185
      %v1253 = vadd.f32 %v1009, %v1188
      %v1254 = vadd.f32 %v1010, %v1190
      %v1255 = vlaneseq
      %v1256 = vshrl.u32 %v1255, 7
      %v1257 = vsub.s32 5, %v1256
      %v1258 = vrot.slane %v415, %v1257
      %v1259 = vmul.f32 %v364, %v1258
      %v1260 = vmul.f32 %v365, %v1258
      %v1261 = vmul.f32 %v366, %v1258
      %v1262 = vmul.f32 %v367, %v1258
      %v1263 = vmul.f32 %v368, %v1258
      %v1264 = vmul.f32 %v369, %v1258
      %v1265 = vmul.f32 %v370, %v1258
      %v1266 = vmul.f32 %v371, %v1258
      %v1267 = vmul.f32 %v372, %v1258
      %v1268 = vmul.f32 %v373, %v1258
      %v1269 = vmul.f32 %v374, %v1258
      %v1270 = vmul.f32 %v375, %v1258
      %v1271 = vmul.f32 %v376, %v1258
      %v1272 = vmul.f32 %v377, %v1258
      %v1273 = vmul.f32 %v378, %v1258
      %v1274 = vmul.f32 %v379, %v1258
      %v1275 = vmul.f32 %v380, %v1258
      %v1276 = vmul.f32 %v381, %v1258
      %v1277 = vmul.f32 %v382, %v1258
      %v1278 = vmul.f32 %v383, %v1258
      %v1279 = vmul.f32 %v384, %v1258
      %v1280 = vmul.f32 %v385, %v1258
      %v1281 = vmul.f32 %v386, %v1258
      %v1282 = vmul.f32 %v387, %v1258
      %v1283 = vmul.f32 %v388, %v1258
      %v1284 = vmul.f32 %v389, %v1258
      %v1285 = vmul.f32 %v390, %v1258
      %v1286 = vmul.f32 %v391, %v1258
      %v1287 = vmul.f32 %v392, %v1258
      %v1288 = vmul.f32 %v393, %v1258
      %v1289 = vmul.f32 %v394, %v1258
      %v1290 = vmul.f32 %v395, %v1258
      %v1291 = vmul.f32 %v396, %v1258
      %v1292 = vmul.f32 %v397, %v1258
      %v1293 = vmul.f32 %v398, %v1258
      %v1294 = vmul.f32 %v399, %v1258
      %v1295 = vmul.f32 %v400, %v1258
      %v1296 = vmul.f32 %v401, %v1258
      %v1297 = vmul.f32 %v402, %v1258
      %v1298 = vmul.f32 %v403, %v1258
      %v1299 = vmul.f32 %v404, %v1258
      %v1300 = vmul.f32 %v405, %v1258
      %v1301 = vmul.f32 %v406, %v1258
      %v1302 = vmul.f32 %v407, %v1258
      %v1303 = vmul.f32 %v408, %v1258
      %v1304 = vmul.f32 %v409, %v1258
      %v1305 = vmul.f32 %v410, %v1258
      %v1306 = vmul.f32 %v411, %v1258
      %v1355 = vrot.slane %v1259, 2
      %v1356 = vrot.slane %v1260, 2
      %v1357 = vsel %vm798, %v1355, %v1356
      %v1358 = vrot.slane %v1261, 2
      %v1359 = vsel %vm798, %v1356, %v1358
      %v1360 = vrot.slane %v1262, 2
      %v1361 = vrot.slane %v1263, 2
      %v1362 = vsel %vm798, %v1360, %v1361
      %v1363 = vrot.slane %v1264, 2
      %v1364 = vsel %vm798, %v1361, %v1363
      %v1365 = vrot.slane %v1265, 2
      %v1366 = vrot.slane %v1266, 2
      %v1367 = vsel %vm798, %v1365, %v1366
      %v1368 = vrot.slane %v1267, 2
      %v1369 = vsel %vm798, %v1366, %v1368
      %v1370 = vrot.slane %v1268, 2
      %v1371 = vrot.slane %v1269, 2
      %v1372 = vsel %vm798, %v1370, %v1371
      %v1373 = vrot.slane %v1270, 2
      %v1374 = vsel %vm798, %v1371, %v1373
      %v1375 = vrot.slane %v1271, 2
      %v1376 = vrot.slane %v1272, 2
      %v1377 = vsel %vm798, %v1375, %v1376
      %v1378 = vrot.slane %v1273, 2
      %v1379 = vsel %vm798, %v1376, %v1378
      %v1380 = vrot.slane %v1274, 2
      %v1381 = vrot.slane %v1275, 2
      %v1382 = vsel %vm798, %v1380, %v1381
      %v1383 = vrot.slane %v1276, 2
      %v1384 = vsel %vm798, %v1381, %v1383
      %v1385 = vrot.slane %v1277, 2
      %v1386 = vrot.slane %v1278, 2
      %v1387 = vsel %vm798, %v1385, %v1386
      %v1388 = vrot.slane %v1279, 2
      %v1389 = vsel %vm798, %v1386, %v1388
      %v1390 = vrot.slane %v1280, 2
      %v1391 = vrot.slane %v1281, 2
      %v1392 = vsel %vm798, %v1390, %v1391
      %v1393 = vrot.slane %v1282, 2
      %v1394 = vsel %vm798, %v1391, %v1393
      %v1395 = vrot.slane %v1283, 2
      %v1396 = vrot.slane %v1284, 2
      %v1397 = vsel %vm798, %v1395, %v1396
      %v1398 = vrot.slane %v1285, 2
      %v1399 = vsel %vm798, %v1396, %v1398
      %v1400 = vrot.slane %v1286, 2
      %v1401 = vrot.slane %v1287, 2
      %v1402 = vsel %vm798, %v1400, %v1401
      %v1403 = vrot.slane %v1288, 2
      %v1404 = vsel %vm798, %v1401, %v1403
      %v1405 = vrot.slane %v1289, 2
      %v1406 = vrot.slane %v1290, 2
      %v1407 = vsel %vm798, %v1405, %v1406
      %v1408 = vrot.slane %v1291, 2
      %v1409 = vsel %vm798, %v1406, %v1408
      %v1410 = vrot.slane %v1292, 2
      %v1411 = vrot.slane %v1293, 2
      %v1412 = vsel %vm798, %v1410, %v1411
      %v1413 = vrot.slane %v1294, 2
      %v1414 = vsel %vm798, %v1411, %v1413
      %v1415 = vrot.slane %v1295, 2
      %v1416 = vrot.slane %v1296, 2
      %v1417 = vsel %vm798, %v1415, %v1416
      %v1418 = vrot.slane %v1297, 2
      %v1419 = vsel %vm798, %v1416, %v1418
      %v1420 = vrot.slane %v1298, 2
      %v1421 = vrot.slane %v1299, 2
      %v1422 = vsel %vm798, %v1420, %v1421
      %v1423 = vrot.slane %v1300, 2
      %v1424 = vsel %vm798, %v1421, %v1423
      %v1425 = vrot.slane %v1301, 2
      %v1426 = vrot.slane %v1302, 2
      %v1427 = vsel %vm798, %v1425, %v1426
      %v1428 = vrot.slane %v1303, 2
      %v1429 = vsel %vm798, %v1426, %v1428
      %v1430 = vrot.slane %v1304, 2
      %v1431 = vrot.slane %v1305, 2
      %v1432 = vsel %vm798, %v1430, %v1431
      %v1433 = vrot.slane %v1306, 2
      %v1434 = vsel %vm798, %v1431, %v1433
      %v1467 = vadd.f32 %v1223, %v1357
      %v1468 = vadd.f32 %v1224, %v1359
      %v1469 = vadd.f32 %v1225, %v1362
      %v1470 = vadd.f32 %v1226, %v1364
      %v1471 = vadd.f32 %v1227, %v1367
      %v1472 = vadd.f32 %v1228, %v1369
      %v1473 = vadd.f32 %v1229, %v1372
      %v1474 = vadd.f32 %v1230, %v1374
      %v1475 = vadd.f32 %v1231, %v1377
      %v1476 = vadd.f32 %v1232, %v1379
      %v1477 = vadd.f32 %v1233, %v1382
      %v1478 = vadd.f32 %v1234, %v1384
      %v1479 = vadd.f32 %v1235, %v1387
      %v1480 = vadd.f32 %v1236, %v1389
      %v1481 = vadd.f32 %v1237, %v1392
      %v1482 = vadd.f32 %v1238, %v1394
      %v1483 = vadd.f32 %v1239, %v1397
      %v1484 = vadd.f32 %v1240, %v1399
      %v1485 = vadd.f32 %v1241, %v1402
      %v1486 = vadd.f32 %v1242, %v1404
      %v1487 = vadd.f32 %v1243, %v1407
      %v1488 = vadd.f32 %v1244, %v1409
      %v1489 = vadd.f32 %v1245, %v1412
      %v1490 = vadd.f32 %v1246, %v1414
      %v1491 = vadd.f32 %v1247, %v1417
      %v1492 = vadd.f32 %v1248, %v1419
      %v1493 = vadd.f32 %v1249, %v1422
      %v1494 = vadd.f32 %v1250, %v1424
      %v1495 = vadd.f32 %v1251, %v1427
      %v1496 = vadd.f32 %v1252, %v1429
      %v1497 = vadd.f32 %v1253, %v1432
      %v1498 = vadd.f32 %v1254, %v1434
      %v1499 = vlaneseq
      %v1500 = vshrl.u32 %v1499, 7
      %v1501 = vsub.s32 6, %v1500
      %v1502 = vrot.slane %v415, %v1501
      %v1503 = vmul.f32 %v367, %v1502
      %v1504 = vmul.f32 %v368, %v1502
      %v1505 = vmul.f32 %v370, %v1502
      %v1506 = vmul.f32 %v371, %v1502
      %v1507 = vmul.f32 %v373, %v1502
      %v1508 = vmul.f32 %v374, %v1502
      %v1509 = vmul.f32 %v376, %v1502
      %v1510 = vmul.f32 %v377, %v1502
      %v1511 = vmul.f32 %v379, %v1502
      %v1512 = vmul.f32 %v380, %v1502
      %v1513 = vmul.f32 %v382, %v1502
      %v1514 = vmul.f32 %v383, %v1502
      %v1515 = vmul.f32 %v385, %v1502
      %v1516 = vmul.f32 %v386, %v1502
      %v1517 = vmul.f32 %v388, %v1502
      %v1518 = vmul.f32 %v389, %v1502
      %v1519 = vmul.f32 %v391, %v1502
      %v1520 = vmul.f32 %v392, %v1502
      %v1521 = vmul.f32 %v394, %v1502
      %v1522 = vmul.f32 %v395, %v1502
      %v1523 = vmul.f32 %v397, %v1502
      %v1524 = vmul.f32 %v398, %v1502
      %v1525 = vmul.f32 %v400, %v1502
      %v1526 = vmul.f32 %v401, %v1502
      %v1527 = vmul.f32 %v403, %v1502
      %v1528 = vmul.f32 %v404, %v1502
      %v1529 = vmul.f32 %v406, %v1502
      %v1530 = vmul.f32 %v407, %v1502
      %v1531 = vmul.f32 %v409, %v1502
      %v1532 = vmul.f32 %v410, %v1502
      %v1533 = vmul.f32 %v412, %v1502
      %v1534 = vmul.f32 %v413, %v1502
      %v1535 = vadd.f32 %v1467, %v1503
      %v1536 = vadd.f32 %v1468, %v1504
      %v1537 = vadd.f32 %v1469, %v1505
      %v1538 = vadd.f32 %v1470, %v1506
      %v1539 = vadd.f32 %v1471, %v1507
      %v1540 = vadd.f32 %v1472, %v1508
      %v1541 = vadd.f32 %v1473, %v1509
      %v1542 = vadd.f32 %v1474, %v1510
      %v1543 = vadd.f32 %v1475, %v1511
      %v1544 = vadd.f32 %v1476, %v1512
      %v1545 = vadd.f32 %v1477, %v1513
      %v1546 = vadd.f32 %v1478, %v1514
      %v1547 = vadd.f32 %v1479, %v1515
      %v1548 = vadd.f32 %v1480, %v1516
      %v1549 = vadd.f32 %v1481, %v1517
      %v1550 = vadd.f32 %v1482, %v1518
      %v1551 = vadd.f32 %v1483, %v1519
      %v1552 = vadd.f32 %v1484, %v1520
      %v1553 = vadd.f32 %v1485, %v1521
      %v1554 = vadd.f32 %v1486, %v1522
      %v1555 = vadd.f32 %v1487, %v1523
      %v1556 = vadd.f32 %v1488, %v1524
      %v1557 = vadd.f32 %v1489, %v1525
      %v1558 = vadd.f32 %v1490, %v1526
      %v1559 = vadd.f32 %v1491, %v1527
      %v1560 = vadd.f32 %v1492, %v1528
      %v1561 = vadd.f32 %v1493, %v1529
      %v1562 = vadd.f32 %v1494, %v1530
      %v1563 = vadd.f32 %v1495, %v1531
      %v1564 = vadd.f32 %v1496, %v1532
      %v1565 = vadd.f32 %v1497, %v1533
      %v1566 = vadd.f32 %v1498, %v1534
      %v1567 = vlaneseq
      %v1568 = vshrl.u32 %v1567, 7
      %v1569 = vsub.s32 7, %v1568
      %v1570 = vrot.slane %v415, %v1569
      %v1571 = vmul.f32 %v367, %v1570
      %v1572 = vmul.f32 %v368, %v1570
      %v1573 = vmul.f32 %v369, %v1570
      %v1574 = vmul.f32 %v370, %v1570
      %v1575 = vmul.f32 %v371, %v1570
      %v1576 = vmul.f32 %v372, %v1570
      %v1577 = vmul.f32 %v373, %v1570
      %v1578 = vmul.f32 %v374, %v1570
      %v1579 = vmul.f32 %v375, %v1570
      %v1580 = vmul.f32 %v376, %v1570
      %v1581 = vmul.f32 %v377, %v1570
      %v1582 = vmul.f32 %v378, %v1570
      %v1583 = vmul.f32 %v379, %v1570
      %v1584 = vmul.f32 %v380, %v1570
      %v1585 = vmul.f32 %v381, %v1570
      %v1586 = vmul.f32 %v382, %v1570
      %v1587 = vmul.f32 %v383, %v1570
      %v1588 = vmul.f32 %v384, %v1570
      %v1589 = vmul.f32 %v385, %v1570
      %v1590 = vmul.f32 %v386, %v1570
      %v1591 = vmul.f32 %v387, %v1570
      %v1592 = vmul.f32 %v388, %v1570
      %v1593 = vmul.f32 %v389, %v1570
      %v1594 = vmul.f32 %v390, %v1570
      %v1595 = vmul.f32 %v391, %v1570
      %v1596 = vmul.f32 %v392, %v1570
      %v1597 = vmul.f32 %v393, %v1570
      %v1598 = vmul.f32 %v394, %v1570
      %v1599 = vmul.f32 %v395, %v1570
      %v1600 = vmul.f32 %v396, %v1570
      %v1601 = vmul.f32 %v397, %v1570
      %v1602 = vmul.f32 %v398, %v1570
      %v1603 = vmul.f32 %v399, %v1570
      %v1604 = vmul.f32 %v400, %v1570
      %v1605 = vmul.f32 %v401, %v1570
      %v1606 = vmul.f32 %v402, %v1570
      %v1607 = vmul.f32 %v403, %v1570
      %v1608 = vmul.f32 %v404, %v1570
      %v1609 = vmul.f32 %v405, %v1570
      %v1610 = vmul.f32 %v406, %v1570
      %v1611 = vmul.f32 %v407, %v1570
      %v1612 = vmul.f32 %v408, %v1570
      %v1613 = vmul.f32 %v409, %v1570
      %v1614 = vmul.f32 %v410, %v1570
      %v1615 = vmul.f32 %v411, %v1570
      %v1616 = vmul.f32 %v412, %v1570
      %v1617 = vmul.f32 %v413, %v1570
      %v1618 = vmul.f32 %v414, %v1570
      %v1667 = vrot.slane %v1571, 1
      %v1668 = vrot.slane %v1572, 1
      %v1669 = vsel %vm553, %v1667, %v1668
      %v1670 = vrot.slane %v1573, 1
      %v1671 = vsel %vm553, %v1668, %v1670
      %v1672 = vrot.slane %v1574, 1
      %v1673 = vrot.slane %v1575, 1
      %v1674 = vsel %vm553, %v1672, %v1673
      %v1675 = vrot.slane %v1576, 1
      %v1676 = vsel %vm553, %v1673, %v1675
      %v1677 = vrot.slane %v1577, 1
      %v1678 = vrot.slane %v1578, 1
      %v1679 = vsel %vm553, %v1677, %v1678
      %v1680 = vrot.slane %v1579, 1
      %v1681 = vsel %vm553, %v1678, %v1680
      %v1682 = vrot.slane %v1580, 1
      %v1683 = vrot.slane %v1581, 1
      %v1684 = vsel %vm553, %v1682, %v1683
      %v1685 = vrot.slane %v1582, 1
      %v1686 = vsel %vm553, %v1683, %v1685
      %v1687 = vrot.slane %v1583, 1
      %v1688 = vrot.slane %v1584, 1
      %v1689 = vsel %vm553, %v1687, %v1688
      %v1690 = vrot.slane %v1585, 1
      %v1691 = vsel %vm553, %v1688, %v1690
      %v1692 = vrot.slane %v1586, 1
      %v1693 = vrot.slane %v1587, 1
      %v1694 = vsel %vm553, %v1692, %v1693
      %v1695 = vrot.slane %v1588, 1
      %v1696 = vsel %vm553, %v1693, %v1695
      %v1697 = vrot.slane %v1589, 1
      %v1698 = vrot.slane %v1590, 1
      %v1699 = vsel %vm553, %v1697, %v1698
      %v1700 = vrot.slane %v1591, 1
      %v1701 = vsel %vm553, %v1698, %v1700
      %v1702 = vrot.slane %v1592, 1
      %v1703 = vrot.slane %v1593, 1
      %v1704 = vsel %vm553, %v1702, %v1703
      %v1705 = vrot.slane %v1594, 1
      %v1706 = vsel %vm553, %v1703, %v1705
      %v1707 = vrot.slane %v1595, 1
      %v1708 = vrot.slane %v1596, 1
      %v1709 = vsel %vm553, %v1707, %v1708
      %v1710 = vrot.slane %v1597, 1
      %v1711 = vsel %vm553, %v1708, %v1710
      %v1712 = vrot.slane %v1598, 1
      %v1713 = vrot.slane %v1599, 1
      %v1714 = vsel %vm553, %v1712, %v1713
      %v1715 = vrot.slane %v1600, 1
      %v1716 = vsel %vm553, %v1713, %v1715
      %v1717 = vrot.slane %v1601, 1
      %v1718 = vrot.slane %v1602, 1
      %v1719 = vsel %vm553, %v1717, %v1718
      %v1720 = vrot.slane %v1603, 1
      %v1721 = vsel %vm553, %v1718, %v1720
      %v1722 = vrot.slane %v1604, 1
      %v1723 = vrot.slane %v1605, 1
      %v1724 = vsel %vm553, %v1722, %v1723
      %v1725 = vrot.slane %v1606, 1
      %v1726 = vsel %vm553, %v1723, %v1725
      %v1727 = vrot.slane %v1607, 1
      %v1728 = vrot.slane %v1608, 1
      %v1729 = vsel %vm553, %v1727, %v1728
      %v1730 = vrot.slane %v1609, 1
      %v1731 = vsel %vm553, %v1728, %v1730
      %v1732 = vrot.slane %v1610, 1
      %v1733 = vrot.slane %v1611, 1
      %v1734 = vsel %vm553, %v1732, %v1733
      %v1735 = vrot.slane %v1612, 1
      %v1736 = vsel %vm553, %v1733, %v1735
      %v1737 = vrot.slane %v1613, 1
      %v1738 = vrot.slane %v1614, 1
      %v1739 = vsel %vm553, %v1737, %v1738
      %v1740 = vrot.slane %v1615, 1
      %v1741 = vsel %vm553, %v1738, %v1740
      %v1742 = vrot.slane %v1616, 1
      %v1743 = vrot.slane %v1617, 1
      %v1744 = vsel %vm553, %v1742, %v1743
      %v1745 = vrot.slane %v1618, 1
      %v1746 = vsel %vm553, %v1743, %v1745
      %v1779 = vadd.f32 %v1535, %v1669
      %v1780 = vadd.f32 %v1536, %v1671
      %v1781 = vadd.f32 %v1537, %v1674
      %v1782 = vadd.f32 %v1538, %v1676
      %v1783 = vadd.f32 %v1539, %v1679
      %v1784 = vadd.f32 %v1540, %v1681
      %v1785 = vadd.f32 %v1541, %v1684
      %v1786 = vadd.f32 %v1542, %v1686
      %v1787 = vadd.f32 %v1543, %v1689
      %v1788 = vadd.f32 %v1544, %v1691
      %v1789 = vadd.f32 %v1545, %v1694
      %v1790 = vadd.f32 %v1546, %v1696
      %v1791 = vadd.f32 %v1547, %v1699
      %v1792 = vadd.f32 %v1548, %v1701
      %v1793 = vadd.f32 %v1549, %v1704
      %v1794 = vadd.f32 %v1550, %v1706
      %v1795 = vadd.f32 %v1551, %v1709
      %v1796 = vadd.f32 %v1552, %v1711
      %v1797 = vadd.f32 %v1553, %v1714
      %v1798 = vadd.f32 %v1554, %v1716
      %v1799 = vadd.f32 %v1555, %v1719
      %v1800 = vadd.f32 %v1556, %v1721
      %v1801 = vadd.f32 %v1557, %v1724
      %v1802 = vadd.f32 %v1558, %v1726
      %v1803 = vadd.f32 %v1559, %v1729
      %v1804 = vadd.f32 %v1560, %v1731
      %v1805 = vadd.f32 %v1561, %v1734
      %v1806 = vadd.f32 %v1562, %v1736
      %v1807 = vadd.f32 %v1563, %v1739
      %v1808 = vadd.f32 %v1564, %v1741
      %v1809 = vadd.f32 %v1565, %v1744
      %v1810 = vadd.f32 %v1566, %v1746
      %v1811 = vlaneseq
      %v1812 = vshrl.u32 %v1811, 7
      %v1813 = vsub.s32 0, %v1812
      %v1814 = vrot.slane %v416, %v1813
      %v1815 = vmul.f32 %v367, %v1814
      %v1816 = vmul.f32 %v368, %v1814
      %v1817 = vmul.f32 %v369, %v1814
      %v1818 = vmul.f32 %v370, %v1814
      %v1819 = vmul.f32 %v371, %v1814
      %v1820 = vmul.f32 %v372, %v1814
      %v1821 = vmul.f32 %v373, %v1814
      %v1822 = vmul.f32 %v374, %v1814
      %v1823 = vmul.f32 %v375, %v1814
      %v1824 = vmul.f32 %v376, %v1814
      %v1825 = vmul.f32 %v377, %v1814
      %v1826 = vmul.f32 %v378, %v1814
      %v1827 = vmul.f32 %v379, %v1814
      %v1828 = vmul.f32 %v380, %v1814
      %v1829 = vmul.f32 %v381, %v1814
      %v1830 = vmul.f32 %v382, %v1814
      %v1831 = vmul.f32 %v383, %v1814
      %v1832 = vmul.f32 %v384, %v1814
      %v1833 = vmul.f32 %v385, %v1814
      %v1834 = vmul.f32 %v386, %v1814
      %v1835 = vmul.f32 %v387, %v1814
      %v1836 = vmul.f32 %v388, %v1814
      %v1837 = vmul.f32 %v389, %v1814
      %v1838 = vmul.f32 %v390, %v1814
      %v1839 = vmul.f32 %v391, %v1814
      %v1840 = vmul.f32 %v392, %v1814
      %v1841 = vmul.f32 %v393, %v1814
      %v1842 = vmul.f32 %v394, %v1814
      %v1843 = vmul.f32 %v395, %v1814
      %v1844 = vmul.f32 %v396, %v1814
      %v1845 = vmul.f32 %v397, %v1814
      %v1846 = vmul.f32 %v398, %v1814
      %v1847 = vmul.f32 %v399, %v1814
      %v1848 = vmul.f32 %v400, %v1814
      %v1849 = vmul.f32 %v401, %v1814
      %v1850 = vmul.f32 %v402, %v1814
      %v1851 = vmul.f32 %v403, %v1814
      %v1852 = vmul.f32 %v404, %v1814
      %v1853 = vmul.f32 %v405, %v1814
      %v1854 = vmul.f32 %v406, %v1814
      %v1855 = vmul.f32 %v407, %v1814
      %v1856 = vmul.f32 %v408, %v1814
      %v1857 = vmul.f32 %v409, %v1814
      %v1858 = vmul.f32 %v410, %v1814
      %v1859 = vmul.f32 %v411, %v1814
      %v1860 = vmul.f32 %v412, %v1814
      %v1861 = vmul.f32 %v413, %v1814
      %v1862 = vmul.f32 %v414, %v1814
      %v1911 = vrot.slane %v1815, 2
      %v1912 = vrot.slane %v1816, 2
      %v1913 = vsel %vm798, %v1911, %v1912
      %v1914 = vrot.slane %v1817, 2
      %v1915 = vsel %vm798, %v1912, %v1914
      %v1916 = vrot.slane %v1818, 2
      %v1917 = vrot.slane %v1819, 2
      %v1918 = vsel %vm798, %v1916, %v1917
      %v1919 = vrot.slane %v1820, 2
      %v1920 = vsel %vm798, %v1917, %v1919
      %v1921 = vrot.slane %v1821, 2
      %v1922 = vrot.slane %v1822, 2
      %v1923 = vsel %vm798, %v1921, %v1922
      %v1924 = vrot.slane %v1823, 2
      %v1925 = vsel %vm798, %v1922, %v1924
      %v1926 = vrot.slane %v1824, 2
      %v1927 = vrot.slane %v1825, 2
      %v1928 = vsel %vm798, %v1926, %v1927
      %v1929 = vrot.slane %v1826, 2
      %v1930 = vsel %vm798, %v1927, %v1929
      %v1931 = vrot.slane %v1827, 2
      %v1932 = vrot.slane %v1828, 2
      %v1933 = vsel %vm798, %v1931, %v1932
      %v1934 = vrot.slane %v1829, 2
      %v1935 = vsel %vm798, %v1932, %v1934
      %v1936 = vrot.slane %v1830, 2
      %v1937 = vrot.slane %v1831, 2
      %v1938 = vsel %vm798, %v1936, %v1937
      %v1939 = vrot.slane %v1832, 2
      %v1940 = vsel %vm798, %v1937, %v1939
      %v1941 = vrot.slane %v1833, 2
      %v1942 = vrot.slane %v1834, 2
      %v1943 = vsel %vm798, %v1941, %v1942
      %v1944 = vrot.slane %v1835, 2
      %v1945 = vsel %vm798, %v1942, %v1944
      %v1946 = vrot.slane %v1836, 2
      %v1947 = vrot.slane %v1837, 2
      %v1948 = vsel %vm798, %v1946, %v1947
      %v1949 = vrot.slane %v1838, 2
      %v1950 = vsel %vm798, %v1947, %v1949
      %v1951 = vrot.slane %v1839, 2
      %v1952 = vrot.slane %v1840, 2
      %v1953 = vsel %vm798, %v1951, %v1952
      %v1954 = vrot.slane %v1841, 2
      %v1955 = vsel %vm798, %v1952, %v1954
      %v1956 = vrot.slane %v1842, 2
      %v1957 = vrot.slane %v1843, 2
      %v1958 = vsel %vm798, %v1956, %v1957
      %v1959 = vrot.slane %v1844, 2
      %v1960 = vsel %vm798, %v1957, %v1959
      %v1961 = vrot.slane %v1845, 2
      %v1962 = vrot.slane %v1846, 2
      %v1963 = vsel %vm798, %v1961, %v1962
      %v1964 = vrot.slane %v1847, 2
      %v1965 = vsel %vm798, %v1962, %v1964
      %v1966 = vrot.slane %v1848, 2
      %v1967 = vrot.slane %v1849, 2
      %v1968 = vsel %vm798, %v1966, %v1967
      %v1969 = vrot.slane %v1850, 2
      %v1970 = vsel %vm798, %v1967, %v1969
      %v1971 = vrot.slane %v1851, 2
      %v1972 = vrot.slane %v1852, 2
      %v1973 = vsel %vm798, %v1971, %v1972
      %v1974 = vrot.slane %v1853, 2
      %v1975 = vsel %vm798, %v1972, %v1974
      %v1976 = vrot.slane %v1854, 2
      %v1977 = vrot.slane %v1855, 2
      %v1978 = vsel %vm798, %v1976, %v1977
      %v1979 = vrot.slane %v1856, 2
      %v1980 = vsel %vm798, %v1977, %v1979
      %v1981 = vrot.slane %v1857, 2
      %v1982 = vrot.slane %v1858, 2
      %v1983 = vsel %vm798, %v1981, %v1982
      %v1984 = vrot.slane %v1859, 2
      %v1985 = vsel %vm798, %v1982, %v1984
      %v1986 = vrot.slane %v1860, 2
      %v1987 = vrot.slane %v1861, 2
      %v1988 = vsel %vm798, %v1986, %v1987
      %v1989 = vrot.slane %v1862, 2
      %v1990 = vsel %vm798, %v1987, %v1989
      %v2023 = vadd.f32 %v1779, %v1913
      %v2024 = vadd.f32 %v1780, %v1915
      %v2025 = vadd.f32 %v1781, %v1918
      %v2026 = vadd.f32 %v1782, %v1920
      %v2027 = vadd.f32 %v1783, %v1923
      %v2028 = vadd.f32 %v1784, %v1925
      %v2029 = vadd.f32 %v1785, %v1928
      %v2030 = vadd.f32 %v1786, %v1930
      %v2031 = vadd.f32 %v1787, %v1933
      %v2032 = vadd.f32 %v1788, %v1935
      %v2033 = vadd.f32 %v1789, %v1938
      %v2034 = vadd.f32 %v1790, %v1940
      %v2035 = vadd.f32 %v1791, %v1943
      %v2036 = vadd.f32 %v1792, %v1945
      %v2037 = vadd.f32 %v1793, %v1948
      %v2038 = vadd.f32 %v1794, %v1950
      %v2039 = vadd.f32 %v1795, %v1953
      %v2040 = vadd.f32 %v1796, %v1955
      %v2041 = vadd.f32 %v1797, %v1958
      %v2042 = vadd.f32 %v1798, %v1960
      %v2043 = vadd.f32 %v1799, %v1963
      %v2044 = vadd.f32 %v1800, %v1965
      %v2045 = vadd.f32 %v1801, %v1968
      %v2046 = vadd.f32 %v1802, %v1970
      %v2047 = vadd.f32 %v1803, %v1973
      %v2048 = vadd.f32 %v1804, %v1975
      %v2049 = vadd.f32 %v1805, %v1978
      %v2050 = vadd.f32 %v1806, %v1980
      %v2051 = vadd.f32 %v1807, %v1983
      %v2052 = vadd.f32 %v1808, %v1985
      %v2053 = vadd.f32 %v1809, %v1988
      %v2054 = vadd.f32 %v1810, %v1990
      %v2055 = vld [vmem:[%s4] sm:$0xff]
      %v2056 = vld [vmem:[%s4 + $0x8] sm:$0xff]
      %v2057 = vld [vmem:[%s4 + $0x10] sm:$0xff]
      %v2058 = vld [vmem:[%s4 + $0x18] sm:$0xff]
      %v2059 = vld [vmem:[%s4 + $0x20] sm:$0xff]
      %v2060 = vld [vmem:[%s4 + $0x28] sm:$0xff]
      %v2061 = vld [vmem:[%s4 + $0x30] sm:$0xff]
      %v2062 = vld [vmem:[%s4 + $0x38] sm:$0xff]
      %v2063 = vld [vmem:[%s4 + $0x40] sm:$0xff]
      %v2064 = vld [vmem:[%s4 + $0x48] sm:$0xff]
      %v2065 = vld [vmem:[%s4 + $0x50] sm:$0xff]
      %v2066 = vld [vmem:[%s4 + $0x58] sm:$0xff]
      %v2067 = vld [vmem:[%s4 + $0x60] sm:$0xff]
      %v2068 = vld [vmem:[%s4 + $0x68] sm:$0xff]
      %v2069 = vld [vmem:[%s4 + $0x70] sm:$0xff]
      %v2070 = vld [vmem:[%s4 + $0x78] sm:$0xff]
      %2071 = vmatprep.subr.mxu0 0.0
      %2072 = vmatpush1.msra.mxu0 %v2023
      %2073 = vmatprep.subr.mxu0 0.0
      %2074 = vmatpush1.msra.mxu0 %v2024
      %2075 = vmatprep.subr.mxu0 0.0
      %2076 = vmatpush1.msra.mxu0 %v2025
      %2077 = vmatprep.subr.mxu0 0.0
      %2078 = vmatpush1.msra.mxu0 %v2026
      %2079 = vmatprep.subr.mxu0 0.0
      %2080 = vmatpush1.msra.mxu0 %v2027
      %2081 = vmatprep.subr.mxu0 0.0
      %2082 = vmatpush1.msra.mxu0 %v2028
      %2083 = vmatprep.subr.mxu0 0.0
      %2084 = vmatpush1.msra.mxu0 %v2029
      %2085 = vmatprep.subr.mxu0 0.0
      %2086 = vmatpush1.msra.mxu0 %v2030
      %2087 = vmatprep.subr.mxu0 0.0
      %2088 = vmatpush1.msra.mxu0 %v2031
      %2089 = vmatprep.subr.mxu0 0.0
      %2090 = vmatpush1.msra.mxu0 %v2032
      %2091 = vmatprep.subr.mxu0 0.0
      %2092 = vmatpush1.msra.mxu0 %v2033
      %2093 = vmatprep.subr.mxu0 0.0
      %2094 = vmatpush1.msra.mxu0 %v2034
      %2095 = vmatprep.subr.mxu0 0.0
      %2096 = vmatpush1.msra.mxu0 %v2035
      %2097 = vmatprep.subr.mxu0 0.0
      %2098 = vmatpush1.msra.mxu0 %v2036
      %2099 = vmatprep.subr.mxu0 0.0
      %2100 = vmatpush1.msra.mxu0 %v2037
      %2101 = vmatprep.subr.mxu0 0.0
      %2102 = vmatpush1.msra.mxu0 %v2038
      %2103 = vmatprep.subr.mxu0 0.0
      %2104 = vmatpush1.msra.mxu0 %v2039
      %2105 = vmatprep.subr.mxu0 0.0
      %2106 = vmatpush1.msra.mxu0 %v2040
      %2107 = vmatprep.subr.mxu0 0.0
      %2108 = vmatpush1.msra.mxu0 %v2041
      %2109 = vmatprep.subr.mxu0 0.0
      %2110 = vmatpush1.msra.mxu0 %v2042
      %2111 = vmatprep.subr.mxu0 0.0
      %2112 = vmatpush1.msra.mxu0 %v2043
      %2113 = vmatprep.subr.mxu0 0.0
      %2114 = vmatpush1.msra.mxu0 %v2044
      %2115 = vmatprep.subr.mxu0 0.0
      %2116 = vmatpush1.msra.mxu0 %v2045
      %2117 = vmatprep.subr.mxu0 0.0
      %2118 = vmatpush1.msra.mxu0 %v2046
      %2119 = vmatprep.subr.mxu0 0.0
      %2120 = vmatpush1.msra.mxu0 %v2047
      %2121 = vmatprep.subr.mxu0 0.0
      %2122 = vmatpush1.msra.mxu0 %v2048
      %2123 = vmatprep.subr.mxu0 0.0
      %2124 = vmatpush1.msra.mxu0 %v2049
      %2125 = vmatprep.subr.mxu0 0.0
      %2126 = vmatpush1.msra.mxu0 %v2050
      %2127 = vmatprep.subr.mxu0 0.0
      %2128 = vmatpush1.msra.mxu0 %v2051
      %2129 = vmatprep.subr.mxu0 0.0
      %2130 = vmatpush1.msra.mxu0 %v2052
      %2131 = vmatprep.subr.mxu0 0.0
      %2132 = vmatpush1.msra.mxu0 %v2053
      %2133 = vmatprep.subr.mxu0 0.0
      %2134 = vmatpush1.msra.mxu0 %v2054
      %2135 = vmatprep.mubr.f32.mxu0 %v2056
      %2136 = vmatmul.mubr.f32.gmra.mrb[0].mxu0 %v2055
      %v2137 = vpop.f32.mrb[0].mxu0
      %v2138 = vadd.f32 0.0, %v2137
      %v2139 = vpop.f32.mrb[0].mxu0
      %2140 = vmatprep.mubr.f32.mxu0 %v2058
      %2141 = vmatmul.mubr.f32.gmra.mrb[0].mxu0 %v2057
      %v2142 = vpop.f32.mrb[0].mxu0
      %v2143 = vadd.f32 0.0, %v2142
      %v2144 = vpop.f32.mrb[0].mxu0
      %2145 = vmatprep.mubr.f32.mxu0 %v2060
      %2146 = vmatmul.mubr.f32.gmra.mrb[0].mxu0 %v2059
      %v2147 = vpop.f32.mrb[0].mxu0
      %v2148 = vadd.f32 0.0, %v2147
      %v2149 = vpop.f32.mrb[0].mxu0
      %2150 = vmatprep.mubr.f32.mxu0 %v2062
      %2151 = vmatmul.mubr.f32.gmra.mrb[0].mxu0 %v2061
      %v2152 = vpop.f32.mrb[0].mxu0
      %v2153 = vadd.f32 0.0, %v2152
      %v2154 = vpop.f32.mrb[0].mxu0
      %2155 = vmatprep.mubr.f32.mxu0 %v2064
      %2156 = vmatmul.mubr.f32.gmra.mrb[0].mxu0 %v2063
      %v2157 = vpop.f32.mrb[0].mxu0
      %v2158 = vadd.f32 0.0, %v2157
      %v2159 = vpop.f32.mrb[0].mxu0
      %2160 = vmatprep.mubr.f32.mxu0 %v2066
      %2161 = vmatmul.mubr.f32.gmra.mrb[0].mxu0 %v2065
      %v2162 = vpop.f32.mrb[0].mxu0
      %v2163 = vadd.f32 0.0, %v2162
      %v2164 = vpop.f32.mrb[0].mxu0
      %2165 = vmatprep.mubr.f32.mxu0 %v2068
      %2166 = vmatmul.mubr.f32.gmra.mrb[0].mxu0 %v2067
      %v2167 = vpop.f32.mrb[0].mxu0
      %v2168 = vadd.f32 0.0, %v2167
      %v2169 = vpop.f32.mrb[0].mxu0
      %2170 = vmatprep.mubr.f32.mxu0 %v2070
      %2171 = vmatmul.mubr.f32.gmra.mrb[0].mxu0 %v2069
      %v2172 = vpop.f32.mrb[0].mxu0
      %v2173 = vadd.f32 0.0, %v2172
      %v2174 = vpop.f32.mrb[0].mxu0
      %2175 = vdwg.mxu0
      %v2176 = vld [vmem:[%s2] sm:$0x1]
      %v2178 = vlaneseq
      %v2179 = vshrl.u32 %v2178, 7
      %v2180 = vsub.s32 0, %v2179
      %v2181 = vrot.slane %v2176, %v2180
      %v2183 = vmul.f32 %v2138, %v2181
      %v2184 = vmul.f32 %v2143, %v2181
      %v2185 = vmul.f32 %v2148, %v2181
      %v2186 = vmul.f32 %v2153, %v2181
      %v2187 = vmul.f32 %v2158, %v2181
      %v2188 = vmul.f32 %v2163, %v2181
      %v2189 = vmul.f32 %v2168, %v2181
      %v2190 = vmul.f32 %v2173, %v2181
      %v2191 = vld [vmem:[%s3] sm:$0x1]
      %v2193 = vlaneseq
      %v2194 = vshrl.u32 %v2193, 7
      %v2195 = vsub.s32 0, %v2194
      %v2196 = vrot.slane %v2191, %v2195
      %v2198 = vadd.f32 %v2183, %v2196
      %v2199 = vadd.f32 %v2184, %v2196
      %v2200 = vadd.f32 %v2185, %v2196
      %v2201 = vadd.f32 %v2186, %v2196
      %v2202 = vadd.f32 %v2187, %v2196
      %v2203 = vadd.f32 %v2188, %v2196
      %v2204 = vadd.f32 %v2189, %v2196
      %v2205 = vadd.f32 %v2190, %v2196
      %v2206 = vmax.f32 %v2198, 0.0
      %v2207 = vmax.f32 %v2199, 0.0
      %v2208 = vmax.f32 %v2200, 0.0
      %v2209 = vmax.f32 %v2201, 0.0
      %v2210 = vmax.f32 %v2202, 0.0
      %v2211 = vmax.f32 %v2203, 0.0
      %v2212 = vmax.f32 %v2204, 0.0
      %v2213 = vmax.f32 %v2205, 0.0
      %v2214 = vpack.c.bf16 %v2207, %v2206
      %v2215 = vpack.c.bf16 %v2209, %v2208
      %v2216 = vpack.c.bf16 %v2211, %v2210
      %v2217 = vpack.c.bf16 %v2213, %v2212
      %v2218 = vld [vmem:[%s5] sm:$0xf]
      %v2219 = vld [vmem:[%s5 + $0x4] sm:$0xf]
      %v2220 = vld [vmem:[%s5 + $0x8] sm:$0xf]
      %v2221 = vld [vmem:[%s5 + $0xc] sm:$0xf]
      %v2222 = vld [vmem:[%s5 + $0x10] sm:$0xf]
      %v2223 = vld [vmem:[%s5 + $0x14] sm:$0xf]
      %v2224 = vld [vmem:[%s5 + $0x18] sm:$0xf]
      %v2225 = vld [vmem:[%s5 + $0x1c] sm:$0xf]
      %v2226 = vld [vmem:[%s5 + $0x20] sm:$0xf]
      %v2227 = vld [vmem:[%s5 + $0x24] sm:$0xf]
      %v2228 = vld [vmem:[%s5 + $0x28] sm:$0xf]
      %v2229 = vld [vmem:[%s5 + $0x2c] sm:$0xf]
      %v2230 = vld [vmem:[%s5 + $0x30] sm:$0xf]
      %v2231 = vld [vmem:[%s5 + $0x34] sm:$0xf]
      %v2232 = vld [vmem:[%s5 + $0x38] sm:$0xf]
      %v2233 = vld [vmem:[%s5 + $0x3c] sm:$0xf]
      %v2250 = vunpack.c.l.b16 %v2218
      %v2251 = vunpack.c.l.b16 %v2219
      %v2252 = vunpack.c.l.b16 %v2220
      %v2253 = vunpack.c.l.b16 %v2221
      %v2254 = vunpack.c.l.b16 %v2222
      %v2255 = vunpack.c.l.b16 %v2223
      %v2256 = vunpack.c.l.b16 %v2224
      %v2257 = vunpack.c.l.b16 %v2225
      %v2258 = vunpack.c.l.b16 %v2226
      %v2259 = vunpack.c.l.b16 %v2227
      %v2260 = vunpack.c.l.b16 %v2228
      %v2261 = vunpack.c.l.b16 %v2229
      %v2262 = vunpack.c.l.b16 %v2230
      %v2263 = vunpack.c.l.b16 %v2231
      %v2264 = vunpack.c.l.b16 %v2232
      %v2265 = vunpack.c.l.b16 %v2233
      %v2266 = vpack.c.b16 %v2251, %v2250
      %v2267 = vpack.c.b16 %v2253, %v2252
      %v2268 = vpack.c.b16 %v2255, %v2254
      %v2269 = vpack.c.b16 %v2257, %v2256
      %v2270 = vpack.c.b16 %v2259, %v2258
      %v2271 = vpack.c.b16 %v2261, %v2260
      %v2272 = vpack.c.b16 %v2263, %v2262
      %v2273 = vpack.c.b16 %v2265, %v2264
      %2282 = vmatprep.subr.bf16.mxu0 0
      %2283 = vmatpush1.bf16.msra.mxu0 %v2266
      %2284 = vmatprep.subr.bf16.mxu0 0
      %2285 = vmatpush1.bf16.msra.mxu0 %v2267
      %2286 = vmatprep.subr.bf16.mxu0 0
      %2287 = vmatpush1.bf16.msra.mxu0 %v2268
      %2288 = vmatprep.subr.bf16.mxu0 0
      %2289 = vmatpush1.bf16.msra.mxu0 %v2269
      %2290 = vmatprep.subr.bf16.mxu0 0
      %2291 = vmatpush1.bf16.msra.mxu0 %v2270
      %2292 = vmatprep.subr.bf16.mxu0 0
      %2293 = vmatpush1.bf16.msra.mxu0 %v2271
      %2294 = vmatprep.subr.bf16.mxu0 0
      %2295 = vmatpush1.bf16.msra.mxu0 %v2272
      %2296 = vmatprep.subr.bf16.mxu0 0
      %2297 = vmatpush1.bf16.msra.mxu0 %v2273
      %2298 = vmatprep.subr.bf16.mxu0 0
      %2299 = vmatpush1.bf16.msra.mxu0 0
      %2300 = vmatprep.subr.bf16.mxu0 0
      %2301 = vmatpush1.bf16.msra.mxu0 0
      %2302 = vmatprep.subr.bf16.mxu0 0
      %2303 = vmatpush1.bf16.msra.mxu0 0
      %2304 = vmatprep.subr.bf16.mxu0 0
      %2305 = vmatpush1.bf16.msra.mxu0 0
      %2306 = vmatprep.subr.bf16.mxu0 0
      %2307 = vmatpush1.bf16.msra.mxu0 0
      %2308 = vmatprep.subr.bf16.mxu0 0
      %2309 = vmatpush1.bf16.msra.mxu0 0
      %2310 = vmatprep.subr.bf16.mxu0 0
      %2311 = vmatpush1.bf16.msra.mxu0 0
      %2312 = vmatprep.subr.bf16.mxu0 0
      %2313 = vmatpush1.bf16.msra.mxu0 0
      %2314 = vmatprep.mubr.bf16.mxu0 0
      %2315 = vmatmul.mubr.bf16.gmra.mrb[0].mxu0 %v2214
      %v2316 = vpop.f32.mrb[0].mxu0
      %v2317 = vadd.f32 0.0, %v2316
      %v2318 = vpop.f32.mrb[0].mxu0
      %v2319 = vpop.f32.mrb[0].mxu0
      %v2320 = vadd.f32 0.0, %v2319
      %v2321 = vpop.f32.mrb[0].mxu0
      %2322 = vmatprep.mubr.bf16.mxu0 0
      %2323 = vmatmul.mubr.bf16.gmra.mrb[0].mxu0 %v2215
      %v2324 = vpop.f32.mrb[0].mxu0
      %v2325 = vadd.f32 0.0, %v2324
      %v2326 = vpop.f32.mrb[0].mxu0
      %v2327 = vpop.f32.mrb[0].mxu0
      %v2328 = vadd.f32 0.0, %v2327
      %v2329 = vpop.f32.mrb[0].mxu0
      %2330 = vmatprep.mubr.bf16.mxu0 0
      %2331 = vmatmul.mubr.bf16.gmra.mrb[0].mxu0 %v2216
      %v2332 = vpop.f32.mrb[0].mxu0
      %v2333 = vadd.f32 0.0, %v2332
      %v2334 = vpop.f32.mrb[0].mxu0
      %v2335 = vpop.f32.mrb[0].mxu0
      %v2336 = vadd.f32 0.0, %v2335
      %v2337 = vpop.f32.mrb[0].mxu0
      %2338 = vmatprep.mubr.bf16.mxu0 0
      %2339 = vmatmul.mubr.bf16.gmra.mrb[0].mxu0 %v2217
      %v2340 = vpop.f32.mrb[0].mxu0
      %v2341 = vadd.f32 0.0, %v2340
      %v2342 = vpop.f32.mrb[0].mxu0
      %v2343 = vpop.f32.mrb[0].mxu0
      %v2344 = vadd.f32 0.0, %v2343
      %v2345 = vpop.f32.mrb[0].mxu0
      %2346 = vdwg.mxu0
      %v2347 = vld [vmem:[%s6] sm:$0x1]
      %v2349 = vlaneseq
      %v2350 = vshrl.u32 %v2349, 7
      %v2351 = vsub.s32 0, %v2350
      %v2352 = vrot.slane %v2347, %v2351
      %v2354 = vmul.f32 %v2317, %v2352
      %v2355 = vmul.f32 %v2320, %v2352
      %v2356 = vmul.f32 %v2325, %v2352
      %v2357 = vmul.f32 %v2328, %v2352
      %v2358 = vmul.f32 %v2333, %v2352
      %v2359 = vmul.f32 %v2336, %v2352
      %v2360 = vmul.f32 %v2341, %v2352
      %v2361 = vmul.f32 %v2344, %v2352
      %v2362 = vld [vmem:[%s7] sm:$0x1]
      %v2364 = vlaneseq
      %v2365 = vshrl.u32 %v2364, 7
      %v2366 = vsub.s32 0, %v2365
      %v2367 = vrot.slane %v2362, %v2366
      %v2369 = vadd.f32 %v2354, %v2367
      %v2370 = vadd.f32 %v2355, %v2367
      %v2371 = vadd.f32 %v2356, %v2367
      %v2372 = vadd.f32 %v2357, %v2367
      %v2373 = vadd.f32 %v2358, %v2367
      %v2374 = vadd.f32 %v2359, %v2367
      %v2375 = vadd.f32 %v2360, %v2367
      %v2376 = vadd.f32 %v2361, %v2367
      %v2377 = vmax.f32 %v2369, 0.0
      %v2378 = vmax.f32 %v2370, 0.0
      %v2379 = vmax.f32 %v2371, 0.0
      %v2380 = vmax.f32 %v2372, 0.0
      %v2381 = vmax.f32 %v2373, 0.0
      %v2382 = vmax.f32 %v2374, 0.0
      %v2383 = vmax.f32 %v2375, 0.0
      %v2384 = vmax.f32 %v2376, 0.0
      %v2385 = vpack.c.bf16 %v2378, %v2377
      %v2386 = vpack.c.bf16 %v2380, %v2379
      %v2387 = vpack.c.bf16 %v2382, %v2381
      %v2388 = vpack.c.bf16 %v2384, %v2383
      %v2393 = vunpack.c.l.b16 %v2385
      %v2394 = vunpack.c.h.b16 %v2385
      %v2395 = vunpack.c.l.b16 %v2386
      %v2396 = vunpack.c.h.b16 %v2386
      %v2397 = vunpack.c.l.b16 %v2387
      %v2398 = vunpack.c.h.b16 %v2387
      %v2399 = vunpack.c.l.b16 %v2388
      %v2400 = vunpack.c.h.b16 %v2388
      %v2401 = vpack.c.b16 %v2393, %v2393
      %v2402 = vpack.c.b16 %v2394, %v2394
      %v2403 = vpack.c.b16 %v2395, %v2395
      %v2404 = vpack.c.b16 %v2396, %v2396
      %v2405 = vpack.c.b16 %v2397, %v2397
      %v2406 = vpack.c.b16 %v2398, %v2398
      %v2407 = vpack.c.b16 %v2399, %v2399
      %v2408 = vpack.c.b16 %v2400, %v2400
      %2417 = vst [vmem:[%s305] sm:$0xf] %v2401
      %2418 = vst [vmem:[%s305 + $0x4] sm:$0xf] %v2402
      %2419 = vst [vmem:[%s305 + $0x8] sm:$0xf] %v2403
      %2420 = vst [vmem:[%s305 + $0xc] sm:$0xf] %v2404
      %2421 = vst [vmem:[%s305 + $0x10] sm:$0xf] %v2405
      %2422 = vst [vmem:[%s305 + $0x14] sm:$0xf] %v2406
      %2423 = vst [vmem:[%s305 + $0x18] sm:$0xf] %v2407
      %2424 = vst [vmem:[%s305 + $0x1c] sm:$0xf] %v2408
      %p2425 = scmp.lt.s32.totalorder %s19, 1
      %s2426 = scalar_select %p2425, %s19, 1
      %s2427 = smul.addr %s2426, 8
      %s2428 = smul.addr %s2427, 4
      %s2429 = scalar_lea.vmem %s8, %s2428
      // Predicated region
      $region53: #{_lambda_.8} parent=51 // pred_check
        %p2430 = pneg %p210
      $region54: #{_lambda_.8} parent=51 // pred_check_branch
        %2432 = sbr.rel (%p2430) target = $region56
      $region55: #{_lambda_.8} parent=51 // pred_region
        _
      $region56: #{_lambda_.8} parent=51 // pred_fallthru
        _
    $region52: #{_lambda_.8} parent=5 // pred_fallthru
      _
    %p2433 = scmp.le.s32.totalorder 2, %s14
    // Predicated region
    $region57: #{_lambda_.8} parent=5 // pred_check
      %p2434 = pneg %p2433
    $region58: #{_lambda_.8} parent=5 // pred_check_branch
      %2436 = sbr.rel (%p2434) target = $region60
    $region59: #{_lambda_.8} parent=5 // pred_region
      %s2437 = ssub.s32 %s14, 2
      // Predicated region
      $region61: #{_lambda_.8} parent=59 // pred_check
        %p2438 = pneg %p216
      $region62: #{_lambda_.8} parent=59 // pred_check_branch
        %2440 = sbr.rel (%p2438) target = $region64
      $region63: #{_lambda_.8} parent=59 // pred_region
        %p2441 = scmp.lt.s32.totalorder %s20, 1
        %s2442 = scalar_select %p2441, %s20, 1
        %s2443 = smul.addr %s2442, 8
        %s2444 = smul.addr %s2443, 4
        %s2445 = scalar_lea.vmem %s8, %s2444
      $region64: #{_lambda_.8} parent=59 // pred_fallthru
        _
    $region60: #{_lambda_.8} parent=5 // pred_fallthru
      _
  $region6: #{_lambda_.8} parent=0 // loop_footer
    %s18 = sadd.s32 1, %s14
  $region7: #{_lambda_.8} parent=0 // loop_footer_branch
    %13 = sbr.rel target = $region3
  $region8: #{_lambda_.8} parent=0 // loop_exit
    _

// kernel: _lambda_.7
$region0: #{_lambda_.7}
  #allocation0 [shape = 'u32[]', space=smem, size = 0x4, offset = 0x4, fixed_abs, tag = 'smem constant byte address 0x4 - core index']
  #allocation1 [shape = 'u32[144,128]{1,0:T(1,128)}', space=vmem, size = 0x12000, scoped, tag = 'internal scratch']
  %s0 = inlined_call_operand.vmem [shape: bf16[2,18,18,128], index: 0, kind: input, shape index: {}]
  %s1 = inlined_call_operand.vmem [shape: f32[9,128], index: 1, kind: input, shape index: {}]
  %s2 = inlined_call_operand.vmem [shape: f32[1,128], index: 2, kind: input, shape index: {}, may-alias: {2,5}]
  %s3 = inlined_call_operand.vmem [shape: f32[1,128], index: 3, kind: input, shape index: {}, may-alias: {3,6}]
  %s4 = inlined_call_operand.vmem [shape: bf16[128,128], index: 4, kind: input, shape index: {}]
  %s5 = inlined_call_operand.vmem [shape: f32[1,128], index: 5, kind: input, shape index: {}, may-alias: {2,5}]
  %s6 = inlined_call_operand.vmem [shape: f32[1,128], index: 6, kind: input, shape index: {}, may-alias: {3,6}]
  %s7 = inlined_call_operand.vmem [shape: bf16[2,256,128], index: 7, kind: output, shape index: {}]
  %s8 = sld [smem:[#allocation0]]
  $region61: #{_lambda_.7} parent=0
    _
  %s10 = ssub.s32 1, %s8
  %s11 = scalar_select 0, %s10, %s8
  loop: start=0, step=1, limit=4
  $region2: #{_lambda_.7} parent=0 // loop_pre_header
    _
  $region3: #{_lambda_.7} parent=0 // loop_header
    %s13 = sphi 0, %s17
    %p14 = scmp.ge.s32.totalorder %s13, 4
    %s23 = sphi 0, %s25
    %s26 = sphi 0, %s23
    %s27 = sphi 0, %s26
    %s43 = sphi 0, %s27
    %s47 = sphi 0, %s47
    %s49 = sphi 0, %s47
    %s50 = sphi 0, %s49
    %s64 = sphi 0, %s50
    %s68 = sphi 0, %s68
    %s70 = sphi 0, %s68
    %s71 = sphi 0, %s70
    %s85 = sphi 0, %s71
    %s89 = sphi 0, %s89
    %s91 = sphi 0, %s89
    %s92 = sphi 0, %s91
    %s106 = sphi 0, %s92
    %s110 = sphi 0, %s110
    %s112 = sphi 0, %s110
    %s113 = sphi 0, %s112
    %s127 = sphi 0, %s113
    %s131 = sphi 0, %s131
    %s133 = sphi 0, %s131
    %s134 = sphi 0, %s133
    %s148 = sphi 0, %s134
    %s152 = sphi 0, %s152
    %s154 = sphi 0, %s152
    %s155 = sphi 0, %s154
    %s169 = sphi 0, %s155
    %s175 = sphi 0, %s177
    %s178 = sphi 0, %s175
    %s179 = sphi 0, %s178
    %s195 = sphi 0, %s179
  $region4: #{_lambda_.7} parent=0 // loop_header_branch
    %16 = sbr.rel (%p14) target = $region8
  $region5: #{_lambda_.7} parent=0 // loop_body
    %s18 = ssub.s32 %s13, 1
    %s19 = ssub.s32 %s13, 2
    %s20 = sadd.s32 %s13, 1
    %s21 = ssub.s32 %s13, %s20
    %p22 = scmp.eq.s32.totalorder %s21, 0
    %s24 = sadd.s32 %s23, 1
    %s25 = scalar_select %p22, %s23, %s24
    %p28 = pneg %p22
    %p29 = scmp.eq.s32.totalorder %s13, 1
    %p30 = por %p28, %p29
    %p31 = scmp.ne.s32.totalorder %s23, %s26
    %p32 = scmp.eq.s32.totalorder %s13, 0
    %p33 = por %p31, %p32
    %p34 = scmp.ne.s32.totalorder %s23, %s26
    %p35 = scmp.eq.s32.totalorder %s18, 1
    %p36 = por %p34, %p35
    %p37 = scmp.ne.s32.totalorder %s26, %s27
    %p38 = scmp.eq.s32.totalorder %s18, 0
    %p39 = por %p37, %p38
    %p40 = scmp.ne.s32.totalorder %s26, %s27
    %p41 = scmp.eq.s32.totalorder %s19, 1
    %p42 = por %p40, %p41
    %p44 = scmp.ne.s32.totalorder %s27, %s43
    %p45 = scmp.eq.s32.totalorder %s19, 0
    %p46 = por %p44, %p45
    %s48 = sadd.s32 %s47, 1
    %p51 = scmp.eq.s32.totalorder %s13, 1
    %p52 = scmp.ne.s32.totalorder %s47, %s49
    %p53 = scmp.eq.s32.totalorder %s13, 0
    %p54 = por %p52, %p53
    %p55 = scmp.ne.s32.totalorder %s47, %s49
    %p56 = scmp.eq.s32.totalorder %s18, 1
    %p57 = por %p55, %p56
    %p58 = scmp.ne.s32.totalorder %s49, %s50
    %p59 = scmp.eq.s32.totalorder %s18, 0
    %p60 = por %p58, %p59
    %p61 = scmp.ne.s32.totalorder %s49, %s50
    %p62 = scmp.eq.s32.totalorder %s19, 1
    %p63 = por %p61, %p62
    %p65 = scmp.ne.s32.totalorder %s50, %s64
    %p66 = scmp.eq.s32.totalorder %s19, 0
    %p67 = por %p65, %p66
    %s69 = sadd.s32 %s68, 1
    %p72 = scmp.eq.s32.totalorder %s13, 1
    %p73 = scmp.ne.s32.totalorder %s68, %s70
    %p74 = scmp.eq.s32.totalorder %s13, 0
    %p75 = por %p73, %p74
    %p76 = scmp.ne.s32.totalorder %s68, %s70
    %p77 = scmp.eq.s32.totalorder %s18, 1
    %p78 = por %p76, %p77
    %p79 = scmp.ne.s32.totalorder %s70, %s71
    %p80 = scmp.eq.s32.totalorder %s18, 0
    %p81 = por %p79, %p80
    %p82 = scmp.ne.s32.totalorder %s70, %s71
    %p83 = scmp.eq.s32.totalorder %s19, 1
    %p84 = por %p82, %p83
    %p86 = scmp.ne.s32.totalorder %s71, %s85
    %p87 = scmp.eq.s32.totalorder %s19, 0
    %p88 = por %p86, %p87
    %s90 = sadd.s32 %s89, 1
    %p93 = scmp.eq.s32.totalorder %s13, 1
    %p94 = scmp.ne.s32.totalorder %s89, %s91
    %p95 = scmp.eq.s32.totalorder %s13, 0
    %p96 = por %p94, %p95
    %p97 = scmp.ne.s32.totalorder %s89, %s91
    %p98 = scmp.eq.s32.totalorder %s18, 1
    %p99 = por %p97, %p98
    %p100 = scmp.ne.s32.totalorder %s91, %s92
    %p101 = scmp.eq.s32.totalorder %s18, 0
    %p102 = por %p100, %p101
    %p103 = scmp.ne.s32.totalorder %s91, %s92
    %p104 = scmp.eq.s32.totalorder %s19, 1
    %p105 = por %p103, %p104
    %p107 = scmp.ne.s32.totalorder %s92, %s106
    %p108 = scmp.eq.s32.totalorder %s19, 0
    %p109 = por %p107, %p108
    %s111 = sadd.s32 %s110, 1
    %p114 = scmp.eq.s32.totalorder %s13, 1
    %p115 = scmp.ne.s32.totalorder %s110, %s112
    %p116 = scmp.eq.s32.totalorder %s13, 0
    %p117 = por %p115, %p116
    %p118 = scmp.ne.s32.totalorder %s110, %s112
    %p119 = scmp.eq.s32.totalorder %s18, 1
    %p120 = por %p118, %p119
    %p121 = scmp.ne.s32.totalorder %s112, %s113
    %p122 = scmp.eq.s32.totalorder %s18, 0
    %p123 = por %p121, %p122
    %p124 = scmp.ne.s32.totalorder %s112, %s113
    %p125 = scmp.eq.s32.totalorder %s19, 1
    %p126 = por %p124, %p125
    %p128 = scmp.ne.s32.totalorder %s113, %s127
    %p129 = scmp.eq.s32.totalorder %s19, 0
    %p130 = por %p128, %p129
    %s132 = sadd.s32 %s131, 1
    %p135 = scmp.eq.s32.totalorder %s13, 1
    %p136 = scmp.ne.s32.totalorder %s131, %s133
    %p137 = scmp.eq.s32.totalorder %s13, 0
    %p138 = por %p136, %p137
    %p139 = scmp.ne.s32.totalorder %s131, %s133
    %p140 = scmp.eq.s32.totalorder %s18, 1
    %p141 = por %p139, %p140
    %p142 = scmp.ne.s32.totalorder %s133, %s134
    %p143 = scmp.eq.s32.totalorder %s18, 0
    %p144 = por %p142, %p143
    %p145 = scmp.ne.s32.totalorder %s133, %s134
    %p146 = scmp.eq.s32.totalorder %s19, 1
    %p147 = por %p145, %p146
    %p149 = scmp.ne.s32.totalorder %s134, %s148
    %p150 = scmp.eq.s32.totalorder %s19, 0
    %p151 = por %p149, %p150
    %s153 = sadd.s32 %s152, 1
    %p156 = scmp.eq.s32.totalorder %s13, 1
    %p157 = scmp.ne.s32.totalorder %s152, %s154
    %p158 = scmp.eq.s32.totalorder %s13, 0
    %p159 = por %p157, %p158
    %p160 = scmp.ne.s32.totalorder %s152, %s154
    %p161 = scmp.eq.s32.totalorder %s18, 1
    %p162 = por %p160, %p161
    %p163 = scmp.ne.s32.totalorder %s154, %s155
    %p164 = scmp.eq.s32.totalorder %s18, 0
    %p165 = por %p163, %p164
    %p166 = scmp.ne.s32.totalorder %s154, %s155
    %p167 = scmp.eq.s32.totalorder %s19, 1
    %p168 = por %p166, %p167
    %p170 = scmp.ne.s32.totalorder %s155, %s169
    %p171 = scmp.eq.s32.totalorder %s19, 0
    %p172 = por %p170, %p171
    %s173 = ssub.s32 %s13, %s20
    %p174 = scmp.eq.s32.totalorder %s173, 0
    %s176 = sadd.s32 %s175, 1
    %s177 = scalar_select %p174, %s175, %s176
    %p180 = pneg %p174
    %p181 = scmp.eq.s32.totalorder %s13, 1
    %p182 = por %p180, %p181
    %p183 = scmp.ne.s32.totalorder %s175, %s178
    %p184 = scmp.eq.s32.totalorder %s13, 0
    %p185 = por %p183, %p184
    %p186 = scmp.ne.s32.totalorder %s175, %s178
    %p187 = scmp.eq.s32.totalorder %s18, 1
    %p188 = por %p186, %p187
    %p189 = scmp.ne.s32.totalorder %s178, %s179
    %p190 = scmp.eq.s32.totalorder %s18, 0
    %p191 = por %p189, %p190
    %p192 = scmp.ne.s32.totalorder %s178, %s179
    %p193 = scmp.eq.s32.totalorder %s19, 1
    %p194 = por %p192, %p193
    %p196 = scmp.ne.s32.totalorder %s179, %s195
    %p197 = scmp.eq.s32.totalorder %s19, 0
    %p198 = por %p196, %p197
    %p199 = scmp.le.s32.totalorder 1, %s13
    %p200 = scmp.lt.s32.totalorder %s13, 3
    %p201 = pnand %p199, %p200
    %p202 = pneg %p201
    // Predicated region
    $region9: #{_lambda_.7} parent=5 // pred_check
      _
    $region10: #{_lambda_.7} parent=5 // pred_check_branch
      %204 = sbr.rel (%p201) target = $region12
    $region11: #{_lambda_.7} parent=5 // pred_region
      %s205 = ssub.s32 %s13, 1
      // Predicated region
      $region13: #{_lambda_.7} parent=11 // pred_check
        %p206 = pneg %p60
      $region14: #{_lambda_.7} parent=11 // pred_check_branch
        %208 = sbr.rel (%p206) target = $region16
      $region15: #{_lambda_.7} parent=11 // pred_region
        _
      $region16: #{_lambda_.7} parent=11 // pred_fallthru
        _
      // Predicated region
      $region17: #{_lambda_.7} parent=11 // pred_check
        %p209 = pneg %p81
      $region18: #{_lambda_.7} parent=11 // pred_check_branch
        %211 = sbr.rel (%p209) target = $region20
      $region19: #{_lambda_.7} parent=11 // pred_region
        _
      $region20: #{_lambda_.7} parent=11 // pred_fallthru
        _
      // Predicated region
      $region21: #{_lambda_.7} parent=11 // pred_check
        %p212 = pneg %p102
      $region22: #{_lambda_.7} parent=11 // pred_check_branch
        %214 = sbr.rel (%p212) target = $region24
      $region23: #{_lambda_.7} parent=11 // pred_region
        _
      $region24: #{_lambda_.7} parent=11 // pred_fallthru
        _
      // Predicated region
      $region25: #{_lambda_.7} parent=11 // pred_check
        %p215 = pneg %p123
      $region26: #{_lambda_.7} parent=11 // pred_check_branch
        %217 = sbr.rel (%p215) target = $region28
      $region27: #{_lambda_.7} parent=11 // pred_region
        _
      $region28: #{_lambda_.7} parent=11 // pred_fallthru
        _
      // Predicated region
      $region29: #{_lambda_.7} parent=11 // pred_check
        %p218 = pneg %p144
      $region30: #{_lambda_.7} parent=11 // pred_check_branch
        %220 = sbr.rel (%p218) target = $region32
      $region31: #{_lambda_.7} parent=11 // pred_region
        _
      $region32: #{_lambda_.7} parent=11 // pred_fallthru
        _
      // Predicated region
      $region33: #{_lambda_.7} parent=11 // pred_check
        %p221 = pneg %p165
      $region34: #{_lambda_.7} parent=11 // pred_check_branch
        %223 = sbr.rel (%p221) target = $region36
      $region35: #{_lambda_.7} parent=11 // pred_region
        _
      $region36: #{_lambda_.7} parent=11 // pred_fallthru
        _
    $region12: #{_lambda_.7} parent=5 // pred_fallthru
      _
    %p224 = scmp.lt.s32.totalorder %s13, 2
    // Predicated region
    $region37: #{_lambda_.7} parent=5 // pred_check
      %p225 = pneg %p224
    $region38: #{_lambda_.7} parent=5 // pred_check_branch
      %227 = sbr.rel (%p225) target = $region40
    $region39: #{_lambda_.7} parent=5 // pred_region
      // Predicated region
      $region41: #{_lambda_.7} parent=39 // pred_check
        %p228 = pneg %p33
      $region42: #{_lambda_.7} parent=39 // pred_check_branch
        %230 = sbr.rel (%p228) target = $region44
      $region43: #{_lambda_.7} parent=39 // pred_region
        %p231 = scmp.lt.s32.totalorder %s13, 1
        %s232 = scalar_select %p231, %s13, 1
        %s233 = smul.addr %s232, 54
        %s234 = smul.addr %s233, 4
        %s235 = scalar_lea.vmem %s0, %s234
      $region44: #{_lambda_.7} parent=39 // pred_fallthru
        _
    $region40: #{_lambda_.7} parent=5 // pred_fallthru
      _
    %p236 = scmp.le.s32.totalorder 1, %s13
    %p237 = scmp.lt.s32.totalorder %s13, 3
    %p238 = pnand %p236, %p237
    %p239 = pneg %p238
    // Predicated region
    $region45: #{_lambda_.7} parent=5 // pred_check
      _
    $region46: #{_lambda_.7} parent=5 // pred_check_branch
      %241 = sbr.rel (%p238) target = $region48
    $region47: #{_lambda_.7} parent=5 // pred_region
      %s242 = ssub.s32 %s13, 1
      %p243 = scmp.lt.s32.totalorder %s18, 1
      %s244 = scalar_select %p243, %s18, 1
      %s245 = smul.addr %s244, 54
      %s246 = smul.addr %s245, 4
      %s247 = scalar_lea.vmem %s0, %s246
      %p248 = pneg %p39
      %p249 = pneg %p36
      %p250 = pneg %p60
      %p251 = pneg %p57
      %p252 = pneg %p81
      %p253 = pneg %p78
      %p254 = pneg %p102
      %p255 = pneg %p99
      %p256 = pneg %p123
      %p257 = pneg %p120
      %p258 = pneg %p144
      %p259 = pneg %p141
      %p260 = pneg %p165
      %p261 = pneg %p162
      %p262 = pneg %p191
      %p263 = pneg %p188
      %p264 = scmp.lt.s32.totalorder %s18, 1
      %s265 = scalar_select %p264, %s18, 1
      %s266 = smul.addr %s265, 32
      %s267 = smul.addr %s266, 4
      %s268 = scalar_lea.vmem %s7, %s267
      %p269 = scmp.lt.s32.totalorder %s18, 1
      %s270 = scalar_select %p269, %s18, 1
      %s271 = smul.addr %s270, 54
      %s272 = smul.addr %s271, 4
      %s273 = scalar_lea.vmem %s0, %s272
      %p274 = scmp.lt.s32.totalorder %s18, 1
      %s275 = scalar_select %p274, %s18, 1
      %s276 = smul.addr %s275, 32
      %s277 = smul.addr %s276, 4
      %s278 = scalar_lea.vmem %s7, %s277
      %v280 = vld [vmem:[%s273] sm:$0xf]
      %v281 = vld [vmem:[%s273 + $0x4] sm:$0xf]
      %v282 = vld [vmem:[%s273 + $0x8] sm:$0x1]
      %v283 = vld [vmem:[%s273 + $0xc] sm:$0xf]
      %v284 = vld [vmem:[%s273 + $0x10] sm:$0xf]
      %v285 = vld [vmem:[%s273 + $0x14] sm:$0x1]
      %v286 = vld [vmem:[%s273 + $0x18] sm:$0xf]
      %v287 = vld [vmem:[%s273 + $0x1c] sm:$0xf]
      %v288 = vld [vmem:[%s273 + $0x20] sm:$0x1]
      %v289 = vld [vmem:[%s273 + $0x24] sm:$0xf]
      %v290 = vld [vmem:[%s273 + $0x28] sm:$0xf]
      %v291 = vld [vmem:[%s273 + $0x2c] sm:$0x1]
      %v292 = vld [vmem:[%s273 + $0x30] sm:$0xf]
      %v293 = vld [vmem:[%s273 + $0x34] sm:$0xf]
      %v294 = vld [vmem:[%s273 + $0x38] sm:$0x1]
      %v295 = vld [vmem:[%s273 + $0x3c] sm:$0xf]
      %v296 = vld [vmem:[%s273 + $0x40] sm:$0xf]
      %v297 = vld [vmem:[%s273 + $0x44] sm:$0x1]
      %v298 = vld [vmem:[%s273 + $0x48] sm:$0xf]
      %v299 = vld [vmem:[%s273 + $0x4c] sm:$0xf]
      %v300 = vld [vmem:[%s273 + $0x50] sm:$0x1]
      %v301 = vld [vmem:[%s273 + $0x54] sm:$0xf]
      %v302 = vld [vmem:[%s273 + $0x58] sm:$0xf]
      %v303 = vld [vmem:[%s273 + $0x5c] sm:$0x1]
      %v304 = vld [vmem:[%s273 + $0x60] sm:$0xf]
      %v305 = vld [vmem:[%s273 + $0x64] sm:$0xf]
      %v306 = vld [vmem:[%s273 + $0x68] sm:$0x1]
      %v307 = vld [vmem:[%s273 + $0x6c] sm:$0xf]
      %v308 = vld [vmem:[%s273 + $0x70] sm:$0xf]
      %v309 = vld [vmem:[%s273 + $0x74] sm:$0x1]
      %v310 = vld [vmem:[%s273 + $0x78] sm:$0xf]
      %v311 = vld [vmem:[%s273 + $0x7c] sm:$0xf]
      %v312 = vld [vmem:[%s273 + $0x80] sm:$0x1]
      %v313 = vld [vmem:[%s273 + $0x84] sm:$0xf]
      %v314 = vld [vmem:[%s273 + $0x88] sm:$0xf]
      %v315 = vld [vmem:[%s273 + $0x8c] sm:$0x1]
      %v316 = vld [vmem:[%s273 + $0x90] sm:$0xf]
      %v317 = vld [vmem:[%s273 + $0x94] sm:$0xf]
      %v318 = vld [vmem:[%s273 + $0x98] sm:$0x1]
      %v319 = vld [vmem:[%s273 + $0x9c] sm:$0xf]
      %v320 = vld [vmem:[%s273 + $0xa0] sm:$0xf]
      %v321 = vld [vmem:[%s273 + $0xa4] sm:$0x1]
      %v322 = vld [vmem:[%s273 + $0xa8] sm:$0xf]
      %v323 = vld [vmem:[%s273 + $0xac] sm:$0xf]
      %v324 = vld [vmem:[%s273 + $0xb0] sm:$0x1]
      %v325 = vld [vmem:[%s273 + $0xb4] sm:$0xf]
      %v326 = vld [vmem:[%s273 + $0xb8] sm:$0xf]
      %v327 = vld [vmem:[%s273 + $0xbc] sm:$0x1]
      %v328 = vld [vmem:[%s273 + $0xc0] sm:$0xf]
      %v329 = vld [vmem:[%s273 + $0xc4] sm:$0xf]
      %v330 = vld [vmem:[%s273 + $0xc8] sm:$0x1]
      %v331 = vld [vmem:[%s273 + $0xcc] sm:$0xf]
      %v332 = vld [vmem:[%s273 + $0xd0] sm:$0xf]
      %v333 = vld [vmem:[%s273 + $0xd4] sm:$0x1]
      %v334 = vunpack.c.l.bf16 %v280
      %v335 = vunpack.c.l.bf16 %v281
      %v336 = vunpack.c.l.bf16 %v282
      %v337 = vunpack.c.l.bf16 %v283
      %v338 = vunpack.c.l.bf16 %v284
      %v339 = vunpack.c.l.bf16 %v285
      %v340 = vunpack.c.l.bf16 %v286
      %v341 = vunpack.c.l.bf16 %v287
      %v342 = vunpack.c.l.bf16 %v288
      %v343 = vunpack.c.l.bf16 %v289
      %v344 = vunpack.c.l.bf16 %v290
      %v345 = vunpack.c.l.bf16 %v291
      %v346 = vunpack.c.l.bf16 %v292
      %v347 = vunpack.c.l.bf16 %v293
      %v348 = vunpack.c.l.bf16 %v294
      %v349 = vunpack.c.l.bf16 %v295
      %v350 = vunpack.c.l.bf16 %v296
      %v351 = vunpack.c.l.bf16 %v297
      %v352 = vunpack.c.l.bf16 %v298
      %v353 = vunpack.c.l.bf16 %v299
      %v354 = vunpack.c.l.bf16 %v300
      %v355 = vunpack.c.l.bf16 %v301
      %v356 = vunpack.c.l.bf16 %v302
      %v357 = vunpack.c.l.bf16 %v303
      %v358 = vunpack.c.l.bf16 %v304
      %v359 = vunpack.c.l.bf16 %v305
      %v360 = vunpack.c.l.bf16 %v306
      %v361 = vunpack.c.l.bf16 %v307
      %v362 = vunpack.c.l.bf16 %v308
      %v363 = vunpack.c.l.bf16 %v309
      %v364 = vunpack.c.l.bf16 %v310
      %v365 = vunpack.c.l.bf16 %v311
      %v366 = vunpack.c.l.bf16 %v312
      %v367 = vunpack.c.l.bf16 %v313
      %v368 = vunpack.c.l.bf16 %v314
      %v369 = vunpack.c.l.bf16 %v315
      %v370 = vunpack.c.l.bf16 %v316
      %v371 = vunpack.c.l.bf16 %v317
      %v372 = vunpack.c.l.bf16 %v318
      %v373 = vunpack.c.l.bf16 %v319
      %v374 = vunpack.c.l.bf16 %v320
      %v375 = vunpack.c.l.bf16 %v321
      %v376 = vunpack.c.l.bf16 %v322
      %v377 = vunpack.c.l.bf16 %v323
      %v378 = vunpack.c.l.bf16 %v324
      %v379 = vunpack.c.l.bf16 %v325
      %v380 = vunpack.c.l.bf16 %v326
      %v381 = vunpack.c.l.bf16 %v327
      %v382 = vunpack.c.l.bf16 %v328
      %v383 = vunpack.c.l.bf16 %v329
      %v384 = vunpack.c.l.bf16 %v330
      %v385 = vunpack.c.l.bf16 %v331
      %v386 = vunpack.c.l.bf16 %v332
      %v387 = vunpack.c.l.bf16 %v333
      %v388 = vld [vmem:[%s1] sm:$0xff]
      %v389 = vld [vmem:[%s1 + $0x8] sm:$0x1]
      %v390 = vlaneseq
      %v391 = vshrl.u32 %v390, 7
      %v392 = vsub.s32 0, %v391
      %v393 = vrot.slane %v388, %v392
      %v394 = vmul.f32 %v334, %v393
      %v395 = vmul.f32 %v335, %v393
      %v396 = vmul.f32 %v337, %v393
      %v397 = vmul.f32 %v338, %v393
      %v398 = vmul.f32 %v340, %v393
      %v399 = vmul.f32 %v341, %v393
      %v400 = vmul.f32 %v343, %v393
      %v401 = vmul.f32 %v344, %v393
      %v402 = vmul.f32 %v346, %v393
      %v403 = vmul.f32 %v347, %v393
      %v404 = vmul.f32 %v349, %v393
      %v405 = vmul.f32 %v350, %v393
      %v406 = vmul.f32 %v352, %v393
      %v407 = vmul.f32 %v353, %v393
      %v408 = vmul.f32 %v355, %v393
      %v409 = vmul.f32 %v356, %v393
      %v410 = vmul.f32 %v358, %v393
      %v411 = vmul.f32 %v359, %v393
      %v412 = vmul.f32 %v361, %v393
      %v413 = vmul.f32 %v362, %v393
      %v414 = vmul.f32 %v364, %v393
      %v415 = vmul.f32 %v365, %v393
      %v416 = vmul.f32 %v367, %v393
      %v417 = vmul.f32 %v368, %v393
      %v418 = vmul.f32 %v370, %v393
      %v419 = vmul.f32 %v371, %v393
      %v420 = vmul.f32 %v373, %v393
      %v421 = vmul.f32 %v374, %v393
      %v422 = vmul.f32 %v376, %v393
      %v423 = vmul.f32 %v377, %v393
      %v424 = vmul.f32 %v379, %v393
      %v425 = vmul.f32 %v380, %v393
      %v426 = vlaneseq
      %v427 = vshrl.u32 %v426, 7
      %v428 = vsub.s32 1, %v427
      %v429 = vrot.slane %v388, %v428
      %v430 = vmul.f32 %v334, %v429
      %v431 = vmul.f32 %v335, %v429
      %v432 = vmul.f32 %v336, %v429
      %v433 = vmul.f32 %v337, %v429
      %v434 = vmul.f32 %v338, %v429
      %v435 = vmul.f32 %v339, %v429
      %v436 = vmul.f32 %v340, %v429
      %v437 = vmul.f32 %v341, %v429
      %v438 = vmul.f32 %v342, %v429
      %v439 = vmul.f32 %v343, %v429
      %v440 = vmul.f32 %v344, %v429
      %v441 = vmul.f32 %v345, %v429
      %v442 = vmul.f32 %v346, %v429
      %v443 = vmul.f32 %v347, %v429
      %v444 = vmul.f32 %v348, %v429
      %v445 = vmul.f32 %v349, %v429
      %v446 = vmul.f32 %v350, %v429
      %v447 = vmul.f32 %v351, %v429
      %v448 = vmul.f32 %v352, %v429
      %v449 = vmul.f32 %v353, %v429
      %v450 = vmul.f32 %v354, %v429
      %v451 = vmul.f32 %v355, %v429
      %v452 = vmul.f32 %v356, %v429
      %v453 = vmul.f32 %v357, %v429
      %v454 = vmul.f32 %v358, %v429
      %v455 = vmul.f32 %v359, %v429
      %v456 = vmul.f32 %v360, %v429
      %v457 = vmul.f32 %v361, %v429
      %v458 = vmul.f32 %v362, %v429
      %v459 = vmul.f32 %v363, %v429
      %v460 = vmul.f32 %v364, %v429
      %v461 = vmul.f32 %v365, %v429
      %v462 = vmul.f32 %v366, %v429
      %v463 = vmul.f32 %v367, %v429
      %v464 = vmul.f32 %v368, %v429
      %v465 = vmul.f32 %v369, %v429
      %v466 = vmul.f32 %v370, %v429
      %v467 = vmul.f32 %v371, %v429
      %v468 = vmul.f32 %v372, %v429
      %v469 = vmul.f32 %v373, %v429
      %v470 = vmul.f32 %v374, %v429
      %v471 = vmul.f32 %v375, %v429
      %v472 = vmul.f32 %v376, %v429
      %v473 = vmul.f32 %v377, %v429
      %v474 = vmul.f32 %v378, %v429
      %v475 = vmul.f32 %v379, %v429
      %v476 = vmul.f32 %v380, %v429
      %v477 = vmul.f32 %v381, %v429
      %vm526 = vcmask 1046528
      %v527 = vrot.slane %v430, 1
      %v528 = vrot.slane %v431, 1
      %v529 = vsel %vm526, %v527, %v528
      %v530 = vrot.slane %v432, 1
      %v531 = vsel %vm526, %v528, %v530
      %v532 = vrot.slane %v433, 1
      %v533 = vrot.slane %v434, 1
      %v534 = vsel %vm526, %v532, %v533
      %v535 = vrot.slane %v435, 1
      %v536 = vsel %vm526, %v533, %v535
      %v537 = vrot.slane %v436, 1
      %v538 = vrot.slane %v437, 1
      %v539 = vsel %vm526, %v537, %v538
      %v540 = vrot.slane %v438, 1
      %v541 = vsel %vm526, %v538, %v540
      %v542 = vrot.slane %v439, 1
      %v543 = vrot.slane %v440, 1
      %v544 = vsel %vm526, %v542, %v543
      %v545 = vrot.slane %v441, 1
      %v546 = vsel %vm526, %v543, %v545
      %v547 = vrot.slane %v442, 1
      %v548 = vrot.slane %v443, 1
      %v549 = vsel %vm526, %v547, %v548
      %v550 = vrot.slane %v444, 1
      %v551 = vsel %vm526, %v548, %v550
      %v552 = vrot.slane %v445, 1
      %v553 = vrot.slane %v446, 1
      %v554 = vsel %vm526, %v552, %v553
      %v555 = vrot.slane %v447, 1
      %v556 = vsel %vm526, %v553, %v555
      %v557 = vrot.slane %v448, 1
      %v558 = vrot.slane %v449, 1
      %v559 = vsel %vm526, %v557, %v558
      %v560 = vrot.slane %v450, 1
      %v561 = vsel %vm526, %v558, %v560
      %v562 = vrot.slane %v451, 1
      %v563 = vrot.slane %v452, 1
      %v564 = vsel %vm526, %v562, %v563
      %v565 = vrot.slane %v453, 1
      %v566 = vsel %vm526, %v563, %v565
      %v567 = vrot.slane %v454, 1
      %v568 = vrot.slane %v455, 1
      %v569 = vsel %vm526, %v567, %v568
      %v570 = vrot.slane %v456, 1
      %v571 = vsel %vm526, %v568, %v570
      %v572 = vrot.slane %v457, 1
      %v573 = vrot.slane %v458, 1
      %v574 = vsel %vm526, %v572, %v573
      %v575 = vrot.slane %v459, 1
      %v576 = vsel %vm526, %v573, %v575
      %v577 = vrot.slane %v460, 1
      %v578 = vrot.slane %v461, 1
      %v579 = vsel %vm526, %v577, %v578
      %v580 = vrot.slane %v462, 1
      %v581 = vsel %vm526, %v578, %v580
      %v582 = vrot.slane %v463, 1
      %v583 = vrot.slane %v464, 1
      %v584 = vsel %vm526, %v582, %v583
      %v585 = vrot.slane %v465, 1
      %v586 = vsel %vm526, %v583, %v585
      %v587 = vrot.slane %v466, 1
      %v588 = vrot.slane %v467, 1
      %v589 = vsel %vm526, %v587, %v588
      %v590 = vrot.slane %v468, 1
      %v591 = vsel %vm526, %v588, %v590
      %v592 = vrot.slane %v469, 1
      %v593 = vrot.slane %v470, 1
      %v594 = vsel %vm526, %v592, %v593
      %v595 = vrot.slane %v471, 1
      %v596 = vsel %vm526, %v593, %v595
      %v597 = vrot.slane %v472, 1
      %v598 = vrot.slane %v473, 1
      %v599 = vsel %vm526, %v597, %v598
      %v600 = vrot.slane %v474, 1
      %v601 = vsel %vm526, %v598, %v600
      %v602 = vrot.slane %v475, 1
      %v603 = vrot.slane %v476, 1
      %v604 = vsel %vm526, %v602, %v603
      %v605 = vrot.slane %v477, 1
      %v606 = vsel %vm526, %v603, %v605
      %v639 = vadd.f32 %v394, %v529
      %v640 = vadd.f32 %v395, %v531
      %v641 = vadd.f32 %v396, %v534
      %v642 = vadd.f32 %v397, %v536
      %v643 = vadd.f32 %v398, %v539
      %v644 = vadd.f32 %v399, %v541
      %v645 = vadd.f32 %v400, %v544
      %v646 = vadd.f32 %v401, %v546
      %v647 = vadd.f32 %v402, %v549
      %v648 = vadd.f32 %v403, %v551
      %v649 = vadd.f32 %v404, %v554
      %v650 = vadd.f32 %v405, %v556
      %v651 = vadd.f32 %v406, %v559
      %v652 = vadd.f32 %v407, %v561
      %v653 = vadd.f32 %v408, %v564
      %v654 = vadd.f32 %v409, %v566
      %v655 = vadd.f32 %v410, %v569
      %v656 = vadd.f32 %v411, %v571
      %v657 = vadd.f32 %v412, %v574
      %v658 = vadd.f32 %v413, %v576
      %v659 = vadd.f32 %v414, %v579
      %v660 = vadd.f32 %v415, %v581
      %v661 = vadd.f32 %v416, %v584
      %v662 = vadd.f32 %v417, %v586
      %v663 = vadd.f32 %v418, %v589
      %v664 = vadd.f32 %v419, %v591
      %v665 = vadd.f32 %v420, %v594
      %v666 = vadd.f32 %v421, %v596
      %v667 = vadd.f32 %v422, %v599
      %v668 = vadd.f32 %v423, %v601
      %v669 = vadd.f32 %v424, %v604
      %v670 = vadd.f32 %v425, %v606
      %v671 = vlaneseq
      %v672 = vshrl.u32 %v671, 7
      %v673 = vsub.s32 2, %v672
      %v674 = vrot.slane %v388, %v673
      %v675 = vmul.f32 %v334, %v674
      %v676 = vmul.f32 %v335, %v674
      %v677 = vmul.f32 %v336, %v674
      %v678 = vmul.f32 %v337, %v674
      %v679 = vmul.f32 %v338, %v674
      %v680 = vmul.f32 %v339, %v674
      %v681 = vmul.f32 %v340, %v674
      %v682 = vmul.f32 %v341, %v674
      %v683 = vmul.f32 %v342, %v674
      %v684 = vmul.f32 %v343, %v674
      %v685 = vmul.f32 %v344, %v674
      %v686 = vmul.f32 %v345, %v674
      %v687 = vmul.f32 %v346, %v674
      %v688 = vmul.f32 %v347, %v674
      %v689 = vmul.f32 %v348, %v674
      %v690 = vmul.f32 %v349, %v674
      %v691 = vmul.f32 %v350, %v674
      %v692 = vmul.f32 %v351, %v674
      %v693 = vmul.f32 %v352, %v674
      %v694 = vmul.f32 %v353, %v674
      %v695 = vmul.f32 %v354, %v674
      %v696 = vmul.f32 %v355, %v674
      %v697 = vmul.f32 %v356, %v674
      %v698 = vmul.f32 %v357, %v674
      %v699 = vmul.f32 %v358, %v674
      %v700 = vmul.f32 %v359, %v674
      %v701 = vmul.f32 %v360, %v674
      %v702 = vmul.f32 %v361, %v674
      %v703 = vmul.f32 %v362, %v674
      %v704 = vmul.f32 %v363, %v674
      %v705 = vmul.f32 %v364, %v674
      %v706 = vmul.f32 %v365, %v674
      %v707 = vmul.f32 %v366, %v674
      %v708 = vmul.f32 %v367, %v674
      %v709 = vmul.f32 %v368, %v674
      %v710 = vmul.f32 %v369, %v674
      %v711 = vmul.f32 %v370, %v674
      %v712 = vmul.f32 %v371, %v674
      %v713 = vmul.f32 %v372, %v674
      %v714 = vmul.f32 %v373, %v674
      %v715 = vmul.f32 %v374, %v674
      %v716 = vmul.f32 %v375, %v674
      %v717 = vmul.f32 %v376, %v674
      %v718 = vmul.f32 %v377, %v674
      %v719 = vmul.f32 %v378, %v674
      %v720 = vmul.f32 %v379, %v674
      %v721 = vmul.f32 %v380, %v674
      %v722 = vmul.f32 %v381, %v674
      %vm771 = vcmask 1045504
      %v772 = vrot.slane %v675, 2
      %v773 = vrot.slane %v676, 2
      %v774 = vsel %vm771, %v772, %v773
      %v775 = vrot.slane %v677, 2
      %v776 = vsel %vm771, %v773, %v775
      %v777 = vrot.slane %v678, 2
      %v778 = vrot.slane %v679, 2
      %v779 = vsel %vm771, %v777, %v778
      %v780 = vrot.slane %v680, 2
      %v781 = vsel %vm771, %v778, %v780
      %v782 = vrot.slane %v681, 2
      %v783 = vrot.slane %v682, 2
      %v784 = vsel %vm771, %v782, %v783
      %v785 = vrot.slane %v683, 2
      %v786 = vsel %vm771, %v783, %v785
      %v787 = vrot.slane %v684, 2
      %v788 = vrot.slane %v685, 2
      %v789 = vsel %vm771, %v787, %v788
      %v790 = vrot.slane %v686, 2
      %v791 = vsel %vm771, %v788, %v790
      %v792 = vrot.slane %v687, 2
      %v793 = vrot.slane %v688, 2
      %v794 = vsel %vm771, %v792, %v793
      %v795 = vrot.slane %v689, 2
      %v796 = vsel %vm771, %v793, %v795
      %v797 = vrot.slane %v690, 2
      %v798 = vrot.slane %v691, 2
      %v799 = vsel %vm771, %v797, %v798
      %v800 = vrot.slane %v692, 2
      %v801 = vsel %vm771, %v798, %v800
      %v802 = vrot.slane %v693, 2
      %v803 = vrot.slane %v694, 2
      %v804 = vsel %vm771, %v802, %v803
      %v805 = vrot.slane %v695, 2
      %v806 = vsel %vm771, %v803, %v805
      %v807 = vrot.slane %v696, 2
      %v808 = vrot.slane %v697, 2
      %v809 = vsel %vm771, %v807, %v808
      %v810 = vrot.slane %v698, 2
      %v811 = vsel %vm771, %v808, %v810
      %v812 = vrot.slane %v699, 2
      %v813 = vrot.slane %v700, 2
      %v814 = vsel %vm771, %v812, %v813
      %v815 = vrot.slane %v701, 2
      %v816 = vsel %vm771, %v813, %v815
      %v817 = vrot.slane %v702, 2
      %v818 = vrot.slane %v703, 2
      %v819 = vsel %vm771, %v817, %v818
      %v820 = vrot.slane %v704, 2
      %v821 = vsel %vm771, %v818, %v820
      %v822 = vrot.slane %v705, 2
      %v823 = vrot.slane %v706, 2
      %v824 = vsel %vm771, %v822, %v823
      %v825 = vrot.slane %v707, 2
      %v826 = vsel %vm771, %v823, %v825
      %v827 = vrot.slane %v708, 2
      %v828 = vrot.slane %v709, 2
      %v829 = vsel %vm771, %v827, %v828
      %v830 = vrot.slane %v710, 2
      %v831 = vsel %vm771, %v828, %v830
      %v832 = vrot.slane %v711, 2
      %v833 = vrot.slane %v712, 2
      %v834 = vsel %vm771, %v832, %v833
      %v835 = vrot.slane %v713, 2
      %v836 = vsel %vm771, %v833, %v835
      %v837 = vrot.slane %v714, 2
      %v838 = vrot.slane %v715, 2
      %v839 = vsel %vm771, %v837, %v838
      %v840 = vrot.slane %v716, 2
      %v841 = vsel %vm771, %v838, %v840
      %v842 = vrot.slane %v717, 2
      %v843 = vrot.slane %v718, 2
      %v844 = vsel %vm771, %v842, %v843
      %v845 = vrot.slane %v719, 2
      %v846 = vsel %vm771, %v843, %v845
      %v847 = vrot.slane %v720, 2
      %v848 = vrot.slane %v721, 2
      %v849 = vsel %vm771, %v847, %v848
      %v850 = vrot.slane %v722, 2
      %v851 = vsel %vm771, %v848, %v850
      %v884 = vadd.f32 %v639, %v774
      %v885 = vadd.f32 %v640, %v776
      %v886 = vadd.f32 %v641, %v779
      %v887 = vadd.f32 %v642, %v781
      %v888 = vadd.f32 %v643, %v784
      %v889 = vadd.f32 %v644, %v786
      %v890 = vadd.f32 %v645, %v789
      %v891 = vadd.f32 %v646, %v791
      %v892 = vadd.f32 %v647, %v794
      %v893 = vadd.f32 %v648, %v796
      %v894 = vadd.f32 %v649, %v799
      %v895 = vadd.f32 %v650, %v801
      %v896 = vadd.f32 %v651, %v804
      %v897 = vadd.f32 %v652, %v806
      %v898 = vadd.f32 %v653, %v809
      %v899 = vadd.f32 %v654, %v811
      %v900 = vadd.f32 %v655, %v814
      %v901 = vadd.f32 %v656, %v816
      %v902 = vadd.f32 %v657, %v819
      %v903 = vadd.f32 %v658, %v821
      %v904 = vadd.f32 %v659, %v824
      %v905 = vadd.f32 %v660, %v826
      %v906 = vadd.f32 %v661, %v829
      %v907 = vadd.f32 %v662, %v831
      %v908 = vadd.f32 %v663, %v834
      %v909 = vadd.f32 %v664, %v836
      %v910 = vadd.f32 %v665, %v839
      %v911 = vadd.f32 %v666, %v841
      %v912 = vadd.f32 %v667, %v844
      %v913 = vadd.f32 %v668, %v846
      %v914 = vadd.f32 %v669, %v849
      %v915 = vadd.f32 %v670, %v851
      %v916 = vlaneseq
      %v917 = vshrl.u32 %v916, 7
      %v918 = vsub.s32 3, %v917
      %v919 = vrot.slane %v388, %v918
      %v920 = vmul.f32 %v337, %v919
      %v921 = vmul.f32 %v338, %v919
      %v922 = vmul.f32 %v340, %v919
      %v923 = vmul.f32 %v341, %v919
      %v924 = vmul.f32 %v343, %v919
      %v925 = vmul.f32 %v344, %v919
      %v926 = vmul.f32 %v346, %v919
      %v927 = vmul.f32 %v347, %v919
      %v928 = vmul.f32 %v349, %v919
      %v929 = vmul.f32 %v350, %v919
      %v930 = vmul.f32 %v352, %v919
      %v931 = vmul.f32 %v353, %v919
      %v932 = vmul.f32 %v355, %v919
      %v933 = vmul.f32 %v356, %v919
      %v934 = vmul.f32 %v358, %v919
      %v935 = vmul.f32 %v359, %v919
      %v936 = vmul.f32 %v361, %v919
      %v937 = vmul.f32 %v362, %v919
      %v938 = vmul.f32 %v364, %v919
      %v939 = vmul.f32 %v365, %v919
      %v940 = vmul.f32 %v367, %v919
      %v941 = vmul.f32 %v368, %v919
      %v942 = vmul.f32 %v370, %v919
      %v943 = vmul.f32 %v371, %v919
      %v944 = vmul.f32 %v373, %v919
      %v945 = vmul.f32 %v374, %v919
      %v946 = vmul.f32 %v376, %v919
      %v947 = vmul.f32 %v377, %v919
      %v948 = vmul.f32 %v379, %v919
      %v949 = vmul.f32 %v380, %v919
      %v950 = vmul.f32 %v382, %v919
      %v951 = vmul.f32 %v383, %v919
      %v952 = vadd.f32 %v884, %v920
      %v953 = vadd.f32 %v885, %v921
      %v954 = vadd.f32 %v886, %v922
      %v955 = vadd.f32 %v887, %v923
      %v956 = vadd.f32 %v888, %v924
      %v957 = vadd.f32 %v889, %v925
      %v958 = vadd.f32 %v890, %v926
      %v959 = vadd.f32 %v891, %v927
      %v960 = vadd.f32 %v892, %v928
      %v961 = vadd.f32 %v893, %v929
      %v962 = vadd.f32 %v894, %v930
      %v963 = vadd.f32 %v895, %v931
      %v964 = vadd.f32 %v896, %v932
      %v965 = vadd.f32 %v897, %v933
      %v966 = vadd.f32 %v898, %v934
      %v967 = vadd.f32 %v899, %v935
      %v968 = vadd.f32 %v900, %v936
      %v969 = vadd.f32 %v901, %v937
      %v970 = vadd.f32 %v902, %v938
      %v971 = vadd.f32 %v903, %v939
      %v972 = vadd.f32 %v904, %v940
      %v973 = vadd.f32 %v905, %v941
      %v974 = vadd.f32 %v906, %v942
      %v975 = vadd.f32 %v907, %v943
      %v976 = vadd.f32 %v908, %v944
      %v977 = vadd.f32 %v909, %v945
      %v978 = vadd.f32 %v910, %v946
      %v979 = vadd.f32 %v911, %v947
      %v980 = vadd.f32 %v912, %v948
      %v981 = vadd.f32 %v913, %v949
      %v982 = vadd.f32 %v914, %v950
      %v983 = vadd.f32 %v915, %v951
      %v984 = vlaneseq
      %v985 = vshrl.u32 %v984, 7
      %v986 = vsub.s32 4, %v985
      %v987 = vrot.slane %v388, %v986
      %v988 = vmul.f32 %v337, %v987
      %v989 = vmul.f32 %v338, %v987
      %v990 = vmul.f32 %v339, %v987
      %v991 = vmul.f32 %v340, %v987
      %v992 = vmul.f32 %v341, %v987
      %v993 = vmul.f32 %v342, %v987
      %v994 = vmul.f32 %v343, %v987
      %v995 = vmul.f32 %v344, %v987
      %v996 = vmul.f32 %v345, %v987
      %v997 = vmul.f32 %v346, %v987
      %v998 = vmul.f32 %v347, %v987
      %v999 = vmul.f32 %v348, %v987
      %v1000 = vmul.f32 %v349, %v987
      %v1001 = vmul.f32 %v350, %v987
      %v1002 = vmul.f32 %v351, %v987
      %v1003 = vmul.f32 %v352, %v987
      %v1004 = vmul.f32 %v353, %v987
      %v1005 = vmul.f32 %v354, %v987
      %v1006 = vmul.f32 %v355, %v987
      %v1007 = vmul.f32 %v356, %v987
      %v1008 = vmul.f32 %v357, %v987
      %v1009 = vmul.f32 %v358, %v987
      %v1010 = vmul.f32 %v359, %v987
      %v1011 = vmul.f32 %v360, %v987
      %v1012 = vmul.f32 %v361, %v987
      %v1013 = vmul.f32 %v362, %v987
      %v1014 = vmul.f32 %v363, %v987
      %v1015 = vmul.f32 %v364, %v987
      %v1016 = vmul.f32 %v365, %v987
      %v1017 = vmul.f32 %v366, %v987
      %v1018 = vmul.f32 %v367, %v987
      %v1019 = vmul.f32 %v368, %v987
      %v1020 = vmul.f32 %v369, %v987
      %v1021 = vmul.f32 %v370, %v987
      %v1022 = vmul.f32 %v371, %v987
      %v1023 = vmul.f32 %v372, %v987
      %v1024 = vmul.f32 %v373, %v987
      %v1025 = vmul.f32 %v374, %v987
      %v1026 = vmul.f32 %v375, %v987
      %v1027 = vmul.f32 %v376, %v987
      %v1028 = vmul.f32 %v377, %v987
      %v1029 = vmul.f32 %v378, %v987
      %v1030 = vmul.f32 %v379, %v987
      %v1031 = vmul.f32 %v380, %v987
      %v1032 = vmul.f32 %v381, %v987
      %v1033 = vmul.f32 %v382, %v987
      %v1034 = vmul.f32 %v383, %v987
      %v1035 = vmul.f32 %v384, %v987
      %v1084 = vrot.slane %v988, 1
      %v1085 = vrot.slane %v989, 1
      %v1086 = vsel %vm526, %v1084, %v1085
      %v1087 = vrot.slane %v990, 1
      %v1088 = vsel %vm526, %v1085, %v1087
      %v1089 = vrot.slane %v991, 1
      %v1090 = vrot.slane %v992, 1
      %v1091 = vsel %vm526, %v1089, %v1090
      %v1092 = vrot.slane %v993, 1
      %v1093 = vsel %vm526, %v1090, %v1092
      %v1094 = vrot.slane %v994, 1
      %v1095 = vrot.slane %v995, 1
      %v1096 = vsel %vm526, %v1094, %v1095
      %v1097 = vrot.slane %v996, 1
      %v1098 = vsel %vm526, %v1095, %v1097
      %v1099 = vrot.slane %v997, 1
      %v1100 = vrot.slane %v998, 1
      %v1101 = vsel %vm526, %v1099, %v1100
      %v1102 = vrot.slane %v999, 1
      %v1103 = vsel %vm526, %v1100, %v1102
      %v1104 = vrot.slane %v1000, 1
      %v1105 = vrot.slane %v1001, 1
      %v1106 = vsel %vm526, %v1104, %v1105
      %v1107 = vrot.slane %v1002, 1
      %v1108 = vsel %vm526, %v1105, %v1107
      %v1109 = vrot.slane %v1003, 1
      %v1110 = vrot.slane %v1004, 1
      %v1111 = vsel %vm526, %v1109, %v1110
      %v1112 = vrot.slane %v1005, 1
      %v1113 = vsel %vm526, %v1110, %v1112
      %v1114 = vrot.slane %v1006, 1
      %v1115 = vrot.slane %v1007, 1
      %v1116 = vsel %vm526, %v1114, %v1115
      %v1117 = vrot.slane %v1008, 1
      %v1118 = vsel %vm526, %v1115, %v1117
      %v1119 = vrot.slane %v1009, 1
      %v1120 = vrot.slane %v1010, 1
      %v1121 = vsel %vm526, %v1119, %v1120
      %v1122 = vrot.slane %v1011, 1
      %v1123 = vsel %vm526, %v1120, %v1122
      %v1124 = vrot.slane %v1012, 1
      %v1125 = vrot.slane %v1013, 1
      %v1126 = vsel %vm526, %v1124, %v1125
      %v1127 = vrot.slane %v1014, 1
      %v1128 = vsel %vm526, %v1125, %v1127
      %v1129 = vrot.slane %v1015, 1
      %v1130 = vrot.slane %v1016, 1
      %v1131 = vsel %vm526, %v1129, %v1130
      %v1132 = vrot.slane %v1017, 1
      %v1133 = vsel %vm526, %v1130, %v1132
      %v1134 = vrot.slane %v1018, 1
      %v1135 = vrot.slane %v1019, 1
      %v1136 = vsel %vm526, %v1134, %v1135
      %v1137 = vrot.slane %v1020, 1
      %v1138 = vsel %vm526, %v1135, %v1137
      %v1139 = vrot.slane %v1021, 1
      %v1140 = vrot.slane %v1022, 1
      %v1141 = vsel %vm526, %v1139, %v1140
      %v1142 = vrot.slane %v1023, 1
      %v1143 = vsel %vm526, %v1140, %v1142
      %v1144 = vrot.slane %v1024, 1
      %v1145 = vrot.slane %v1025, 1
      %v1146 = vsel %vm526, %v1144, %v1145
      %v1147 = vrot.slane %v1026, 1
      %v1148 = vsel %vm526, %v1145, %v1147
      %v1149 = vrot.slane %v1027, 1
      %v1150 = vrot.slane %v1028, 1
      %v1151 = vsel %vm526, %v1149, %v1150
      %v1152 = vrot.slane %v1029, 1
      %v1153 = vsel %vm526, %v1150, %v1152
      %v1154 = vrot.slane %v1030, 1
      %v1155 = vrot.slane %v1031, 1
      %v1156 = vsel %vm526, %v1154, %v1155
      %v1157 = vrot.slane %v1032, 1
      %v1158 = vsel %vm526, %v1155, %v1157
      %v1159 = vrot.slane %v1033, 1
      %v1160 = vrot.slane %v1034, 1
      %v1161 = vsel %vm526, %v1159, %v1160
      %v1162 = vrot.slane %v1035, 1
      %v1163 = vsel %vm526, %v1160, %v1162
      %v1196 = vadd.f32 %v952, %v1086
      %v1197 = vadd.f32 %v953, %v1088
      %v1198 = vadd.f32 %v954, %v1091
      %v1199 = vadd.f32 %v955, %v1093
      %v1200 = vadd.f32 %v956, %v1096
      %v1201 = vadd.f32 %v957, %v1098
      %v1202 = vadd.f32 %v958, %v1101
      %v1203 = vadd.f32 %v959, %v1103
      %v1204 = vadd.f32 %v960, %v1106
      %v1205 = vadd.f32 %v961, %v1108
      %v1206 = vadd.f32 %v962, %v1111
      %v1207 = vadd.f32 %v963, %v1113
      %v1208 = vadd.f32 %v964, %v1116
      %v1209 = vadd.f32 %v965, %v1118
      %v1210 = vadd.f32 %v966, %v1121
      %v1211 = vadd.f32 %v967, %v1123
      %v1212 = vadd.f32 %v968, %v1126
      %v1213 = vadd.f32 %v969, %v1128
      %v1214 = vadd.f32 %v970, %v1131
      %v1215 = vadd.f32 %v971, %v1133
      %v1216 = vadd.f32 %v972, %v1136
      %v1217 = vadd.f32 %v973, %v1138
      %v1218 = vadd.f32 %v974, %v1141
      %v1219 = vadd.f32 %v975, %v1143
      %v1220 = vadd.f32 %v976, %v1146
      %v1221 = vadd.f32 %v977, %v1148
      %v1222 = vadd.f32 %v978, %v1151
      %v1223 = vadd.f32 %v979, %v1153
      %v1224 = vadd.f32 %v980, %v1156
      %v1225 = vadd.f32 %v981, %v1158
      %v1226 = vadd.f32 %v982, %v1161
      %v1227 = vadd.f32 %v983, %v1163
      %v1228 = vlaneseq
      %v1229 = vshrl.u32 %v1228, 7
      %v1230 = vsub.s32 5, %v1229
      %v1231 = vrot.slane %v388, %v1230
      %v1232 = vmul.f32 %v337, %v1231
      %v1233 = vmul.f32 %v338, %v1231
      %v1234 = vmul.f32 %v339, %v1231
      %v1235 = vmul.f32 %v340, %v1231
      %v1236 = vmul.f32 %v341, %v1231
      %v1237 = vmul.f32 %v342, %v1231
      %v1238 = vmul.f32 %v343, %v1231
      %v1239 = vmul.f32 %v344, %v1231
      %v1240 = vmul.f32 %v345, %v1231
      %v1241 = vmul.f32 %v346, %v1231
      %v1242 = vmul.f32 %v347, %v1231
      %v1243 = vmul.f32 %v348, %v1231
      %v1244 = vmul.f32 %v349, %v1231
      %v1245 = vmul.f32 %v350, %v1231
      %v1246 = vmul.f32 %v351, %v1231
      %v1247 = vmul.f32 %v352, %v1231
      %v1248 = vmul.f32 %v353, %v1231
      %v1249 = vmul.f32 %v354, %v1231
      %v1250 = vmul.f32 %v355, %v1231
      %v1251 = vmul.f32 %v356, %v1231
      %v1252 = vmul.f32 %v357, %v1231
      %v1253 = vmul.f32 %v358, %v1231
      %v1254 = vmul.f32 %v359, %v1231
      %v1255 = vmul.f32 %v360, %v1231
      %v1256 = vmul.f32 %v361, %v1231
      %v1257 = vmul.f32 %v362, %v1231
      %v1258 = vmul.f32 %v363, %v1231
      %v1259 = vmul.f32 %v364, %v1231
      %v1260 = vmul.f32 %v365, %v1231
      %v1261 = vmul.f32 %v366, %v1231
      %v1262 = vmul.f32 %v367, %v1231
      %v1263 = vmul.f32 %v368, %v1231
      %v1264 = vmul.f32 %v369, %v1231
      %v1265 = vmul.f32 %v370, %v1231
      %v1266 = vmul.f32 %v371, %v1231
      %v1267 = vmul.f32 %v372, %v1231
      %v1268 = vmul.f32 %v373, %v1231
      %v1269 = vmul.f32 %v374, %v1231
      %v1270 = vmul.f32 %v375, %v1231
      %v1271 = vmul.f32 %v376, %v1231
      %v1272 = vmul.f32 %v377, %v1231
      %v1273 = vmul.f32 %v378, %v1231
      %v1274 = vmul.f32 %v379, %v1231
      %v1275 = vmul.f32 %v380, %v1231
      %v1276 = vmul.f32 %v381, %v1231
      %v1277 = vmul.f32 %v382, %v1231
      %v1278 = vmul.f32 %v383, %v1231
      %v1279 = vmul.f32 %v384, %v1231
      %v1328 = vrot.slane %v1232, 2
      %v1329 = vrot.slane %v1233, 2
      %v1330 = vsel %vm771, %v1328, %v1329
      %v1331 = vrot.slane %v1234, 2
      %v1332 = vsel %vm771, %v1329, %v1331
      %v1333 = vrot.slane %v1235, 2
      %v1334 = vrot.slane %v1236, 2
      %v1335 = vsel %vm771, %v1333, %v1334
      %v1336 = vrot.slane %v1237, 2
      %v1337 = vsel %vm771, %v1334, %v1336
      %v1338 = vrot.slane %v1238, 2
      %v1339 = vrot.slane %v1239, 2
      %v1340 = vsel %vm771, %v1338, %v1339
      %v1341 = vrot.slane %v1240, 2
      %v1342 = vsel %vm771, %v1339, %v1341
      %v1343 = vrot.slane %v1241, 2
      %v1344 = vrot.slane %v1242, 2
      %v1345 = vsel %vm771, %v1343, %v1344
      %v1346 = vrot.slane %v1243, 2
      %v1347 = vsel %vm771, %v1344, %v1346
      %v1348 = vrot.slane %v1244, 2
      %v1349 = vrot.slane %v1245, 2
      %v1350 = vsel %vm771, %v1348, %v1349
      %v1351 = vrot.slane %v1246, 2
      %v1352 = vsel %vm771, %v1349, %v1351
      %v1353 = vrot.slane %v1247, 2
      %v1354 = vrot.slane %v1248, 2
      %v1355 = vsel %vm771, %v1353, %v1354
      %v1356 = vrot.slane %v1249, 2
      %v1357 = vsel %vm771, %v1354, %v1356
      %v1358 = vrot.slane %v1250, 2
      %v1359 = vrot.slane %v1251, 2
      %v1360 = vsel %vm771, %v1358, %v1359
      %v1361 = vrot.slane %v1252, 2
      %v1362 = vsel %vm771, %v1359, %v1361
      %v1363 = vrot.slane %v1253, 2
      %v1364 = vrot.slane %v1254, 2
      %v1365 = vsel %vm771, %v1363, %v1364
      %v1366 = vrot.slane %v1255, 2
      %v1367 = vsel %vm771, %v1364, %v1366
      %v1368 = vrot.slane %v1256, 2
      %v1369 = vrot.slane %v1257, 2
      %v1370 = vsel %vm771, %v1368, %v1369
      %v1371 = vrot.slane %v1258, 2
      %v1372 = vsel %vm771, %v1369, %v1371
      %v1373 = vrot.slane %v1259, 2
      %v1374 = vrot.slane %v1260, 2
      %v1375 = vsel %vm771, %v1373, %v1374
      %v1376 = vrot.slane %v1261, 2
      %v1377 = vsel %vm771, %v1374, %v1376
      %v1378 = vrot.slane %v1262, 2
      %v1379 = vrot.slane %v1263, 2
      %v1380 = vsel %vm771, %v1378, %v1379
      %v1381 = vrot.slane %v1264, 2
      %v1382 = vsel %vm771, %v1379, %v1381
      %v1383 = vrot.slane %v1265, 2
      %v1384 = vrot.slane %v1266, 2
      %v1385 = vsel %vm771, %v1383, %v1384
      %v1386 = vrot.slane %v1267, 2
      %v1387 = vsel %vm771, %v1384, %v1386
      %v1388 = vrot.slane %v1268, 2
      %v1389 = vrot.slane %v1269, 2
      %v1390 = vsel %vm771, %v1388, %v1389
      %v1391 = vrot.slane %v1270, 2
      %v1392 = vsel %vm771, %v1389, %v1391
      %v1393 = vrot.slane %v1271, 2
      %v1394 = vrot.slane %v1272, 2
      %v1395 = vsel %vm771, %v1393, %v1394
      %v1396 = vrot.slane %v1273, 2
      %v1397 = vsel %vm771, %v1394, %v1396
      %v1398 = vrot.slane %v1274, 2
      %v1399 = vrot.slane %v1275, 2
      %v1400 = vsel %vm771, %v1398, %v1399
      %v1401 = vrot.slane %v1276, 2
      %v1402 = vsel %vm771, %v1399, %v1401
      %v1403 = vrot.slane %v1277, 2
      %v1404 = vrot.slane %v1278, 2
      %v1405 = vsel %vm771, %v1403, %v1404
      %v1406 = vrot.slane %v1279, 2
      %v1407 = vsel %vm771, %v1404, %v1406
      %v1440 = vadd.f32 %v1196, %v1330
      %v1441 = vadd.f32 %v1197, %v1332
      %v1442 = vadd.f32 %v1198, %v1335
      %v1443 = vadd.f32 %v1199, %v1337
      %v1444 = vadd.f32 %v1200, %v1340
      %v1445 = vadd.f32 %v1201, %v1342
      %v1446 = vadd.f32 %v1202, %v1345
      %v1447 = vadd.f32 %v1203, %v1347
      %v1448 = vadd.f32 %v1204, %v1350
      %v1449 = vadd.f32 %v1205, %v1352
      %v1450 = vadd.f32 %v1206, %v1355
      %v1451 = vadd.f32 %v1207, %v1357
      %v1452 = vadd.f32 %v1208, %v1360
      %v1453 = vadd.f32 %v1209, %v1362
      %v1454 = vadd.f32 %v1210, %v1365
      %v1455 = vadd.f32 %v1211, %v1367
      %v1456 = vadd.f32 %v1212, %v1370
      %v1457 = vadd.f32 %v1213, %v1372
      %v1458 = vadd.f32 %v1214, %v1375
      %v1459 = vadd.f32 %v1215, %v1377
      %v1460 = vadd.f32 %v1216, %v1380
      %v1461 = vadd.f32 %v1217, %v1382
      %v1462 = vadd.f32 %v1218, %v1385
      %v1463 = vadd.f32 %v1219, %v1387
      %v1464 = vadd.f32 %v1220, %v1390
      %v1465 = vadd.f32 %v1221, %v1392
      %v1466 = vadd.f32 %v1222, %v1395
      %v1467 = vadd.f32 %v1223, %v1397
      %v1468 = vadd.f32 %v1224, %v1400
      %v1469 = vadd.f32 %v1225, %v1402
      %v1470 = vadd.f32 %v1226, %v1405
      %v1471 = vadd.f32 %v1227, %v1407
      %v1472 = vlaneseq
      %v1473 = vshrl.u32 %v1472, 7
      %v1474 = vsub.s32 6, %v1473
      %v1475 = vrot.slane %v388, %v1474
      %v1476 = vmul.f32 %v340, %v1475
      %v1477 = vmul.f32 %v341, %v1475
      %v1478 = vmul.f32 %v343, %v1475
      %v1479 = vmul.f32 %v344, %v1475
      %v1480 = vmul.f32 %v346, %v1475
      %v1481 = vmul.f32 %v347, %v1475
      %v1482 = vmul.f32 %v349, %v1475
      %v1483 = vmul.f32 %v350, %v1475
      %v1484 = vmul.f32 %v352, %v1475
      %v1485 = vmul.f32 %v353, %v1475
      %v1486 = vmul.f32 %v355, %v1475
      %v1487 = vmul.f32 %v356, %v1475
      %v1488 = vmul.f32 %v358, %v1475
      %v1489 = vmul.f32 %v359, %v1475
      %v1490 = vmul.f32 %v361, %v1475
      %v1491 = vmul.f32 %v362, %v1475
      %v1492 = vmul.f32 %v364, %v1475
      %v1493 = vmul.f32 %v365, %v1475
      %v1494 = vmul.f32 %v367, %v1475
      %v1495 = vmul.f32 %v368, %v1475
      %v1496 = vmul.f32 %v370, %v1475
      %v1497 = vmul.f32 %v371, %v1475
      %v1498 = vmul.f32 %v373, %v1475
      %v1499 = vmul.f32 %v374, %v1475
      %v1500 = vmul.f32 %v376, %v1475
      %v1501 = vmul.f32 %v377, %v1475
      %v1502 = vmul.f32 %v379, %v1475
      %v1503 = vmul.f32 %v380, %v1475
      %v1504 = vmul.f32 %v382, %v1475
      %v1505 = vmul.f32 %v383, %v1475
      %v1506 = vmul.f32 %v385, %v1475
      %v1507 = vmul.f32 %v386, %v1475
      %v1508 = vadd.f32 %v1440, %v1476
      %v1509 = vadd.f32 %v1441, %v1477
      %v1510 = vadd.f32 %v1442, %v1478
      %v1511 = vadd.f32 %v1443, %v1479
      %v1512 = vadd.f32 %v1444, %v1480
      %v1513 = vadd.f32 %v1445, %v1481
      %v1514 = vadd.f32 %v1446, %v1482
      %v1515 = vadd.f32 %v1447, %v1483
      %v1516 = vadd.f32 %v1448, %v1484
      %v1517 = vadd.f32 %v1449, %v1485
      %v1518 = vadd.f32 %v1450, %v1486
      %v1519 = vadd.f32 %v1451, %v1487
      %v1520 = vadd.f32 %v1452, %v1488
      %v1521 = vadd.f32 %v1453, %v1489
      %v1522 = vadd.f32 %v1454, %v1490
      %v1523 = vadd.f32 %v1455, %v1491
      %v1524 = vadd.f32 %v1456, %v1492
      %v1525 = vadd.f32 %v1457, %v1493
      %v1526 = vadd.f32 %v1458, %v1494
      %v1527 = vadd.f32 %v1459, %v1495
      %v1528 = vadd.f32 %v1460, %v1496
      %v1529 = vadd.f32 %v1461, %v1497
      %v1530 = vadd.f32 %v1462, %v1498
      %v1531 = vadd.f32 %v1463, %v1499
      %v1532 = vadd.f32 %v1464, %v1500
      %v1533 = vadd.f32 %v1465, %v1501
      %v1534 = vadd.f32 %v1466, %v1502
      %v1535 = vadd.f32 %v1467, %v1503
      %v1536 = vadd.f32 %v1468, %v1504
      %v1537 = vadd.f32 %v1469, %v1505
      %v1538 = vadd.f32 %v1470, %v1506
      %v1539 = vadd.f32 %v1471, %v1507
      %v1540 = vlaneseq
      %v1541 = vshrl.u32 %v1540, 7
      %v1542 = vsub.s32 7, %v1541
      %v1543 = vrot.slane %v388, %v1542
      %v1544 = vmul.f32 %v340, %v1543
      %v1545 = vmul.f32 %v341, %v1543
      %v1546 = vmul.f32 %v342, %v1543
      %v1547 = vmul.f32 %v343, %v1543
      %v1548 = vmul.f32 %v344, %v1543
      %v1549 = vmul.f32 %v345, %v1543
      %v1550 = vmul.f32 %v346, %v1543
      %v1551 = vmul.f32 %v347, %v1543
      %v1552 = vmul.f32 %v348, %v1543
      %v1553 = vmul.f32 %v349, %v1543
      %v1554 = vmul.f32 %v350, %v1543
      %v1555 = vmul.f32 %v351, %v1543
      %v1556 = vmul.f32 %v352, %v1543
      %v1557 = vmul.f32 %v353, %v1543
      %v1558 = vmul.f32 %v354, %v1543
      %v1559 = vmul.f32 %v355, %v1543
      %v1560 = vmul.f32 %v356, %v1543
      %v1561 = vmul.f32 %v357, %v1543
      %v1562 = vmul.f32 %v358, %v1543
      %v1563 = vmul.f32 %v359, %v1543
      %v1564 = vmul.f32 %v360, %v1543
      %v1565 = vmul.f32 %v361, %v1543
      %v1566 = vmul.f32 %v362, %v1543
      %v1567 = vmul.f32 %v363, %v1543
      %v1568 = vmul.f32 %v364, %v1543
      %v1569 = vmul.f32 %v365, %v1543
      %v1570 = vmul.f32 %v366, %v1543
      %v1571 = vmul.f32 %v367, %v1543
      %v1572 = vmul.f32 %v368, %v1543
      %v1573 = vmul.f32 %v369, %v1543
      %v1574 = vmul.f32 %v370, %v1543
      %v1575 = vmul.f32 %v371, %v1543
      %v1576 = vmul.f32 %v372, %v1543
      %v1577 = vmul.f32 %v373, %v1543
      %v1578 = vmul.f32 %v374, %v1543
      %v1579 = vmul.f32 %v375, %v1543
      %v1580 = vmul.f32 %v376, %v1543
      %v1581 = vmul.f32 %v377, %v1543
      %v1582 = vmul.f32 %v378, %v1543
      %v1583 = vmul.f32 %v379, %v1543
      %v1584 = vmul.f32 %v380, %v1543
      %v1585 = vmul.f32 %v381, %v1543
      %v1586 = vmul.f32 %v382, %v1543
      %v1587 = vmul.f32 %v383, %v1543
      %v1588 = vmul.f32 %v384, %v1543
      %v1589 = vmul.f32 %v385, %v1543
      %v1590 = vmul.f32 %v386, %v1543
      %v1591 = vmul.f32 %v387, %v1543
      %v1640 = vrot.slane %v1544, 1
      %v1641 = vrot.slane %v1545, 1
      %v1642 = vsel %vm526, %v1640, %v1641
      %v1643 = vrot.slane %v1546, 1
      %v1644 = vsel %vm526, %v1641, %v1643
      %v1645 = vrot.slane %v1547, 1
      %v1646 = vrot.slane %v1548, 1
      %v1647 = vsel %vm526, %v1645, %v1646
      %v1648 = vrot.slane %v1549, 1
      %v1649 = vsel %vm526, %v1646, %v1648
      %v1650 = vrot.slane %v1550, 1
      %v1651 = vrot.slane %v1551, 1
      %v1652 = vsel %vm526, %v1650, %v1651
      %v1653 = vrot.slane %v1552, 1
      %v1654 = vsel %vm526, %v1651, %v1653
      %v1655 = vrot.slane %v1553, 1
      %v1656 = vrot.slane %v1554, 1
      %v1657 = vsel %vm526, %v1655, %v1656
      %v1658 = vrot.slane %v1555, 1
      %v1659 = vsel %vm526, %v1656, %v1658
      %v1660 = vrot.slane %v1556, 1
      %v1661 = vrot.slane %v1557, 1
      %v1662 = vsel %vm526, %v1660, %v1661
      %v1663 = vrot.slane %v1558, 1
      %v1664 = vsel %vm526, %v1661, %v1663
      %v1665 = vrot.slane %v1559, 1
      %v1666 = vrot.slane %v1560, 1
      %v1667 = vsel %vm526, %v1665, %v1666
      %v1668 = vrot.slane %v1561, 1
      %v1669 = vsel %vm526, %v1666, %v1668
      %v1670 = vrot.slane %v1562, 1
      %v1671 = vrot.slane %v1563, 1
      %v1672 = vsel %vm526, %v1670, %v1671
      %v1673 = vrot.slane %v1564, 1
      %v1674 = vsel %vm526, %v1671, %v1673
      %v1675 = vrot.slane %v1565, 1
      %v1676 = vrot.slane %v1566, 1
      %v1677 = vsel %vm526, %v1675, %v1676
      %v1678 = vrot.slane %v1567, 1
      %v1679 = vsel %vm526, %v1676, %v1678
      %v1680 = vrot.slane %v1568, 1
      %v1681 = vrot.slane %v1569, 1
      %v1682 = vsel %vm526, %v1680, %v1681
      %v1683 = vrot.slane %v1570, 1
      %v1684 = vsel %vm526, %v1681, %v1683
      %v1685 = vrot.slane %v1571, 1
      %v1686 = vrot.slane %v1572, 1
      %v1687 = vsel %vm526, %v1685, %v1686
      %v1688 = vrot.slane %v1573, 1
      %v1689 = vsel %vm526, %v1686, %v1688
      %v1690 = vrot.slane %v1574, 1
      %v1691 = vrot.slane %v1575, 1
      %v1692 = vsel %vm526, %v1690, %v1691
      %v1693 = vrot.slane %v1576, 1
      %v1694 = vsel %vm526, %v1691, %v1693
      %v1695 = vrot.slane %v1577, 1
      %v1696 = vrot.slane %v1578, 1
      %v1697 = vsel %vm526, %v1695, %v1696
      %v1698 = vrot.slane %v1579, 1
      %v1699 = vsel %vm526, %v1696, %v1698
      %v1700 = vrot.slane %v1580, 1
      %v1701 = vrot.slane %v1581, 1
      %v1702 = vsel %vm526, %v1700, %v1701
      %v1703 = vrot.slane %v1582, 1
      %v1704 = vsel %vm526, %v1701, %v1703
      %v1705 = vrot.slane %v1583, 1
      %v1706 = vrot.slane %v1584, 1
      %v1707 = vsel %vm526, %v1705, %v1706
      %v1708 = vrot.slane %v1585, 1
      %v1709 = vsel %vm526, %v1706, %v1708
      %v1710 = vrot.slane %v1586, 1
      %v1711 = vrot.slane %v1587, 1
      %v1712 = vsel %vm526, %v1710, %v1711
      %v1713 = vrot.slane %v1588, 1
      %v1714 = vsel %vm526, %v1711, %v1713
      %v1715 = vrot.slane %v1589, 1
      %v1716 = vrot.slane %v1590, 1
      %v1717 = vsel %vm526, %v1715, %v1716
      %v1718 = vrot.slane %v1591, 1
      %v1719 = vsel %vm526, %v1716, %v1718
      %v1752 = vadd.f32 %v1508, %v1642
      %v1753 = vadd.f32 %v1509, %v1644
      %v1754 = vadd.f32 %v1510, %v1647
      %v1755 = vadd.f32 %v1511, %v1649
      %v1756 = vadd.f32 %v1512, %v1652
      %v1757 = vadd.f32 %v1513, %v1654
      %v1758 = vadd.f32 %v1514, %v1657
      %v1759 = vadd.f32 %v1515, %v1659
      %v1760 = vadd.f32 %v1516, %v1662
      %v1761 = vadd.f32 %v1517, %v1664
      %v1762 = vadd.f32 %v1518, %v1667
      %v1763 = vadd.f32 %v1519, %v1669
      %v1764 = vadd.f32 %v1520, %v1672
      %v1765 = vadd.f32 %v1521, %v1674
      %v1766 = vadd.f32 %v1522, %v1677
      %v1767 = vadd.f32 %v1523, %v1679
      %v1768 = vadd.f32 %v1524, %v1682
      %v1769 = vadd.f32 %v1525, %v1684
      %v1770 = vadd.f32 %v1526, %v1687
      %v1771 = vadd.f32 %v1527, %v1689
      %v1772 = vadd.f32 %v1528, %v1692
      %v1773 = vadd.f32 %v1529, %v1694
      %v1774 = vadd.f32 %v1530, %v1697
      %v1775 = vadd.f32 %v1531, %v1699
      %v1776 = vadd.f32 %v1532, %v1702
      %v1777 = vadd.f32 %v1533, %v1704
      %v1778 = vadd.f32 %v1534, %v1707
      %v1779 = vadd.f32 %v1535, %v1709
      %v1780 = vadd.f32 %v1536, %v1712
      %v1781 = vadd.f32 %v1537, %v1714
      %v1782 = vadd.f32 %v1538, %v1717
      %v1783 = vadd.f32 %v1539, %v1719
      %v1784 = vlaneseq
      %v1785 = vshrl.u32 %v1784, 7
      %v1786 = vsub.s32 0, %v1785
      %v1787 = vrot.slane %v389, %v1786
      %v1788 = vmul.f32 %v340, %v1787
      %v1789 = vmul.f32 %v341, %v1787
      %v1790 = vmul.f32 %v342, %v1787
      %v1791 = vmul.f32 %v343, %v1787
      %v1792 = vmul.f32 %v344, %v1787
      %v1793 = vmul.f32 %v345, %v1787
      %v1794 = vmul.f32 %v346, %v1787
      %v1795 = vmul.f32 %v347, %v1787
      %v1796 = vmul.f32 %v348, %v1787
      %v1797 = vmul.f32 %v349, %v1787
      %v1798 = vmul.f32 %v350, %v1787
      %v1799 = vmul.f32 %v351, %v1787
      %v1800 = vmul.f32 %v352, %v1787
      %v1801 = vmul.f32 %v353, %v1787
      %v1802 = vmul.f32 %v354, %v1787
      %v1803 = vmul.f32 %v355, %v1787
      %v1804 = vmul.f32 %v356, %v1787
      %v1805 = vmul.f32 %v357, %v1787
      %v1806 = vmul.f32 %v358, %v1787
      %v1807 = vmul.f32 %v359, %v1787
      %v1808 = vmul.f32 %v360, %v1787
      %v1809 = vmul.f32 %v361, %v1787
      %v1810 = vmul.f32 %v362, %v1787
      %v1811 = vmul.f32 %v363, %v1787
      %v1812 = vmul.f32 %v364, %v1787
      %v1813 = vmul.f32 %v365, %v1787
      %v1814 = vmul.f32 %v366, %v1787
      %v1815 = vmul.f32 %v367, %v1787
      %v1816 = vmul.f32 %v368, %v1787
      %v1817 = vmul.f32 %v369, %v1787
      %v1818 = vmul.f32 %v370, %v1787
      %v1819 = vmul.f32 %v371, %v1787
      %v1820 = vmul.f32 %v372, %v1787
      %v1821 = vmul.f32 %v373, %v1787
      %v1822 = vmul.f32 %v374, %v1787
      %v1823 = vmul.f32 %v375, %v1787
      %v1824 = vmul.f32 %v376, %v1787
      %v1825 = vmul.f32 %v377, %v1787
      %v1826 = vmul.f32 %v378, %v1787
      %v1827 = vmul.f32 %v379, %v1787
      %v1828 = vmul.f32 %v380, %v1787
      %v1829 = vmul.f32 %v381, %v1787
      %v1830 = vmul.f32 %v382, %v1787
      %v1831 = vmul.f32 %v383, %v1787
      %v1832 = vmul.f32 %v384, %v1787
      %v1833 = vmul.f32 %v385, %v1787
      %v1834 = vmul.f32 %v386, %v1787
      %v1835 = vmul.f32 %v387, %v1787
      %v1884 = vrot.slane %v1788, 2
      %v1885 = vrot.slane %v1789, 2
      %v1886 = vsel %vm771, %v1884, %v1885
      %v1887 = vrot.slane %v1790, 2
      %v1888 = vsel %vm771, %v1885, %v1887
      %v1889 = vrot.slane %v1791, 2
      %v1890 = vrot.slane %v1792, 2
      %v1891 = vsel %vm771, %v1889, %v1890
      %v1892 = vrot.slane %v1793, 2
      %v1893 = vsel %vm771, %v1890, %v1892
      %v1894 = vrot.slane %v1794, 2
      %v1895 = vrot.slane %v1795, 2
      %v1896 = vsel %vm771, %v1894, %v1895
      %v1897 = vrot.slane %v1796, 2
      %v1898 = vsel %vm771, %v1895, %v1897
      %v1899 = vrot.slane %v1797, 2
      %v1900 = vrot.slane %v1798, 2
      %v1901 = vsel %vm771, %v1899, %v1900
      %v1902 = vrot.slane %v1799, 2
      %v1903 = vsel %vm771, %v1900, %v1902
      %v1904 = vrot.slane %v1800, 2
      %v1905 = vrot.slane %v1801, 2
      %v1906 = vsel %vm771, %v1904, %v1905
      %v1907 = vrot.slane %v1802, 2
      %v1908 = vsel %vm771, %v1905, %v1907
      %v1909 = vrot.slane %v1803, 2
      %v1910 = vrot.slane %v1804, 2
      %v1911 = vsel %vm771, %v1909, %v1910
      %v1912 = vrot.slane %v1805, 2
      %v1913 = vsel %vm771, %v1910, %v1912
      %v1914 = vrot.slane %v1806, 2
      %v1915 = vrot.slane %v1807, 2
      %v1916 = vsel %vm771, %v1914, %v1915
      %v1917 = vrot.slane %v1808, 2
      %v1918 = vsel %vm771, %v1915, %v1917
      %v1919 = vrot.slane %v1809, 2
      %v1920 = vrot.slane %v1810, 2
      %v1921 = vsel %vm771, %v1919, %v1920
      %v1922 = vrot.slane %v1811, 2
      %v1923 = vsel %vm771, %v1920, %v1922
      %v1924 = vrot.slane %v1812, 2
      %v1925 = vrot.slane %v1813, 2
      %v1926 = vsel %vm771, %v1924, %v1925
      %v1927 = vrot.slane %v1814, 2
      %v1928 = vsel %vm771, %v1925, %v1927
      %v1929 = vrot.slane %v1815, 2
      %v1930 = vrot.slane %v1816, 2
      %v1931 = vsel %vm771, %v1929, %v1930
      %v1932 = vrot.slane %v1817, 2
      %v1933 = vsel %vm771, %v1930, %v1932
      %v1934 = vrot.slane %v1818, 2
      %v1935 = vrot.slane %v1819, 2
      %v1936 = vsel %vm771, %v1934, %v1935
      %v1937 = vrot.slane %v1820, 2
      %v1938 = vsel %vm771, %v1935, %v1937
      %v1939 = vrot.slane %v1821, 2
      %v1940 = vrot.slane %v1822, 2
      %v1941 = vsel %vm771, %v1939, %v1940
      %v1942 = vrot.slane %v1823, 2
      %v1943 = vsel %vm771, %v1940, %v1942
      %v1944 = vrot.slane %v1824, 2
      %v1945 = vrot.slane %v1825, 2
      %v1946 = vsel %vm771, %v1944, %v1945
      %v1947 = vrot.slane %v1826, 2
      %v1948 = vsel %vm771, %v1945, %v1947
      %v1949 = vrot.slane %v1827, 2
      %v1950 = vrot.slane %v1828, 2
      %v1951 = vsel %vm771, %v1949, %v1950
      %v1952 = vrot.slane %v1829, 2
      %v1953 = vsel %vm771, %v1950, %v1952
      %v1954 = vrot.slane %v1830, 2
      %v1955 = vrot.slane %v1831, 2
      %v1956 = vsel %vm771, %v1954, %v1955
      %v1957 = vrot.slane %v1832, 2
      %v1958 = vsel %vm771, %v1955, %v1957
      %v1959 = vrot.slane %v1833, 2
      %v1960 = vrot.slane %v1834, 2
      %v1961 = vsel %vm771, %v1959, %v1960
      %v1962 = vrot.slane %v1835, 2
      %v1963 = vsel %vm771, %v1960, %v1962
      %v1996 = vadd.f32 %v1752, %v1886
      %v1997 = vadd.f32 %v1753, %v1888
      %v1998 = vadd.f32 %v1754, %v1891
      %v1999 = vadd.f32 %v1755, %v1893
      %v2000 = vadd.f32 %v1756, %v1896
      %v2001 = vadd.f32 %v1757, %v1898
      %v2002 = vadd.f32 %v1758, %v1901
      %v2003 = vadd.f32 %v1759, %v1903
      %v2004 = vadd.f32 %v1760, %v1906
      %v2005 = vadd.f32 %v1761, %v1908
      %v2006 = vadd.f32 %v1762, %v1911
      %v2007 = vadd.f32 %v1763, %v1913
      %v2008 = vadd.f32 %v1764, %v1916
      %v2009 = vadd.f32 %v1765, %v1918
      %v2010 = vadd.f32 %v1766, %v1921
      %v2011 = vadd.f32 %v1767, %v1923
      %v2012 = vadd.f32 %v1768, %v1926
      %v2013 = vadd.f32 %v1769, %v1928
      %v2014 = vadd.f32 %v1770, %v1931
      %v2015 = vadd.f32 %v1771, %v1933
      %v2016 = vadd.f32 %v1772, %v1936
      %v2017 = vadd.f32 %v1773, %v1938
      %v2018 = vadd.f32 %v1774, %v1941
      %v2019 = vadd.f32 %v1775, %v1943
      %v2020 = vadd.f32 %v1776, %v1946
      %v2021 = vadd.f32 %v1777, %v1948
      %v2022 = vadd.f32 %v1778, %v1951
      %v2023 = vadd.f32 %v1779, %v1953
      %v2024 = vadd.f32 %v1780, %v1956
      %v2025 = vadd.f32 %v1781, %v1958
      %v2026 = vadd.f32 %v1782, %v1961
      %v2027 = vadd.f32 %v1783, %v1963
      %v2028 = vld [vmem:[%s2] sm:$0x1]
      %v2030 = vlaneseq
      %v2031 = vshrl.u32 %v2030, 7
      %v2032 = vsub.s32 0, %v2031
      %v2033 = vrot.slane %v2028, %v2032
      %v2035 = vmul.f32 %v1996, %v2033
      %v2036 = vmul.f32 %v1997, %v2033
      %v2037 = vmul.f32 %v1998, %v2033
      %v2038 = vmul.f32 %v1999, %v2033
      %v2039 = vmul.f32 %v2000, %v2033
      %v2040 = vmul.f32 %v2001, %v2033
      %v2041 = vmul.f32 %v2002, %v2033
      %v2042 = vmul.f32 %v2003, %v2033
      %v2043 = vmul.f32 %v2004, %v2033
      %v2044 = vmul.f32 %v2005, %v2033
      %v2045 = vmul.f32 %v2006, %v2033
      %v2046 = vmul.f32 %v2007, %v2033
      %v2047 = vmul.f32 %v2008, %v2033
      %v2048 = vmul.f32 %v2009, %v2033
      %v2049 = vmul.f32 %v2010, %v2033
      %v2050 = vmul.f32 %v2011, %v2033
      %v2051 = vmul.f32 %v2012, %v2033
      %v2052 = vmul.f32 %v2013, %v2033
      %v2053 = vmul.f32 %v2014, %v2033
      %v2054 = vmul.f32 %v2015, %v2033
      %v2055 = vmul.f32 %v2016, %v2033
      %v2056 = vmul.f32 %v2017, %v2033
      %v2057 = vmul.f32 %v2018, %v2033
      %v2058 = vmul.f32 %v2019, %v2033
      %v2059 = vmul.f32 %v2020, %v2033
      %v2060 = vmul.f32 %v2021, %v2033
      %v2061 = vmul.f32 %v2022, %v2033
      %v2062 = vmul.f32 %v2023, %v2033
      %v2063 = vmul.f32 %v2024, %v2033
      %v2064 = vmul.f32 %v2025, %v2033
      %v2065 = vmul.f32 %v2026, %v2033
      %v2066 = vmul.f32 %v2027, %v2033
      %v2067 = vld [vmem:[%s3] sm:$0x1]
      %v2069 = vlaneseq
      %v2070 = vshrl.u32 %v2069, 7
      %v2071 = vsub.s32 0, %v2070
      %v2072 = vrot.slane %v2067, %v2071
      %v2074 = vadd.f32 %v2035, %v2072
      %v2075 = vadd.f32 %v2036, %v2072
      %v2076 = vadd.f32 %v2037, %v2072
      %v2077 = vadd.f32 %v2038, %v2072
      %v2078 = vadd.f32 %v2039, %v2072
      %v2079 = vadd.f32 %v2040, %v2072
      %v2080 = vadd.f32 %v2041, %v2072
      %v2081 = vadd.f32 %v2042, %v2072
      %v2082 = vadd.f32 %v2043, %v2072
      %v2083 = vadd.f32 %v2044, %v2072
      %v2084 = vadd.f32 %v2045, %v2072
      %v2085 = vadd.f32 %v2046, %v2072
      %v2086 = vadd.f32 %v2047, %v2072
      %v2087 = vadd.f32 %v2048, %v2072
      %v2088 = vadd.f32 %v2049, %v2072
      %v2089 = vadd.f32 %v2050, %v2072
      %v2090 = vadd.f32 %v2051, %v2072
      %v2091 = vadd.f32 %v2052, %v2072
      %v2092 = vadd.f32 %v2053, %v2072
      %v2093 = vadd.f32 %v2054, %v2072
      %v2094 = vadd.f32 %v2055, %v2072
      %v2095 = vadd.f32 %v2056, %v2072
      %v2096 = vadd.f32 %v2057, %v2072
      %v2097 = vadd.f32 %v2058, %v2072
      %v2098 = vadd.f32 %v2059, %v2072
      %v2099 = vadd.f32 %v2060, %v2072
      %v2100 = vadd.f32 %v2061, %v2072
      %v2101 = vadd.f32 %v2062, %v2072
      %v2102 = vadd.f32 %v2063, %v2072
      %v2103 = vadd.f32 %v2064, %v2072
      %v2104 = vadd.f32 %v2065, %v2072
      %v2105 = vadd.f32 %v2066, %v2072
      %v2106 = vmax.f32 %v2074, 0.0
      %v2107 = vmax.f32 %v2075, 0.0
      %v2108 = vmax.f32 %v2076, 0.0
      %v2109 = vmax.f32 %v2077, 0.0
      %v2110 = vmax.f32 %v2078, 0.0
      %v2111 = vmax.f32 %v2079, 0.0
      %v2112 = vmax.f32 %v2080, 0.0
      %v2113 = vmax.f32 %v2081, 0.0
      %v2114 = vmax.f32 %v2082, 0.0
      %v2115 = vmax.f32 %v2083, 0.0
      %v2116 = vmax.f32 %v2084, 0.0
      %v2117 = vmax.f32 %v2085, 0.0
      %v2118 = vmax.f32 %v2086, 0.0
      %v2119 = vmax.f32 %v2087, 0.0
      %v2120 = vmax.f32 %v2088, 0.0
      %v2121 = vmax.f32 %v2089, 0.0
      %v2122 = vmax.f32 %v2090, 0.0
      %v2123 = vmax.f32 %v2091, 0.0
      %v2124 = vmax.f32 %v2092, 0.0
      %v2125 = vmax.f32 %v2093, 0.0
      %v2126 = vmax.f32 %v2094, 0.0
      %v2127 = vmax.f32 %v2095, 0.0
      %v2128 = vmax.f32 %v2096, 0.0
      %v2129 = vmax.f32 %v2097, 0.0
      %v2130 = vmax.f32 %v2098, 0.0
      %v2131 = vmax.f32 %v2099, 0.0
      %v2132 = vmax.f32 %v2100, 0.0
      %v2133 = vmax.f32 %v2101, 0.0
      %v2134 = vmax.f32 %v2102, 0.0
      %v2135 = vmax.f32 %v2103, 0.0
      %v2136 = vmax.f32 %v2104, 0.0
      %v2137 = vmax.f32 %v2105, 0.0
      %v2138 = vpack.c.bf16 %v2107, %v2106
      %v2139 = vpack.c.bf16 %v2109, %v2108
      %v2140 = vpack.c.bf16 %v2111, %v2110
      %v2141 = vpack.c.bf16 %v2113, %v2112
      %v2142 = vpack.c.bf16 %v2115, %v2114
      %v2143 = vpack.c.bf16 %v2117, %v2116
      %v2144 = vpack.c.bf16 %v2119, %v2118
      %v2145 = vpack.c.bf16 %v2121, %v2120
      %v2146 = vpack.c.bf16 %v2123, %v2122
      %v2147 = vpack.c.bf16 %v2125, %v2124
      %v2148 = vpack.c.bf16 %v2127, %v2126
      %v2149 = vpack.c.bf16 %v2129, %v2128
      %v2150 = vpack.c.bf16 %v2131, %v2130
      %v2151 = vpack.c.bf16 %v2133, %v2132
      %v2152 = vpack.c.bf16 %v2135, %v2134
      %v2153 = vpack.c.bf16 %v2137, %v2136
      %v2154 = vld [vmem:[%s4] sm:$0xf]
      %v2155 = vld [vmem:[%s4 + $0x4] sm:$0xf]
      %v2156 = vld [vmem:[%s4 + $0x8] sm:$0xf]
      %v2157 = vld [vmem:[%s4 + $0xc] sm:$0xf]
      %v2158 = vld [vmem:[%s4 + $0x10] sm:$0xf]
      %v2159 = vld [vmem:[%s4 + $0x14] sm:$0xf]
      %v2160 = vld [vmem:[%s4 + $0x18] sm:$0xf]
      %v2161 = vld [vmem:[%s4 + $0x1c] sm:$0xf]
      %v2162 = vld [vmem:[%s4 + $0x20] sm:$0xf]
      %v2163 = vld [vmem:[%s4 + $0x24] sm:$0xf]
      %v2164 = vld [vmem:[%s4 + $0x28] sm:$0xf]
      %v2165 = vld [vmem:[%s4 + $0x2c] sm:$0xf]
      %v2166 = vld [vmem:[%s4 + $0x30] sm:$0xf]
      %v2167 = vld [vmem:[%s4 + $0x34] sm:$0xf]
      %v2168 = vld [vmem:[%s4 + $0x38] sm:$0xf]
      %v2169 = vld [vmem:[%s4 + $0x3c] sm:$0xf]
      %v2186 = vunpack.c.l.b16 %v2154
      %v2187 = vunpack.c.l.b16 %v2155
      %v2188 = vunpack.c.l.b16 %v2156
      %v2189 = vunpack.c.l.b16 %v2157
      %v2190 = vunpack.c.l.b16 %v2158
      %v2191 = vunpack.c.l.b16 %v2159
      %v2192 = vunpack.c.l.b16 %v2160
      %v2193 = vunpack.c.l.b16 %v2161
      %v2194 = vunpack.c.l.b16 %v2162
      %v2195 = vunpack.c.l.b16 %v2163
      %v2196 = vunpack.c.l.b16 %v2164
      %v2197 = vunpack.c.l.b16 %v2165
      %v2198 = vunpack.c.l.b16 %v2166
      %v2199 = vunpack.c.l.b16 %v2167
      %v2200 = vunpack.c.l.b16 %v2168
      %v2201 = vunpack.c.l.b16 %v2169
      %v2202 = vpack.c.b16 %v2187, %v2186
      %v2203 = vpack.c.b16 %v2189, %v2188
      %v2204 = vpack.c.b16 %v2191, %v2190
      %v2205 = vpack.c.b16 %v2193, %v2192
      %v2206 = vpack.c.b16 %v2195, %v2194
      %v2207 = vpack.c.b16 %v2197, %v2196
      %v2208 = vpack.c.b16 %v2199, %v2198
      %v2209 = vpack.c.b16 %v2201, %v2200
      %2218 = vmatprep.subr.bf16.mxu0 0
      %2219 = vmatpush1.bf16.msra.mxu0 %v2202
      %2220 = vmatprep.subr.bf16.mxu0 0
      %2221 = vmatpush1.bf16.msra.mxu0 %v2203
      %2222 = vmatprep.subr.bf16.mxu0 0
      %2223 = vmatpush1.bf16.msra.mxu0 %v2204
      %2224 = vmatprep.subr.bf16.mxu0 0
      %2225 = vmatpush1.bf16.msra.mxu0 %v2205
      %2226 = vmatprep.subr.bf16.mxu0 0
      %2227 = vmatpush1.bf16.msra.mxu0 %v2206
      %2228 = vmatprep.subr.bf16.mxu0 0
      %2229 = vmatpush1.bf16.msra.mxu0 %v2207
      %2230 = vmatprep.subr.bf16.mxu0 0
      %2231 = vmatpush1.bf16.msra.mxu0 %v2208
      %2232 = vmatprep.subr.bf16.mxu0 0
      %2233 = vmatpush1.bf16.msra.mxu0 %v2209
      %2234 = vmatprep.subr.bf16.mxu0 0
      %2235 = vmatpush1.bf16.msra.mxu0 0
      %2236 = vmatprep.subr.bf16.mxu0 0
      %2237 = vmatpush1.bf16.msra.mxu0 0
      %2238 = vmatprep.subr.bf16.mxu0 0
      %2239 = vmatpush1.bf16.msra.mxu0 0
      %2240 = vmatprep.subr.bf16.mxu0 0
      %2241 = vmatpush1.bf16.msra.mxu0 0
      %2242 = vmatprep.subr.bf16.mxu0 0
      %2243 = vmatpush1.bf16.msra.mxu0 0
      %2244 = vmatprep.subr.bf16.mxu0 0
      %2245 = vmatpush1.bf16.msra.mxu0 0
      %2246 = vmatprep.subr.bf16.mxu0 0
      %2247 = vmatpush1.bf16.msra.mxu0 0
      %2248 = vmatprep.subr.bf16.mxu0 0
      %2249 = vmatpush1.bf16.msra.mxu0 0
      %2250 = vmatprep.mubr.bf16.mxu0 0
      %2251 = vmatmul.mubr.bf16.gmra.mrb[0].mxu0 %v2138
      %v2252 = vpop.f32.mrb[0].mxu0
      %v2253 = vadd.f32 0.0, %v2252
      %v2254 = vpop.f32.mrb[0].mxu0
      %v2255 = vpop.f32.mrb[0].mxu0
      %v2256 = vadd.f32 0.0, %v2255
      %v2257 = vpop.f32.mrb[0].mxu0
      %2258 = vmatprep.mubr.bf16.mxu0 0
      %2259 = vmatmul.mubr.bf16.gmra.mrb[0].mxu0 %v2139
      %v2260 = vpop.f32.mrb[0].mxu0
      %v2261 = vadd.f32 0.0, %v2260
      %v2262 = vpop.f32.mrb[0].mxu0
      %v2263 = vpop.f32.mrb[0].mxu0
      %v2264 = vadd.f32 0.0, %v2263
      %v2265 = vpop.f32.mrb[0].mxu0
      %2266 = vmatprep.mubr.bf16.mxu0 0
      %2267 = vmatmul.mubr.bf16.gmra.mrb[0].mxu0 %v2140
      %v2268 = vpop.f32.mrb[0].mxu0
      %v2269 = vadd.f32 0.0, %v2268
      %v2270 = vpop.f32.mrb[0].mxu0
      %v2271 = vpop.f32.mrb[0].mxu0
      %v2272 = vadd.f32 0.0, %v2271
      %v2273 = vpop.f32.mrb[0].mxu0
      %2274 = vmatprep.mubr.bf16.mxu0 0
      %2275 = vmatmul.mubr.bf16.gmra.mrb[0].mxu0 %v2141
      %v2276 = vpop.f32.mrb[0].mxu0
      %v2277 = vadd.f32 0.0, %v2276
      %v2278 = vpop.f32.mrb[0].mxu0
      %v2279 = vpop.f32.mrb[0].mxu0
      %v2280 = vadd.f32 0.0, %v2279
      %v2281 = vpop.f32.mrb[0].mxu0
      %2282 = vmatprep.mubr.bf16.mxu0 0
      %2283 = vmatmul.mubr.bf16.gmra.mrb[0].mxu0 %v2142
      %v2284 = vpop.f32.mrb[0].mxu0
      %v2285 = vadd.f32 0.0, %v2284
      %v2286 = vpop.f32.mrb[0].mxu0
      %v2287 = vpop.f32.mrb[0].mxu0
      %v2288 = vadd.f32 0.0, %v2287
      %v2289 = vpop.f32.mrb[0].mxu0
      %2290 = vmatprep.mubr.bf16.mxu0 0
      %2291 = vmatmul.mubr.bf16.gmra.mrb[0].mxu0 %v2143
      %v2292 = vpop.f32.mrb[0].mxu0
      %v2293 = vadd.f32 0.0, %v2292
      %v2294 = vpop.f32.mrb[0].mxu0
      %v2295 = vpop.f32.mrb[0].mxu0
      %v2296 = vadd.f32 0.0, %v2295
      %v2297 = vpop.f32.mrb[0].mxu0
      %2298 = vmatprep.mubr.bf16.mxu0 0
      %2299 = vmatmul.mubr.bf16.gmra.mrb[0].mxu0 %v2144
      %v2300 = vpop.f32.mrb[0].mxu0
      %v2301 = vadd.f32 0.0, %v2300
      %v2302 = vpop.f32.mrb[0].mxu0
      %v2303 = vpop.f32.mrb[0].mxu0
      %v2304 = vadd.f32 0.0, %v2303
      %v2305 = vpop.f32.mrb[0].mxu0
      %2306 = vmatprep.mubr.bf16.mxu0 0
      %2307 = vmatmul.mubr.bf16.gmra.mrb[0].mxu0 %v2145
      %v2308 = vpop.f32.mrb[0].mxu0
      %v2309 = vadd.f32 0.0, %v2308
      %v2310 = vpop.f32.mrb[0].mxu0
      %v2311 = vpop.f32.mrb[0].mxu0
      %v2312 = vadd.f32 0.0, %v2311
      %v2313 = vpop.f32.mrb[0].mxu0
      %2314 = vmatprep.mubr.bf16.mxu0 0
      %2315 = vmatmul.mubr.bf16.gmra.mrb[0].mxu0 %v2146
      %v2316 = vpop.f32.mrb[0].mxu0
      %v2317 = vadd.f32 0.0, %v2316
      %v2318 = vpop.f32.mrb[0].mxu0
      %v2319 = vpop.f32.mrb[0].mxu0
      %v2320 = vadd.f32 0.0, %v2319
      %v2321 = vpop.f32.mrb[0].mxu0
      %2322 = vmatprep.mubr.bf16.mxu0 0
      %2323 = vmatmul.mubr.bf16.gmra.mrb[0].mxu0 %v2147
      %v2324 = vpop.f32.mrb[0].mxu0
      %v2325 = vadd.f32 0.0, %v2324
      %v2326 = vpop.f32.mrb[0].mxu0
      %v2327 = vpop.f32.mrb[0].mxu0
      %v2328 = vadd.f32 0.0, %v2327
      %v2329 = vpop.f32.mrb[0].mxu0
      %2330 = vmatprep.mubr.bf16.mxu0 0
      %2331 = vmatmul.mubr.bf16.gmra.mrb[0].mxu0 %v2148
      %v2332 = vpop.f32.mrb[0].mxu0
      %v2333 = vadd.f32 0.0, %v2332
      %v2334 = vpop.f32.mrb[0].mxu0
      %v2335 = vpop.f32.mrb[0].mxu0
      %v2336 = vadd.f32 0.0, %v2335
      %v2337 = vpop.f32.mrb[0].mxu0
      %2338 = vmatprep.mubr.bf16.mxu0 0
      %2339 = vmatmul.mubr.bf16.gmra.mrb[0].mxu0 %v2149
      %v2340 = vpop.f32.mrb[0].mxu0
      %v2341 = vadd.f32 0.0, %v2340
      %v2342 = vpop.f32.mrb[0].mxu0
      %v2343 = vpop.f32.mrb[0].mxu0
      %v2344 = vadd.f32 0.0, %v2343
      %v2345 = vpop.f32.mrb[0].mxu0
      %2346 = vmatprep.mubr.bf16.mxu0 0
      %2347 = vmatmul.mubr.bf16.gmra.mrb[0].mxu0 %v2150
      %v2348 = vpop.f32.mrb[0].mxu0
      %v2349 = vadd.f32 0.0, %v2348
      %v2350 = vpop.f32.mrb[0].mxu0
      %v2351 = vpop.f32.mrb[0].mxu0
      %v2352 = vadd.f32 0.0, %v2351
      %v2353 = vpop.f32.mrb[0].mxu0
      %2354 = vmatprep.mubr.bf16.mxu0 0
      %2355 = vmatmul.mubr.bf16.gmra.mrb[0].mxu0 %v2151
      %v2356 = vpop.f32.mrb[0].mxu0
      %v2357 = vadd.f32 0.0, %v2356
      %v2358 = vpop.f32.mrb[0].mxu0
      %v2359 = vpop.f32.mrb[0].mxu0
      %v2360 = vadd.f32 0.0, %v2359
      %v2361 = vpop.f32.mrb[0].mxu0
      %2362 = vmatprep.mubr.bf16.mxu0 0
      %2363 = vmatmul.mubr.bf16.gmra.mrb[0].mxu0 %v2152
      %v2364 = vpop.f32.mrb[0].mxu0
      %v2365 = vadd.f32 0.0, %v2364
      %v2366 = vpop.f32.mrb[0].mxu0
      %v2367 = vpop.f32.mrb[0].mxu0
      %v2368 = vadd.f32 0.0, %v2367
      %v2369 = vpop.f32.mrb[0].mxu0
      %2370 = vmatprep.mubr.bf16.mxu0 0
      %2371 = vmatmul.mubr.bf16.gmra.mrb[0].mxu0 %v2153
      %v2372 = vpop.f32.mrb[0].mxu0
      %v2373 = vadd.f32 0.0, %v2372
      %v2374 = vpop.f32.mrb[0].mxu0
      %v2375 = vpop.f32.mrb[0].mxu0
      %v2376 = vadd.f32 0.0, %v2375
      %v2377 = vpop.f32.mrb[0].mxu0
      %2378 = vdwg.mxu0
      %v2379 = vld [vmem:[%s5] sm:$0x1]
      %v2381 = vlaneseq
      %v2382 = vshrl.u32 %v2381, 7
      %v2383 = vsub.s32 0, %v2382
      %v2384 = vrot.slane %v2379, %v2383
      %v2386 = vmul.f32 %v2253, %v2384
      %v2387 = vmul.f32 %v2256, %v2384
      %v2388 = vmul.f32 %v2261, %v2384
      %v2389 = vmul.f32 %v2264, %v2384
      %v2390 = vmul.f32 %v2269, %v2384
      %v2391 = vmul.f32 %v2272, %v2384
      %v2392 = vmul.f32 %v2277, %v2384
      %v2393 = vmul.f32 %v2280, %v2384
      %v2394 = vmul.f32 %v2285, %v2384
      %v2395 = vmul.f32 %v2288, %v2384
      %v2396 = vmul.f32 %v2293, %v2384
      %v2397 = vmul.f32 %v2296, %v2384
      %v2398 = vmul.f32 %v2301, %v2384
      %v2399 = vmul.f32 %v2304, %v2384
      %v2400 = vmul.f32 %v2309, %v2384
      %v2401 = vmul.f32 %v2312, %v2384
      %v2402 = vmul.f32 %v2317, %v2384
      %v2403 = vmul.f32 %v2320, %v2384
      %v2404 = vmul.f32 %v2325, %v2384
      %v2405 = vmul.f32 %v2328, %v2384
      %v2406 = vmul.f32 %v2333, %v2384
      %v2407 = vmul.f32 %v2336, %v2384
      %v2408 = vmul.f32 %v2341, %v2384
      %v2409 = vmul.f32 %v2344, %v2384
      %v2410 = vmul.f32 %v2349, %v2384
      %v2411 = vmul.f32 %v2352, %v2384
      %v2412 = vmul.f32 %v2357, %v2384
      %v2413 = vmul.f32 %v2360, %v2384
      %v2414 = vmul.f32 %v2365, %v2384
      %v2415 = vmul.f32 %v2368, %v2384
      %v2416 = vmul.f32 %v2373, %v2384
      %v2417 = vmul.f32 %v2376, %v2384
      %v2418 = vld [vmem:[%s6] sm:$0x1]
      %v2420 = vlaneseq
      %v2421 = vshrl.u32 %v2420, 7
      %v2422 = vsub.s32 0, %v2421
      %v2423 = vrot.slane %v2418, %v2422
      %v2425 = vadd.f32 %v2386, %v2423
      %v2426 = vadd.f32 %v2387, %v2423
      %v2427 = vadd.f32 %v2388, %v2423
      %v2428 = vadd.f32 %v2389, %v2423
      %v2429 = vadd.f32 %v2390, %v2423
      %v2430 = vadd.f32 %v2391, %v2423
      %v2431 = vadd.f32 %v2392, %v2423
      %v2432 = vadd.f32 %v2393, %v2423
      %v2433 = vadd.f32 %v2394, %v2423
      %v2434 = vadd.f32 %v2395, %v2423
      %v2435 = vadd.f32 %v2396, %v2423
      %v2436 = vadd.f32 %v2397, %v2423
      %v2437 = vadd.f32 %v2398, %v2423
      %v2438 = vadd.f32 %v2399, %v2423
      %v2439 = vadd.f32 %v2400, %v2423
      %v2440 = vadd.f32 %v2401, %v2423
      %v2441 = vadd.f32 %v2402, %v2423
      %v2442 = vadd.f32 %v2403, %v2423
      %v2443 = vadd.f32 %v2404, %v2423
      %v2444 = vadd.f32 %v2405, %v2423
      %v2445 = vadd.f32 %v2406, %v2423
      %v2446 = vadd.f32 %v2407, %v2423
      %v2447 = vadd.f32 %v2408, %v2423
      %v2448 = vadd.f32 %v2409, %v2423
      %v2449 = vadd.f32 %v2410, %v2423
      %v2450 = vadd.f32 %v2411, %v2423
      %v2451 = vadd.f32 %v2412, %v2423
      %v2452 = vadd.f32 %v2413, %v2423
      %v2453 = vadd.f32 %v2414, %v2423
      %v2454 = vadd.f32 %v2415, %v2423
      %v2455 = vadd.f32 %v2416, %v2423
      %v2456 = vadd.f32 %v2417, %v2423
      %v2457 = vmax.f32 %v2425, 0.0
      %v2458 = vmax.f32 %v2426, 0.0
      %v2459 = vmax.f32 %v2427, 0.0
      %v2460 = vmax.f32 %v2428, 0.0
      %v2461 = vmax.f32 %v2429, 0.0
      %v2462 = vmax.f32 %v2430, 0.0
      %v2463 = vmax.f32 %v2431, 0.0
      %v2464 = vmax.f32 %v2432, 0.0
      %v2465 = vmax.f32 %v2433, 0.0
      %v2466 = vmax.f32 %v2434, 0.0
      %v2467 = vmax.f32 %v2435, 0.0
      %v2468 = vmax.f32 %v2436, 0.0
      %v2469 = vmax.f32 %v2437, 0.0
      %v2470 = vmax.f32 %v2438, 0.0
      %v2471 = vmax.f32 %v2439, 0.0
      %v2472 = vmax.f32 %v2440, 0.0
      %v2473 = vmax.f32 %v2441, 0.0
      %v2474 = vmax.f32 %v2442, 0.0
      %v2475 = vmax.f32 %v2443, 0.0
      %v2476 = vmax.f32 %v2444, 0.0
      %v2477 = vmax.f32 %v2445, 0.0
      %v2478 = vmax.f32 %v2446, 0.0
      %v2479 = vmax.f32 %v2447, 0.0
      %v2480 = vmax.f32 %v2448, 0.0
      %v2481 = vmax.f32 %v2449, 0.0
      %v2482 = vmax.f32 %v2450, 0.0
      %v2483 = vmax.f32 %v2451, 0.0
      %v2484 = vmax.f32 %v2452, 0.0
      %v2485 = vmax.f32 %v2453, 0.0
      %v2486 = vmax.f32 %v2454, 0.0
      %v2487 = vmax.f32 %v2455, 0.0
      %v2488 = vmax.f32 %v2456, 0.0
      %v2489 = vpack.c.bf16 %v2458, %v2457
      %v2490 = vpack.c.bf16 %v2460, %v2459
      %v2491 = vpack.c.bf16 %v2462, %v2461
      %v2492 = vpack.c.bf16 %v2464, %v2463
      %v2493 = vpack.c.bf16 %v2466, %v2465
      %v2494 = vpack.c.bf16 %v2468, %v2467
      %v2495 = vpack.c.bf16 %v2470, %v2469
      %v2496 = vpack.c.bf16 %v2472, %v2471
      %v2497 = vpack.c.bf16 %v2474, %v2473
      %v2498 = vpack.c.bf16 %v2476, %v2475
      %v2499 = vpack.c.bf16 %v2478, %v2477
      %v2500 = vpack.c.bf16 %v2480, %v2479
      %v2501 = vpack.c.bf16 %v2482, %v2481
      %v2502 = vpack.c.bf16 %v2484, %v2483
      %v2503 = vpack.c.bf16 %v2486, %v2485
      %v2504 = vpack.c.bf16 %v2488, %v2487
      %v2521 = vunpack.c.l.b16 %v2489
      %v2522 = vunpack.c.h.b16 %v2489
      %v2523 = vunpack.c.l.b16 %v2490
      %v2524 = vunpack.c.h.b16 %v2490
      %v2525 = vunpack.c.l.b16 %v2491
      %v2526 = vunpack.c.h.b16 %v2491
      %v2527 = vunpack.c.l.b16 %v2492
      %v2528 = vunpack.c.h.b16 %v2492
      %v2529 = vunpack.c.l.b16 %v2493
      %v2530 = vunpack.c.h.b16 %v2493
      %v2531 = vunpack.c.l.b16 %v2494
      %v2532 = vunpack.c.h.b16 %v2494
      %v2533 = vunpack.c.l.b16 %v2495
      %v2534 = vunpack.c.h.b16 %v2495
      %v2535 = vunpack.c.l.b16 %v2496
      %v2536 = vunpack.c.h.b16 %v2496
      %v2537 = vunpack.c.l.b16 %v2497
      %v2538 = vunpack.c.h.b16 %v2497
      %v2539 = vunpack.c.l.b16 %v2498
      %v2540 = vunpack.c.h.b16 %v2498
      %v2541 = vunpack.c.l.b16 %v2499
      %v2542 = vunpack.c.h.b16 %v2499
      %v2543 = vunpack.c.l.b16 %v2500
      %v2544 = vunpack.c.h.b16 %v2500
      %v2545 = vunpack.c.l.b16 %v2501
      %v2546 = vunpack.c.h.b16 %v2501
      %v2547 = vunpack.c.l.b16 %v2502
      %v2548 = vunpack.c.h.b16 %v2502
      %v2549 = vunpack.c.l.b16 %v2503
      %v2550 = vunpack.c.h.b16 %v2503
      %v2551 = vunpack.c.l.b16 %v2504
      %v2552 = vunpack.c.h.b16 %v2504
      %v2553 = vpack.c.b16 %v2521, %v2521
      %v2554 = vpack.c.b16 %v2522, %v2522
      %v2555 = vpack.c.b16 %v2523, %v2523
      %v2556 = vpack.c.b16 %v2524, %v2524
      %v2557 = vpack.c.b16 %v2525, %v2525
      %v2558 = vpack.c.b16 %v2526, %v2526
      %v2559 = vpack.c.b16 %v2527, %v2527
      %v2560 = vpack.c.b16 %v2528, %v2528
      %v2561 = vpack.c.b16 %v2529, %v2529
      %v2562 = vpack.c.b16 %v2530, %v2530
      %v2563 = vpack.c.b16 %v2531, %v2531
      %v2564 = vpack.c.b16 %v2532, %v2532
      %v2565 = vpack.c.b16 %v2533, %v2533
      %v2566 = vpack.c.b16 %v2534, %v2534
      %v2567 = vpack.c.b16 %v2535, %v2535
      %v2568 = vpack.c.b16 %v2536, %v2536
      %v2569 = vpack.c.b16 %v2537, %v2537
      %v2570 = vpack.c.b16 %v2538, %v2538
      %v2571 = vpack.c.b16 %v2539, %v2539
      %v2572 = vpack.c.b16 %v2540, %v2540
      %v2573 = vpack.c.b16 %v2541, %v2541
      %v2574 = vpack.c.b16 %v2542, %v2542
      %v2575 = vpack.c.b16 %v2543, %v2543
      %v2576 = vpack.c.b16 %v2544, %v2544
      %v2577 = vpack.c.b16 %v2545, %v2545
      %v2578 = vpack.c.b16 %v2546, %v2546
      %v2579 = vpack.c.b16 %v2547, %v2547
      %v2580 = vpack.c.b16 %v2548, %v2548
      %v2581 = vpack.c.b16 %v2549, %v2549
      %v2582 = vpack.c.b16 %v2550, %v2550
      %v2583 = vpack.c.b16 %v2551, %v2551
      %v2584 = vpack.c.b16 %v2552, %v2552
      %2617 = vst [vmem:[%s278] sm:$0xf] %v2553
      %2618 = vst [vmem:[%s278 + $0x4] sm:$0xf] %v2554
      %2619 = vst [vmem:[%s278 + $0x8] sm:$0xf] %v2555
      %2620 = vst [vmem:[%s278 + $0xc] sm:$0xf] %v2556
      %2621 = vst [vmem:[%s278 + $0x10] sm:$0xf] %v2557
      %2622 = vst [vmem:[%s278 + $0x14] sm:$0xf] %v2558
      %2623 = vst [vmem:[%s278 + $0x18] sm:$0xf] %v2559
      %2624 = vst [vmem:[%s278 + $0x1c] sm:$0xf] %v2560
      %2625 = vst [vmem:[%s278 + $0x20] sm:$0xf] %v2561
      %2626 = vst [vmem:[%s278 + $0x24] sm:$0xf] %v2562
      %2627 = vst [vmem:[%s278 + $0x28] sm:$0xf] %v2563
      %2628 = vst [vmem:[%s278 + $0x2c] sm:$0xf] %v2564
      %2629 = vst [vmem:[%s278 + $0x30] sm:$0xf] %v2565
      %2630 = vst [vmem:[%s278 + $0x34] sm:$0xf] %v2566
      %2631 = vst [vmem:[%s278 + $0x38] sm:$0xf] %v2567
      %2632 = vst [vmem:[%s278 + $0x3c] sm:$0xf] %v2568
      %2633 = vst [vmem:[%s278 + $0x40] sm:$0xf] %v2569
      %2634 = vst [vmem:[%s278 + $0x44] sm:$0xf] %v2570
      %2635 = vst [vmem:[%s278 + $0x48] sm:$0xf] %v2571
      %2636 = vst [vmem:[%s278 + $0x4c] sm:$0xf] %v2572
      %2637 = vst [vmem:[%s278 + $0x50] sm:$0xf] %v2573
      %2638 = vst [vmem:[%s278 + $0x54] sm:$0xf] %v2574
      %2639 = vst [vmem:[%s278 + $0x58] sm:$0xf] %v2575
      %2640 = vst [vmem:[%s278 + $0x5c] sm:$0xf] %v2576
      %2641 = vst [vmem:[%s278 + $0x60] sm:$0xf] %v2577
      %2642 = vst [vmem:[%s278 + $0x64] sm:$0xf] %v2578
      %2643 = vst [vmem:[%s278 + $0x68] sm:$0xf] %v2579
      %2644 = vst [vmem:[%s278 + $0x6c] sm:$0xf] %v2580
      %2645 = vst [vmem:[%s278 + $0x70] sm:$0xf] %v2581
      %2646 = vst [vmem:[%s278 + $0x74] sm:$0xf] %v2582
      %2647 = vst [vmem:[%s278 + $0x78] sm:$0xf] %v2583
      %2648 = vst [vmem:[%s278 + $0x7c] sm:$0xf] %v2584
      %p2649 = scmp.lt.s32.totalorder %s18, 1
      %s2650 = scalar_select %p2649, %s18, 1
      %s2651 = smul.addr %s2650, 32
      %s2652 = smul.addr %s2651, 4
      %s2653 = scalar_lea.vmem %s7, %s2652
      // Predicated region
      $region49: #{_lambda_.7} parent=47 // pred_check
        %p2654 = pneg %p188
      $region50: #{_lambda_.7} parent=47 // pred_check_branch
        %2656 = sbr.rel (%p2654) target = $region52
      $region51: #{_lambda_.7} parent=47 // pred_region
        _
      $region52: #{_lambda_.7} parent=47 // pred_fallthru
        _
    $region48: #{_lambda_.7} parent=5 // pred_fallthru
      _
    %p2657 = scmp.le.s32.totalorder 2, %s13
    // Predicated region
    $region53: #{_lambda_.7} parent=5 // pred_check
      %p2658 = pneg %p2657
    $region54: #{_lambda_.7} parent=5 // pred_check_branch
      %2660 = sbr.rel (%p2658) target = $region56
    $region55: #{_lambda_.7} parent=5 // pred_region
      %s2661 = ssub.s32 %s13, 2
      // Predicated region
      $region57: #{_lambda_.7} parent=55 // pred_check
        %p2662 = pneg %p194
      $region58: #{_lambda_.7} parent=55 // pred_check_branch
        %2664 = sbr.rel (%p2662) target = $region60
      $region59: #{_lambda_.7} parent=55 // pred_region
        %p2665 = scmp.lt.s32.totalorder %s19, 1
        %s2666 = scalar_select %p2665, %s19, 1
        %s2667 = smul.addr %s2666, 32
        %s2668 = smul.addr %s2667, 4
        %s2669 = scalar_lea.vmem %s7, %s2668
      $region60: #{_lambda_.7} parent=55 // pred_fallthru
        _
    $region56: #{_lambda_.7} parent=5 // pred_fallthru
      _
  $region6: #{_lambda_.7} parent=0 // loop_footer
    %s17 = sadd.s32 1, %s13
  $region7: #{_lambda_.7} parent=0 // loop_footer_branch
    %12 = sbr.rel target = $region3
  $region8: #{_lambda_.7} parent=0 // loop_exit
    _

// kernel: _lambda_.6
$region0: #{_lambda_.6}
  #allocation0 [shape = 'u32[]', space=smem, size = 0x4, offset = 0x4, fixed_abs, tag = 'smem constant byte address 0x4 - core index']
  #allocation1 [shape = 'u32[144,128]{1,0:T(1,128)}', space=vmem, size = 0x12000, scoped, tag = 'internal scratch']
  %s0 = inlined_call_operand.vmem [shape: bf16[2,18,18,128], index: 0, kind: input, shape index: {}]
  %s1 = inlined_call_operand.vmem [shape: bf16[9,128,128], index: 1, kind: input, shape index: {}]
  %s2 = inlined_call_operand.vmem [shape: f32[1,128], index: 2, kind: input, shape index: {}]
  %s3 = inlined_call_operand.vmem [shape: f32[1,128], index: 3, kind: input, shape index: {}]
  %s4 = inlined_call_operand.vmem [shape: bf16[2,256,128], index: 4, kind: output, shape index: {}]
  %s5 = sld [smem:[#allocation0]]
  $region49: #{_lambda_.6} parent=0
    _
  %s7 = ssub.s32 1, %s5
  %s8 = scalar_select 0, %s7, %s5
  loop: start=0, step=1, limit=4
  $region2: #{_lambda_.6} parent=0 // loop_pre_header
    _
  $region3: #{_lambda_.6} parent=0 // loop_header
    %s10 = sphi 0, %s14
    %p11 = scmp.ge.s32.totalorder %s10, 4
    %s20 = sphi 0, %s22
    %s23 = sphi 0, %s20
    %s24 = sphi 0, %s23
    %s40 = sphi 0, %s24
    %s44 = sphi 0, %s44
    %s46 = sphi 0, %s44
    %s47 = sphi 0, %s46
    %s61 = sphi 0, %s47
    %s65 = sphi 0, %s65
    %s67 = sphi 0, %s65
    %s68 = sphi 0, %s67
    %s82 = sphi 0, %s68
    %s86 = sphi 0, %s86
    %s88 = sphi 0, %s86
    %s89 = sphi 0, %s88
    %s103 = sphi 0, %s89
    %s109 = sphi 0, %s111
    %s112 = sphi 0, %s109
    %s113 = sphi 0, %s112
    %s129 = sphi 0, %s113
  $region4: #{_lambda_.6} parent=0 // loop_header_branch
    %13 = sbr.rel (%p11) target = $region8
  $region5: #{_lambda_.6} parent=0 // loop_body
    %s15 = ssub.s32 %s10, 1
    %s16 = ssub.s32 %s10, 2
    %s17 = sadd.s32 %s10, 1
    %s18 = ssub.s32 %s10, %s17
    %p19 = scmp.eq.s32.totalorder %s18, 0
    %s21 = sadd.s32 %s20, 1
    %s22 = scalar_select %p19, %s20, %s21
    %p25 = pneg %p19
    %p26 = scmp.eq.s32.totalorder %s10, 1
    %p27 = por %p25, %p26
    %p28 = scmp.ne.s32.totalorder %s20, %s23
    %p29 = scmp.eq.s32.totalorder %s10, 0
    %p30 = por %p28, %p29
    %p31 = scmp.ne.s32.totalorder %s20, %s23
    %p32 = scmp.eq.s32.totalorder %s15, 1
    %p33 = por %p31, %p32
    %p34 = scmp.ne.s32.totalorder %s23, %s24
    %p35 = scmp.eq.s32.totalorder %s15, 0
    %p36 = por %p34, %p35
    %p37 = scmp.ne.s32.totalorder %s23, %s24
    %p38 = scmp.eq.s32.totalorder %s16, 1
    %p39 = por %p37, %p38
    %p41 = scmp.ne.s32.totalorder %s24, %s40
    %p42 = scmp.eq.s32.totalorder %s16, 0
    %p43 = por %p41, %p42
    %s45 = sadd.s32 %s44, 1
    %p48 = scmp.eq.s32.totalorder %s10, 1
    %p49 = scmp.ne.s32.totalorder %s44, %s46
    %p50 = scmp.eq.s32.totalorder %s10, 0
    %p51 = por %p49, %p50
    %p52 = scmp.ne.s32.totalorder %s44, %s46
    %p53 = scmp.eq.s32.totalorder %s15, 1
    %p54 = por %p52, %p53
    %p55 = scmp.ne.s32.totalorder %s46, %s47
    %p56 = scmp.eq.s32.totalorder %s15, 0
    %p57 = por %p55, %p56
    %p58 = scmp.ne.s32.totalorder %s46, %s47
    %p59 = scmp.eq.s32.totalorder %s16, 1
    %p60 = por %p58, %p59
    %p62 = scmp.ne.s32.totalorder %s47, %s61
    %p63 = scmp.eq.s32.totalorder %s16, 0
    %p64 = por %p62, %p63
    %s66 = sadd.s32 %s65, 1
    %p69 = scmp.eq.s32.totalorder %s10, 1
    %p70 = scmp.ne.s32.totalorder %s65, %s67
    %p71 = scmp.eq.s32.totalorder %s10, 0
    %p72 = por %p70, %p71
    %p73 = scmp.ne.s32.totalorder %s65, %s67
    %p74 = scmp.eq.s32.totalorder %s15, 1
    %p75 = por %p73, %p74
    %p76 = scmp.ne.s32.totalorder %s67, %s68
    %p77 = scmp.eq.s32.totalorder %s15, 0
    %p78 = por %p76, %p77
    %p79 = scmp.ne.s32.totalorder %s67, %s68
    %p80 = scmp.eq.s32.totalorder %s16, 1
    %p81 = por %p79, %p80
    %p83 = scmp.ne.s32.totalorder %s68, %s82
    %p84 = scmp.eq.s32.totalorder %s16, 0
    %p85 = por %p83, %p84
    %s87 = sadd.s32 %s86, 1
    %p90 = scmp.eq.s32.totalorder %s10, 1
    %p91 = scmp.ne.s32.totalorder %s86, %s88
    %p92 = scmp.eq.s32.totalorder %s10, 0
    %p93 = por %p91, %p92
    %p94 = scmp.ne.s32.totalorder %s86, %s88
    %p95 = scmp.eq.s32.totalorder %s15, 1
    %p96 = por %p94, %p95
    %p97 = scmp.ne.s32.totalorder %s88, %s89
    %p98 = scmp.eq.s32.totalorder %s15, 0
    %p99 = por %p97, %p98
    %p100 = scmp.ne.s32.totalorder %s88, %s89
    %p101 = scmp.eq.s32.totalorder %s16, 1
    %p102 = por %p100, %p101
    %p104 = scmp.ne.s32.totalorder %s89, %s103
    %p105 = scmp.eq.s32.totalorder %s16, 0
    %p106 = por %p104, %p105
    %s107 = ssub.s32 %s10, %s17
    %p108 = scmp.eq.s32.totalorder %s107, 0
    %s110 = sadd.s32 %s109, 1
    %s111 = scalar_select %p108, %s109, %s110
    %p114 = pneg %p108
    %p115 = scmp.eq.s32.totalorder %s10, 1
    %p116 = por %p114, %p115
    %p117 = scmp.ne.s32.totalorder %s109, %s112
    %p118 = scmp.eq.s32.totalorder %s10, 0
    %p119 = por %p117, %p118
    %p120 = scmp.ne.s32.totalorder %s109, %s112
    %p121 = scmp.eq.s32.totalorder %s15, 1
    %p122 = por %p120, %p121
    %p123 = scmp.ne.s32.totalorder %s112, %s113
    %p124 = scmp.eq.s32.totalorder %s15, 0
    %p125 = por %p123, %p124
    %p126 = scmp.ne.s32.totalorder %s112, %s113
    %p127 = scmp.eq.s32.totalorder %s16, 1
    %p128 = por %p126, %p127
    %p130 = scmp.ne.s32.totalorder %s113, %s129
    %p131 = scmp.eq.s32.totalorder %s16, 0
    %p132 = por %p130, %p131
    %p133 = scmp.le.s32.totalorder 1, %s10
    %p134 = scmp.lt.s32.totalorder %s10, 3
    %p135 = pnand %p133, %p134
    %p136 = pneg %p135
    // Predicated region
    $region9: #{_lambda_.6} parent=5 // pred_check
      _
    $region10: #{_lambda_.6} parent=5 // pred_check_branch
      %138 = sbr.rel (%p135) target = $region12
    $region11: #{_lambda_.6} parent=5 // pred_region
      %s139 = ssub.s32 %s10, 1
      // Predicated region
      $region13: #{_lambda_.6} parent=11 // pred_check
        %p140 = pneg %p57
      $region14: #{_lambda_.6} parent=11 // pred_check_branch
        %142 = sbr.rel (%p140) target = $region16
      $region15: #{_lambda_.6} parent=11 // pred_region
        _
      $region16: #{_lambda_.6} parent=11 // pred_fallthru
        _
      // Predicated region
      $region17: #{_lambda_.6} parent=11 // pred_check
        %p143 = pneg %p78
      $region18: #{_lambda_.6} parent=11 // pred_check_branch
        %145 = sbr.rel (%p143) target = $region20
      $region19: #{_lambda_.6} parent=11 // pred_region
        _
      $region20: #{_lambda_.6} parent=11 // pred_fallthru
        _
      // Predicated region
      $region21: #{_lambda_.6} parent=11 // pred_check
        %p146 = pneg %p99
      $region22: #{_lambda_.6} parent=11 // pred_check_branch
        %148 = sbr.rel (%p146) target = $region24
      $region23: #{_lambda_.6} parent=11 // pred_region
        _
      $region24: #{_lambda_.6} parent=11 // pred_fallthru
        _
    $region12: #{_lambda_.6} parent=5 // pred_fallthru
      _
    %p149 = scmp.lt.s32.totalorder %s10, 2
    // Predicated region
    $region25: #{_lambda_.6} parent=5 // pred_check
      %p150 = pneg %p149
    $region26: #{_lambda_.6} parent=5 // pred_check_branch
      %152 = sbr.rel (%p150) target = $region28
    $region27: #{_lambda_.6} parent=5 // pred_region
      // Predicated region
      $region29: #{_lambda_.6} parent=27 // pred_check
        %p153 = pneg %p30
      $region30: #{_lambda_.6} parent=27 // pred_check_branch
        %155 = sbr.rel (%p153) target = $region32
      $region31: #{_lambda_.6} parent=27 // pred_region
        %p156 = scmp.lt.s32.totalorder %s10, 1
        %s157 = scalar_select %p156, %s10, 1
        %s158 = smul.addr %s157, 54
        %s159 = smul.addr %s158, 4
        %s160 = scalar_lea.vmem %s0, %s159
      $region32: #{_lambda_.6} parent=27 // pred_fallthru
        _
    $region28: #{_lambda_.6} parent=5 // pred_fallthru
      _
    %p161 = scmp.le.s32.totalorder 1, %s10
    %p162 = scmp.lt.s32.totalorder %s10, 3
    %p163 = pnand %p161, %p162
    %p164 = pneg %p163
    // Predicated region
    $region33: #{_lambda_.6} parent=5 // pred_check
      _
    $region34: #{_lambda_.6} parent=5 // pred_check_branch
      %166 = sbr.rel (%p163) target = $region36
    $region35: #{_lambda_.6} parent=5 // pred_region
      %s167 = ssub.s32 %s10, 1
      %p168 = scmp.lt.s32.totalorder %s15, 1
      %s169 = scalar_select %p168, %s15, 1
      %s170 = smul.addr %s169, 54
      %s171 = smul.addr %s170, 4
      %s172 = scalar_lea.vmem %s0, %s171
      %p173 = pneg %p36
      %p174 = pneg %p33
      %p175 = pneg %p57
      %p176 = pneg %p54
      %p177 = pneg %p78
      %p178 = pneg %p75
      %p179 = pneg %p99
      %p180 = pneg %p96
      %p181 = pneg %p125
      %p182 = pneg %p122
      %p183 = scmp.lt.s32.totalorder %s15, 1
      %s184 = scalar_select %p183, %s15, 1
      %s185 = smul.addr %s184, 32
      %s186 = smul.addr %s185, 4
      %s187 = scalar_lea.vmem %s4, %s186
      %p188 = scmp.lt.s32.totalorder %s15, 1
      %s189 = scalar_select %p188, %s15, 1
      %s190 = smul.addr %s189, 54
      %s191 = smul.addr %s190, 4
      %s192 = scalar_lea.vmem %s0, %s191
      %p193 = scmp.lt.s32.totalorder %s15, 1
      %s194 = scalar_select %p193, %s15, 1
      %s195 = smul.addr %s194, 32
      %s196 = smul.addr %s195, 4
      %s197 = scalar_lea.vmem %s4, %s196
      %v199 = vld [vmem:[%s192] sm:$0xf]
      %v200 = vld [vmem:[%s192 + $0x4] sm:$0xf]
      %v201 = vld [vmem:[%s192 + $0x8] sm:$0x1]
      %v202 = vld [vmem:[%s192 + $0xc] sm:$0xf]
      %v203 = vld [vmem:[%s192 + $0x10] sm:$0xf]
      %v204 = vld [vmem:[%s192 + $0x14] sm:$0x1]
      %v205 = vld [vmem:[%s192 + $0x18] sm:$0xf]
      %v206 = vld [vmem:[%s192 + $0x1c] sm:$0xf]
      %v207 = vld [vmem:[%s192 + $0x20] sm:$0x1]
      %v208 = vld [vmem:[%s192 + $0x24] sm:$0xf]
      %v209 = vld [vmem:[%s192 + $0x28] sm:$0xf]
      %v210 = vld [vmem:[%s192 + $0x2c] sm:$0x1]
      %v211 = vld [vmem:[%s192 + $0x30] sm:$0xf]
      %v212 = vld [vmem:[%s192 + $0x34] sm:$0xf]
      %v213 = vld [vmem:[%s192 + $0x38] sm:$0x1]
      %v214 = vld [vmem:[%s192 + $0x3c] sm:$0xf]
      %v215 = vld [vmem:[%s192 + $0x40] sm:$0xf]
      %v216 = vld [vmem:[%s192 + $0x44] sm:$0x1]
      %v217 = vld [vmem:[%s192 + $0x48] sm:$0xf]
      %v218 = vld [vmem:[%s192 + $0x4c] sm:$0xf]
      %v219 = vld [vmem:[%s192 + $0x50] sm:$0x1]
      %v220 = vld [vmem:[%s192 + $0x54] sm:$0xf]
      %v221 = vld [vmem:[%s192 + $0x58] sm:$0xf]
      %v222 = vld [vmem:[%s192 + $0x5c] sm:$0x1]
      %v223 = vld [vmem:[%s192 + $0x60] sm:$0xf]
      %v224 = vld [vmem:[%s192 + $0x64] sm:$0xf]
      %v225 = vld [vmem:[%s192 + $0x68] sm:$0x1]
      %v226 = vld [vmem:[%s192 + $0x6c] sm:$0xf]
      %v227 = vld [vmem:[%s192 + $0x70] sm:$0xf]
      %v228 = vld [vmem:[%s192 + $0x74] sm:$0x1]
      %v229 = vld [vmem:[%s192 + $0x78] sm:$0xf]
      %v230 = vld [vmem:[%s192 + $0x7c] sm:$0xf]
      %v231 = vld [vmem:[%s192 + $0x80] sm:$0x1]
      %v232 = vld [vmem:[%s192 + $0x84] sm:$0xf]
      %v233 = vld [vmem:[%s192 + $0x88] sm:$0xf]
      %v234 = vld [vmem:[%s192 + $0x8c] sm:$0x1]
      %v235 = vld [vmem:[%s192 + $0x90] sm:$0xf]
      %v236 = vld [vmem:[%s192 + $0x94] sm:$0xf]
      %v237 = vld [vmem:[%s192 + $0x98] sm:$0x1]
      %v238 = vld [vmem:[%s192 + $0x9c] sm:$0xf]
      %v239 = vld [vmem:[%s192 + $0xa0] sm:$0xf]
      %v240 = vld [vmem:[%s192 + $0xa4] sm:$0x1]
      %v241 = vld [vmem:[%s192 + $0xa8] sm:$0xf]
      %v242 = vld [vmem:[%s192 + $0xac] sm:$0xf]
      %v243 = vld [vmem:[%s192 + $0xb0] sm:$0x1]
      %v244 = vld [vmem:[%s192 + $0xb4] sm:$0xf]
      %v245 = vld [vmem:[%s192 + $0xb8] sm:$0xf]
      %v246 = vld [vmem:[%s192 + $0xbc] sm:$0x1]
      %v247 = vld [vmem:[%s192 + $0xc0] sm:$0xf]
      %v248 = vld [vmem:[%s192 + $0xc4] sm:$0xf]
      %v249 = vld [vmem:[%s192 + $0xc8] sm:$0x1]
      %v250 = vld [vmem:[%s192 + $0xcc] sm:$0xf]
      %v251 = vld [vmem:[%s192 + $0xd0] sm:$0xf]
      %v252 = vld [vmem:[%s192 + $0xd4] sm:$0x1]
      %v253 = vunpack.c.l.bf16 %v199
      %v254 = vunpack.c.l.bf16 %v200
      %v255 = vunpack.c.l.bf16 %v201
      %v256 = vunpack.c.l.bf16 %v202
      %v257 = vunpack.c.l.bf16 %v203
      %v258 = vunpack.c.l.bf16 %v204
      %v259 = vunpack.c.l.bf16 %v205
      %v260 = vunpack.c.l.bf16 %v206
      %v261 = vunpack.c.l.bf16 %v207
      %v262 = vunpack.c.l.bf16 %v208
      %v263 = vunpack.c.l.bf16 %v209
      %v264 = vunpack.c.l.bf16 %v210
      %v265 = vunpack.c.l.bf16 %v211
      %v266 = vunpack.c.l.bf16 %v212
      %v267 = vunpack.c.l.bf16 %v213
      %v268 = vunpack.c.l.bf16 %v214
      %v269 = vunpack.c.l.bf16 %v215
      %v270 = vunpack.c.l.bf16 %v216
      %v271 = vunpack.c.l.bf16 %v217
      %v272 = vunpack.c.l.bf16 %v218
      %v273 = vunpack.c.l.bf16 %v219
      %v274 = vunpack.c.l.bf16 %v220
      %v275 = vunpack.c.l.bf16 %v221
      %v276 = vunpack.c.l.bf16 %v222
      %v277 = vunpack.c.l.bf16 %v223
      %v278 = vunpack.c.l.bf16 %v224
      %v279 = vunpack.c.l.bf16 %v225
      %v280 = vunpack.c.l.bf16 %v226
      %v281 = vunpack.c.l.bf16 %v227
      %v282 = vunpack.c.l.bf16 %v228
      %v283 = vunpack.c.l.bf16 %v229
      %v284 = vunpack.c.l.bf16 %v230
      %v285 = vunpack.c.l.bf16 %v231
      %v286 = vunpack.c.l.bf16 %v232
      %v287 = vunpack.c.l.bf16 %v233
      %v288 = vunpack.c.l.bf16 %v234
      %v289 = vunpack.c.l.bf16 %v235
      %v290 = vunpack.c.l.bf16 %v236
      %v291 = vunpack.c.l.bf16 %v237
      %v292 = vunpack.c.l.bf16 %v238
      %v293 = vunpack.c.l.bf16 %v239
      %v294 = vunpack.c.l.bf16 %v240
      %v295 = vunpack.c.l.bf16 %v241
      %v296 = vunpack.c.l.bf16 %v242
      %v297 = vunpack.c.l.bf16 %v243
      %v298 = vunpack.c.l.bf16 %v244
      %v299 = vunpack.c.l.bf16 %v245
      %v300 = vunpack.c.l.bf16 %v246
      %v301 = vunpack.c.l.bf16 %v247
      %v302 = vunpack.c.l.bf16 %v248
      %v303 = vunpack.c.l.bf16 %v249
      %v304 = vunpack.c.l.bf16 %v250
      %v305 = vunpack.c.l.bf16 %v251
      %v306 = vunpack.c.l.bf16 %v252
      %v307 = vpack.c.bf16 %v254, %v253
      %v308 = vpack.c.bf16 %v257, %v256
      %v309 = vpack.c.bf16 %v260, %v259
      %v310 = vpack.c.bf16 %v263, %v262
      %v311 = vpack.c.bf16 %v266, %v265
      %v312 = vpack.c.bf16 %v269, %v268
      %v313 = vpack.c.bf16 %v272, %v271
      %v314 = vpack.c.bf16 %v275, %v274
      %v315 = vpack.c.bf16 %v278, %v277
      %v316 = vpack.c.bf16 %v281, %v280
      %v317 = vpack.c.bf16 %v284, %v283
      %v318 = vpack.c.bf16 %v287, %v286
      %v319 = vpack.c.bf16 %v290, %v289
      %v320 = vpack.c.bf16 %v293, %v292
      %v321 = vpack.c.bf16 %v296, %v295
      %v322 = vpack.c.bf16 %v299, %v298
      %v323 = vld [vmem:[%s1] sm:$0xf]
      %v324 = vld [vmem:[%s1 + $0x4] sm:$0xf]
      %v325 = vld [vmem:[%s1 + $0x8] sm:$0xf]
      %v326 = vld [vmem:[%s1 + $0xc] sm:$0xf]
      %v327 = vld [vmem:[%s1 + $0x10] sm:$0xf]
      %v328 = vld [vmem:[%s1 + $0x14] sm:$0xf]
      %v329 = vld [vmem:[%s1 + $0x18] sm:$0xf]
      %v330 = vld [vmem:[%s1 + $0x1c] sm:$0xf]
      %v331 = vld [vmem:[%s1 + $0x20] sm:$0xf]
      %v332 = vld [vmem:[%s1 + $0x24] sm:$0xf]
      %v333 = vld [vmem:[%s1 + $0x28] sm:$0xf]
      %v334 = vld [vmem:[%s1 + $0x2c] sm:$0xf]
      %v335 = vld [vmem:[%s1 + $0x30] sm:$0xf]
      %v336 = vld [vmem:[%s1 + $0x34] sm:$0xf]
      %v337 = vld [vmem:[%s1 + $0x38] sm:$0xf]
      %v338 = vld [vmem:[%s1 + $0x3c] sm:$0xf]
      %vm387 = vcmask 1046528
      %v388 = vrot.slane %v253, 1
      %v389 = vrot.slane %v254, 1
      %v390 = vsel %vm387, %v388, %v389
      %v391 = vrot.slane %v255, 1
      %v392 = vsel %vm387, %v389, %v391
      %v393 = vrot.slane %v256, 1
      %v394 = vrot.slane %v257, 1
      %v395 = vsel %vm387, %v393, %v394
      %v396 = vrot.slane %v258, 1
      %v397 = vsel %vm387, %v394, %v396
      %v398 = vrot.slane %v259, 1
      %v399 = vrot.slane %v260, 1
      %v400 = vsel %vm387, %v398, %v399
      %v401 = vrot.slane %v261, 1
      %v402 = vsel %vm387, %v399, %v401
      %v403 = vrot.slane %v262, 1
      %v404 = vrot.slane %v263, 1
      %v405 = vsel %vm387, %v403, %v404
      %v406 = vrot.slane %v264, 1
      %v407 = vsel %vm387, %v404, %v406
      %v408 = vrot.slane %v265, 1
      %v409 = vrot.slane %v266, 1
      %v410 = vsel %vm387, %v408, %v409
      %v411 = vrot.slane %v267, 1
      %v412 = vsel %vm387, %v409, %v411
      %v413 = vrot.slane %v268, 1
      %v414 = vrot.slane %v269, 1
      %v415 = vsel %vm387, %v413, %v414
      %v416 = vrot.slane %v270, 1
      %v417 = vsel %vm387, %v414, %v416
      %v418 = vrot.slane %v271, 1
      %v419 = vrot.slane %v272, 1
      %v420 = vsel %vm387, %v418, %v419
      %v421 = vrot.slane %v273, 1
      %v422 = vsel %vm387, %v419, %v421
      %v423 = vrot.slane %v274, 1
      %v424 = vrot.slane %v275, 1
      %v425 = vsel %vm387, %v423, %v424
      %v426 = vrot.slane %v276, 1
      %v427 = vsel %vm387, %v424, %v426
      %v428 = vrot.slane %v277, 1
      %v429 = vrot.slane %v278, 1
      %v430 = vsel %vm387, %v428, %v429
      %v431 = vrot.slane %v279, 1
      %v432 = vsel %vm387, %v429, %v431
      %v433 = vrot.slane %v280, 1
      %v434 = vrot.slane %v281, 1
      %v435 = vsel %vm387, %v433, %v434
      %v436 = vrot.slane %v282, 1
      %v437 = vsel %vm387, %v434, %v436
      %v438 = vrot.slane %v283, 1
      %v439 = vrot.slane %v284, 1
      %v440 = vsel %vm387, %v438, %v439
      %v441 = vrot.slane %v285, 1
      %v442 = vsel %vm387, %v439, %v441
      %v443 = vrot.slane %v286, 1
      %v444 = vrot.slane %v287, 1
      %v445 = vsel %vm387, %v443, %v444
      %v446 = vrot.slane %v288, 1
      %v447 = vsel %vm387, %v444, %v446
      %v448 = vrot.slane %v289, 1
      %v449 = vrot.slane %v290, 1
      %v450 = vsel %vm387, %v448, %v449
      %v451 = vrot.slane %v291, 1
      %v452 = vsel %vm387, %v449, %v451
      %v453 = vrot.slane %v292, 1
      %v454 = vrot.slane %v293, 1
      %v455 = vsel %vm387, %v453, %v454
      %v456 = vrot.slane %v294, 1
      %v457 = vsel %vm387, %v454, %v456
      %v458 = vrot.slane %v295, 1
      %v459 = vrot.slane %v296, 1
      %v460 = vsel %vm387, %v458, %v459
      %v461 = vrot.slane %v297, 1
      %v462 = vsel %vm387, %v459, %v461
      %v463 = vrot.slane %v298, 1
      %v464 = vrot.slane %v299, 1
      %v465 = vsel %vm387, %v463, %v464
      %v466 = vrot.slane %v300, 1
      %v467 = vsel %vm387, %v464, %v466
      %v500 = vpack.c.bf16 %v392, %v390
      %v501 = vpack.c.bf16 %v397, %v395
      %v502 = vpack.c.bf16 %v402, %v400
      %v503 = vpack.c.bf16 %v407, %v405
      %v504 = vpack.c.bf16 %v412, %v410
      %v505 = vpack.c.bf16 %v417, %v415
      %v506 = vpack.c.bf16 %v422, %v420
      %v507 = vpack.c.bf16 %v427, %v425
      %v508 = vpack.c.bf16 %v432, %v430
      %v509 = vpack.c.bf16 %v437, %v435
      %v510 = vpack.c.bf16 %v442, %v440
      %v511 = vpack.c.bf16 %v447, %v445
      %v512 = vpack.c.bf16 %v452, %v450
      %v513 = vpack.c.bf16 %v457, %v455
      %v514 = vpack.c.bf16 %v462, %v460
      %v515 = vpack.c.bf16 %v467, %v465
      %s516 = scalar_lea.vmem %s1, 64
      %v517 = vld [vmem:[%s516] sm:$0xf]
      %v518 = vld [vmem:[%s516 + $0x4] sm:$0xf]
      %v519 = vld [vmem:[%s516 + $0x8] sm:$0xf]
      %v520 = vld [vmem:[%s516 + $0xc] sm:$0xf]
      %v521 = vld [vmem:[%s516 + $0x10] sm:$0xf]
      %v522 = vld [vmem:[%s516 + $0x14] sm:$0xf]
      %v523 = vld [vmem:[%s516 + $0x18] sm:$0xf]
      %v524 = vld [vmem:[%s516 + $0x1c] sm:$0xf]
      %v525 = vld [vmem:[%s516 + $0x20] sm:$0xf]
      %v526 = vld [vmem:[%s516 + $0x24] sm:$0xf]
      %v527 = vld [vmem:[%s516 + $0x28] sm:$0xf]
      %v528 = vld [vmem:[%s516 + $0x2c] sm:$0xf]
      %v529 = vld [vmem:[%s516 + $0x30] sm:$0xf]
      %v530 = vld [vmem:[%s516 + $0x34] sm:$0xf]
      %v531 = vld [vmem:[%s516 + $0x38] sm:$0xf]
      %v532 = vld [vmem:[%s516 + $0x3c] sm:$0xf]
      %v549 = vunpack.c.l.b16 %v517
      %v550 = vunpack.c.l.b16 %v518
      %v551 = vunpack.c.l.b16 %v519
      %v552 = vunpack.c.l.b16 %v520
      %v553 = vunpack.c.l.b16 %v521
      %v554 = vunpack.c.l.b16 %v522
      %v555 = vunpack.c.l.b16 %v523
      %v556 = vunpack.c.l.b16 %v524
      %v557 = vunpack.c.l.b16 %v525
      %v558 = vunpack.c.l.b16 %v526
      %v559 = vunpack.c.l.b16 %v527
      %v560 = vunpack.c.l.b16 %v528
      %v561 = vunpack.c.l.b16 %v529
      %v562 = vunpack.c.l.b16 %v530
      %v563 = vunpack.c.l.b16 %v531
      %v564 = vunpack.c.l.b16 %v532
      %v565 = vpack.c.b16 %v550, %v549
      %v566 = vpack.c.b16 %v552, %v551
      %v567 = vpack.c.b16 %v554, %v553
      %v568 = vpack.c.b16 %v556, %v555
      %v569 = vpack.c.b16 %v558, %v557
      %v570 = vpack.c.b16 %v560, %v559
      %v571 = vpack.c.b16 %v562, %v561
      %v572 = vpack.c.b16 %v564, %v563
      %581 = vmatprep.subr.bf16.mxu0 0
      %582 = vmatpush1.bf16.msra.mxu0 %v565
      %583 = vmatprep.subr.bf16.mxu0 0
      %584 = vmatpush1.bf16.msra.mxu0 %v566
      %585 = vmatprep.subr.bf16.mxu0 0
      %586 = vmatpush1.bf16.msra.mxu0 %v567
      %587 = vmatprep.subr.bf16.mxu0 0
      %588 = vmatpush1.bf16.msra.mxu0 %v568
      %589 = vmatprep.subr.bf16.mxu0 0
      %590 = vmatpush1.bf16.msra.mxu0 %v569
      %591 = vmatprep.subr.bf16.mxu0 0
      %592 = vmatpush1.bf16.msra.mxu0 %v570
      %593 = vmatprep.subr.bf16.mxu0 0
      %594 = vmatpush1.bf16.msra.mxu0 %v571
      %595 = vmatprep.subr.bf16.mxu0 0
      %596 = vmatpush1.bf16.msra.mxu0 %v572
      %597 = vmatprep.subr.bf16.mxu0 0
      %598 = vmatpush1.bf16.msra.mxu0 0
      %599 = vmatprep.subr.bf16.mxu0 0
      %600 = vmatpush1.bf16.msra.mxu0 0
      %601 = vmatprep.subr.bf16.mxu0 0
      %602 = vmatpush1.bf16.msra.mxu0 0
      %603 = vmatprep.subr.bf16.mxu0 0
      %604 = vmatpush1.bf16.msra.mxu0 0
      %605 = vmatprep.subr.bf16.mxu0 0
      %606 = vmatpush1.bf16.msra.mxu0 0
      %607 = vmatprep.subr.bf16.mxu0 0
      %608 = vmatpush1.bf16.msra.mxu0 0
      %609 = vmatprep.subr.bf16.mxu0 0
      %610 = vmatpush1.bf16.msra.mxu0 0
      %611 = vmatprep.subr.bf16.mxu0 0
      %612 = vmatpush1.bf16.msra.mxu0 0
      %613 = vmatprep.mubr.bf16.mxu0 0
      %614 = vmatmul.mubr.bf16.gmra.mrb[0].mxu0 %v500
      %v615 = vpop.f32.mrb[0].mxu0
      %v616 = vadd.f32 0.0, %v615
      %v617 = vpop.f32.mrb[0].mxu0
      %v618 = vpop.f32.mrb[0].mxu0
      %v619 = vadd.f32 0.0, %v618
      %v620 = vpop.f32.mrb[0].mxu0
      %621 = vmatprep.mubr.bf16.mxu0 0
      %622 = vmatmul.mubr.bf16.gmra.mrb[0].mxu0 %v501
      %v623 = vpop.f32.mrb[0].mxu0
      %v624 = vadd.f32 0.0, %v623
      %v625 = vpop.f32.mrb[0].mxu0
      %v626 = vpop.f32.mrb[0].mxu0
      %v627 = vadd.f32 0.0, %v626
      %v628 = vpop.f32.mrb[0].mxu0
      %629 = vmatprep.mubr.bf16.mxu0 0
      %630 = vmatmul.mubr.bf16.gmra.mrb[0].mxu0 %v502
      %v631 = vpop.f32.mrb[0].mxu0
      %v632 = vadd.f32 0.0, %v631
      %v633 = vpop.f32.mrb[0].mxu0
      %v634 = vpop.f32.mrb[0].mxu0
      %v635 = vadd.f32 0.0, %v634
      %v636 = vpop.f32.mrb[0].mxu0
      %637 = vmatprep.mubr.bf16.mxu0 0
      %638 = vmatmul.mubr.bf16.gmra.mrb[0].mxu0 %v503
      %v639 = vpop.f32.mrb[0].mxu0
      %v640 = vadd.f32 0.0, %v639
      %v641 = vpop.f32.mrb[0].mxu0
      %v642 = vpop.f32.mrb[0].mxu0
      %v643 = vadd.f32 0.0, %v642
      %v644 = vpop.f32.mrb[0].mxu0
      %645 = vmatprep.mubr.bf16.mxu0 0
      %646 = vmatmul.mubr.bf16.gmra.mrb[0].mxu0 %v504
      %v647 = vpop.f32.mrb[0].mxu0
      %v648 = vadd.f32 0.0, %v647
      %v649 = vpop.f32.mrb[0].mxu0
      %v650 = vpop.f32.mrb[0].mxu0
      %v651 = vadd.f32 0.0, %v650
      %v652 = vpop.f32.mrb[0].mxu0
      %653 = vmatprep.mubr.bf16.mxu0 0
      %654 = vmatmul.mubr.bf16.gmra.mrb[0].mxu0 %v505
      %v655 = vpop.f32.mrb[0].mxu0
      %v656 = vadd.f32 0.0, %v655
      %v657 = vpop.f32.mrb[0].mxu0
      %v658 = vpop.f32.mrb[0].mxu0
      %v659 = vadd.f32 0.0, %v658
      %v660 = vpop.f32.mrb[0].mxu0
      %661 = vmatprep.mubr.bf16.mxu0 0
      %662 = vmatmul.mubr.bf16.gmra.mrb[0].mxu0 %v506
      %v663 = vpop.f32.mrb[0].mxu0
      %v664 = vadd.f32 0.0, %v663
      %v665 = vpop.f32.mrb[0].mxu0
      %v666 = vpop.f32.mrb[0].mxu0
      %v667 = vadd.f32 0.0, %v666
      %v668 = vpop.f32.mrb[0].mxu0
      %669 = vmatprep.mubr.bf16.mxu0 0
      %670 = vmatmul.mubr.bf16.gmra.mrb[0].mxu0 %v507
      %v671 = vpop.f32.mrb[0].mxu0
      %v672 = vadd.f32 0.0, %v671
      %v673 = vpop.f32.mrb[0].mxu0
      %v674 = vpop.f32.mrb[0].mxu0
      %v675 = vadd.f32 0.0, %v674
      %v676 = vpop.f32.mrb[0].mxu0
      %677 = vmatprep.mubr.bf16.mxu0 0
      %678 = vmatmul.mubr.bf16.gmra.mrb[0].mxu0 %v508
      %v679 = vpop.f32.mrb[0].mxu0
      %v680 = vadd.f32 0.0, %v679
      %v681 = vpop.f32.mrb[0].mxu0
      %v682 = vpop.f32.mrb[0].mxu0
      %v683 = vadd.f32 0.0, %v682
      %v684 = vpop.f32.mrb[0].mxu0
      %685 = vmatprep.mubr.bf16.mxu0 0
      %686 = vmatmul.mubr.bf16.gmra.mrb[0].mxu0 %v509
      %v687 = vpop.f32.mrb[0].mxu0
      %v688 = vadd.f32 0.0, %v687
      %v689 = vpop.f32.mrb[0].mxu0
      %v690 = vpop.f32.mrb[0].mxu0
      %v691 = vadd.f32 0.0, %v690
      %v692 = vpop.f32.mrb[0].mxu0
      %693 = vmatprep.mubr.bf16.mxu0 0
      %694 = vmatmul.mubr.bf16.gmra.mrb[0].mxu0 %v510
      %v695 = vpop.f32.mrb[0].mxu0
      %v696 = vadd.f32 0.0, %v695
      %v697 = vpop.f32.mrb[0].mxu0
      %v698 = vpop.f32.mrb[0].mxu0
      %v699 = vadd.f32 0.0, %v698
      %v700 = vpop.f32.mrb[0].mxu0
      %701 = vmatprep.mubr.bf16.mxu0 0
      %702 = vmatmul.mubr.bf16.gmra.mrb[0].mxu0 %v511
      %v703 = vpop.f32.mrb[0].mxu0
      %v704 = vadd.f32 0.0, %v703
      %v705 = vpop.f32.mrb[0].mxu0
      %v706 = vpop.f32.mrb[0].mxu0
      %v707 = vadd.f32 0.0, %v706
      %v708 = vpop.f32.mrb[0].mxu0
      %709 = vmatprep.mubr.bf16.mxu0 0
      %710 = vmatmul.mubr.bf16.gmra.mrb[0].mxu0 %v512
      %v711 = vpop.f32.mrb[0].mxu0
      %v712 = vadd.f32 0.0, %v711
      %v713 = vpop.f32.mrb[0].mxu0
      %v714 = vpop.f32.mrb[0].mxu0
      %v715 = vadd.f32 0.0, %v714
      %v716 = vpop.f32.mrb[0].mxu0
      %717 = vmatprep.mubr.bf16.mxu0 0
      %718 = vmatmul.mubr.bf16.gmra.mrb[0].mxu0 %v513
      %v719 = vpop.f32.mrb[0].mxu0
      %v720 = vadd.f32 0.0, %v719
      %v721 = vpop.f32.mrb[0].mxu0
      %v722 = vpop.f32.mrb[0].mxu0
      %v723 = vadd.f32 0.0, %v722
      %v724 = vpop.f32.mrb[0].mxu0
      %725 = vmatprep.mubr.bf16.mxu0 0
      %726 = vmatmul.mubr.bf16.gmra.mrb[0].mxu0 %v514
      %v727 = vpop.f32.mrb[0].mxu0
      %v728 = vadd.f32 0.0, %v727
      %v729 = vpop.f32.mrb[0].mxu0
      %v730 = vpop.f32.mrb[0].mxu0
      %v731 = vadd.f32 0.0, %v730
      %v732 = vpop.f32.mrb[0].mxu0
      %733 = vmatprep.mubr.bf16.mxu0 0
      %734 = vmatmul.mubr.bf16.gmra.mrb[0].mxu0 %v515
      %v735 = vpop.f32.mrb[0].mxu0
      %v736 = vadd.f32 0.0, %v735
      %v737 = vpop.f32.mrb[0].mxu0
      %v738 = vpop.f32.mrb[0].mxu0
      %v739 = vadd.f32 0.0, %v738
      %v740 = vpop.f32.mrb[0].mxu0
      %741 = vdwg.mxu0
      %v758 = vunpack.c.l.b16 %v323
      %v759 = vunpack.c.l.b16 %v324
      %v760 = vunpack.c.l.b16 %v325
      %v761 = vunpack.c.l.b16 %v326
      %v762 = vunpack.c.l.b16 %v327
      %v763 = vunpack.c.l.b16 %v328
      %v764 = vunpack.c.l.b16 %v329
      %v765 = vunpack.c.l.b16 %v330
      %v766 = vunpack.c.l.b16 %v331
      %v767 = vunpack.c.l.b16 %v332
      %v768 = vunpack.c.l.b16 %v333
      %v769 = vunpack.c.l.b16 %v334
      %v770 = vunpack.c.l.b16 %v335
      %v771 = vunpack.c.l.b16 %v336
      %v772 = vunpack.c.l.b16 %v337
      %v773 = vunpack.c.l.b16 %v338
      %v774 = vpack.c.b16 %v759, %v758
      %v775 = vpack.c.b16 %v761, %v760
      %v776 = vpack.c.b16 %v763, %v762
      %v777 = vpack.c.b16 %v765, %v764
      %v778 = vpack.c.b16 %v767, %v766
      %v779 = vpack.c.b16 %v769, %v768
      %v780 = vpack.c.b16 %v771, %v770
      %v781 = vpack.c.b16 %v773, %v772
      %790 = vmatprep.subr.bf16.mxu0 0
      %791 = vmatpush1.bf16.msra.mxu0 %v774
      %792 = vmatprep.subr.bf16.mxu0 0
      %793 = vmatpush1.bf16.msra.mxu0 %v775
      %794 = vmatprep.subr.bf16.mxu0 0
      %795 = vmatpush1.bf16.msra.mxu0 %v776
      %796 = vmatprep.subr.bf16.mxu0 0
      %797 = vmatpush1.bf16.msra.mxu0 %v777
      %798 = vmatprep.subr.bf16.mxu0 0
      %799 = vmatpush1.bf16.msra.mxu0 %v778
      %800 = vmatprep.subr.bf16.mxu0 0
      %801 = vmatpush1.bf16.msra.mxu0 %v779
      %802 = vmatprep.subr.bf16.mxu0 0
      %803 = vmatpush1.bf16.msra.mxu0 %v780
      %804 = vmatprep.subr.bf16.mxu0 0
      %805 = vmatpush1.bf16.msra.mxu0 %v781
      %806 = vmatprep.subr.bf16.mxu0 0
      %807 = vmatpush1.bf16.msra.mxu0 0
      %808 = vmatprep.subr.bf16.mxu0 0
      %809 = vmatpush1.bf16.msra.mxu0 0
      %810 = vmatprep.subr.bf16.mxu0 0
      %811 = vmatpush1.bf16.msra.mxu0 0
      %812 = vmatprep.subr.bf16.mxu0 0
      %813 = vmatpush1.bf16.msra.mxu0 0
      %814 = vmatprep.subr.bf16.mxu0 0
      %815 = vmatpush1.bf16.msra.mxu0 0
      %816 = vmatprep.subr.bf16.mxu0 0
      %817 = vmatpush1.bf16.msra.mxu0 0
      %818 = vmatprep.subr.bf16.mxu0 0
      %819 = vmatpush1.bf16.msra.mxu0 0
      %820 = vmatprep.subr.bf16.mxu0 0
      %821 = vmatpush1.bf16.msra.mxu0 0
      %822 = vmatprep.mubr.bf16.mxu0 0
      %823 = vmatmul.mubr.bf16.gmra.mrb[0].mxu0 %v307
      %v824 = vpop.f32.mrb[0].mxu0
      %v825 = vadd.f32 %v616, %v824
      %v826 = vpop.f32.mrb[0].mxu0
      %v827 = vpop.f32.mrb[0].mxu0
      %v828 = vadd.f32 %v619, %v827
      %v829 = vpop.f32.mrb[0].mxu0
      %830 = vmatprep.mubr.bf16.mxu0 0
      %831 = vmatmul.mubr.bf16.gmra.mrb[0].mxu0 %v308
      %v832 = vpop.f32.mrb[0].mxu0
      %v833 = vadd.f32 %v624, %v832
      %v834 = vpop.f32.mrb[0].mxu0
      %v835 = vpop.f32.mrb[0].mxu0
      %v836 = vadd.f32 %v627, %v835
      %v837 = vpop.f32.mrb[0].mxu0
      %838 = vmatprep.mubr.bf16.mxu0 0
      %839 = vmatmul.mubr.bf16.gmra.mrb[0].mxu0 %v309
      %v840 = vpop.f32.mrb[0].mxu0
      %v841 = vadd.f32 %v632, %v840
      %v842 = vpop.f32.mrb[0].mxu0
      %v843 = vpop.f32.mrb[0].mxu0
      %v844 = vadd.f32 %v635, %v843
      %v845 = vpop.f32.mrb[0].mxu0
      %846 = vmatprep.mubr.bf16.mxu0 0
      %847 = vmatmul.mubr.bf16.gmra.mrb[0].mxu0 %v310
      %v848 = vpop.f32.mrb[0].mxu0
      %v849 = vadd.f32 %v640, %v848
      %v850 = vpop.f32.mrb[0].mxu0
      %v851 = vpop.f32.mrb[0].mxu0
      %v852 = vadd.f32 %v643, %v851
      %v853 = vpop.f32.mrb[0].mxu0
      %854 = vmatprep.mubr.bf16.mxu0 0
      %855 = vmatmul.mubr.bf16.gmra.mrb[0].mxu0 %v311
      %v856 = vpop.f32.mrb[0].mxu0
      %v857 = vadd.f32 %v648, %v856
      %v858 = vpop.f32.mrb[0].mxu0
      %v859 = vpop.f32.mrb[0].mxu0
      %v860 = vadd.f32 %v651, %v859
      %v861 = vpop.f32.mrb[0].mxu0
      %862 = vmatprep.mubr.bf16.mxu0 0
      %863 = vmatmul.mubr.bf16.gmra.mrb[0].mxu0 %v312
      %v864 = vpop.f32.mrb[0].mxu0
      %v865 = vadd.f32 %v656, %v864
      %v866 = vpop.f32.mrb[0].mxu0
      %v867 = vpop.f32.mrb[0].mxu0
      %v868 = vadd.f32 %v659, %v867
      %v869 = vpop.f32.mrb[0].mxu0
      %870 = vmatprep.mubr.bf16.mxu0 0
      %871 = vmatmul.mubr.bf16.gmra.mrb[0].mxu0 %v313
      %v872 = vpop.f32.mrb[0].mxu0
      %v873 = vadd.f32 %v664, %v872
      %v874 = vpop.f32.mrb[0].mxu0
      %v875 = vpop.f32.mrb[0].mxu0
      %v876 = vadd.f32 %v667, %v875
      %v877 = vpop.f32.mrb[0].mxu0
      %878 = vmatprep.mubr.bf16.mxu0 0
      %879 = vmatmul.mubr.bf16.gmra.mrb[0].mxu0 %v314
      %v880 = vpop.f32.mrb[0].mxu0
      %v881 = vadd.f32 %v672, %v880
      %v882 = vpop.f32.mrb[0].mxu0
      %v883 = vpop.f32.mrb[0].mxu0
      %v884 = vadd.f32 %v675, %v883
      %v885 = vpop.f32.mrb[0].mxu0
      %886 = vmatprep.mubr.bf16.mxu0 0
      %887 = vmatmul.mubr.bf16.gmra.mrb[0].mxu0 %v315
      %v888 = vpop.f32.mrb[0].mxu0
      %v889 = vadd.f32 %v680, %v888
      %v890 = vpop.f32.mrb[0].mxu0
      %v891 = vpop.f32.mrb[0].mxu0
      %v892 = vadd.f32 %v683, %v891
      %v893 = vpop.f32.mrb[0].mxu0
      %894 = vmatprep.mubr.bf16.mxu0 0
      %895 = vmatmul.mubr.bf16.gmra.mrb[0].mxu0 %v316
      %v896 = vpop.f32.mrb[0].mxu0
      %v897 = vadd.f32 %v688, %v896
      %v898 = vpop.f32.mrb[0].mxu0
      %v899 = vpop.f32.mrb[0].mxu0
      %v900 = vadd.f32 %v691, %v899
      %v901 = vpop.f32.mrb[0].mxu0
      %902 = vmatprep.mubr.bf16.mxu0 0
      %903 = vmatmul.mubr.bf16.gmra.mrb[0].mxu0 %v317
      %v904 = vpop.f32.mrb[0].mxu0
      %v905 = vadd.f32 %v696, %v904
      %v906 = vpop.f32.mrb[0].mxu0
      %v907 = vpop.f32.mrb[0].mxu0
      %v908 = vadd.f32 %v699, %v907
      %v909 = vpop.f32.mrb[0].mxu0
      %910 = vmatprep.mubr.bf16.mxu0 0
      %911 = vmatmul.mubr.bf16.gmra.mrb[0].mxu0 %v318
      %v912 = vpop.f32.mrb[0].mxu0
      %v913 = vadd.f32 %v704, %v912
      %v914 = vpop.f32.mrb[0].mxu0
      %v915 = vpop.f32.mrb[0].mxu0
      %v916 = vadd.f32 %v707, %v915
      %v917 = vpop.f32.mrb[0].mxu0
      %918 = vmatprep.mubr.bf16.mxu0 0
      %919 = vmatmul.mubr.bf16.gmra.mrb[0].mxu0 %v319
      %v920 = vpop.f32.mrb[0].mxu0
      %v921 = vadd.f32 %v712, %v920
      %v922 = vpop.f32.mrb[0].mxu0
      %v923 = vpop.f32.mrb[0].mxu0
      %v924 = vadd.f32 %v715, %v923
      %v925 = vpop.f32.mrb[0].mxu0
      %926 = vmatprep.mubr.bf16.mxu0 0
      %927 = vmatmul.mubr.bf16.gmra.mrb[0].mxu0 %v320
      %v928 = vpop.f32.mrb[0].mxu0
      %v929 = vadd.f32 %v720, %v928
      %v930 = vpop.f32.mrb[0].mxu0
      %v931 = vpop.f32.mrb[0].mxu0
      %v932 = vadd.f32 %v723, %v931
      %v933 = vpop.f32.mrb[0].mxu0
      %934 = vmatprep.mubr.bf16.mxu0 0
      %935 = vmatmul.mubr.bf16.gmra.mrb[0].mxu0 %v321
      %v936 = vpop.f32.mrb[0].mxu0
      %v937 = vadd.f32 %v728, %v936
      %v938 = vpop.f32.mrb[0].mxu0
      %v939 = vpop.f32.mrb[0].mxu0
      %v940 = vadd.f32 %v731, %v939
      %v941 = vpop.f32.mrb[0].mxu0
      %942 = vmatprep.mubr.bf16.mxu0 0
      %943 = vmatmul.mubr.bf16.gmra.mrb[0].mxu0 %v322
      %v944 = vpop.f32.mrb[0].mxu0
      %v945 = vadd.f32 %v736, %v944
      %v946 = vpop.f32.mrb[0].mxu0
      %v947 = vpop.f32.mrb[0].mxu0
      %v948 = vadd.f32 %v739, %v947
      %v949 = vpop.f32.mrb[0].mxu0
      %950 = vdwg.mxu0
      %vm951 = vcmask 1045504
      %v952 = vrot.slane %v253, 2
      %v953 = vrot.slane %v254, 2
      %v954 = vsel %vm951, %v952, %v953
      %v955 = vrot.slane %v255, 2
      %v956 = vsel %vm951, %v953, %v955
      %v957 = vrot.slane %v256, 2
      %v958 = vrot.slane %v257, 2
      %v959 = vsel %vm951, %v957, %v958
      %v960 = vrot.slane %v258, 2
      %v961 = vsel %vm951, %v958, %v960
      %v962 = vrot.slane %v259, 2
      %v963 = vrot.slane %v260, 2
      %v964 = vsel %vm951, %v962, %v963
      %v965 = vrot.slane %v261, 2
      %v966 = vsel %vm951, %v963, %v965
      %v967 = vrot.slane %v262, 2
      %v968 = vrot.slane %v263, 2
      %v969 = vsel %vm951, %v967, %v968
      %v970 = vrot.slane %v264, 2
      %v971 = vsel %vm951, %v968, %v970
      %v972 = vrot.slane %v265, 2
      %v973 = vrot.slane %v266, 2
      %v974 = vsel %vm951, %v972, %v973
      %v975 = vrot.slane %v267, 2
      %v976 = vsel %vm951, %v973, %v975
      %v977 = vrot.slane %v268, 2
      %v978 = vrot.slane %v269, 2
      %v979 = vsel %vm951, %v977, %v978
      %v980 = vrot.slane %v270, 2
      %v981 = vsel %vm951, %v978, %v980
      %v982 = vrot.slane %v271, 2
      %v983 = vrot.slane %v272, 2
      %v984 = vsel %vm951, %v982, %v983
      %v985 = vrot.slane %v273, 2
      %v986 = vsel %vm951, %v983, %v985
      %v987 = vrot.slane %v274, 2
      %v988 = vrot.slane %v275, 2
      %v989 = vsel %vm951, %v987, %v988
      %v990 = vrot.slane %v276, 2
      %v991 = vsel %vm951, %v988, %v990
      %v992 = vrot.slane %v277, 2
      %v993 = vrot.slane %v278, 2
      %v994 = vsel %vm951, %v992, %v993
      %v995 = vrot.slane %v279, 2
      %v996 = vsel %vm951, %v993, %v995
      %v997 = vrot.slane %v280, 2
      %v998 = vrot.slane %v281, 2
      %v999 = vsel %vm951, %v997, %v998
      %v1000 = vrot.slane %v282, 2
      %v1001 = vsel %vm951, %v998, %v1000
      %v1002 = vrot.slane %v283, 2
      %v1003 = vrot.slane %v284, 2
      %v1004 = vsel %vm951, %v1002, %v1003
      %v1005 = vrot.slane %v285, 2
      %v1006 = vsel %vm951, %v1003, %v1005
      %v1007 = vrot.slane %v286, 2
      %v1008 = vrot.slane %v287, 2
      %v1009 = vsel %vm951, %v1007, %v1008
      %v1010 = vrot.slane %v288, 2
      %v1011 = vsel %vm951, %v1008, %v1010
      %v1012 = vrot.slane %v289, 2
      %v1013 = vrot.slane %v290, 2
      %v1014 = vsel %vm951, %v1012, %v1013
      %v1015 = vrot.slane %v291, 2
      %v1016 = vsel %vm951, %v1013, %v1015
      %v1017 = vrot.slane %v292, 2
      %v1018 = vrot.slane %v293, 2
      %v1019 = vsel %vm951, %v1017, %v1018
      %v1020 = vrot.slane %v294, 2
      %v1021 = vsel %vm951, %v1018, %v1020
      %v1022 = vrot.slane %v295, 2
      %v1023 = vrot.slane %v296, 2
      %v1024 = vsel %vm951, %v1022, %v1023
      %v1025 = vrot.slane %v297, 2
      %v1026 = vsel %vm951, %v1023, %v1025
      %v1027 = vrot.slane %v298, 2
      %v1028 = vrot.slane %v299, 2
      %v1029 = vsel %vm951, %v1027, %v1028
      %v1030 = vrot.slane %v300, 2
      %v1031 = vsel %vm951, %v1028, %v1030
      %v1064 = vpack.c.bf16 %v956, %v954
      %v1065 = vpack.c.bf16 %v961, %v959
      %v1066 = vpack.c.bf16 %v966, %v964
      %v1067 = vpack.c.bf16 %v971, %v969
      %v1068 = vpack.c.bf16 %v976, %v974
      %v1069 = vpack.c.bf16 %v981, %v979
      %v1070 = vpack.c.bf16 %v986, %v984
      %v1071 = vpack.c.bf16 %v991, %v989
      %v1072 = vpack.c.bf16 %v996, %v994
      %v1073 = vpack.c.bf16 %v1001, %v999
      %v1074 = vpack.c.bf16 %v1006, %v1004
      %v1075 = vpack.c.bf16 %v1011, %v1009
      %v1076 = vpack.c.bf16 %v1016, %v1014
      %v1077 = vpack.c.bf16 %v1021, %v1019
      %v1078 = vpack.c.bf16 %v1026, %v1024
      %v1079 = vpack.c.bf16 %v1031, %v1029
      %s1080 = scalar_lea.vmem %s1, 128
      %v1081 = vld [vmem:[%s1080] sm:$0xf]
      %v1082 = vld [vmem:[%s1080 + $0x4] sm:$0xf]
      %v1083 = vld [vmem:[%s1080 + $0x8] sm:$0xf]
      %v1084 = vld [vmem:[%s1080 + $0xc] sm:$0xf]
      %v1085 = vld [vmem:[%s1080 + $0x10] sm:$0xf]
      %v1086 = vld [vmem:[%s1080 + $0x14] sm:$0xf]
      %v1087 = vld [vmem:[%s1080 + $0x18] sm:$0xf]
      %v1088 = vld [vmem:[%s1080 + $0x1c] sm:$0xf]
      %v1089 = vld [vmem:[%s1080 + $0x20] sm:$0xf]
      %v1090 = vld [vmem:[%s1080 + $0x24] sm:$0xf]
      %v1091 = vld [vmem:[%s1080 + $0x28] sm:$0xf]
      %v1092 = vld [vmem:[%s1080 + $0x2c] sm:$0xf]
      %v1093 = vld [vmem:[%s1080 + $0x30] sm:$0xf]
      %v1094 = vld [vmem:[%s1080 + $0x34] sm:$0xf]
      %v1095 = vld [vmem:[%s1080 + $0x38] sm:$0xf]
      %v1096 = vld [vmem:[%s1080 + $0x3c] sm:$0xf]
      %v1113 = vunpack.c.l.b16 %v1081
      %v1114 = vunpack.c.l.b16 %v1082
      %v1115 = vunpack.c.l.b16 %v1083
      %v1116 = vunpack.c.l.b16 %v1084
      %v1117 = vunpack.c.l.b16 %v1085
      %v1118 = vunpack.c.l.b16 %v1086
      %v1119 = vunpack.c.l.b16 %v1087
      %v1120 = vunpack.c.l.b16 %v1088
      %v1121 = vunpack.c.l.b16 %v1089
      %v1122 = vunpack.c.l.b16 %v1090
      %v1123 = vunpack.c.l.b16 %v1091
      %v1124 = vunpack.c.l.b16 %v1092
      %v1125 = vunpack.c.l.b16 %v1093
      %v1126 = vunpack.c.l.b16 %v1094
      %v1127 = vunpack.c.l.b16 %v1095
      %v1128 = vunpack.c.l.b16 %v1096
      %v1129 = vpack.c.b16 %v1114, %v1113
      %v1130 = vpack.c.b16 %v1116, %v1115
      %v1131 = vpack.c.b16 %v1118, %v1117
      %v1132 = vpack.c.b16 %v1120, %v1119
      %v1133 = vpack.c.b16 %v1122, %v1121
      %v1134 = vpack.c.b16 %v1124, %v1123
      %v1135 = vpack.c.b16 %v1126, %v1125
      %v1136 = vpack.c.b16 %v1128, %v1127
      %1145 = vmatprep.subr.bf16.mxu0 0
      %1146 = vmatpush1.bf16.msra.mxu0 %v1129
      %1147 = vmatprep.subr.bf16.mxu0 0
      %1148 = vmatpush1.bf16.msra.mxu0 %v1130
      %1149 = vmatprep.subr.bf16.mxu0 0
      %1150 = vmatpush1.bf16.msra.mxu0 %v1131
      %1151 = vmatprep.subr.bf16.mxu0 0
      %1152 = vmatpush1.bf16.msra.mxu0 %v1132
      %1153 = vmatprep.subr.bf16.mxu0 0
      %1154 = vmatpush1.bf16.msra.mxu0 %v1133
      %1155 = vmatprep.subr.bf16.mxu0 0
      %1156 = vmatpush1.bf16.msra.mxu0 %v1134
      %1157 = vmatprep.subr.bf16.mxu0 0
      %1158 = vmatpush1.bf16.msra.mxu0 %v1135
      %1159 = vmatprep.subr.bf16.mxu0 0
      %1160 = vmatpush1.bf16.msra.mxu0 %v1136
      %1161 = vmatprep.subr.bf16.mxu0 0
      %1162 = vmatpush1.bf16.msra.mxu0 0
      %1163 = vmatprep.subr.bf16.mxu0 0
      %1164 = vmatpush1.bf16.msra.mxu0 0
      %1165 = vmatprep.subr.bf16.mxu0 0
      %1166 = vmatpush1.bf16.msra.mxu0 0
      %1167 = vmatprep.subr.bf16.mxu0 0
      %1168 = vmatpush1.bf16.msra.mxu0 0
      %1169 = vmatprep.subr.bf16.mxu0 0
      %1170 = vmatpush1.bf16.msra.mxu0 0
      %1171 = vmatprep.subr.bf16.mxu0 0
      %1172 = vmatpush1.bf16.msra.mxu0 0
      %1173 = vmatprep.subr.bf16.mxu0 0
      %1174 = vmatpush1.bf16.msra.mxu0 0
      %1175 = vmatprep.subr.bf16.mxu0 0
      %1176 = vmatpush1.bf16.msra.mxu0 0
      %1177 = vmatprep.mubr.bf16.mxu0 0
      %1178 = vmatmul.mubr.bf16.gmra.mrb[0].mxu0 %v1064
      %v1179 = vpop.f32.mrb[0].mxu0
      %v1180 = vadd.f32 0.0, %v1179
      %v1181 = vpop.f32.mrb[0].mxu0
      %v1182 = vpop.f32.mrb[0].mxu0
      %v1183 = vadd.f32 0.0, %v1182
      %v1184 = vpop.f32.mrb[0].mxu0
      %1185 = vmatprep.mubr.bf16.mxu0 0
      %1186 = vmatmul.mubr.bf16.gmra.mrb[0].mxu0 %v1065
      %v1187 = vpop.f32.mrb[0].mxu0
      %v1188 = vadd.f32 0.0, %v1187
      %v1189 = vpop.f32.mrb[0].mxu0
      %v1190 = vpop.f32.mrb[0].mxu0
      %v1191 = vadd.f32 0.0, %v1190
      %v1192 = vpop.f32.mrb[0].mxu0
      %1193 = vmatprep.mubr.bf16.mxu0 0
      %1194 = vmatmul.mubr.bf16.gmra.mrb[0].mxu0 %v1066
      %v1195 = vpop.f32.mrb[0].mxu0
      %v1196 = vadd.f32 0.0, %v1195
      %v1197 = vpop.f32.mrb[0].mxu0
      %v1198 = vpop.f32.mrb[0].mxu0
      %v1199 = vadd.f32 0.0, %v1198
      %v1200 = vpop.f32.mrb[0].mxu0
      %1201 = vmatprep.mubr.bf16.mxu0 0
      %1202 = vmatmul.mubr.bf16.gmra.mrb[0].mxu0 %v1067
      %v1203 = vpop.f32.mrb[0].mxu0
      %v1204 = vadd.f32 0.0, %v1203
      %v1205 = vpop.f32.mrb[0].mxu0
      %v1206 = vpop.f32.mrb[0].mxu0
      %v1207 = vadd.f32 0.0, %v1206
      %v1208 = vpop.f32.mrb[0].mxu0
      %1209 = vmatprep.mubr.bf16.mxu0 0
      %1210 = vmatmul.mubr.bf16.gmra.mrb[0].mxu0 %v1068
      %v1211 = vpop.f32.mrb[0].mxu0
      %v1212 = vadd.f32 0.0, %v1211
      %v1213 = vpop.f32.mrb[0].mxu0
      %v1214 = vpop.f32.mrb[0].mxu0
      %v1215 = vadd.f32 0.0, %v1214
      %v1216 = vpop.f32.mrb[0].mxu0
      %1217 = vmatprep.mubr.bf16.mxu0 0
      %1218 = vmatmul.mubr.bf16.gmra.mrb[0].mxu0 %v1069
      %v1219 = vpop.f32.mrb[0].mxu0
      %v1220 = vadd.f32 0.0, %v1219
      %v1221 = vpop.f32.mrb[0].mxu0
      %v1222 = vpop.f32.mrb[0].mxu0
      %v1223 = vadd.f32 0.0, %v1222
      %v1224 = vpop.f32.mrb[0].mxu0
      %1225 = vmatprep.mubr.bf16.mxu0 0
      %1226 = vmatmul.mubr.bf16.gmra.mrb[0].mxu0 %v1070
      %v1227 = vpop.f32.mrb[0].mxu0
      %v1228 = vadd.f32 0.0, %v1227
      %v1229 = vpop.f32.mrb[0].mxu0
      %v1230 = vpop.f32.mrb[0].mxu0
      %v1231 = vadd.f32 0.0, %v1230
      %v1232 = vpop.f32.mrb[0].mxu0
      %1233 = vmatprep.mubr.bf16.mxu0 0
      %1234 = vmatmul.mubr.bf16.gmra.mrb[0].mxu0 %v1071
      %v1235 = vpop.f32.mrb[0].mxu0
      %v1236 = vadd.f32 0.0, %v1235
      %v1237 = vpop.f32.mrb[0].mxu0
      %v1238 = vpop.f32.mrb[0].mxu0
      %v1239 = vadd.f32 0.0, %v1238
      %v1240 = vpop.f32.mrb[0].mxu0
      %1241 = vmatprep.mubr.bf16.mxu0 0
      %1242 = vmatmul.mubr.bf16.gmra.mrb[0].mxu0 %v1072
      %v1243 = vpop.f32.mrb[0].mxu0
      %v1244 = vadd.f32 0.0, %v1243
      %v1245 = vpop.f32.mrb[0].mxu0
      %v1246 = vpop.f32.mrb[0].mxu0
      %v1247 = vadd.f32 0.0, %v1246
      %v1248 = vpop.f32.mrb[0].mxu0
      %1249 = vmatprep.mubr.bf16.mxu0 0
      %1250 = vmatmul.mubr.bf16.gmra.mrb[0].mxu0 %v1073
      %v1251 = vpop.f32.mrb[0].mxu0
      %v1252 = vadd.f32 0.0, %v1251
      %v1253 = vpop.f32.mrb[0].mxu0
      %v1254 = vpop.f32.mrb[0].mxu0
      %v1255 = vadd.f32 0.0, %v1254
      %v1256 = vpop.f32.mrb[0].mxu0
      %1257 = vmatprep.mubr.bf16.mxu0 0
      %1258 = vmatmul.mubr.bf16.gmra.mrb[0].mxu0 %v1074
      %v1259 = vpop.f32.mrb[0].mxu0
      %v1260 = vadd.f32 0.0, %v1259
      %v1261 = vpop.f32.mrb[0].mxu0
      %v1262 = vpop.f32.mrb[0].mxu0
      %v1263 = vadd.f32 0.0, %v1262
      %v1264 = vpop.f32.mrb[0].mxu0
      %1265 = vmatprep.mubr.bf16.mxu0 0
      %1266 = vmatmul.mubr.bf16.gmra.mrb[0].mxu0 %v1075
      %v1267 = vpop.f32.mrb[0].mxu0
      %v1268 = vadd.f32 0.0, %v1267
      %v1269 = vpop.f32.mrb[0].mxu0
      %v1270 = vpop.f32.mrb[0].mxu0
      %v1271 = vadd.f32 0.0, %v1270
      %v1272 = vpop.f32.mrb[0].mxu0
      %1273 = vmatprep.mubr.bf16.mxu0 0
      %1274 = vmatmul.mubr.bf16.gmra.mrb[0].mxu0 %v1076
      %v1275 = vpop.f32.mrb[0].mxu0
      %v1276 = vadd.f32 0.0, %v1275
      %v1277 = vpop.f32.mrb[0].mxu0
      %v1278 = vpop.f32.mrb[0].mxu0
      %v1279 = vadd.f32 0.0, %v1278
      %v1280 = vpop.f32.mrb[0].mxu0
      %1281 = vmatprep.mubr.bf16.mxu0 0
      %1282 = vmatmul.mubr.bf16.gmra.mrb[0].mxu0 %v1077
      %v1283 = vpop.f32.mrb[0].mxu0
      %v1284 = vadd.f32 0.0, %v1283
      %v1285 = vpop.f32.mrb[0].mxu0
      %v1286 = vpop.f32.mrb[0].mxu0
      %v1287 = vadd.f32 0.0, %v1286
      %v1288 = vpop.f32.mrb[0].mxu0
      %1289 = vmatprep.mubr.bf16.mxu0 0
      %1290 = vmatmul.mubr.bf16.gmra.mrb[0].mxu0 %v1078
      %v1291 = vpop.f32.mrb[0].mxu0
      %v1292 = vadd.f32 0.0, %v1291
      %v1293 = vpop.f32.mrb[0].mxu0
      %v1294 = vpop.f32.mrb[0].mxu0
      %v1295 = vadd.f32 0.0, %v1294
      %v1296 = vpop.f32.mrb[0].mxu0
      %1297 = vmatprep.mubr.bf16.mxu0 0
      %1298 = vmatmul.mubr.bf16.gmra.mrb[0].mxu0 %v1079
      %v1299 = vpop.f32.mrb[0].mxu0
      %v1300 = vadd.f32 0.0, %v1299
      %v1301 = vpop.f32.mrb[0].mxu0
      %v1302 = vpop.f32.mrb[0].mxu0
      %v1303 = vadd.f32 0.0, %v1302
      %v1304 = vpop.f32.mrb[0].mxu0
      %1305 = vdwg.mxu0
      %v1306 = vadd.f32 %v825, %v1180
      %v1307 = vadd.f32 %v828, %v1183
      %v1308 = vadd.f32 %v833, %v1188
      %v1309 = vadd.f32 %v836, %v1191
      %v1310 = vadd.f32 %v841, %v1196
      %v1311 = vadd.f32 %v844, %v1199
      %v1312 = vadd.f32 %v849, %v1204
      %v1313 = vadd.f32 %v852, %v1207
      %v1314 = vadd.f32 %v857, %v1212
      %v1315 = vadd.f32 %v860, %v1215
      %v1316 = vadd.f32 %v865, %v1220
      %v1317 = vadd.f32 %v868, %v1223
      %v1318 = vadd.f32 %v873, %v1228
      %v1319 = vadd.f32 %v876, %v1231
      %v1320 = vadd.f32 %v881, %v1236
      %v1321 = vadd.f32 %v884, %v1239
      %v1322 = vadd.f32 %v889, %v1244
      %v1323 = vadd.f32 %v892, %v1247
      %v1324 = vadd.f32 %v897, %v1252
      %v1325 = vadd.f32 %v900, %v1255
      %v1326 = vadd.f32 %v905, %v1260
      %v1327 = vadd.f32 %v908, %v1263
      %v1328 = vadd.f32 %v913, %v1268
      %v1329 = vadd.f32 %v916, %v1271
      %v1330 = vadd.f32 %v921, %v1276
      %v1331 = vadd.f32 %v924, %v1279
      %v1332 = vadd.f32 %v929, %v1284
      %v1333 = vadd.f32 %v932, %v1287
      %v1334 = vadd.f32 %v937, %v1292
      %v1335 = vadd.f32 %v940, %v1295
      %v1336 = vadd.f32 %v945, %v1300
      %v1337 = vadd.f32 %v948, %v1303
      %v1338 = vpack.c.bf16 %v302, %v301
      %s1339 = scalar_lea.vmem %s1, 192
      %v1340 = vld [vmem:[%s1339] sm:$0xf]
      %v1341 = vld [vmem:[%s1339 + $0x4] sm:$0xf]
      %v1342 = vld [vmem:[%s1339 + $0x8] sm:$0xf]
      %v1343 = vld [vmem:[%s1339 + $0xc] sm:$0xf]
      %v1344 = vld [vmem:[%s1339 + $0x10] sm:$0xf]
      %v1345 = vld [vmem:[%s1339 + $0x14] sm:$0xf]
      %v1346 = vld [vmem:[%s1339 + $0x18] sm:$0xf]
      %v1347 = vld [vmem:[%s1339 + $0x1c] sm:$0xf]
      %v1348 = vld [vmem:[%s1339 + $0x20] sm:$0xf]
      %v1349 = vld [vmem:[%s1339 + $0x24] sm:$0xf]
      %v1350 = vld [vmem:[%s1339 + $0x28] sm:$0xf]
      %v1351 = vld [vmem:[%s1339 + $0x2c] sm:$0xf]
      %v1352 = vld [vmem:[%s1339 + $0x30] sm:$0xf]
      %v1353 = vld [vmem:[%s1339 + $0x34] sm:$0xf]
      %v1354 = vld [vmem:[%s1339 + $0x38] sm:$0xf]
      %v1355 = vld [vmem:[%s1339 + $0x3c] sm:$0xf]
      %v1372 = vunpack.c.l.b16 %v1340
      %v1373 = vunpack.c.l.b16 %v1341
      %v1374 = vunpack.c.l.b16 %v1342
      %v1375 = vunpack.c.l.b16 %v1343
      %v1376 = vunpack.c.l.b16 %v1344
      %v1377 = vunpack.c.l.b16 %v1345
      %v1378 = vunpack.c.l.b16 %v1346
      %v1379 = vunpack.c.l.b16 %v1347
      %v1380 = vunpack.c.l.b16 %v1348
      %v1381 = vunpack.c.l.b16 %v1349
      %v1382 = vunpack.c.l.b16 %v1350
      %v1383 = vunpack.c.l.b16 %v1351
      %v1384 = vunpack.c.l.b16 %v1352
      %v1385 = vunpack.c.l.b16 %v1353
      %v1386 = vunpack.c.l.b16 %v1354
      %v1387 = vunpack.c.l.b16 %v1355
      %v1388 = vpack.c.b16 %v1373, %v1372
      %v1389 = vpack.c.b16 %v1375, %v1374
      %v1390 = vpack.c.b16 %v1377, %v1376
      %v1391 = vpack.c.b16 %v1379, %v1378
      %v1392 = vpack.c.b16 %v1381, %v1380
      %v1393 = vpack.c.b16 %v1383, %v1382
      %v1394 = vpack.c.b16 %v1385, %v1384
      %v1395 = vpack.c.b16 %v1387, %v1386
      %1404 = vmatprep.subr.bf16.mxu0 0
      %1405 = vmatpush1.bf16.msra.mxu0 %v1388
      %1406 = vmatprep.subr.bf16.mxu0 0
      %1407 = vmatpush1.bf16.msra.mxu0 %v1389
      %1408 = vmatprep.subr.bf16.mxu0 0
      %1409 = vmatpush1.bf16.msra.mxu0 %v1390
      %1410 = vmatprep.subr.bf16.mxu0 0
      %1411 = vmatpush1.bf16.msra.mxu0 %v1391
      %1412 = vmatprep.subr.bf16.mxu0 0
      %1413 = vmatpush1.bf16.msra.mxu0 %v1392
      %1414 = vmatprep.subr.bf16.mxu0 0
      %1415 = vmatpush1.bf16.msra.mxu0 %v1393
      %1416 = vmatprep.subr.bf16.mxu0 0
      %1417 = vmatpush1.bf16.msra.mxu0 %v1394
      %1418 = vmatprep.subr.bf16.mxu0 0
      %1419 = vmatpush1.bf16.msra.mxu0 %v1395
      %1420 = vmatprep.subr.bf16.mxu0 0
      %1421 = vmatpush1.bf16.msra.mxu0 0
      %1422 = vmatprep.subr.bf16.mxu0 0
      %1423 = vmatpush1.bf16.msra.mxu0 0
      %1424 = vmatprep.subr.bf16.mxu0 0
      %1425 = vmatpush1.bf16.msra.mxu0 0
      %1426 = vmatprep.subr.bf16.mxu0 0
      %1427 = vmatpush1.bf16.msra.mxu0 0
      %1428 = vmatprep.subr.bf16.mxu0 0
      %1429 = vmatpush1.bf16.msra.mxu0 0
      %1430 = vmatprep.subr.bf16.mxu0 0
      %1431 = vmatpush1.bf16.msra.mxu0 0
      %1432 = vmatprep.subr.bf16.mxu0 0
      %1433 = vmatpush1.bf16.msra.mxu0 0
      %1434 = vmatprep.subr.bf16.mxu0 0
      %1435 = vmatpush1.bf16.msra.mxu0 0
      %1436 = vmatprep.mubr.bf16.mxu0 0
      %1437 = vmatmul.mubr.bf16.gmra.mrb[0].mxu0 %v308
      %v1438 = vpop.f32.mrb[0].mxu0
      %v1439 = vadd.f32 0.0, %v1438
      %v1440 = vpop.f32.mrb[0].mxu0
      %v1441 = vpop.f32.mrb[0].mxu0
      %v1442 = vadd.f32 0.0, %v1441
      %v1443 = vpop.f32.mrb[0].mxu0
      %1444 = vmatprep.mubr.bf16.mxu0 0
      %1445 = vmatmul.mubr.bf16.gmra.mrb[0].mxu0 %v309
      %v1446 = vpop.f32.mrb[0].mxu0
      %v1447 = vadd.f32 0.0, %v1446
      %v1448 = vpop.f32.mrb[0].mxu0
      %v1449 = vpop.f32.mrb[0].mxu0
      %v1450 = vadd.f32 0.0, %v1449
      %v1451 = vpop.f32.mrb[0].mxu0
      %1452 = vmatprep.mubr.bf16.mxu0 0
      %1453 = vmatmul.mubr.bf16.gmra.mrb[0].mxu0 %v310
      %v1454 = vpop.f32.mrb[0].mxu0
      %v1455 = vadd.f32 0.0, %v1454
      %v1456 = vpop.f32.mrb[0].mxu0
      %v1457 = vpop.f32.mrb[0].mxu0
      %v1458 = vadd.f32 0.0, %v1457
      %v1459 = vpop.f32.mrb[0].mxu0
      %1460 = vmatprep.mubr.bf16.mxu0 0
      %1461 = vmatmul.mubr.bf16.gmra.mrb[0].mxu0 %v311
      %v1462 = vpop.f32.mrb[0].mxu0
      %v1463 = vadd.f32 0.0, %v1462
      %v1464 = vpop.f32.mrb[0].mxu0
      %v1465 = vpop.f32.mrb[0].mxu0
      %v1466 = vadd.f32 0.0, %v1465
      %v1467 = vpop.f32.mrb[0].mxu0
      %1468 = vmatprep.mubr.bf16.mxu0 0
      %1469 = vmatmul.mubr.bf16.gmra.mrb[0].mxu0 %v312
      %v1470 = vpop.f32.mrb[0].mxu0
      %v1471 = vadd.f32 0.0, %v1470
      %v1472 = vpop.f32.mrb[0].mxu0
      %v1473 = vpop.f32.mrb[0].mxu0
      %v1474 = vadd.f32 0.0, %v1473
      %v1475 = vpop.f32.mrb[0].mxu0
      %1476 = vmatprep.mubr.bf16.mxu0 0
      %1477 = vmatmul.mubr.bf16.gmra.mrb[0].mxu0 %v313
      %v1478 = vpop.f32.mrb[0].mxu0
      %v1479 = vadd.f32 0.0, %v1478
      %v1480 = vpop.f32.mrb[0].mxu0
      %v1481 = vpop.f32.mrb[0].mxu0
      %v1482 = vadd.f32 0.0, %v1481
      %v1483 = vpop.f32.mrb[0].mxu0
      %1484 = vmatprep.mubr.bf16.mxu0 0
      %1485 = vmatmul.mubr.bf16.gmra.mrb[0].mxu0 %v314
      %v1486 = vpop.f32.mrb[0].mxu0
      %v1487 = vadd.f32 0.0, %v1486
      %v1488 = vpop.f32.mrb[0].mxu0
      %v1489 = vpop.f32.mrb[0].mxu0
      %v1490 = vadd.f32 0.0, %v1489
      %v1491 = vpop.f32.mrb[0].mxu0
      %1492 = vmatprep.mubr.bf16.mxu0 0
      %1493 = vmatmul.mubr.bf16.gmra.mrb[0].mxu0 %v315
      %v1494 = vpop.f32.mrb[0].mxu0
      %v1495 = vadd.f32 0.0, %v1494
      %v1496 = vpop.f32.mrb[0].mxu0
      %v1497 = vpop.f32.mrb[0].mxu0
      %v1498 = vadd.f32 0.0, %v1497
      %v1499 = vpop.f32.mrb[0].mxu0
      %1500 = vmatprep.mubr.bf16.mxu0 0
      %1501 = vmatmul.mubr.bf16.gmra.mrb[0].mxu0 %v316
      %v1502 = vpop.f32.mrb[0].mxu0
      %v1503 = vadd.f32 0.0, %v1502
      %v1504 = vpop.f32.mrb[0].mxu0
      %v1505 = vpop.f32.mrb[0].mxu0
      %v1506 = vadd.f32 0.0, %v1505
      %v1507 = vpop.f32.mrb[0].mxu0
      %1508 = vmatprep.mubr.bf16.mxu0 0
      %1509 = vmatmul.mubr.bf16.gmra.mrb[0].mxu0 %v317
      %v1510 = vpop.f32.mrb[0].mxu0
      %v1511 = vadd.f32 0.0, %v1510
      %v1512 = vpop.f32.mrb[0].mxu0
      %v1513 = vpop.f32.mrb[0].mxu0
      %v1514 = vadd.f32 0.0, %v1513
      %v1515 = vpop.f32.mrb[0].mxu0
      %1516 = vmatprep.mubr.bf16.mxu0 0
      %1517 = vmatmul.mubr.bf16.gmra.mrb[0].mxu0 %v318
      %v1518 = vpop.f32.mrb[0].mxu0
      %v1519 = vadd.f32 0.0, %v1518
      %v1520 = vpop.f32.mrb[0].mxu0
      %v1521 = vpop.f32.mrb[0].mxu0
      %v1522 = vadd.f32 0.0, %v1521
      %v1523 = vpop.f32.mrb[0].mxu0
      %1524 = vmatprep.mubr.bf16.mxu0 0
      %1525 = vmatmul.mubr.bf16.gmra.mrb[0].mxu0 %v319
      %v1526 = vpop.f32.mrb[0].mxu0
      %v1527 = vadd.f32 0.0, %v1526
      %v1528 = vpop.f32.mrb[0].mxu0
      %v1529 = vpop.f32.mrb[0].mxu0
      %v1530 = vadd.f32 0.0, %v1529
      %v1531 = vpop.f32.mrb[0].mxu0
      %1532 = vmatprep.mubr.bf16.mxu0 0
      %1533 = vmatmul.mubr.bf16.gmra.mrb[0].mxu0 %v320
      %v1534 = vpop.f32.mrb[0].mxu0
      %v1535 = vadd.f32 0.0, %v1534
      %v1536 = vpop.f32.mrb[0].mxu0
      %v1537 = vpop.f32.mrb[0].mxu0
      %v1538 = vadd.f32 0.0, %v1537
      %v1539 = vpop.f32.mrb[0].mxu0
      %1540 = vmatprep.mubr.bf16.mxu0 0
      %1541 = vmatmul.mubr.bf16.gmra.mrb[0].mxu0 %v321
      %v1542 = vpop.f32.mrb[0].mxu0
      %v1543 = vadd.f32 0.0, %v1542
      %v1544 = vpop.f32.mrb[0].mxu0
      %v1545 = vpop.f32.mrb[0].mxu0
      %v1546 = vadd.f32 0.0, %v1545
      %v1547 = vpop.f32.mrb[0].mxu0
      %1548 = vmatprep.mubr.bf16.mxu0 0
      %1549 = vmatmul.mubr.bf16.gmra.mrb[0].mxu0 %v322
      %v1550 = vpop.f32.mrb[0].mxu0
      %v1551 = vadd.f32 0.0, %v1550
      %v1552 = vpop.f32.mrb[0].mxu0
      %v1553 = vpop.f32.mrb[0].mxu0
      %v1554 = vadd.f32 0.0, %v1553
      %v1555 = vpop.f32.mrb[0].mxu0
      %1556 = vmatprep.mubr.bf16.mxu0 0
      %1557 = vmatmul.mubr.bf16.gmra.mrb[0].mxu0 %v1338
      %v1558 = vpop.f32.mrb[0].mxu0
      %v1559 = vadd.f32 0.0, %v1558
      %v1560 = vpop.f32.mrb[0].mxu0
      %v1561 = vpop.f32.mrb[0].mxu0
      %v1562 = vadd.f32 0.0, %v1561
      %v1563 = vpop.f32.mrb[0].mxu0
      %1564 = vdwg.mxu0
      %v1565 = vadd.f32 %v1306, %v1439
      %v1566 = vadd.f32 %v1307, %v1442
      %v1567 = vadd.f32 %v1308, %v1447
      %v1568 = vadd.f32 %v1309, %v1450
      %v1569 = vadd.f32 %v1310, %v1455
      %v1570 = vadd.f32 %v1311, %v1458
      %v1571 = vadd.f32 %v1312, %v1463
      %v1572 = vadd.f32 %v1313, %v1466
      %v1573 = vadd.f32 %v1314, %v1471
      %v1574 = vadd.f32 %v1315, %v1474
      %v1575 = vadd.f32 %v1316, %v1479
      %v1576 = vadd.f32 %v1317, %v1482
      %v1577 = vadd.f32 %v1318, %v1487
      %v1578 = vadd.f32 %v1319, %v1490
      %v1579 = vadd.f32 %v1320, %v1495
      %v1580 = vadd.f32 %v1321, %v1498
      %v1581 = vadd.f32 %v1322, %v1503
      %v1582 = vadd.f32 %v1323, %v1506
      %v1583 = vadd.f32 %v1324, %v1511
      %v1584 = vadd.f32 %v1325, %v1514
      %v1585 = vadd.f32 %v1326, %v1519
      %v1586 = vadd.f32 %v1327, %v1522
      %v1587 = vadd.f32 %v1328, %v1527
      %v1588 = vadd.f32 %v1329, %v1530
      %v1589 = vadd.f32 %v1330, %v1535
      %v1590 = vadd.f32 %v1331, %v1538
      %v1591 = vadd.f32 %v1332, %v1543
      %v1592 = vadd.f32 %v1333, %v1546
      %v1593 = vadd.f32 %v1334, %v1551
      %v1594 = vadd.f32 %v1335, %v1554
      %v1595 = vadd.f32 %v1336, %v1559
      %v1596 = vadd.f32 %v1337, %v1562
      %v1600 = vrot.slane %v301, 1
      %v1601 = vrot.slane %v302, 1
      %v1602 = vsel %vm387, %v1600, %v1601
      %v1603 = vrot.slane %v303, 1
      %v1604 = vsel %vm387, %v1601, %v1603
      %v1607 = vpack.c.bf16 %v1604, %v1602
      %s1608 = scalar_lea.vmem %s1, 256
      %v1609 = vld [vmem:[%s1608] sm:$0xf]
      %v1610 = vld [vmem:[%s1608 + $0x4] sm:$0xf]
      %v1611 = vld [vmem:[%s1608 + $0x8] sm:$0xf]
      %v1612 = vld [vmem:[%s1608 + $0xc] sm:$0xf]
      %v1613 = vld [vmem:[%s1608 + $0x10] sm:$0xf]
      %v1614 = vld [vmem:[%s1608 + $0x14] sm:$0xf]
      %v1615 = vld [vmem:[%s1608 + $0x18] sm:$0xf]
      %v1616 = vld [vmem:[%s1608 + $0x1c] sm:$0xf]
      %v1617 = vld [vmem:[%s1608 + $0x20] sm:$0xf]
      %v1618 = vld [vmem:[%s1608 + $0x24] sm:$0xf]
      %v1619 = vld [vmem:[%s1608 + $0x28] sm:$0xf]
      %v1620 = vld [vmem:[%s1608 + $0x2c] sm:$0xf]
      %v1621 = vld [vmem:[%s1608 + $0x30] sm:$0xf]
      %v1622 = vld [vmem:[%s1608 + $0x34] sm:$0xf]
      %v1623 = vld [vmem:[%s1608 + $0x38] sm:$0xf]
      %v1624 = vld [vmem:[%s1608 + $0x3c] sm:$0xf]
      %v1641 = vunpack.c.l.b16 %v1609
      %v1642 = vunpack.c.l.b16 %v1610
      %v1643 = vunpack.c.l.b16 %v1611
      %v1644 = vunpack.c.l.b16 %v1612
      %v1645 = vunpack.c.l.b16 %v1613
      %v1646 = vunpack.c.l.b16 %v1614
      %v1647 = vunpack.c.l.b16 %v1615
      %v1648 = vunpack.c.l.b16 %v1616
      %v1649 = vunpack.c.l.b16 %v1617
      %v1650 = vunpack.c.l.b16 %v1618
      %v1651 = vunpack.c.l.b16 %v1619
      %v1652 = vunpack.c.l.b16 %v1620
      %v1653 = vunpack.c.l.b16 %v1621
      %v1654 = vunpack.c.l.b16 %v1622
      %v1655 = vunpack.c.l.b16 %v1623
      %v1656 = vunpack.c.l.b16 %v1624
      %v1657 = vpack.c.b16 %v1642, %v1641
      %v1658 = vpack.c.b16 %v1644, %v1643
      %v1659 = vpack.c.b16 %v1646, %v1645
      %v1660 = vpack.c.b16 %v1648, %v1647
      %v1661 = vpack.c.b16 %v1650, %v1649
      %v1662 = vpack.c.b16 %v1652, %v1651
      %v1663 = vpack.c.b16 %v1654, %v1653
      %v1664 = vpack.c.b16 %v1656, %v1655
      %1673 = vmatprep.subr.bf16.mxu0 0
      %1674 = vmatpush1.bf16.msra.mxu0 %v1657
      %1675 = vmatprep.subr.bf16.mxu0 0
      %1676 = vmatpush1.bf16.msra.mxu0 %v1658
      %1677 = vmatprep.subr.bf16.mxu0 0
      %1678 = vmatpush1.bf16.msra.mxu0 %v1659
      %1679 = vmatprep.subr.bf16.mxu0 0
      %1680 = vmatpush1.bf16.msra.mxu0 %v1660
      %1681 = vmatprep.subr.bf16.mxu0 0
      %1682 = vmatpush1.bf16.msra.mxu0 %v1661
      %1683 = vmatprep.subr.bf16.mxu0 0
      %1684 = vmatpush1.bf16.msra.mxu0 %v1662
      %1685 = vmatprep.subr.bf16.mxu0 0
      %1686 = vmatpush1.bf16.msra.mxu0 %v1663
      %1687 = vmatprep.subr.bf16.mxu0 0
      %1688 = vmatpush1.bf16.msra.mxu0 %v1664
      %1689 = vmatprep.subr.bf16.mxu0 0
      %1690 = vmatpush1.bf16.msra.mxu0 0
      %1691 = vmatprep.subr.bf16.mxu0 0
      %1692 = vmatpush1.bf16.msra.mxu0 0
      %1693 = vmatprep.subr.bf16.mxu0 0
      %1694 = vmatpush1.bf16.msra.mxu0 0
      %1695 = vmatprep.subr.bf16.mxu0 0
      %1696 = vmatpush1.bf16.msra.mxu0 0
      %1697 = vmatprep.subr.bf16.mxu0 0
      %1698 = vmatpush1.bf16.msra.mxu0 0
      %1699 = vmatprep.subr.bf16.mxu0 0
      %1700 = vmatpush1.bf16.msra.mxu0 0
      %1701 = vmatprep.subr.bf16.mxu0 0
      %1702 = vmatpush1.bf16.msra.mxu0 0
      %1703 = vmatprep.subr.bf16.mxu0 0
      %1704 = vmatpush1.bf16.msra.mxu0 0
      %1705 = vmatprep.mubr.bf16.mxu0 0
      %1706 = vmatmul.mubr.bf16.gmra.mrb[0].mxu0 %v501
      %v1707 = vpop.f32.mrb[0].mxu0
      %v1708 = vadd.f32 0.0, %v1707
      %v1709 = vpop.f32.mrb[0].mxu0
      %v1710 = vpop.f32.mrb[0].mxu0
      %v1711 = vadd.f32 0.0, %v1710
      %v1712 = vpop.f32.mrb[0].mxu0
      %1713 = vmatprep.mubr.bf16.mxu0 0
      %1714 = vmatmul.mubr.bf16.gmra.mrb[0].mxu0 %v502
      %v1715 = vpop.f32.mrb[0].mxu0
      %v1716 = vadd.f32 0.0, %v1715
      %v1717 = vpop.f32.mrb[0].mxu0
      %v1718 = vpop.f32.mrb[0].mxu0
      %v1719 = vadd.f32 0.0, %v1718
      %v1720 = vpop.f32.mrb[0].mxu0
      %1721 = vmatprep.mubr.bf16.mxu0 0
      %1722 = vmatmul.mubr.bf16.gmra.mrb[0].mxu0 %v503
      %v1723 = vpop.f32.mrb[0].mxu0
      %v1724 = vadd.f32 0.0, %v1723
      %v1725 = vpop.f32.mrb[0].mxu0
      %v1726 = vpop.f32.mrb[0].mxu0
      %v1727 = vadd.f32 0.0, %v1726
      %v1728 = vpop.f32.mrb[0].mxu0
      %1729 = vmatprep.mubr.bf16.mxu0 0
      %1730 = vmatmul.mubr.bf16.gmra.mrb[0].mxu0 %v504
      %v1731 = vpop.f32.mrb[0].mxu0
      %v1732 = vadd.f32 0.0, %v1731
      %v1733 = vpop.f32.mrb[0].mxu0
      %v1734 = vpop.f32.mrb[0].mxu0
      %v1735 = vadd.f32 0.0, %v1734
      %v1736 = vpop.f32.mrb[0].mxu0
      %1737 = vmatprep.mubr.bf16.mxu0 0
      %1738 = vmatmul.mubr.bf16.gmra.mrb[0].mxu0 %v505
      %v1739 = vpop.f32.mrb[0].mxu0
      %v1740 = vadd.f32 0.0, %v1739
      %v1741 = vpop.f32.mrb[0].mxu0
      %v1742 = vpop.f32.mrb[0].mxu0
      %v1743 = vadd.f32 0.0, %v1742
      %v1744 = vpop.f32.mrb[0].mxu0
      %1745 = vmatprep.mubr.bf16.mxu0 0
      %1746 = vmatmul.mubr.bf16.gmra.mrb[0].mxu0 %v506
      %v1747 = vpop.f32.mrb[0].mxu0
      %v1748 = vadd.f32 0.0, %v1747
      %v1749 = vpop.f32.mrb[0].mxu0
      %v1750 = vpop.f32.mrb[0].mxu0
      %v1751 = vadd.f32 0.0, %v1750
      %v1752 = vpop.f32.mrb[0].mxu0
      %1753 = vmatprep.mubr.bf16.mxu0 0
      %1754 = vmatmul.mubr.bf16.gmra.mrb[0].mxu0 %v507
      %v1755 = vpop.f32.mrb[0].mxu0
      %v1756 = vadd.f32 0.0, %v1755
      %v1757 = vpop.f32.mrb[0].mxu0
      %v1758 = vpop.f32.mrb[0].mxu0
      %v1759 = vadd.f32 0.0, %v1758
      %v1760 = vpop.f32.mrb[0].mxu0
      %1761 = vmatprep.mubr.bf16.mxu0 0
      %1762 = vmatmul.mubr.bf16.gmra.mrb[0].mxu0 %v508
      %v1763 = vpop.f32.mrb[0].mxu0
      %v1764 = vadd.f32 0.0, %v1763
      %v1765 = vpop.f32.mrb[0].mxu0
      %v1766 = vpop.f32.mrb[0].mxu0
      %v1767 = vadd.f32 0.0, %v1766
      %v1768 = vpop.f32.mrb[0].mxu0
      %1769 = vmatprep.mubr.bf16.mxu0 0
      %1770 = vmatmul.mubr.bf16.gmra.mrb[0].mxu0 %v509
      %v1771 = vpop.f32.mrb[0].mxu0
      %v1772 = vadd.f32 0.0, %v1771
      %v1773 = vpop.f32.mrb[0].mxu0
      %v1774 = vpop.f32.mrb[0].mxu0
      %v1775 = vadd.f32 0.0, %v1774
      %v1776 = vpop.f32.mrb[0].mxu0
      %1777 = vmatprep.mubr.bf16.mxu0 0
      %1778 = vmatmul.mubr.bf16.gmra.mrb[0].mxu0 %v510
      %v1779 = vpop.f32.mrb[0].mxu0
      %v1780 = vadd.f32 0.0, %v1779
      %v1781 = vpop.f32.mrb[0].mxu0
      %v1782 = vpop.f32.mrb[0].mxu0
      %v1783 = vadd.f32 0.0, %v1782
      %v1784 = vpop.f32.mrb[0].mxu0
      %1785 = vmatprep.mubr.bf16.mxu0 0
      %1786 = vmatmul.mubr.bf16.gmra.mrb[0].mxu0 %v511
      %v1787 = vpop.f32.mrb[0].mxu0
      %v1788 = vadd.f32 0.0, %v1787
      %v1789 = vpop.f32.mrb[0].mxu0
      %v1790 = vpop.f32.mrb[0].mxu0
      %v1791 = vadd.f32 0.0, %v1790
      %v1792 = vpop.f32.mrb[0].mxu0
      %1793 = vmatprep.mubr.bf16.mxu0 0
      %1794 = vmatmul.mubr.bf16.gmra.mrb[0].mxu0 %v512
      %v1795 = vpop.f32.mrb[0].mxu0
      %v1796 = vadd.f32 0.0, %v1795
      %v1797 = vpop.f32.mrb[0].mxu0
      %v1798 = vpop.f32.mrb[0].mxu0
      %v1799 = vadd.f32 0.0, %v1798
      %v1800 = vpop.f32.mrb[0].mxu0
      %1801 = vmatprep.mubr.bf16.mxu0 0
      %1802 = vmatmul.mubr.bf16.gmra.mrb[0].mxu0 %v513
      %v1803 = vpop.f32.mrb[0].mxu0
      %v1804 = vadd.f32 0.0, %v1803
      %v1805 = vpop.f32.mrb[0].mxu0
      %v1806 = vpop.f32.mrb[0].mxu0
      %v1807 = vadd.f32 0.0, %v1806
      %v1808 = vpop.f32.mrb[0].mxu0
      %1809 = vmatprep.mubr.bf16.mxu0 0
      %1810 = vmatmul.mubr.bf16.gmra.mrb[0].mxu0 %v514
      %v1811 = vpop.f32.mrb[0].mxu0
      %v1812 = vadd.f32 0.0, %v1811
      %v1813 = vpop.f32.mrb[0].mxu0
      %v1814 = vpop.f32.mrb[0].mxu0
      %v1815 = vadd.f32 0.0, %v1814
      %v1816 = vpop.f32.mrb[0].mxu0
      %1817 = vmatprep.mubr.bf16.mxu0 0
      %1818 = vmatmul.mubr.bf16.gmra.mrb[0].mxu0 %v515
      %v1819 = vpop.f32.mrb[0].mxu0
      %v1820 = vadd.f32 0.0, %v1819
      %v1821 = vpop.f32.mrb[0].mxu0
      %v1822 = vpop.f32.mrb[0].mxu0
      %v1823 = vadd.f32 0.0, %v1822
      %v1824 = vpop.f32.mrb[0].mxu0
      %1825 = vmatprep.mubr.bf16.mxu0 0
      %1826 = vmatmul.mubr.bf16.gmra.mrb[0].mxu0 %v1607
      %v1827 = vpop.f32.mrb[0].mxu0
      %v1828 = vadd.f32 0.0, %v1827
      %v1829 = vpop.f32.mrb[0].mxu0
      %v1830 = vpop.f32.mrb[0].mxu0
      %v1831 = vadd.f32 0.0, %v1830
      %v1832 = vpop.f32.mrb[0].mxu0
      %1833 = vdwg.mxu0
      %v1834 = vadd.f32 %v1565, %v1708
      %v1835 = vadd.f32 %v1566, %v1711
      %v1836 = vadd.f32 %v1567, %v1716
      %v1837 = vadd.f32 %v1568, %v1719
      %v1838 = vadd.f32 %v1569, %v1724
      %v1839 = vadd.f32 %v1570, %v1727
      %v1840 = vadd.f32 %v1571, %v1732
      %v1841 = vadd.f32 %v1572, %v1735
      %v1842 = vadd.f32 %v1573, %v1740
      %v1843 = vadd.f32 %v1574, %v1743
      %v1844 = vadd.f32 %v1575, %v1748
      %v1845 = vadd.f32 %v1576, %v1751
      %v1846 = vadd.f32 %v1577, %v1756
      %v1847 = vadd.f32 %v1578, %v1759
      %v1848 = vadd.f32 %v1579, %v1764
      %v1849 = vadd.f32 %v1580, %v1767
      %v1850 = vadd.f32 %v1581, %v1772
      %v1851 = vadd.f32 %v1582, %v1775
      %v1852 = vadd.f32 %v1583, %v1780
      %v1853 = vadd.f32 %v1584, %v1783
      %v1854 = vadd.f32 %v1585, %v1788
      %v1855 = vadd.f32 %v1586, %v1791
      %v1856 = vadd.f32 %v1587, %v1796
      %v1857 = vadd.f32 %v1588, %v1799
      %v1858 = vadd.f32 %v1589, %v1804
      %v1859 = vadd.f32 %v1590, %v1807
      %v1860 = vadd.f32 %v1591, %v1812
      %v1861 = vadd.f32 %v1592, %v1815
      %v1862 = vadd.f32 %v1593, %v1820
      %v1863 = vadd.f32 %v1594, %v1823
      %v1864 = vadd.f32 %v1595, %v1828
      %v1865 = vadd.f32 %v1596, %v1831
      %v1866 = vrot.slane %v301, 2
      %v1867 = vrot.slane %v302, 2
      %v1868 = vsel %vm951, %v1866, %v1867
      %v1869 = vrot.slane %v303, 2
      %v1870 = vsel %vm951, %v1867, %v1869
      %v1873 = vpack.c.bf16 %v1870, %v1868
      %s1874 = scalar_lea.vmem %s1, 320
      %v1875 = vld [vmem:[%s1874] sm:$0xf]
      %v1876 = vld [vmem:[%s1874 + $0x4] sm:$0xf]
      %v1877 = vld [vmem:[%s1874 + $0x8] sm:$0xf]
      %v1878 = vld [vmem:[%s1874 + $0xc] sm:$0xf]
      %v1879 = vld [vmem:[%s1874 + $0x10] sm:$0xf]
      %v1880 = vld [vmem:[%s1874 + $0x14] sm:$0xf]
      %v1881 = vld [vmem:[%s1874 + $0x18] sm:$0xf]
      %v1882 = vld [vmem:[%s1874 + $0x1c] sm:$0xf]
      %v1883 = vld [vmem:[%s1874 + $0x20] sm:$0xf]
      %v1884 = vld [vmem:[%s1874 + $0x24] sm:$0xf]
      %v1885 = vld [vmem:[%s1874 + $0x28] sm:$0xf]
      %v1886 = vld [vmem:[%s1874 + $0x2c] sm:$0xf]
      %v1887 = vld [vmem:[%s1874 + $0x30] sm:$0xf]
      %v1888 = vld [vmem:[%s1874 + $0x34] sm:$0xf]
      %v1889 = vld [vmem:[%s1874 + $0x38] sm:$0xf]
      %v1890 = vld [vmem:[%s1874 + $0x3c] sm:$0xf]
      %v1907 = vunpack.c.l.b16 %v1875
      %v1908 = vunpack.c.l.b16 %v1876
      %v1909 = vunpack.c.l.b16 %v1877
      %v1910 = vunpack.c.l.b16 %v1878
      %v1911 = vunpack.c.l.b16 %v1879
      %v1912 = vunpack.c.l.b16 %v1880
      %v1913 = vunpack.c.l.b16 %v1881
      %v1914 = vunpack.c.l.b16 %v1882
      %v1915 = vunpack.c.l.b16 %v1883
      %v1916 = vunpack.c.l.b16 %v1884
      %v1917 = vunpack.c.l.b16 %v1885
      %v1918 = vunpack.c.l.b16 %v1886
      %v1919 = vunpack.c.l.b16 %v1887
      %v1920 = vunpack.c.l.b16 %v1888
      %v1921 = vunpack.c.l.b16 %v1889
      %v1922 = vunpack.c.l.b16 %v1890
      %v1923 = vpack.c.b16 %v1908, %v1907
      %v1924 = vpack.c.b16 %v1910, %v1909
      %v1925 = vpack.c.b16 %v1912, %v1911
      %v1926 = vpack.c.b16 %v1914, %v1913
      %v1927 = vpack.c.b16 %v1916, %v1915
      %v1928 = vpack.c.b16 %v1918, %v1917
      %v1929 = vpack.c.b16 %v1920, %v1919
      %v1930 = vpack.c.b16 %v1922, %v1921
      %1939 = vmatprep.subr.bf16.mxu0 0
      %1940 = vmatpush1.bf16.msra.mxu0 %v1923
      %1941 = vmatprep.subr.bf16.mxu0 0
      %1942 = vmatpush1.bf16.msra.mxu0 %v1924
      %1943 = vmatprep.subr.bf16.mxu0 0
      %1944 = vmatpush1.bf16.msra.mxu0 %v1925
      %1945 = vmatprep.subr.bf16.mxu0 0
      %1946 = vmatpush1.bf16.msra.mxu0 %v1926
      %1947 = vmatprep.subr.bf16.mxu0 0
      %1948 = vmatpush1.bf16.msra.mxu0 %v1927
      %1949 = vmatprep.subr.bf16.mxu0 0
      %1950 = vmatpush1.bf16.msra.mxu0 %v1928
      %1951 = vmatprep.subr.bf16.mxu0 0
      %1952 = vmatpush1.bf16.msra.mxu0 %v1929
      %1953 = vmatprep.subr.bf16.mxu0 0
      %1954 = vmatpush1.bf16.msra.mxu0 %v1930
      %1955 = vmatprep.subr.bf16.mxu0 0
      %1956 = vmatpush1.bf16.msra.mxu0 0
      %1957 = vmatprep.subr.bf16.mxu0 0
      %1958 = vmatpush1.bf16.msra.mxu0 0
      %1959 = vmatprep.subr.bf16.mxu0 0
      %1960 = vmatpush1.bf16.msra.mxu0 0
      %1961 = vmatprep.subr.bf16.mxu0 0
      %1962 = vmatpush1.bf16.msra.mxu0 0
      %1963 = vmatprep.subr.bf16.mxu0 0
      %1964 = vmatpush1.bf16.msra.mxu0 0
      %1965 = vmatprep.subr.bf16.mxu0 0
      %1966 = vmatpush1.bf16.msra.mxu0 0
      %1967 = vmatprep.subr.bf16.mxu0 0
      %1968 = vmatpush1.bf16.msra.mxu0 0
      %1969 = vmatprep.subr.bf16.mxu0 0
      %1970 = vmatpush1.bf16.msra.mxu0 0
      %1971 = vmatprep.mubr.bf16.mxu0 0
      %1972 = vmatmul.mubr.bf16.gmra.mrb[0].mxu0 %v1065
      %v1973 = vpop.f32.mrb[0].mxu0
      %v1974 = vadd.f32 0.0, %v1973
      %v1975 = vpop.f32.mrb[0].mxu0
      %v1976 = vpop.f32.mrb[0].mxu0
      %v1977 = vadd.f32 0.0, %v1976
      %v1978 = vpop.f32.mrb[0].mxu0
      %1979 = vmatprep.mubr.bf16.mxu0 0
      %1980 = vmatmul.mubr.bf16.gmra.mrb[0].mxu0 %v1066
      %v1981 = vpop.f32.mrb[0].mxu0
      %v1982 = vadd.f32 0.0, %v1981
      %v1983 = vpop.f32.mrb[0].mxu0
      %v1984 = vpop.f32.mrb[0].mxu0
      %v1985 = vadd.f32 0.0, %v1984
      %v1986 = vpop.f32.mrb[0].mxu0
      %1987 = vmatprep.mubr.bf16.mxu0 0
      %1988 = vmatmul.mubr.bf16.gmra.mrb[0].mxu0 %v1067
      %v1989 = vpop.f32.mrb[0].mxu0
      %v1990 = vadd.f32 0.0, %v1989
      %v1991 = vpop.f32.mrb[0].mxu0
      %v1992 = vpop.f32.mrb[0].mxu0
      %v1993 = vadd.f32 0.0, %v1992
      %v1994 = vpop.f32.mrb[0].mxu0
      %1995 = vmatprep.mubr.bf16.mxu0 0
      %1996 = vmatmul.mubr.bf16.gmra.mrb[0].mxu0 %v1068
      %v1997 = vpop.f32.mrb[0].mxu0
      %v1998 = vadd.f32 0.0, %v1997
      %v1999 = vpop.f32.mrb[0].mxu0
      %v2000 = vpop.f32.mrb[0].mxu0
      %v2001 = vadd.f32 0.0, %v2000
      %v2002 = vpop.f32.mrb[0].mxu0
      %2003 = vmatprep.mubr.bf16.mxu0 0
      %2004 = vmatmul.mubr.bf16.gmra.mrb[0].mxu0 %v1069
      %v2005 = vpop.f32.mrb[0].mxu0
      %v2006 = vadd.f32 0.0, %v2005
      %v2007 = vpop.f32.mrb[0].mxu0
      %v2008 = vpop.f32.mrb[0].mxu0
      %v2009 = vadd.f32 0.0, %v2008
      %v2010 = vpop.f32.mrb[0].mxu0
      %2011 = vmatprep.mubr.bf16.mxu0 0
      %2012 = vmatmul.mubr.bf16.gmra.mrb[0].mxu0 %v1070
      %v2013 = vpop.f32.mrb[0].mxu0
      %v2014 = vadd.f32 0.0, %v2013
      %v2015 = vpop.f32.mrb[0].mxu0
      %v2016 = vpop.f32.mrb[0].mxu0
      %v2017 = vadd.f32 0.0, %v2016
      %v2018 = vpop.f32.mrb[0].mxu0
      %2019 = vmatprep.mubr.bf16.mxu0 0
      %2020 = vmatmul.mubr.bf16.gmra.mrb[0].mxu0 %v1071
      %v2021 = vpop.f32.mrb[0].mxu0
      %v2022 = vadd.f32 0.0, %v2021
      %v2023 = vpop.f32.mrb[0].mxu0
      %v2024 = vpop.f32.mrb[0].mxu0
      %v2025 = vadd.f32 0.0, %v2024
      %v2026 = vpop.f32.mrb[0].mxu0
      %2027 = vmatprep.mubr.bf16.mxu0 0
      %2028 = vmatmul.mubr.bf16.gmra.mrb[0].mxu0 %v1072
      %v2029 = vpop.f32.mrb[0].mxu0
      %v2030 = vadd.f32 0.0, %v2029
      %v2031 = vpop.f32.mrb[0].mxu0
      %v2032 = vpop.f32.mrb[0].mxu0
      %v2033 = vadd.f32 0.0, %v2032
      %v2034 = vpop.f32.mrb[0].mxu0
      %2035 = vmatprep.mubr.bf16.mxu0 0
      %2036 = vmatmul.mubr.bf16.gmra.mrb[0].mxu0 %v1073
      %v2037 = vpop.f32.mrb[0].mxu0
      %v2038 = vadd.f32 0.0, %v2037
      %v2039 = vpop.f32.mrb[0].mxu0
      %v2040 = vpop.f32.mrb[0].mxu0
      %v2041 = vadd.f32 0.0, %v2040
      %v2042 = vpop.f32.mrb[0].mxu0
      %2043 = vmatprep.mubr.bf16.mxu0 0
      %2044 = vmatmul.mubr.bf16.gmra.mrb[0].mxu0 %v1074
      %v2045 = vpop.f32.mrb[0].mxu0
      %v2046 = vadd.f32 0.0, %v2045
      %v2047 = vpop.f32.mrb[0].mxu0
      %v2048 = vpop.f32.mrb[0].mxu0
      %v2049 = vadd.f32 0.0, %v2048
      %v2050 = vpop.f32.mrb[0].mxu0
      %2051 = vmatprep.mubr.bf16.mxu0 0
      %2052 = vmatmul.mubr.bf16.gmra.mrb[0].mxu0 %v1075
      %v2053 = vpop.f32.mrb[0].mxu0
      %v2054 = vadd.f32 0.0, %v2053
      %v2055 = vpop.f32.mrb[0].mxu0
      %v2056 = vpop.f32.mrb[0].mxu0
      %v2057 = vadd.f32 0.0, %v2056
      %v2058 = vpop.f32.mrb[0].mxu0
      %2059 = vmatprep.mubr.bf16.mxu0 0
      %2060 = vmatmul.mubr.bf16.gmra.mrb[0].mxu0 %v1076
      %v2061 = vpop.f32.mrb[0].mxu0
      %v2062 = vadd.f32 0.0, %v2061
      %v2063 = vpop.f32.mrb[0].mxu0
      %v2064 = vpop.f32.mrb[0].mxu0
      %v2065 = vadd.f32 0.0, %v2064
      %v2066 = vpop.f32.mrb[0].mxu0
      %2067 = vmatprep.mubr.bf16.mxu0 0
      %2068 = vmatmul.mubr.bf16.gmra.mrb[0].mxu0 %v1077
      %v2069 = vpop.f32.mrb[0].mxu0
      %v2070 = vadd.f32 0.0, %v2069
      %v2071 = vpop.f32.mrb[0].mxu0
      %v2072 = vpop.f32.mrb[0].mxu0
      %v2073 = vadd.f32 0.0, %v2072
      %v2074 = vpop.f32.mrb[0].mxu0
      %2075 = vmatprep.mubr.bf16.mxu0 0
      %2076 = vmatmul.mubr.bf16.gmra.mrb[0].mxu0 %v1078
      %v2077 = vpop.f32.mrb[0].mxu0
      %v2078 = vadd.f32 0.0, %v2077
      %v2079 = vpop.f32.mrb[0].mxu0
      %v2080 = vpop.f32.mrb[0].mxu0
      %v2081 = vadd.f32 0.0, %v2080
      %v2082 = vpop.f32.mrb[0].mxu0
      %2083 = vmatprep.mubr.bf16.mxu0 0
      %2084 = vmatmul.mubr.bf16.gmra.mrb[0].mxu0 %v1079
      %v2085 = vpop.f32.mrb[0].mxu0
      %v2086 = vadd.f32 0.0, %v2085
      %v2087 = vpop.f32.mrb[0].mxu0
      %v2088 = vpop.f32.mrb[0].mxu0
      %v2089 = vadd.f32 0.0, %v2088
      %v2090 = vpop.f32.mrb[0].mxu0
      %2091 = vmatprep.mubr.bf16.mxu0 0
      %2092 = vmatmul.mubr.bf16.gmra.mrb[0].mxu0 %v1873
      %v2093 = vpop.f32.mrb[0].mxu0
      %v2094 = vadd.f32 0.0, %v2093
      %v2095 = vpop.f32.mrb[0].mxu0
      %v2096 = vpop.f32.mrb[0].mxu0
      %v2097 = vadd.f32 0.0, %v2096
      %v2098 = vpop.f32.mrb[0].mxu0
      %2099 = vdwg.mxu0
      %v2100 = vadd.f32 %v1834, %v1974
      %v2101 = vadd.f32 %v1835, %v1977
      %v2102 = vadd.f32 %v1836, %v1982
      %v2103 = vadd.f32 %v1837, %v1985
      %v2104 = vadd.f32 %v1838, %v1990
      %v2105 = vadd.f32 %v1839, %v1993
      %v2106 = vadd.f32 %v1840, %v1998
      %v2107 = vadd.f32 %v1841, %v2001
      %v2108 = vadd.f32 %v1842, %v2006
      %v2109 = vadd.f32 %v1843, %v2009
      %v2110 = vadd.f32 %v1844, %v2014
      %v2111 = vadd.f32 %v1845, %v2017
      %v2112 = vadd.f32 %v1846, %v2022
      %v2113 = vadd.f32 %v1847, %v2025
      %v2114 = vadd.f32 %v1848, %v2030
      %v2115 = vadd.f32 %v1849, %v2033
      %v2116 = vadd.f32 %v1850, %v2038
      %v2117 = vadd.f32 %v1851, %v2041
      %v2118 = vadd.f32 %v1852, %v2046
      %v2119 = vadd.f32 %v1853, %v2049
      %v2120 = vadd.f32 %v1854, %v2054
      %v2121 = vadd.f32 %v1855, %v2057
      %v2122 = vadd.f32 %v1856, %v2062
      %v2123 = vadd.f32 %v1857, %v2065
      %v2124 = vadd.f32 %v1858, %v2070
      %v2125 = vadd.f32 %v1859, %v2073
      %v2126 = vadd.f32 %v1860, %v2078
      %v2127 = vadd.f32 %v1861, %v2081
      %v2128 = vadd.f32 %v1862, %v2086
      %v2129 = vadd.f32 %v1863, %v2089
      %v2130 = vadd.f32 %v1864, %v2094
      %v2131 = vadd.f32 %v1865, %v2097
      %v2132 = vpack.c.bf16 %v305, %v304
      %s2133 = scalar_lea.vmem %s1, 384
      %v2134 = vld [vmem:[%s2133] sm:$0xf]
      %v2135 = vld [vmem:[%s2133 + $0x4] sm:$0xf]
      %v2136 = vld [vmem:[%s2133 + $0x8] sm:$0xf]
      %v2137 = vld [vmem:[%s2133 + $0xc] sm:$0xf]
      %v2138 = vld [vmem:[%s2133 + $0x10] sm:$0xf]
      %v2139 = vld [vmem:[%s2133 + $0x14] sm:$0xf]
      %v2140 = vld [vmem:[%s2133 + $0x18] sm:$0xf]
      %v2141 = vld [vmem:[%s2133 + $0x1c] sm:$0xf]
      %v2142 = vld [vmem:[%s2133 + $0x20] sm:$0xf]
      %v2143 = vld [vmem:[%s2133 + $0x24] sm:$0xf]
      %v2144 = vld [vmem:[%s2133 + $0x28] sm:$0xf]
      %v2145 = vld [vmem:[%s2133 + $0x2c] sm:$0xf]
      %v2146 = vld [vmem:[%s2133 + $0x30] sm:$0xf]
      %v2147 = vld [vmem:[%s2133 + $0x34] sm:$0xf]
      %v2148 = vld [vmem:[%s2133 + $0x38] sm:$0xf]
      %v2149 = vld [vmem:[%s2133 + $0x3c] sm:$0xf]
      %v2166 = vunpack.c.l.b16 %v2134
      %v2167 = vunpack.c.l.b16 %v2135
      %v2168 = vunpack.c.l.b16 %v2136
      %v2169 = vunpack.c.l.b16 %v2137
      %v2170 = vunpack.c.l.b16 %v2138
      %v2171 = vunpack.c.l.b16 %v2139
      %v2172 = vunpack.c.l.b16 %v2140
      %v2173 = vunpack.c.l.b16 %v2141
      %v2174 = vunpack.c.l.b16 %v2142
      %v2175 = vunpack.c.l.b16 %v2143
      %v2176 = vunpack.c.l.b16 %v2144
      %v2177 = vunpack.c.l.b16 %v2145
      %v2178 = vunpack.c.l.b16 %v2146
      %v2179 = vunpack.c.l.b16 %v2147
      %v2180 = vunpack.c.l.b16 %v2148
      %v2181 = vunpack.c.l.b16 %v2149
      %v2182 = vpack.c.b16 %v2167, %v2166
      %v2183 = vpack.c.b16 %v2169, %v2168
      %v2184 = vpack.c.b16 %v2171, %v2170
      %v2185 = vpack.c.b16 %v2173, %v2172
      %v2186 = vpack.c.b16 %v2175, %v2174
      %v2187 = vpack.c.b16 %v2177, %v2176
      %v2188 = vpack.c.b16 %v2179, %v2178
      %v2189 = vpack.c.b16 %v2181, %v2180
      %2198 = vmatprep.subr.bf16.mxu0 0
      %2199 = vmatpush1.bf16.msra.mxu0 %v2182
      %2200 = vmatprep.subr.bf16.mxu0 0
      %2201 = vmatpush1.bf16.msra.mxu0 %v2183
      %2202 = vmatprep.subr.bf16.mxu0 0
      %2203 = vmatpush1.bf16.msra.mxu0 %v2184
      %2204 = vmatprep.subr.bf16.mxu0 0
      %2205 = vmatpush1.bf16.msra.mxu0 %v2185
      %2206 = vmatprep.subr.bf16.mxu0 0
      %2207 = vmatpush1.bf16.msra.mxu0 %v2186
      %2208 = vmatprep.subr.bf16.mxu0 0
      %2209 = vmatpush1.bf16.msra.mxu0 %v2187
      %2210 = vmatprep.subr.bf16.mxu0 0
      %2211 = vmatpush1.bf16.msra.mxu0 %v2188
      %2212 = vmatprep.subr.bf16.mxu0 0
      %2213 = vmatpush1.bf16.msra.mxu0 %v2189
      %2214 = vmatprep.subr.bf16.mxu0 0
      %2215 = vmatpush1.bf16.msra.mxu0 0
      %2216 = vmatprep.subr.bf16.mxu0 0
      %2217 = vmatpush1.bf16.msra.mxu0 0
      %2218 = vmatprep.subr.bf16.mxu0 0
      %2219 = vmatpush1.bf16.msra.mxu0 0
      %2220 = vmatprep.subr.bf16.mxu0 0
      %2221 = vmatpush1.bf16.msra.mxu0 0
      %2222 = vmatprep.subr.bf16.mxu0 0
      %2223 = vmatpush1.bf16.msra.mxu0 0
      %2224 = vmatprep.subr.bf16.mxu0 0
      %2225 = vmatpush1.bf16.msra.mxu0 0
      %2226 = vmatprep.subr.bf16.mxu0 0
      %2227 = vmatpush1.bf16.msra.mxu0 0
      %2228 = vmatprep.subr.bf16.mxu0 0
      %2229 = vmatpush1.bf16.msra.mxu0 0
      %2230 = vmatprep.mubr.bf16.mxu0 0
      %2231 = vmatmul.mubr.bf16.gmra.mrb[0].mxu0 %v309
      %v2232 = vpop.f32.mrb[0].mxu0
      %v2233 = vadd.f32 0.0, %v2232
      %v2234 = vpop.f32.mrb[0].mxu0
      %v2235 = vpop.f32.mrb[0].mxu0
      %v2236 = vadd.f32 0.0, %v2235
      %v2237 = vpop.f32.mrb[0].mxu0
      %2238 = vmatprep.mubr.bf16.mxu0 0
      %2239 = vmatmul.mubr.bf16.gmra.mrb[0].mxu0 %v310
      %v2240 = vpop.f32.mrb[0].mxu0
      %v2241 = vadd.f32 0.0, %v2240
      %v2242 = vpop.f32.mrb[0].mxu0
      %v2243 = vpop.f32.mrb[0].mxu0
      %v2244 = vadd.f32 0.0, %v2243
      %v2245 = vpop.f32.mrb[0].mxu0
      %2246 = vmatprep.mubr.bf16.mxu0 0
      %2247 = vmatmul.mubr.bf16.gmra.mrb[0].mxu0 %v311
      %v2248 = vpop.f32.mrb[0].mxu0
      %v2249 = vadd.f32 0.0, %v2248
      %v2250 = vpop.f32.mrb[0].mxu0
      %v2251 = vpop.f32.mrb[0].mxu0
      %v2252 = vadd.f32 0.0, %v2251
      %v2253 = vpop.f32.mrb[0].mxu0
      %2254 = vmatprep.mubr.bf16.mxu0 0
      %2255 = vmatmul.mubr.bf16.gmra.mrb[0].mxu0 %v312
      %v2256 = vpop.f32.mrb[0].mxu0
      %v2257 = vadd.f32 0.0, %v2256
      %v2258 = vpop.f32.mrb[0].mxu0
      %v2259 = vpop.f32.mrb[0].mxu0
      %v2260 = vadd.f32 0.0, %v2259
      %v2261 = vpop.f32.mrb[0].mxu0
      %2262 = vmatprep.mubr.bf16.mxu0 0
      %2263 = vmatmul.mubr.bf16.gmra.mrb[0].mxu0 %v313
      %v2264 = vpop.f32.mrb[0].mxu0
      %v2265 = vadd.f32 0.0, %v2264
      %v2266 = vpop.f32.mrb[0].mxu0
      %v2267 = vpop.f32.mrb[0].mxu0
      %v2268 = vadd.f32 0.0, %v2267
      %v2269 = vpop.f32.mrb[0].mxu0
      %2270 = vmatprep.mubr.bf16.mxu0 0
      %2271 = vmatmul.mubr.bf16.gmra.mrb[0].mxu0 %v314
      %v2272 = vpop.f32.mrb[0].mxu0
      %v2273 = vadd.f32 0.0, %v2272
      %v2274 = vpop.f32.mrb[0].mxu0
      %v2275 = vpop.f32.mrb[0].mxu0
      %v2276 = vadd.f32 0.0, %v2275
      %v2277 = vpop.f32.mrb[0].mxu0
      %2278 = vmatprep.mubr.bf16.mxu0 0
      %2279 = vmatmul.mubr.bf16.gmra.mrb[0].mxu0 %v315
      %v2280 = vpop.f32.mrb[0].mxu0
      %v2281 = vadd.f32 0.0, %v2280
      %v2282 = vpop.f32.mrb[0].mxu0
      %v2283 = vpop.f32.mrb[0].mxu0
      %v2284 = vadd.f32 0.0, %v2283
      %v2285 = vpop.f32.mrb[0].mxu0
      %2286 = vmatprep.mubr.bf16.mxu0 0
      %2287 = vmatmul.mubr.bf16.gmra.mrb[0].mxu0 %v316
      %v2288 = vpop.f32.mrb[0].mxu0
      %v2289 = vadd.f32 0.0, %v2288
      %v2290 = vpop.f32.mrb[0].mxu0
      %v2291 = vpop.f32.mrb[0].mxu0
      %v2292 = vadd.f32 0.0, %v2291
      %v2293 = vpop.f32.mrb[0].mxu0
      %2294 = vmatprep.mubr.bf16.mxu0 0
      %2295 = vmatmul.mubr.bf16.gmra.mrb[0].mxu0 %v317
      %v2296 = vpop.f32.mrb[0].mxu0
      %v2297 = vadd.f32 0.0, %v2296
      %v2298 = vpop.f32.mrb[0].mxu0
      %v2299 = vpop.f32.mrb[0].mxu0
      %v2300 = vadd.f32 0.0, %v2299
      %v2301 = vpop.f32.mrb[0].mxu0
      %2302 = vmatprep.mubr.bf16.mxu0 0
      %2303 = vmatmul.mubr.bf16.gmra.mrb[0].mxu0 %v318
      %v2304 = vpop.f32.mrb[0].mxu0
      %v2305 = vadd.f32 0.0, %v2304
      %v2306 = vpop.f32.mrb[0].mxu0
      %v2307 = vpop.f32.mrb[0].mxu0
      %v2308 = vadd.f32 0.0, %v2307
      %v2309 = vpop.f32.mrb[0].mxu0
      %2310 = vmatprep.mubr.bf16.mxu0 0
      %2311 = vmatmul.mubr.bf16.gmra.mrb[0].mxu0 %v319
      %v2312 = vpop.f32.mrb[0].mxu0
      %v2313 = vadd.f32 0.0, %v2312
      %v2314 = vpop.f32.mrb[0].mxu0
      %v2315 = vpop.f32.mrb[0].mxu0
      %v2316 = vadd.f32 0.0, %v2315
      %v2317 = vpop.f32.mrb[0].mxu0
      %2318 = vmatprep.mubr.bf16.mxu0 0
      %2319 = vmatmul.mubr.bf16.gmra.mrb[0].mxu0 %v320
      %v2320 = vpop.f32.mrb[0].mxu0
      %v2321 = vadd.f32 0.0, %v2320
      %v2322 = vpop.f32.mrb[0].mxu0
      %v2323 = vpop.f32.mrb[0].mxu0
      %v2324 = vadd.f32 0.0, %v2323
      %v2325 = vpop.f32.mrb[0].mxu0
      %2326 = vmatprep.mubr.bf16.mxu0 0
      %2327 = vmatmul.mubr.bf16.gmra.mrb[0].mxu0 %v321
      %v2328 = vpop.f32.mrb[0].mxu0
      %v2329 = vadd.f32 0.0, %v2328
      %v2330 = vpop.f32.mrb[0].mxu0
      %v2331 = vpop.f32.mrb[0].mxu0
      %v2332 = vadd.f32 0.0, %v2331
      %v2333 = vpop.f32.mrb[0].mxu0
      %2334 = vmatprep.mubr.bf16.mxu0 0
      %2335 = vmatmul.mubr.bf16.gmra.mrb[0].mxu0 %v322
      %v2336 = vpop.f32.mrb[0].mxu0
      %v2337 = vadd.f32 0.0, %v2336
      %v2338 = vpop.f32.mrb[0].mxu0
      %v2339 = vpop.f32.mrb[0].mxu0
      %v2340 = vadd.f32 0.0, %v2339
      %v2341 = vpop.f32.mrb[0].mxu0
      %2342 = vmatprep.mubr.bf16.mxu0 0
      %2343 = vmatmul.mubr.bf16.gmra.mrb[0].mxu0 %v1338
      %v2344 = vpop.f32.mrb[0].mxu0
      %v2345 = vadd.f32 0.0, %v2344
      %v2346 = vpop.f32.mrb[0].mxu0
      %v2347 = vpop.f32.mrb[0].mxu0
      %v2348 = vadd.f32 0.0, %v2347
      %v2349 = vpop.f32.mrb[0].mxu0
      %2350 = vmatprep.mubr.bf16.mxu0 0
      %2351 = vmatmul.mubr.bf16.gmra.mrb[0].mxu0 %v2132
      %v2352 = vpop.f32.mrb[0].mxu0
      %v2353 = vadd.f32 0.0, %v2352
      %v2354 = vpop.f32.mrb[0].mxu0
      %v2355 = vpop.f32.mrb[0].mxu0
      %v2356 = vadd.f32 0.0, %v2355
      %v2357 = vpop.f32.mrb[0].mxu0
      %2358 = vdwg.mxu0
      %v2359 = vadd.f32 %v2100, %v2233
      %v2360 = vadd.f32 %v2101, %v2236
      %v2361 = vadd.f32 %v2102, %v2241
      %v2362 = vadd.f32 %v2103, %v2244
      %v2363 = vadd.f32 %v2104, %v2249
      %v2364 = vadd.f32 %v2105, %v2252
      %v2365 = vadd.f32 %v2106, %v2257
      %v2366 = vadd.f32 %v2107, %v2260
      %v2367 = vadd.f32 %v2108, %v2265
      %v2368 = vadd.f32 %v2109, %v2268
      %v2369 = vadd.f32 %v2110, %v2273
      %v2370 = vadd.f32 %v2111, %v2276
      %v2371 = vadd.f32 %v2112, %v2281
      %v2372 = vadd.f32 %v2113, %v2284
      %v2373 = vadd.f32 %v2114, %v2289
      %v2374 = vadd.f32 %v2115, %v2292
      %v2375 = vadd.f32 %v2116, %v2297
      %v2376 = vadd.f32 %v2117, %v2300
      %v2377 = vadd.f32 %v2118, %v2305
      %v2378 = vadd.f32 %v2119, %v2308
      %v2379 = vadd.f32 %v2120, %v2313
      %v2380 = vadd.f32 %v2121, %v2316
      %v2381 = vadd.f32 %v2122, %v2321
      %v2382 = vadd.f32 %v2123, %v2324
      %v2383 = vadd.f32 %v2124, %v2329
      %v2384 = vadd.f32 %v2125, %v2332
      %v2385 = vadd.f32 %v2126, %v2337
      %v2386 = vadd.f32 %v2127, %v2340
      %v2387 = vadd.f32 %v2128, %v2345
      %v2388 = vadd.f32 %v2129, %v2348
      %v2389 = vadd.f32 %v2130, %v2353
      %v2390 = vadd.f32 %v2131, %v2356
      %v2394 = vrot.slane %v304, 1
      %v2395 = vrot.slane %v305, 1
      %v2396 = vsel %vm387, %v2394, %v2395
      %v2397 = vrot.slane %v306, 1
      %v2398 = vsel %vm387, %v2395, %v2397
      %v2401 = vpack.c.bf16 %v2398, %v2396
      %s2402 = scalar_lea.vmem %s1, 448
      %v2403 = vld [vmem:[%s2402] sm:$0xf]
      %v2404 = vld [vmem:[%s2402 + $0x4] sm:$0xf]
      %v2405 = vld [vmem:[%s2402 + $0x8] sm:$0xf]
      %v2406 = vld [vmem:[%s2402 + $0xc] sm:$0xf]
      %v2407 = vld [vmem:[%s2402 + $0x10] sm:$0xf]
      %v2408 = vld [vmem:[%s2402 + $0x14] sm:$0xf]
      %v2409 = vld [vmem:[%s2402 + $0x18] sm:$0xf]
      %v2410 = vld [vmem:[%s2402 + $0x1c] sm:$0xf]
      %v2411 = vld [vmem:[%s2402 + $0x20] sm:$0xf]
      %v2412 = vld [vmem:[%s2402 + $0x24] sm:$0xf]
      %v2413 = vld [vmem:[%s2402 + $0x28] sm:$0xf]
      %v2414 = vld [vmem:[%s2402 + $0x2c] sm:$0xf]
      %v2415 = vld [vmem:[%s2402 + $0x30] sm:$0xf]
      %v2416 = vld [vmem:[%s2402 + $0x34] sm:$0xf]
      %v2417 = vld [vmem:[%s2402 + $0x38] sm:$0xf]
      %v2418 = vld [vmem:[%s2402 + $0x3c] sm:$0xf]
      %v2435 = vunpack.c.l.b16 %v2403
      %v2436 = vunpack.c.l.b16 %v2404
      %v2437 = vunpack.c.l.b16 %v2405
      %v2438 = vunpack.c.l.b16 %v2406
      %v2439 = vunpack.c.l.b16 %v2407
      %v2440 = vunpack.c.l.b16 %v2408
      %v2441 = vunpack.c.l.b16 %v2409
      %v2442 = vunpack.c.l.b16 %v2410
      %v2443 = vunpack.c.l.b16 %v2411
      %v2444 = vunpack.c.l.b16 %v2412
      %v2445 = vunpack.c.l.b16 %v2413
      %v2446 = vunpack.c.l.b16 %v2414
      %v2447 = vunpack.c.l.b16 %v2415
      %v2448 = vunpack.c.l.b16 %v2416
      %v2449 = vunpack.c.l.b16 %v2417
      %v2450 = vunpack.c.l.b16 %v2418
      %v2451 = vpack.c.b16 %v2436, %v2435
      %v2452 = vpack.c.b16 %v2438, %v2437
      %v2453 = vpack.c.b16 %v2440, %v2439
      %v2454 = vpack.c.b16 %v2442, %v2441
      %v2455 = vpack.c.b16 %v2444, %v2443
      %v2456 = vpack.c.b16 %v2446, %v2445
      %v2457 = vpack.c.b16 %v2448, %v2447
      %v2458 = vpack.c.b16 %v2450, %v2449
      %2467 = vmatprep.subr.bf16.mxu0 0
      %2468 = vmatpush1.bf16.msra.mxu0 %v2451
      %2469 = vmatprep.subr.bf16.mxu0 0
      %2470 = vmatpush1.bf16.msra.mxu0 %v2452
      %2471 = vmatprep.subr.bf16.mxu0 0
      %2472 = vmatpush1.bf16.msra.mxu0 %v2453
      %2473 = vmatprep.subr.bf16.mxu0 0
      %2474 = vmatpush1.bf16.msra.mxu0 %v2454
      %2475 = vmatprep.subr.bf16.mxu0 0
      %2476 = vmatpush1.bf16.msra.mxu0 %v2455
      %2477 = vmatprep.subr.bf16.mxu0 0
      %2478 = vmatpush1.bf16.msra.mxu0 %v2456
      %2479 = vmatprep.subr.bf16.mxu0 0
      %2480 = vmatpush1.bf16.msra.mxu0 %v2457
      %2481 = vmatprep.subr.bf16.mxu0 0
      %2482 = vmatpush1.bf16.msra.mxu0 %v2458
      %2483 = vmatprep.subr.bf16.mxu0 0
      %2484 = vmatpush1.bf16.msra.mxu0 0
      %2485 = vmatprep.subr.bf16.mxu0 0
      %2486 = vmatpush1.bf16.msra.mxu0 0
      %2487 = vmatprep.subr.bf16.mxu0 0
      %2488 = vmatpush1.bf16.msra.mxu0 0
      %2489 = vmatprep.subr.bf16.mxu0 0
      %2490 = vmatpush1.bf16.msra.mxu0 0
      %2491 = vmatprep.subr.bf16.mxu0 0
      %2492 = vmatpush1.bf16.msra.mxu0 0
      %2493 = vmatprep.subr.bf16.mxu0 0
      %2494 = vmatpush1.bf16.msra.mxu0 0
      %2495 = vmatprep.subr.bf16.mxu0 0
      %2496 = vmatpush1.bf16.msra.mxu0 0
      %2497 = vmatprep.subr.bf16.mxu0 0
      %2498 = vmatpush1.bf16.msra.mxu0 0
      %2499 = vmatprep.mubr.bf16.mxu0 0
      %2500 = vmatmul.mubr.bf16.gmra.mrb[0].mxu0 %v502
      %v2501 = vpop.f32.mrb[0].mxu0
      %v2502 = vadd.f32 0.0, %v2501
      %v2503 = vpop.f32.mrb[0].mxu0
      %v2504 = vpop.f32.mrb[0].mxu0
      %v2505 = vadd.f32 0.0, %v2504
      %v2506 = vpop.f32.mrb[0].mxu0
      %2507 = vmatprep.mubr.bf16.mxu0 0
      %2508 = vmatmul.mubr.bf16.gmra.mrb[0].mxu0 %v503
      %v2509 = vpop.f32.mrb[0].mxu0
      %v2510 = vadd.f32 0.0, %v2509
      %v2511 = vpop.f32.mrb[0].mxu0
      %v2512 = vpop.f32.mrb[0].mxu0
      %v2513 = vadd.f32 0.0, %v2512
      %v2514 = vpop.f32.mrb[0].mxu0
      %2515 = vmatprep.mubr.bf16.mxu0 0
      %2516 = vmatmul.mubr.bf16.gmra.mrb[0].mxu0 %v504
      %v2517 = vpop.f32.mrb[0].mxu0
      %v2518 = vadd.f32 0.0, %v2517
      %v2519 = vpop.f32.mrb[0].mxu0
      %v2520 = vpop.f32.mrb[0].mxu0
      %v2521 = vadd.f32 0.0, %v2520
      %v2522 = vpop.f32.mrb[0].mxu0
      %2523 = vmatprep.mubr.bf16.mxu0 0
      %2524 = vmatmul.mubr.bf16.gmra.mrb[0].mxu0 %v505
      %v2525 = vpop.f32.mrb[0].mxu0
      %v2526 = vadd.f32 0.0, %v2525
      %v2527 = vpop.f32.mrb[0].mxu0
      %v2528 = vpop.f32.mrb[0].mxu0
      %v2529 = vadd.f32 0.0, %v2528
      %v2530 = vpop.f32.mrb[0].mxu0
      %2531 = vmatprep.mubr.bf16.mxu0 0
      %2532 = vmatmul.mubr.bf16.gmra.mrb[0].mxu0 %v506
      %v2533 = vpop.f32.mrb[0].mxu0
      %v2534 = vadd.f32 0.0, %v2533
      %v2535 = vpop.f32.mrb[0].mxu0
      %v2536 = vpop.f32.mrb[0].mxu0
      %v2537 = vadd.f32 0.0, %v2536
      %v2538 = vpop.f32.mrb[0].mxu0
      %2539 = vmatprep.mubr.bf16.mxu0 0
      %2540 = vmatmul.mubr.bf16.gmra.mrb[0].mxu0 %v507
      %v2541 = vpop.f32.mrb[0].mxu0
      %v2542 = vadd.f32 0.0, %v2541
      %v2543 = vpop.f32.mrb[0].mxu0
      %v2544 = vpop.f32.mrb[0].mxu0
      %v2545 = vadd.f32 0.0, %v2544
      %v2546 = vpop.f32.mrb[0].mxu0
      %2547 = vmatprep.mubr.bf16.mxu0 0
      %2548 = vmatmul.mubr.bf16.gmra.mrb[0].mxu0 %v508
      %v2549 = vpop.f32.mrb[0].mxu0
      %v2550 = vadd.f32 0.0, %v2549
      %v2551 = vpop.f32.mrb[0].mxu0
      %v2552 = vpop.f32.mrb[0].mxu0
      %v2553 = vadd.f32 0.0, %v2552
      %v2554 = vpop.f32.mrb[0].mxu0
      %2555 = vmatprep.mubr.bf16.mxu0 0
      %2556 = vmatmul.mubr.bf16.gmra.mrb[0].mxu0 %v509
      %v2557 = vpop.f32.mrb[0].mxu0
      %v2558 = vadd.f32 0.0, %v2557
      %v2559 = vpop.f32.mrb[0].mxu0
      %v2560 = vpop.f32.mrb[0].mxu0
      %v2561 = vadd.f32 0.0, %v2560
      %v2562 = vpop.f32.mrb[0].mxu0
      %2563 = vmatprep.mubr.bf16.mxu0 0
      %2564 = vmatmul.mubr.bf16.gmra.mrb[0].mxu0 %v510
      %v2565 = vpop.f32.mrb[0].mxu0
      %v2566 = vadd.f32 0.0, %v2565
      %v2567 = vpop.f32.mrb[0].mxu0
      %v2568 = vpop.f32.mrb[0].mxu0
      %v2569 = vadd.f32 0.0, %v2568
      %v2570 = vpop.f32.mrb[0].mxu0
      %2571 = vmatprep.mubr.bf16.mxu0 0
      %2572 = vmatmul.mubr.bf16.gmra.mrb[0].mxu0 %v511
      %v2573 = vpop.f32.mrb[0].mxu0
      %v2574 = vadd.f32 0.0, %v2573
      %v2575 = vpop.f32.mrb[0].mxu0
      %v2576 = vpop.f32.mrb[0].mxu0
      %v2577 = vadd.f32 0.0, %v2576
      %v2578 = vpop.f32.mrb[0].mxu0
      %2579 = vmatprep.mubr.bf16.mxu0 0
      %2580 = vmatmul.mubr.bf16.gmra.mrb[0].mxu0 %v512
      %v2581 = vpop.f32.mrb[0].mxu0
      %v2582 = vadd.f32 0.0, %v2581
      %v2583 = vpop.f32.mrb[0].mxu0
      %v2584 = vpop.f32.mrb[0].mxu0
      %v2585 = vadd.f32 0.0, %v2584
      %v2586 = vpop.f32.mrb[0].mxu0
      %2587 = vmatprep.mubr.bf16.mxu0 0
      %2588 = vmatmul.mubr.bf16.gmra.mrb[0].mxu0 %v513
      %v2589 = vpop.f32.mrb[0].mxu0
      %v2590 = vadd.f32 0.0, %v2589
      %v2591 = vpop.f32.mrb[0].mxu0
      %v2592 = vpop.f32.mrb[0].mxu0
      %v2593 = vadd.f32 0.0, %v2592
      %v2594 = vpop.f32.mrb[0].mxu0
      %2595 = vmatprep.mubr.bf16.mxu0 0
      %2596 = vmatmul.mubr.bf16.gmra.mrb[0].mxu0 %v514
      %v2597 = vpop.f32.mrb[0].mxu0
      %v2598 = vadd.f32 0.0, %v2597
      %v2599 = vpop.f32.mrb[0].mxu0
      %v2600 = vpop.f32.mrb[0].mxu0
      %v2601 = vadd.f32 0.0, %v2600
      %v2602 = vpop.f32.mrb[0].mxu0
      %2603 = vmatprep.mubr.bf16.mxu0 0
      %2604 = vmatmul.mubr.bf16.gmra.mrb[0].mxu0 %v515
      %v2605 = vpop.f32.mrb[0].mxu0
      %v2606 = vadd.f32 0.0, %v2605
      %v2607 = vpop.f32.mrb[0].mxu0
      %v2608 = vpop.f32.mrb[0].mxu0
      %v2609 = vadd.f32 0.0, %v2608
      %v2610 = vpop.f32.mrb[0].mxu0
      %2611 = vmatprep.mubr.bf16.mxu0 0
      %2612 = vmatmul.mubr.bf16.gmra.mrb[0].mxu0 %v1607
      %v2613 = vpop.f32.mrb[0].mxu0
      %v2614 = vadd.f32 0.0, %v2613
      %v2615 = vpop.f32.mrb[0].mxu0
      %v2616 = vpop.f32.mrb[0].mxu0
      %v2617 = vadd.f32 0.0, %v2616
      %v2618 = vpop.f32.mrb[0].mxu0
      %2619 = vmatprep.mubr.bf16.mxu0 0
      %2620 = vmatmul.mubr.bf16.gmra.mrb[0].mxu0 %v2401
      %v2621 = vpop.f32.mrb[0].mxu0
      %v2622 = vadd.f32 0.0, %v2621
      %v2623 = vpop.f32.mrb[0].mxu0
      %v2624 = vpop.f32.mrb[0].mxu0
      %v2625 = vadd.f32 0.0, %v2624
      %v2626 = vpop.f32.mrb[0].mxu0
      %2627 = vdwg.mxu0
      %v2628 = vadd.f32 %v2359, %v2502
      %v2629 = vadd.f32 %v2360, %v2505
      %v2630 = vadd.f32 %v2361, %v2510
      %v2631 = vadd.f32 %v2362, %v2513
      %v2632 = vadd.f32 %v2363, %v2518
      %v2633 = vadd.f32 %v2364, %v2521
      %v2634 = vadd.f32 %v2365, %v2526
      %v2635 = vadd.f32 %v2366, %v2529
      %v2636 = vadd.f32 %v2367, %v2534
      %v2637 = vadd.f32 %v2368, %v2537
      %v2638 = vadd.f32 %v2369, %v2542
      %v2639 = vadd.f32 %v2370, %v2545
      %v2640 = vadd.f32 %v2371, %v2550
      %v2641 = vadd.f32 %v2372, %v2553
      %v2642 = vadd.f32 %v2373, %v2558
      %v2643 = vadd.f32 %v2374, %v2561
      %v2644 = vadd.f32 %v2375, %v2566
      %v2645 = vadd.f32 %v2376, %v2569
      %v2646 = vadd.f32 %v2377, %v2574
      %v2647 = vadd.f32 %v2378, %v2577
      %v2648 = vadd.f32 %v2379, %v2582
      %v2649 = vadd.f32 %v2380, %v2585
      %v2650 = vadd.f32 %v2381, %v2590
      %v2651 = vadd.f32 %v2382, %v2593
      %v2652 = vadd.f32 %v2383, %v2598
      %v2653 = vadd.f32 %v2384, %v2601
      %v2654 = vadd.f32 %v2385, %v2606
      %v2655 = vadd.f32 %v2386, %v2609
      %v2656 = vadd.f32 %v2387, %v2614
      %v2657 = vadd.f32 %v2388, %v2617
      %v2658 = vadd.f32 %v2389, %v2622
      %v2659 = vadd.f32 %v2390, %v2625
      %v2660 = vrot.slane %v304, 2
      %v2661 = vrot.slane %v305, 2
      %v2662 = vsel %vm951, %v2660, %v2661
      %v2663 = vrot.slane %v306, 2
      %v2664 = vsel %vm951, %v2661, %v2663
      %v2667 = vpack.c.bf16 %v2664, %v2662
      %s2668 = scalar_lea.vmem %s1, 512
      %v2669 = vld [vmem:[%s2668] sm:$0xf]
      %v2670 = vld [vmem:[%s2668 + $0x4] sm:$0xf]
      %v2671 = vld [vmem:[%s2668 + $0x8] sm:$0xf]
      %v2672 = vld [vmem:[%s2668 + $0xc] sm:$0xf]
      %v2673 = vld [vmem:[%s2668 + $0x10] sm:$0xf]
      %v2674 = vld [vmem:[%s2668 + $0x14] sm:$0xf]
      %v2675 = vld [vmem:[%s2668 + $0x18] sm:$0xf]
      %v2676 = vld [vmem:[%s2668 + $0x1c] sm:$0xf]
      %v2677 = vld [vmem:[%s2668 + $0x20] sm:$0xf]
      %v2678 = vld [vmem:[%s2668 + $0x24] sm:$0xf]
      %v2679 = vld [vmem:[%s2668 + $0x28] sm:$0xf]
      %v2680 = vld [vmem:[%s2668 + $0x2c] sm:$0xf]
      %v2681 = vld [vmem:[%s2668 + $0x30] sm:$0xf]
      %v2682 = vld [vmem:[%s2668 + $0x34] sm:$0xf]
      %v2683 = vld [vmem:[%s2668 + $0x38] sm:$0xf]
      %v2684 = vld [vmem:[%s2668 + $0x3c] sm:$0xf]
      %v2701 = vunpack.c.l.b16 %v2669
      %v2702 = vunpack.c.l.b16 %v2670
      %v2703 = vunpack.c.l.b16 %v2671
      %v2704 = vunpack.c.l.b16 %v2672
      %v2705 = vunpack.c.l.b16 %v2673
      %v2706 = vunpack.c.l.b16 %v2674
      %v2707 = vunpack.c.l.b16 %v2675
      %v2708 = vunpack.c.l.b16 %v2676
      %v2709 = vunpack.c.l.b16 %v2677
      %v2710 = vunpack.c.l.b16 %v2678
      %v2711 = vunpack.c.l.b16 %v2679
      %v2712 = vunpack.c.l.b16 %v2680
      %v2713 = vunpack.c.l.b16 %v2681
      %v2714 = vunpack.c.l.b16 %v2682
      %v2715 = vunpack.c.l.b16 %v2683
      %v2716 = vunpack.c.l.b16 %v2684
      %v2717 = vpack.c.b16 %v2702, %v2701
      %v2718 = vpack.c.b16 %v2704, %v2703
      %v2719 = vpack.c.b16 %v2706, %v2705
      %v2720 = vpack.c.b16 %v2708, %v2707
      %v2721 = vpack.c.b16 %v2710, %v2709
      %v2722 = vpack.c.b16 %v2712, %v2711
      %v2723 = vpack.c.b16 %v2714, %v2713
      %v2724 = vpack.c.b16 %v2716, %v2715
      %2733 = vmatprep.subr.bf16.mxu0 0
      %2734 = vmatpush1.bf16.msra.mxu0 %v2717
      %2735 = vmatprep.subr.bf16.mxu0 0
      %2736 = vmatpush1.bf16.msra.mxu0 %v2718
      %2737 = vmatprep.subr.bf16.mxu0 0
      %2738 = vmatpush1.bf16.msra.mxu0 %v2719
      %2739 = vmatprep.subr.bf16.mxu0 0
      %2740 = vmatpush1.bf16.msra.mxu0 %v2720
      %2741 = vmatprep.subr.bf16.mxu0 0
      %2742 = vmatpush1.bf16.msra.mxu0 %v2721
      %2743 = vmatprep.subr.bf16.mxu0 0
      %2744 = vmatpush1.bf16.msra.mxu0 %v2722
      %2745 = vmatprep.subr.bf16.mxu0 0
      %2746 = vmatpush1.bf16.msra.mxu0 %v2723
      %2747 = vmatprep.subr.bf16.mxu0 0
      %2748 = vmatpush1.bf16.msra.mxu0 %v2724
      %2749 = vmatprep.subr.bf16.mxu0 0
      %2750 = vmatpush1.bf16.msra.mxu0 0
      %2751 = vmatprep.subr.bf16.mxu0 0
      %2752 = vmatpush1.bf16.msra.mxu0 0
      %2753 = vmatprep.subr.bf16.mxu0 0
      %2754 = vmatpush1.bf16.msra.mxu0 0
      %2755 = vmatprep.subr.bf16.mxu0 0
      %2756 = vmatpush1.bf16.msra.mxu0 0
      %2757 = vmatprep.subr.bf16.mxu0 0
      %2758 = vmatpush1.bf16.msra.mxu0 0
      %2759 = vmatprep.subr.bf16.mxu0 0
      %2760 = vmatpush1.bf16.msra.mxu0 0
      %2761 = vmatprep.subr.bf16.mxu0 0
      %2762 = vmatpush1.bf16.msra.mxu0 0
      %2763 = vmatprep.subr.bf16.mxu0 0
      %2764 = vmatpush1.bf16.msra.mxu0 0
      %2765 = vmatprep.mubr.bf16.mxu0 0
      %2766 = vmatmul.mubr.bf16.gmra.mrb[0].mxu0 %v1066
      %v2767 = vpop.f32.mrb[0].mxu0
      %v2768 = vadd.f32 0.0, %v2767
      %v2769 = vpop.f32.mrb[0].mxu0
      %v2770 = vpop.f32.mrb[0].mxu0
      %v2771 = vadd.f32 0.0, %v2770
      %v2772 = vpop.f32.mrb[0].mxu0
      %2773 = vmatprep.mubr.bf16.mxu0 0
      %2774 = vmatmul.mubr.bf16.gmra.mrb[0].mxu0 %v1067
      %v2775 = vpop.f32.mrb[0].mxu0
      %v2776 = vadd.f32 0.0, %v2775
      %v2777 = vpop.f32.mrb[0].mxu0
      %v2778 = vpop.f32.mrb[0].mxu0
      %v2779 = vadd.f32 0.0, %v2778
      %v2780 = vpop.f32.mrb[0].mxu0
      %2781 = vmatprep.mubr.bf16.mxu0 0
      %2782 = vmatmul.mubr.bf16.gmra.mrb[0].mxu0 %v1068
      %v2783 = vpop.f32.mrb[0].mxu0
      %v2784 = vadd.f32 0.0, %v2783
      %v2785 = vpop.f32.mrb[0].mxu0
      %v2786 = vpop.f32.mrb[0].mxu0
      %v2787 = vadd.f32 0.0, %v2786
      %v2788 = vpop.f32.mrb[0].mxu0
      %2789 = vmatprep.mubr.bf16.mxu0 0
      %2790 = vmatmul.mubr.bf16.gmra.mrb[0].mxu0 %v1069
      %v2791 = vpop.f32.mrb[0].mxu0
      %v2792 = vadd.f32 0.0, %v2791
      %v2793 = vpop.f32.mrb[0].mxu0
      %v2794 = vpop.f32.mrb[0].mxu0
      %v2795 = vadd.f32 0.0, %v2794
      %v2796 = vpop.f32.mrb[0].mxu0
      %2797 = vmatprep.mubr.bf16.mxu0 0
      %2798 = vmatmul.mubr.bf16.gmra.mrb[0].mxu0 %v1070
      %v2799 = vpop.f32.mrb[0].mxu0
      %v2800 = vadd.f32 0.0, %v2799
      %v2801 = vpop.f32.mrb[0].mxu0
      %v2802 = vpop.f32.mrb[0].mxu0
      %v2803 = vadd.f32 0.0, %v2802
      %v2804 = vpop.f32.mrb[0].mxu0
      %2805 = vmatprep.mubr.bf16.mxu0 0
      %2806 = vmatmul.mubr.bf16.gmra.mrb[0].mxu0 %v1071
      %v2807 = vpop.f32.mrb[0].mxu0
      %v2808 = vadd.f32 0.0, %v2807
      %v2809 = vpop.f32.mrb[0].mxu0
      %v2810 = vpop.f32.mrb[0].mxu0
      %v2811 = vadd.f32 0.0, %v2810
      %v2812 = vpop.f32.mrb[0].mxu0
      %2813 = vmatprep.mubr.bf16.mxu0 0
      %2814 = vmatmul.mubr.bf16.gmra.mrb[0].mxu0 %v1072
      %v2815 = vpop.f32.mrb[0].mxu0
      %v2816 = vadd.f32 0.0, %v2815
      %v2817 = vpop.f32.mrb[0].mxu0
      %v2818 = vpop.f32.mrb[0].mxu0
      %v2819 = vadd.f32 0.0, %v2818
      %v2820 = vpop.f32.mrb[0].mxu0
      %2821 = vmatprep.mubr.bf16.mxu0 0
      %2822 = vmatmul.mubr.bf16.gmra.mrb[0].mxu0 %v1073
      %v2823 = vpop.f32.mrb[0].mxu0
      %v2824 = vadd.f32 0.0, %v2823
      %v2825 = vpop.f32.mrb[0].mxu0
      %v2826 = vpop.f32.mrb[0].mxu0
      %v2827 = vadd.f32 0.0, %v2826
      %v2828 = vpop.f32.mrb[0].mxu0
      %2829 = vmatprep.mubr.bf16.mxu0 0
      %2830 = vmatmul.mubr.bf16.gmra.mrb[0].mxu0 %v1074
      %v2831 = vpop.f32.mrb[0].mxu0
      %v2832 = vadd.f32 0.0, %v2831
      %v2833 = vpop.f32.mrb[0].mxu0
      %v2834 = vpop.f32.mrb[0].mxu0
      %v2835 = vadd.f32 0.0, %v2834
      %v2836 = vpop.f32.mrb[0].mxu0
      %2837 = vmatprep.mubr.bf16.mxu0 0
      %2838 = vmatmul.mubr.bf16.gmra.mrb[0].mxu0 %v1075
      %v2839 = vpop.f32.mrb[0].mxu0
      %v2840 = vadd.f32 0.0, %v2839
      %v2841 = vpop.f32.mrb[0].mxu0
      %v2842 = vpop.f32.mrb[0].mxu0
      %v2843 = vadd.f32 0.0, %v2842
      %v2844 = vpop.f32.mrb[0].mxu0
      %2845 = vmatprep.mubr.bf16.mxu0 0
      %2846 = vmatmul.mubr.bf16.gmra.mrb[0].mxu0 %v1076
      %v2847 = vpop.f32.mrb[0].mxu0
      %v2848 = vadd.f32 0.0, %v2847
      %v2849 = vpop.f32.mrb[0].mxu0
      %v2850 = vpop.f32.mrb[0].mxu0
      %v2851 = vadd.f32 0.0, %v2850
      %v2852 = vpop.f32.mrb[0].mxu0
      %2853 = vmatprep.mubr.bf16.mxu0 0
      %2854 = vmatmul.mubr.bf16.gmra.mrb[0].mxu0 %v1077
      %v2855 = vpop.f32.mrb[0].mxu0
      %v2856 = vadd.f32 0.0, %v2855
      %v2857 = vpop.f32.mrb[0].mxu0
      %v2858 = vpop.f32.mrb[0].mxu0
      %v2859 = vadd.f32 0.0, %v2858
      %v2860 = vpop.f32.mrb[0].mxu0
      %2861 = vmatprep.mubr.bf16.mxu0 0
      %2862 = vmatmul.mubr.bf16.gmra.mrb[0].mxu0 %v1078
      %v2863 = vpop.f32.mrb[0].mxu0
      %v2864 = vadd.f32 0.0, %v2863
      %v2865 = vpop.f32.mrb[0].mxu0
      %v2866 = vpop.f32.mrb[0].mxu0
      %v2867 = vadd.f32 0.0, %v2866
      %v2868 = vpop.f32.mrb[0].mxu0
      %2869 = vmatprep.mubr.bf16.mxu0 0
      %2870 = vmatmul.mubr.bf16.gmra.mrb[0].mxu0 %v1079
      %v2871 = vpop.f32.mrb[0].mxu0
      %v2872 = vadd.f32 0.0, %v2871
      %v2873 = vpop.f32.mrb[0].mxu0
      %v2874 = vpop.f32.mrb[0].mxu0
      %v2875 = vadd.f32 0.0, %v2874
      %v2876 = vpop.f32.mrb[0].mxu0
      %2877 = vmatprep.mubr.bf16.mxu0 0
      %2878 = vmatmul.mubr.bf16.gmra.mrb[0].mxu0 %v1873
      %v2879 = vpop.f32.mrb[0].mxu0
      %v2880 = vadd.f32 0.0, %v2879
      %v2881 = vpop.f32.mrb[0].mxu0
      %v2882 = vpop.f32.mrb[0].mxu0
      %v2883 = vadd.f32 0.0, %v2882
      %v2884 = vpop.f32.mrb[0].mxu0
      %2885 = vmatprep.mubr.bf16.mxu0 0
      %2886 = vmatmul.mubr.bf16.gmra.mrb[0].mxu0 %v2667
      %v2887 = vpop.f32.mrb[0].mxu0
      %v2888 = vadd.f32 0.0, %v2887
      %v2889 = vpop.f32.mrb[0].mxu0
      %v2890 = vpop.f32.mrb[0].mxu0
      %v2891 = vadd.f32 0.0, %v2890
      %v2892 = vpop.f32.mrb[0].mxu0
      %2893 = vdwg.mxu0
      %v2894 = vadd.f32 %v2628, %v2768
      %v2895 = vadd.f32 %v2629, %v2771
      %v2896 = vadd.f32 %v2630, %v2776
      %v2897 = vadd.f32 %v2631, %v2779
      %v2898 = vadd.f32 %v2632, %v2784
      %v2899 = vadd.f32 %v2633, %v2787
      %v2900 = vadd.f32 %v2634, %v2792
      %v2901 = vadd.f32 %v2635, %v2795
      %v2902 = vadd.f32 %v2636, %v2800
      %v2903 = vadd.f32 %v2637, %v2803
      %v2904 = vadd.f32 %v2638, %v2808
      %v2905 = vadd.f32 %v2639, %v2811
      %v2906 = vadd.f32 %v2640, %v2816
      %v2907 = vadd.f32 %v2641, %v2819
      %v2908 = vadd.f32 %v2642, %v2824
      %v2909 = vadd.f32 %v2643, %v2827
      %v2910 = vadd.f32 %v2644, %v2832
      %v2911 = vadd.f32 %v2645, %v2835
      %v2912 = vadd.f32 %v2646, %v2840
      %v2913 = vadd.f32 %v2647, %v2843
      %v2914 = vadd.f32 %v2648, %v2848
      %v2915 = vadd.f32 %v2649, %v2851
      %v2916 = vadd.f32 %v2650, %v2856
      %v2917 = vadd.f32 %v2651, %v2859
      %v2918 = vadd.f32 %v2652, %v2864
      %v2919 = vadd.f32 %v2653, %v2867
      %v2920 = vadd.f32 %v2654, %v2872
      %v2921 = vadd.f32 %v2655, %v2875
      %v2922 = vadd.f32 %v2656, %v2880
      %v2923 = vadd.f32 %v2657, %v2883
      %v2924 = vadd.f32 %v2658, %v2888
      %v2925 = vadd.f32 %v2659, %v2891
      %v2926 = vld [vmem:[%s2] sm:$0x1]
      %v2928 = vlaneseq
      %v2929 = vshrl.u32 %v2928, 7
      %v2930 = vsub.s32 0, %v2929
      %v2931 = vrot.slane %v2926, %v2930
      %v2933 = vmul.f32 %v2894, %v2931
      %v2934 = vmul.f32 %v2895, %v2931
      %v2935 = vmul.f32 %v2896, %v2931
      %v2936 = vmul.f32 %v2897, %v2931
      %v2937 = vmul.f32 %v2898, %v2931
      %v2938 = vmul.f32 %v2899, %v2931
      %v2939 = vmul.f32 %v2900, %v2931
      %v2940 = vmul.f32 %v2901, %v2931
      %v2941 = vmul.f32 %v2902, %v2931
      %v2942 = vmul.f32 %v2903, %v2931
      %v2943 = vmul.f32 %v2904, %v2931
      %v2944 = vmul.f32 %v2905, %v2931
      %v2945 = vmul.f32 %v2906, %v2931
      %v2946 = vmul.f32 %v2907, %v2931
      %v2947 = vmul.f32 %v2908, %v2931
      %v2948 = vmul.f32 %v2909, %v2931
      %v2949 = vmul.f32 %v2910, %v2931
      %v2950 = vmul.f32 %v2911, %v2931
      %v2951 = vmul.f32 %v2912, %v2931
      %v2952 = vmul.f32 %v2913, %v2931
      %v2953 = vmul.f32 %v2914, %v2931
      %v2954 = vmul.f32 %v2915, %v2931
      %v2955 = vmul.f32 %v2916, %v2931
      %v2956 = vmul.f32 %v2917, %v2931
      %v2957 = vmul.f32 %v2918, %v2931
      %v2958 = vmul.f32 %v2919, %v2931
      %v2959 = vmul.f32 %v2920, %v2931
      %v2960 = vmul.f32 %v2921, %v2931
      %v2961 = vmul.f32 %v2922, %v2931
      %v2962 = vmul.f32 %v2923, %v2931
      %v2963 = vmul.f32 %v2924, %v2931
      %v2964 = vmul.f32 %v2925, %v2931
      %v2965 = vld [vmem:[%s3] sm:$0x1]
      %v2967 = vlaneseq
      %v2968 = vshrl.u32 %v2967, 7
      %v2969 = vsub.s32 0, %v2968
      %v2970 = vrot.slane %v2965, %v2969
      %v2972 = vadd.f32 %v2933, %v2970
      %v2973 = vadd.f32 %v2934, %v2970
      %v2974 = vadd.f32 %v2935, %v2970
      %v2975 = vadd.f32 %v2936, %v2970
      %v2976 = vadd.f32 %v2937, %v2970
      %v2977 = vadd.f32 %v2938, %v2970
      %v2978 = vadd.f32 %v2939, %v2970
      %v2979 = vadd.f32 %v2940, %v2970
      %v2980 = vadd.f32 %v2941, %v2970
      %v2981 = vadd.f32 %v2942, %v2970
      %v2982 = vadd.f32 %v2943, %v2970
      %v2983 = vadd.f32 %v2944, %v2970
      %v2984 = vadd.f32 %v2945, %v2970
      %v2985 = vadd.f32 %v2946, %v2970
      %v2986 = vadd.f32 %v2947, %v2970
      %v2987 = vadd.f32 %v2948, %v2970
      %v2988 = vadd.f32 %v2949, %v2970
      %v2989 = vadd.f32 %v2950, %v2970
      %v2990 = vadd.f32 %v2951, %v2970
      %v2991 = vadd.f32 %v2952, %v2970
      %v2992 = vadd.f32 %v2953, %v2970
      %v2993 = vadd.f32 %v2954, %v2970
      %v2994 = vadd.f32 %v2955, %v2970
      %v2995 = vadd.f32 %v2956, %v2970
      %v2996 = vadd.f32 %v2957, %v2970
      %v2997 = vadd.f32 %v2958, %v2970
      %v2998 = vadd.f32 %v2959, %v2970
      %v2999 = vadd.f32 %v2960, %v2970
      %v3000 = vadd.f32 %v2961, %v2970
      %v3001 = vadd.f32 %v2962, %v2970
      %v3002 = vadd.f32 %v2963, %v2970
      %v3003 = vadd.f32 %v2964, %v2970
      %v3004 = vmax.f32 %v2972, 0.0
      %v3005 = vmax.f32 %v2973, 0.0
      %v3006 = vmax.f32 %v2974, 0.0
      %v3007 = vmax.f32 %v2975, 0.0
      %v3008 = vmax.f32 %v2976, 0.0
      %v3009 = vmax.f32 %v2977, 0.0
      %v3010 = vmax.f32 %v2978, 0.0
      %v3011 = vmax.f32 %v2979, 0.0
      %v3012 = vmax.f32 %v2980, 0.0
      %v3013 = vmax.f32 %v2981, 0.0
      %v3014 = vmax.f32 %v2982, 0.0
      %v3015 = vmax.f32 %v2983, 0.0
      %v3016 = vmax.f32 %v2984, 0.0
      %v3017 = vmax.f32 %v2985, 0.0
      %v3018 = vmax.f32 %v2986, 0.0
      %v3019 = vmax.f32 %v2987, 0.0
      %v3020 = vmax.f32 %v2988, 0.0
      %v3021 = vmax.f32 %v2989, 0.0
      %v3022 = vmax.f32 %v2990, 0.0
      %v3023 = vmax.f32 %v2991, 0.0
      %v3024 = vmax.f32 %v2992, 0.0
      %v3025 = vmax.f32 %v2993, 0.0
      %v3026 = vmax.f32 %v2994, 0.0
      %v3027 = vmax.f32 %v2995, 0.0
      %v3028 = vmax.f32 %v2996, 0.0
      %v3029 = vmax.f32 %v2997, 0.0
      %v3030 = vmax.f32 %v2998, 0.0
      %v3031 = vmax.f32 %v2999, 0.0
      %v3032 = vmax.f32 %v3000, 0.0
      %v3033 = vmax.f32 %v3001, 0.0
      %v3034 = vmax.f32 %v3002, 0.0
      %v3035 = vmax.f32 %v3003, 0.0
      %v3036 = vpack.c.bf16 %v3005, %v3004
      %v3037 = vpack.c.bf16 %v3007, %v3006
      %v3038 = vpack.c.bf16 %v3009, %v3008
      %v3039 = vpack.c.bf16 %v3011, %v3010
      %v3040 = vpack.c.bf16 %v3013, %v3012
      %v3041 = vpack.c.bf16 %v3015, %v3014
      %v3042 = vpack.c.bf16 %v3017, %v3016
      %v3043 = vpack.c.bf16 %v3019, %v3018
      %v3044 = vpack.c.bf16 %v3021, %v3020
      %v3045 = vpack.c.bf16 %v3023, %v3022
      %v3046 = vpack.c.bf16 %v3025, %v3024
      %v3047 = vpack.c.bf16 %v3027, %v3026
      %v3048 = vpack.c.bf16 %v3029, %v3028
      %v3049 = vpack.c.bf16 %v3031, %v3030
      %v3050 = vpack.c.bf16 %v3033, %v3032
      %v3051 = vpack.c.bf16 %v3035, %v3034
      %v3068 = vunpack.c.l.b16 %v3036
      %v3069 = vunpack.c.h.b16 %v3036
      %v3070 = vunpack.c.l.b16 %v3037
      %v3071 = vunpack.c.h.b16 %v3037
      %v3072 = vunpack.c.l.b16 %v3038
      %v3073 = vunpack.c.h.b16 %v3038
      %v3074 = vunpack.c.l.b16 %v3039
      %v3075 = vunpack.c.h.b16 %v3039
      %v3076 = vunpack.c.l.b16 %v3040
      %v3077 = vunpack.c.h.b16 %v3040
      %v3078 = vunpack.c.l.b16 %v3041
      %v3079 = vunpack.c.h.b16 %v3041
      %v3080 = vunpack.c.l.b16 %v3042
      %v3081 = vunpack.c.h.b16 %v3042
      %v3082 = vunpack.c.l.b16 %v3043
      %v3083 = vunpack.c.h.b16 %v3043
      %v3084 = vunpack.c.l.b16 %v3044
      %v3085 = vunpack.c.h.b16 %v3044
      %v3086 = vunpack.c.l.b16 %v3045
      %v3087 = vunpack.c.h.b16 %v3045
      %v3088 = vunpack.c.l.b16 %v3046
      %v3089 = vunpack.c.h.b16 %v3046
      %v3090 = vunpack.c.l.b16 %v3047
      %v3091 = vunpack.c.h.b16 %v3047
      %v3092 = vunpack.c.l.b16 %v3048
      %v3093 = vunpack.c.h.b16 %v3048
      %v3094 = vunpack.c.l.b16 %v3049
      %v3095 = vunpack.c.h.b16 %v3049
      %v3096 = vunpack.c.l.b16 %v3050
      %v3097 = vunpack.c.h.b16 %v3050
      %v3098 = vunpack.c.l.b16 %v3051
      %v3099 = vunpack.c.h.b16 %v3051
      %v3100 = vpack.c.b16 %v3068, %v3068
      %v3101 = vpack.c.b16 %v3069, %v3069
      %v3102 = vpack.c.b16 %v3070, %v3070
      %v3103 = vpack.c.b16 %v3071, %v3071
      %v3104 = vpack.c.b16 %v3072, %v3072
      %v3105 = vpack.c.b16 %v3073, %v3073
      %v3106 = vpack.c.b16 %v3074, %v3074
      %v3107 = vpack.c.b16 %v3075, %v3075
      %v3108 = vpack.c.b16 %v3076, %v3076
      %v3109 = vpack.c.b16 %v3077, %v3077
      %v3110 = vpack.c.b16 %v3078, %v3078
      %v3111 = vpack.c.b16 %v3079, %v3079
      %v3112 = vpack.c.b16 %v3080, %v3080
      %v3113 = vpack.c.b16 %v3081, %v3081
      %v3114 = vpack.c.b16 %v3082, %v3082
      %v3115 = vpack.c.b16 %v3083, %v3083
      %v3116 = vpack.c.b16 %v3084, %v3084
      %v3117 = vpack.c.b16 %v3085, %v3085
      %v3118 = vpack.c.b16 %v3086, %v3086
      %v3119 = vpack.c.b16 %v3087, %v3087
      %v3120 = vpack.c.b16 %v3088, %v3088
      %v3121 = vpack.c.b16 %v3089, %v3089
      %v3122 = vpack.c.b16 %v3090, %v3090
      %v3123 = vpack.c.b16 %v3091, %v3091
      %v3124 = vpack.c.b16 %v3092, %v3092
      %v3125 = vpack.c.b16 %v3093, %v3093
      %v3126 = vpack.c.b16 %v3094, %v3094
      %v3127 = vpack.c.b16 %v3095, %v3095
      %v3128 = vpack.c.b16 %v3096, %v3096
      %v3129 = vpack.c.b16 %v3097, %v3097
      %v3130 = vpack.c.b16 %v3098, %v3098
      %v3131 = vpack.c.b16 %v3099, %v3099
      %3164 = vst [vmem:[%s197] sm:$0xf] %v3100
      %3165 = vst [vmem:[%s197 + $0x4] sm:$0xf] %v3101
      %3166 = vst [vmem:[%s197 + $0x8] sm:$0xf] %v3102
      %3167 = vst [vmem:[%s197 + $0xc] sm:$0xf] %v3103
      %3168 = vst [vmem:[%s197 + $0x10] sm:$0xf] %v3104
      %3169 = vst [vmem:[%s197 + $0x14] sm:$0xf] %v3105
      %3170 = vst [vmem:[%s197 + $0x18] sm:$0xf] %v3106
      %3171 = vst [vmem:[%s197 + $0x1c] sm:$0xf] %v3107
      %3172 = vst [vmem:[%s197 + $0x20] sm:$0xf] %v3108
      %3173 = vst [vmem:[%s197 + $0x24] sm:$0xf] %v3109
      %3174 = vst [vmem:[%s197 + $0x28] sm:$0xf] %v3110
      %3175 = vst [vmem:[%s197 + $0x2c] sm:$0xf] %v3111
      %3176 = vst [vmem:[%s197 + $0x30] sm:$0xf] %v3112
      %3177 = vst [vmem:[%s197 + $0x34] sm:$0xf] %v3113
      %3178 = vst [vmem:[%s197 + $0x38] sm:$0xf] %v3114
      %3179 = vst [vmem:[%s197 + $0x3c] sm:$0xf] %v3115
      %3180 = vst [vmem:[%s197 + $0x40] sm:$0xf] %v3116
      %3181 = vst [vmem:[%s197 + $0x44] sm:$0xf] %v3117
      %3182 = vst [vmem:[%s197 + $0x48] sm:$0xf] %v3118
      %3183 = vst [vmem:[%s197 + $0x4c] sm:$0xf] %v3119
      %3184 = vst [vmem:[%s197 + $0x50] sm:$0xf] %v3120
      %3185 = vst [vmem:[%s197 + $0x54] sm:$0xf] %v3121
      %3186 = vst [vmem:[%s197 + $0x58] sm:$0xf] %v3122
      %3187 = vst [vmem:[%s197 + $0x5c] sm:$0xf] %v3123
      %3188 = vst [vmem:[%s197 + $0x60] sm:$0xf] %v3124
      %3189 = vst [vmem:[%s197 + $0x64] sm:$0xf] %v3125
      %3190 = vst [vmem:[%s197 + $0x68] sm:$0xf] %v3126
      %3191 = vst [vmem:[%s197 + $0x6c] sm:$0xf] %v3127
      %3192 = vst [vmem:[%s197 + $0x70] sm:$0xf] %v3128
      %3193 = vst [vmem:[%s197 + $0x74] sm:$0xf] %v3129
      %3194 = vst [vmem:[%s197 + $0x78] sm:$0xf] %v3130
      %3195 = vst [vmem:[%s197 + $0x7c] sm:$0xf] %v3131
      %p3196 = scmp.lt.s32.totalorder %s15, 1
      %s3197 = scalar_select %p3196, %s15, 1
      %s3198 = smul.addr %s3197, 32
      %s3199 = smul.addr %s3198, 4
      %s3200 = scalar_lea.vmem %s4, %s3199
      // Predicated region
      $region37: #{_lambda_.6} parent=35 // pred_check
        %p3201 = pneg %p122
      $region38: #{_lambda_.6} parent=35 // pred_check_branch
        %3203 = sbr.rel (%p3201) target = $region40
      $region39: #{_lambda_.6} parent=35 // pred_region
        _
      $region40: #{_lambda_.6} parent=35 // pred_fallthru
        _
    $region36: #{_lambda_.6} parent=5 // pred_fallthru
      _
    %p3204 = scmp.le.s32.totalorder 2, %s10
    // Predicated region
    $region41: #{_lambda_.6} parent=5 // pred_check
      %p3205 = pneg %p3204
    $region42: #{_lambda_.6} parent=5 // pred_check_branch
      %3207 = sbr.rel (%p3205) target = $region44
    $region43: #{_lambda_.6} parent=5 // pred_region
      %s3208 = ssub.s32 %s10, 2
      // Predicated region
      $region45: #{_lambda_.6} parent=43 // pred_check
        %p3209 = pneg %p128
      $region46: #{_lambda_.6} parent=43 // pred_check_branch
        %3211 = sbr.rel (%p3209) target = $region48
      $region47: #{_lambda_.6} parent=43 // pred_region
        %p3212 = scmp.lt.s32.totalorder %s16, 1
        %s3213 = scalar_select %p3212, %s16, 1
        %s3214 = smul.addr %s3213, 32
        %s3215 = smul.addr %s3214, 4
        %s3216 = scalar_lea.vmem %s4, %s3215
      $region48: #{_lambda_.6} parent=43 // pred_fallthru
        _
    $region44: #{_lambda_.6} parent=5 // pred_fallthru
      _
  $region6: #{_lambda_.6} parent=0 // loop_footer
    %s14 = sadd.s32 1, %s10
  $region7: #{_lambda_.6} parent=0 // loop_footer_branch
    %9 = sbr.rel target = $region3
  $region8: #{_lambda_.6} parent=0 // loop_exit
    _

// kernel: _lambda_.11
$region0: #{_lambda_.11}
  #allocation0 [shape = 'u32[]', space=smem, size = 0x4, offset = 0x4, fixed_abs, tag = 'smem constant byte address 0x4 - core index']
  #allocation1 [shape = 'u32[144,128]{1,0:T(1,128)}', space=vmem, size = 0x12000, scoped, tag = 'internal scratch']
  %s0 = inlined_call_operand.vmem [shape: bf16[2,4,128], index: 0, kind: input, shape index: {}]
  %s1 = inlined_call_operand.vmem [shape: bf16[128,128], index: 1, kind: input, shape index: {}]
  %s2 = inlined_call_operand.vmem [shape: f32[1,128], index: 2, kind: input, shape index: {}]
  %s3 = inlined_call_operand.hbm [shape: f32[2,128], index: 3, kind: output, shape index: {}]
  %s4 = sld [smem:[#allocation0]]
  $region22: #{_lambda_.11} parent=0
    _
  %s6 = ssub.s32 1, %s4
  %s7 = scalar_select 0, %s6, %s4
  $region1: #{_lambda_.11} parent=0
    #allocation2 [shape = 'u8[1024]{0}', space=vmem, size = 0x400, scoped, tag = 'output window, operand 0, single buffered']
    #allocation3 [shape = 's32[1]{0}', space=sflag, size = 0x4, scoped, tag = 'scoped memory for _lambda_.11']
    %8 = vsyncpa [#allocation3], 0
    // Predicated region
    $region2: #{_lambda_.11} parent=1 // pred_check
      _
    $region3: #{_lambda_.11} parent=1 // pred_check_branch
      %10 = sbr.rel (0) target = $region5
    $region4: #{_lambda_.11} parent=1 // pred_region
      _
    $region5: #{_lambda_.11} parent=1 // pred_fallthru
      _
    // Predicated region
    $region6: #{_lambda_.11} parent=1 // pred_check
      _
    $region7: #{_lambda_.11} parent=1 // pred_check_branch
      %12 = sbr.rel (0) target = $region9
    $region8: #{_lambda_.11} parent=1 // pred_region
      _
    $region9: #{_lambda_.11} parent=1 // pred_fallthru
      _
    // Predicated region
    $region10: #{_lambda_.11} parent=1 // pred_check
      _
    $region11: #{_lambda_.11} parent=1 // pred_check_branch
      %14 = sbr.rel (0) target = $region13
    $region12: #{_lambda_.11} parent=1 // pred_region
      _
    $region13: #{_lambda_.11} parent=1 // pred_fallthru
      _
    %v16 = vld [vmem:[%s0] sm:$0x3]
    %v17 = vld [vmem:[%s0 + $0x2] sm:$0x3]
    %v18 = vunpack.c.l.bf16 %v16
    %v19 = vunpack.c.l.bf16 %v17
    %vm20 = vcmask 1043456
    %v21 = vsel %vm20, %v18, 0.0
    %v22 = vrot.slane %v21, 4
    %v23 = vadd.f32 %v21, %v22
    %v24 = vrot.slane %v23, 2
    %v25 = vadd.f32 %v23, %v24
    %v26 = vrot.slane %v25, 1
    %v27 = vadd.f32 %v25, %v26
    %v28 = vsel %vm20, %v19, 0.0
    %v29 = vrot.slane %v28, 4
    %v30 = vadd.f32 %v28, %v29
    %v31 = vrot.slane %v30, 2
    %v32 = vadd.f32 %v30, %v31
    %v33 = vrot.slane %v32, 1
    %v34 = vadd.f32 %v32, %v33
    %v35 = vrcp.pop 4.0
    %v36 = vmul.f32 %v27, %v35
    %v37 = vmul.f32 %v34, %v35
    %v38 = vpack.c.bf16 %v36, %v36
    %v39 = vpack.c.bf16 %v37, %v37
    %v40 = vld [vmem:[%s1] sm:$0xf]
    %v41 = vld [vmem:[%s1 + $0x4] sm:$0xf]
    %v42 = vld [vmem:[%s1 + $0x8] sm:$0xf]
    %v43 = vld [vmem:[%s1 + $0xc] sm:$0xf]
    %v44 = vld [vmem:[%s1 + $0x10] sm:$0xf]
    %v45 = vld [vmem:[%s1 + $0x14] sm:$0xf]
    %v46 = vld [vmem:[%s1 + $0x18] sm:$0xf]
    %v47 = vld [vmem:[%s1 + $0x1c] sm:$0xf]
    %v48 = vld [vmem:[%s1 + $0x20] sm:$0xf]
    %v49 = vld [vmem:[%s1 + $0x24] sm:$0xf]
    %v50 = vld [vmem:[%s1 + $0x28] sm:$0xf]
    %v51 = vld [vmem:[%s1 + $0x2c] sm:$0xf]
    %v52 = vld [vmem:[%s1 + $0x30] sm:$0xf]
    %v53 = vld [vmem:[%s1 + $0x34] sm:$0xf]
    %v54 = vld [vmem:[%s1 + $0x38] sm:$0xf]
    %v55 = vld [vmem:[%s1 + $0x3c] sm:$0xf]
    %v56 = vld [vmem:[%s2] sm:$0x1]
    %v58 = vlaneseq
    %v59 = vshrl.u32 %v58, 7
    %v60 = vsub.s32 0, %v59
    %v61 = vrot.slane %v56, %v60
    %v65 = vunpack.c.l.b16 %v38
    %v66 = vunpack.c.l.b16 %v39
    %vm67 = vcmask 1041409
    %v68 = vsel %vm67, %v66, %v65
    %v69 = vpack.c.b16 %v68, %v68
    %v87 = vunpack.c.l.b16 %v40
    %v88 = vunpack.c.l.b16 %v41
    %v89 = vunpack.c.l.b16 %v42
    %v90 = vunpack.c.l.b16 %v43
    %v91 = vunpack.c.l.b16 %v44
    %v92 = vunpack.c.l.b16 %v45
    %v93 = vunpack.c.l.b16 %v46
    %v94 = vunpack.c.l.b16 %v47
    %v95 = vunpack.c.l.b16 %v48
    %v96 = vunpack.c.l.b16 %v49
    %v97 = vunpack.c.l.b16 %v50
    %v98 = vunpack.c.l.b16 %v51
    %v99 = vunpack.c.l.b16 %v52
    %v100 = vunpack.c.l.b16 %v53
    %v101 = vunpack.c.l.b16 %v54
    %v102 = vunpack.c.l.b16 %v55
    %v103 = vpack.c.b16 %v88, %v87
    %v104 = vpack.c.b16 %v90, %v89
    %v105 = vpack.c.b16 %v92, %v91
    %v106 = vpack.c.b16 %v94, %v93
    %v107 = vpack.c.b16 %v96, %v95
    %v108 = vpack.c.b16 %v98, %v97
    %v109 = vpack.c.b16 %v100, %v99
    %v110 = vpack.c.b16 %v102, %v101
    %119 = vmatprep.subr.bf16.mxu0 0
    %120 = vmatpush1.bf16.msra.mxu0 %v103
    %121 = vmatprep.subr.bf16.mxu0 0
    %122 = vmatpush1.bf16.msra.mxu0 %v104
    %123 = vmatprep.subr.bf16.mxu0 0
    %124 = vmatpush1.bf16.msra.mxu0 %v105
    %125 = vmatprep.subr.bf16.mxu0 0
    %126 = vmatpush1.bf16.msra.mxu0 %v106
    %127 = vmatprep.subr.bf16.mxu0 0
    %128 = vmatpush1.bf16.msra.mxu0 %v107
    %129 = vmatprep.subr.bf16.mxu0 0
    %130 = vmatpush1.bf16.msra.mxu0 %v108
    %131 = vmatprep.subr.bf16.mxu0 0
    %132 = vmatpush1.bf16.msra.mxu0 %v109
    %133 = vmatprep.subr.bf16.mxu0 0
    %134 = vmatpush1.bf16.msra.mxu0 %v110
    %135 = vmatprep.subr.bf16.mxu0 0
    %136 = vmatpush1.bf16.msra.mxu0 0
    %137 = vmatprep.subr.bf16.mxu0 0
    %138 = vmatpush1.bf16.msra.mxu0 0
    %139 = vmatprep.subr.bf16.mxu0 0
    %140 = vmatpush1.bf16.msra.mxu0 0
    %141 = vmatprep.subr.bf16.mxu0 0
    %142 = vmatpush1.bf16.msra.mxu0 0
    %143 = vmatprep.subr.bf16.mxu0 0
    %144 = vmatpush1.bf16.msra.mxu0 0
    %145 = vmatprep.subr.bf16.mxu0 0
    %146 = vmatpush1.bf16.msra.mxu0 0
    %147 = vmatprep.subr.bf16.mxu0 0
    %148 = vmatpush1.bf16.msra.mxu0 0
    %149 = vmatprep.subr.bf16.mxu0 0
    %150 = vmatpush1.bf16.msra.mxu0 0
    %151 = vmatprep.mubr.bf16.mxu0 0
    %152 = vmatmul.mubr.bf16.gmra.mrb[0].mxu0 %v69
    %v153 = vpop.f32.mrb[0].mxu0
    %v154 = vadd.f32 %v61, %v153
    %v155 = vpop.f32.mrb[0].mxu0
    %v156 = vpop.f32.mrb[0].mxu0
    %v157 = vpop.f32.mrb[0].mxu0
    %158 = vdwg.mxu0
    %159 = vst [vmem:[#allocation2] sm:$0x3] %v154
    // Predicated region
    $region14: #{_lambda_.11} parent=1 // pred_check
      _
    $region15: #{_lambda_.11} parent=1 // pred_check_branch
      %161 = sbr.rel (0) target = $region17
    $region16: #{_lambda_.11} parent=1 // pred_region
      %s163 = ssub.s32 32, 32
      %164 = vsyncadd [#allocation3], %s163
      %s166 = sshll.u32 [#allocation2], 4
      %s167 = int_to_ptr.vmem [resolvable:$true] %s166
      %169 = dma.vmem_to_hbm [thread:$0]  %s167, 32, %s3, [#allocation3]
    $region17: #{_lambda_.11} parent=1 // pred_fallthru
      _
    // Predicated region
    $region18: #{_lambda_.11} parent=1 // pred_check
      _
    $region19: #{_lambda_.11} parent=1 // pred_check_branch
      %171 = sbr.rel (0) target = $region21
    $region20: #{_lambda_.11} parent=1 // pred_region
      %172 = dma.done [#allocation3], 32
    $region21: #{_lambda_.11} parent=1 // pred_fallthru
      _
    %173 = vsyncpa [#allocation3], 1

// kernel: _lambda_.10
$region0: #{_lambda_.10}
  #allocation0 [shape = 'u32[]', space=smem, size = 0x4, offset = 0x4, fixed_abs, tag = 'smem constant byte address 0x4 - core index']
  #allocation1 [shape = 'u32[144,128]{1,0:T(1,128)}', space=vmem, size = 0x12000, scoped, tag = 'internal scratch']
  %s0 = inlined_call_operand.vmem [shape: bf16[2,6,10,128], index: 0, kind: input, shape index: {}]
  %s1 = inlined_call_operand.vmem [shape: f32[9,128], index: 1, kind: input, shape index: {}]
  %s2 = inlined_call_operand.vmem [shape: f32[1,128], index: 2, kind: input, shape index: {}]
  %s3 = inlined_call_operand.vmem [shape: f32[1,128], index: 3, kind: input, shape index: {}, may-alias: {3,7}]
  %s4 = inlined_call_operand.vmem [shape: f32[4,32], index: 4, kind: input, shape index: {}]
  %s5 = inlined_call_operand.vmem [shape: bf16[128,128], index: 5, kind: input, shape index: {}]
  %s6 = inlined_call_operand.vmem [shape: f32[1,128], index: 6, kind: input, shape index: {}]
  %s7 = inlined_call_operand.vmem [shape: f32[1,128], index: 7, kind: input, shape index: {}, may-alias: {3,7}]
  %s8 = inlined_call_operand.vmem [shape: bf16[2,4,128], index: 8, kind: output, shape index: {}]
  %s9 = sld [smem:[#allocation0]]
  $region65: #{_lambda_.10} parent=0
    _
  %s11 = ssub.s32 1, %s9
  %s12 = scalar_select 0, %s11, %s9
  loop: start=0, step=1, limit=4
  $region2: #{_lambda_.10} parent=0 // loop_pre_header
    _
  $region3: #{_lambda_.10} parent=0 // loop_header
    %s14 = sphi 0, %s18
    %p15 = scmp.ge.s32.totalorder %s14, 4
    %s24 = sphi 0, %s26
    %s27 = sphi 0, %s24
    %s28 = sphi 0, %s27
    %s44 = sphi 0, %s28
    %s48 = sphi 0, %s48
    %s50 = sphi 0, %s48
    %s51 = sphi 0, %s50
    %s65 = sphi 0, %s51
    %s69 = sphi 0, %s69
    %s71 = sphi 0, %s69
    %s72 = sphi 0, %s71
    %s86 = sphi 0, %s72
    %s90 = sphi 0, %s90
    %s92 = sphi 0, %s90
    %s93 = sphi 0, %s92
    %s107 = sphi 0, %s93
    %s111 = sphi 0, %s111
    %s113 = sphi 0, %s111
    %s114 = sphi 0, %s113
    %s128 = sphi 0, %s114
    %s132 = sphi 0, %s132
    %s134 = sphi 0, %s132
    %s135 = sphi 0, %s134
    %s149 = sphi 0, %s135
    %s153 = sphi 0, %s153
    %s155 = sphi 0, %s153
    %s156 = sphi 0, %s155
    %s170 = sphi 0, %s156
    %s174 = sphi 0, %s174
    %s176 = sphi 0, %s174
    %s177 = sphi 0, %s176
    %s191 = sphi 0, %s177
    %s197 = sphi 0, %s199
    %s200 = sphi 0, %s197
    %s201 = sphi 0, %s200
    %s217 = sphi 0, %s201
  $region4: #{_lambda_.10} parent=0 // loop_header_branch
    %17 = sbr.rel (%p15) target = $region8
  $region5: #{_lambda_.10} parent=0 // loop_body
    %s19 = ssub.s32 %s14, 1
    %s20 = ssub.s32 %s14, 2
    %s21 = sadd.s32 %s14, 1
    %s22 = ssub.s32 %s14, %s21
    %p23 = scmp.eq.s32.totalorder %s22, 0
    %s25 = sadd.s32 %s24, 1
    %s26 = scalar_select %p23, %s24, %s25
    %p29 = pneg %p23
    %p30 = scmp.eq.s32.totalorder %s14, 1
    %p31 = por %p29, %p30
    %p32 = scmp.ne.s32.totalorder %s24, %s27
    %p33 = scmp.eq.s32.totalorder %s14, 0
    %p34 = por %p32, %p33
    %p35 = scmp.ne.s32.totalorder %s24, %s27
    %p36 = scmp.eq.s32.totalorder %s19, 1
    %p37 = por %p35, %p36
    %p38 = scmp.ne.s32.totalorder %s27, %s28
    %p39 = scmp.eq.s32.totalorder %s19, 0
    %p40 = por %p38, %p39
    %p41 = scmp.ne.s32.totalorder %s27, %s28
    %p42 = scmp.eq.s32.totalorder %s20, 1
    %p43 = por %p41, %p42
    %p45 = scmp.ne.s32.totalorder %s28, %s44
    %p46 = scmp.eq.s32.totalorder %s20, 0
    %p47 = por %p45, %p46
    %s49 = sadd.s32 %s48, 1
    %p52 = scmp.eq.s32.totalorder %s14, 1
    %p53 = scmp.ne.s32.totalorder %s48, %s50
    %p54 = scmp.eq.s32.totalorder %s14, 0
    %p55 = por %p53, %p54
    %p56 = scmp.ne.s32.totalorder %s48, %s50
    %p57 = scmp.eq.s32.totalorder %s19, 1
    %p58 = por %p56, %p57
    %p59 = scmp.ne.s32.totalorder %s50, %s51
    %p60 = scmp.eq.s32.totalorder %s19, 0
    %p61 = por %p59, %p60
    %p62 = scmp.ne.s32.totalorder %s50, %s51
    %p63 = scmp.eq.s32.totalorder %s20, 1
    %p64 = por %p62, %p63
    %p66 = scmp.ne.s32.totalorder %s51, %s65
    %p67 = scmp.eq.s32.totalorder %s20, 0
    %p68 = por %p66, %p67
    %s70 = sadd.s32 %s69, 1
    %p73 = scmp.eq.s32.totalorder %s14, 1
    %p74 = scmp.ne.s32.totalorder %s69, %s71
    %p75 = scmp.eq.s32.totalorder %s14, 0
    %p76 = por %p74, %p75
    %p77 = scmp.ne.s32.totalorder %s69, %s71
    %p78 = scmp.eq.s32.totalorder %s19, 1
    %p79 = por %p77, %p78
    %p80 = scmp.ne.s32.totalorder %s71, %s72
    %p81 = scmp.eq.s32.totalorder %s19, 0
    %p82 = por %p80, %p81
    %p83 = scmp.ne.s32.totalorder %s71, %s72
    %p84 = scmp.eq.s32.totalorder %s20, 1
    %p85 = por %p83, %p84
    %p87 = scmp.ne.s32.totalorder %s72, %s86
    %p88 = scmp.eq.s32.totalorder %s20, 0
    %p89 = por %p87, %p88
    %s91 = sadd.s32 %s90, 1
    %p94 = scmp.eq.s32.totalorder %s14, 1
    %p95 = scmp.ne.s32.totalorder %s90, %s92
    %p96 = scmp.eq.s32.totalorder %s14, 0
    %p97 = por %p95, %p96
    %p98 = scmp.ne.s32.totalorder %s90, %s92
    %p99 = scmp.eq.s32.totalorder %s19, 1
    %p100 = por %p98, %p99
    %p101 = scmp.ne.s32.totalorder %s92, %s93
    %p102 = scmp.eq.s32.totalorder %s19, 0
    %p103 = por %p101, %p102
    %p104 = scmp.ne.s32.totalorder %s92, %s93
    %p105 = scmp.eq.s32.totalorder %s20, 1
    %p106 = por %p104, %p105
    %p108 = scmp.ne.s32.totalorder %s93, %s107
    %p109 = scmp.eq.s32.totalorder %s20, 0
    %p110 = por %p108, %p109
    %s112 = sadd.s32 %s111, 1
    %p115 = scmp.eq.s32.totalorder %s14, 1
    %p116 = scmp.ne.s32.totalorder %s111, %s113
    %p117 = scmp.eq.s32.totalorder %s14, 0
    %p118 = por %p116, %p117
    %p119 = scmp.ne.s32.totalorder %s111, %s113
    %p120 = scmp.eq.s32.totalorder %s19, 1
    %p121 = por %p119, %p120
    %p122 = scmp.ne.s32.totalorder %s113, %s114
    %p123 = scmp.eq.s32.totalorder %s19, 0
    %p124 = por %p122, %p123
    %p125 = scmp.ne.s32.totalorder %s113, %s114
    %p126 = scmp.eq.s32.totalorder %s20, 1
    %p127 = por %p125, %p126
    %p129 = scmp.ne.s32.totalorder %s114, %s128
    %p130 = scmp.eq.s32.totalorder %s20, 0
    %p131 = por %p129, %p130
    %s133 = sadd.s32 %s132, 1
    %p136 = scmp.eq.s32.totalorder %s14, 1
    %p137 = scmp.ne.s32.totalorder %s132, %s134
    %p138 = scmp.eq.s32.totalorder %s14, 0
    %p139 = por %p137, %p138
    %p140 = scmp.ne.s32.totalorder %s132, %s134
    %p141 = scmp.eq.s32.totalorder %s19, 1
    %p142 = por %p140, %p141
    %p143 = scmp.ne.s32.totalorder %s134, %s135
    %p144 = scmp.eq.s32.totalorder %s19, 0
    %p145 = por %p143, %p144
    %p146 = scmp.ne.s32.totalorder %s134, %s135
    %p147 = scmp.eq.s32.totalorder %s20, 1
    %p148 = por %p146, %p147
    %p150 = scmp.ne.s32.totalorder %s135, %s149
    %p151 = scmp.eq.s32.totalorder %s20, 0
    %p152 = por %p150, %p151
    %s154 = sadd.s32 %s153, 1
    %p157 = scmp.eq.s32.totalorder %s14, 1
    %p158 = scmp.ne.s32.totalorder %s153, %s155
    %p159 = scmp.eq.s32.totalorder %s14, 0
    %p160 = por %p158, %p159
    %p161 = scmp.ne.s32.totalorder %s153, %s155
    %p162 = scmp.eq.s32.totalorder %s19, 1
    %p163 = por %p161, %p162
    %p164 = scmp.ne.s32.totalorder %s155, %s156
    %p165 = scmp.eq.s32.totalorder %s19, 0
    %p166 = por %p164, %p165
    %p167 = scmp.ne.s32.totalorder %s155, %s156
    %p168 = scmp.eq.s32.totalorder %s20, 1
    %p169 = por %p167, %p168
    %p171 = scmp.ne.s32.totalorder %s156, %s170
    %p172 = scmp.eq.s32.totalorder %s20, 0
    %p173 = por %p171, %p172
    %s175 = sadd.s32 %s174, 1
    %p178 = scmp.eq.s32.totalorder %s14, 1
    %p179 = scmp.ne.s32.totalorder %s174, %s176
    %p180 = scmp.eq.s32.totalorder %s14, 0
    %p181 = por %p179, %p180
    %p182 = scmp.ne.s32.totalorder %s174, %s176
    %p183 = scmp.eq.s32.totalorder %s19, 1
    %p184 = por %p182, %p183
    %p185 = scmp.ne.s32.totalorder %s176, %s177
    %p186 = scmp.eq.s32.totalorder %s19, 0
    %p187 = por %p185, %p186
    %p188 = scmp.ne.s32.totalorder %s176, %s177
    %p189 = scmp.eq.s32.totalorder %s20, 1
    %p190 = por %p188, %p189
    %p192 = scmp.ne.s32.totalorder %s177, %s191
    %p193 = scmp.eq.s32.totalorder %s20, 0
    %p194 = por %p192, %p193
    %s195 = ssub.s32 %s14, %s21
    %p196 = scmp.eq.s32.totalorder %s195, 0
    %s198 = sadd.s32 %s197, 1
    %s199 = scalar_select %p196, %s197, %s198
    %p202 = pneg %p196
    %p203 = scmp.eq.s32.totalorder %s14, 1
    %p204 = por %p202, %p203
    %p205 = scmp.ne.s32.totalorder %s197, %s200
    %p206 = scmp.eq.s32.totalorder %s14, 0
    %p207 = por %p205, %p206
    %p208 = scmp.ne.s32.totalorder %s197, %s200
    %p209 = scmp.eq.s32.totalorder %s19, 1
    %p210 = por %p208, %p209
    %p211 = scmp.ne.s32.totalorder %s200, %s201
    %p212 = scmp.eq.s32.totalorder %s19, 0
    %p213 = por %p211, %p212
    %p214 = scmp.ne.s32.totalorder %s200, %s201
    %p215 = scmp.eq.s32.totalorder %s20, 1
    %p216 = por %p214, %p215
    %p218 = scmp.ne.s32.totalorder %s201, %s217
    %p219 = scmp.eq.s32.totalorder %s20, 0
    %p220 = por %p218, %p219
    %p221 = scmp.le.s32.totalorder 1, %s14
    %p222 = scmp.lt.s32.totalorder %s14, 3
    %p223 = pnand %p221, %p222
    %p224 = pneg %p223
    // Predicated region
    $region9: #{_lambda_.10} parent=5 // pred_check
      _
    $region10: #{_lambda_.10} parent=5 // pred_check_branch
      %226 = sbr.rel (%p223) target = $region12
    $region11: #{_lambda_.10} parent=5 // pred_region
      %s227 = ssub.s32 %s14, 1
      // Predicated region
      $region13: #{_lambda_.10} parent=11 // pred_check
        %p228 = pneg %p61
      $region14: #{_lambda_.10} parent=11 // pred_check_branch
        %230 = sbr.rel (%p228) target = $region16
      $region15: #{_lambda_.10} parent=11 // pred_region
        _
      $region16: #{_lambda_.10} parent=11 // pred_fallthru
        _
      // Predicated region
      $region17: #{_lambda_.10} parent=11 // pred_check
        %p231 = pneg %p82
      $region18: #{_lambda_.10} parent=11 // pred_check_branch
        %233 = sbr.rel (%p231) target = $region20
      $region19: #{_lambda_.10} parent=11 // pred_region
        _
      $region20: #{_lambda_.10} parent=11 // pred_fallthru
        _
      // Predicated region
      $region21: #{_lambda_.10} parent=11 // pred_check
        %p234 = pneg %p103
      $region22: #{_lambda_.10} parent=11 // pred_check_branch
        %236 = sbr.rel (%p234) target = $region24
      $region23: #{_lambda_.10} parent=11 // pred_region
        _
      $region24: #{_lambda_.10} parent=11 // pred_fallthru
        _
      // Predicated region
      $region25: #{_lambda_.10} parent=11 // pred_check
        %p237 = pneg %p124
      $region26: #{_lambda_.10} parent=11 // pred_check_branch
        %239 = sbr.rel (%p237) target = $region28
      $region27: #{_lambda_.10} parent=11 // pred_region
        _
      $region28: #{_lambda_.10} parent=11 // pred_fallthru
        _
      // Predicated region
      $region29: #{_lambda_.10} parent=11 // pred_check
        %p240 = pneg %p145
      $region30: #{_lambda_.10} parent=11 // pred_check_branch
        %242 = sbr.rel (%p240) target = $region32
      $region31: #{_lambda_.10} parent=11 // pred_region
        _
      $region32: #{_lambda_.10} parent=11 // pred_fallthru
        _
      // Predicated region
      $region33: #{_lambda_.10} parent=11 // pred_check
        %p243 = pneg %p166
      $region34: #{_lambda_.10} parent=11 // pred_check_branch
        %245 = sbr.rel (%p243) target = $region36
      $region35: #{_lambda_.10} parent=11 // pred_region
        _
      $region36: #{_lambda_.10} parent=11 // pred_fallthru
        _
      // Predicated region
      $region37: #{_lambda_.10} parent=11 // pred_check
        %p246 = pneg %p187
      $region38: #{_lambda_.10} parent=11 // pred_check_branch
        %248 = sbr.rel (%p246) target = $region40
      $region39: #{_lambda_.10} parent=11 // pred_region
        _
      $region40: #{_lambda_.10} parent=11 // pred_fallthru
        _
    $region12: #{_lambda_.10} parent=5 // pred_fallthru
      _
    %p249 = scmp.lt.s32.totalorder %s14, 2
    // Predicated region
    $region41: #{_lambda_.10} parent=5 // pred_check
      %p250 = pneg %p249
    $region42: #{_lambda_.10} parent=5 // pred_check_branch
      %252 = sbr.rel (%p250) target = $region44
    $region43: #{_lambda_.10} parent=5 // pred_region
      // Predicated region
      $region45: #{_lambda_.10} parent=43 // pred_check
        %p253 = pneg %p34
      $region46: #{_lambda_.10} parent=43 // pred_check_branch
        %255 = sbr.rel (%p253) target = $region48
      $region47: #{_lambda_.10} parent=43 // pred_region
        %p256 = scmp.lt.s32.totalorder %s14, 1
        %s257 = scalar_select %p256, %s14, 1
        %s258 = smul.addr %s257, 12
        %s259 = smul.addr %s258, 4
        %s260 = scalar_lea.vmem %s0, %s259
      $region48: #{_lambda_.10} parent=43 // pred_fallthru
        _
    $region44: #{_lambda_.10} parent=5 // pred_fallthru
      _
    %p261 = scmp.le.s32.totalorder 1, %s14
    %p262 = scmp.lt.s32.totalorder %s14, 3
    %p263 = pnand %p261, %p262
    %p264 = pneg %p263
    // Predicated region
    $region49: #{_lambda_.10} parent=5 // pred_check
      _
    $region50: #{_lambda_.10} parent=5 // pred_check_branch
      %266 = sbr.rel (%p263) target = $region52
    $region51: #{_lambda_.10} parent=5 // pred_region
      %s267 = ssub.s32 %s14, 1
      %p268 = scmp.lt.s32.totalorder %s19, 1
      %s269 = scalar_select %p268, %s19, 1
      %s270 = smul.addr %s269, 12
      %s271 = smul.addr %s270, 4
      %s272 = scalar_lea.vmem %s0, %s271
      %p273 = pneg %p40
      %p274 = pneg %p37
      %p275 = pneg %p61
      %p276 = pneg %p58
      %p277 = pneg %p82
      %p278 = pneg %p79
      %p279 = pneg %p103
      %p280 = pneg %p100
      %p281 = pneg %p124
      %p282 = pneg %p121
      %p283 = pneg %p145
      %p284 = pneg %p142
      %p285 = pneg %p166
      %p286 = pneg %p163
      %p287 = pneg %p187
      %p288 = pneg %p184
      %p289 = pneg %p213
      %p290 = pneg %p210
      %p291 = scmp.lt.s32.totalorder %s19, 1
      %s292 = scalar_select %p291, %s19, 1
      %s293 = smul.addr %s292, 2
      %s294 = scalar_lea.vmem %s8, %s293
      %p295 = scmp.lt.s32.totalorder %s19, 1
      %s296 = scalar_select %p295, %s19, 1
      %s297 = smul.addr %s296, 12
      %s298 = smul.addr %s297, 4
      %s299 = scalar_lea.vmem %s0, %s298
      %p300 = scmp.lt.s32.totalorder %s19, 1
      %s301 = scalar_select %p300, %s19, 1
      %s302 = smul.addr %s301, 2
      %s303 = scalar_lea.vmem %s8, %s302
      %v305 = vld [vmem:[%s299] sm:$0xf]
      %v306 = vld [vmem:[%s299 + $0x4] sm:$0x1]
      %v307 = vld [vmem:[%s299 + $0x8] sm:$0xf]
      %v308 = vld [vmem:[%s299 + $0xc] sm:$0x1]
      %v309 = vld [vmem:[%s299 + $0x10] sm:$0xf]
      %v310 = vld [vmem:[%s299 + $0x14] sm:$0x1]
      %v311 = vld [vmem:[%s299 + $0x18] sm:$0xf]
      %v312 = vld [vmem:[%s299 + $0x1c] sm:$0x1]
      %v313 = vld [vmem:[%s299 + $0x20] sm:$0xf]
      %v314 = vld [vmem:[%s299 + $0x24] sm:$0x1]
      %v315 = vld [vmem:[%s299 + $0x28] sm:$0xf]
      %v316 = vld [vmem:[%s299 + $0x2c] sm:$0x1]
      %v317 = vunpack.c.l.bf16 %v305
      %v318 = vunpack.c.l.bf16 %v306
      %v319 = vunpack.c.l.bf16 %v307
      %v320 = vunpack.c.l.bf16 %v308
      %v321 = vunpack.c.l.bf16 %v309
      %v322 = vunpack.c.l.bf16 %v310
      %v323 = vunpack.c.l.bf16 %v311
      %v324 = vunpack.c.l.bf16 %v312
      %v325 = vunpack.c.l.bf16 %v313
      %v326 = vunpack.c.l.bf16 %v314
      %v327 = vunpack.c.l.bf16 %v315
      %v328 = vunpack.c.l.bf16 %v316
      %v329 = vld [vmem:[%s1] sm:$0xff]
      %v330 = vld [vmem:[%s1 + $0x8] sm:$0x1]
      %v331 = vlaneseq
      %v332 = vshrl.u32 %v331, 7
      %v333 = vsub.s32 0, %v332
      %v334 = vrot.slane %v329, %v333
      %v335 = vmul.f32 %v317, %v334
      %v336 = vmul.f32 %v319, %v334
      %v337 = vmul.f32 %v321, %v334
      %v338 = vmul.f32 %v323, %v334
      %v339 = vlaneseq
      %v340 = vshrl.u32 %v339, 7
      %v341 = vsub.s32 1, %v340
      %v342 = vrot.slane %v329, %v341
      %v343 = vmul.f32 %v317, %v342
      %v344 = vmul.f32 %v318, %v342
      %v345 = vmul.f32 %v319, %v342
      %v346 = vmul.f32 %v320, %v342
      %v347 = vmul.f32 %v321, %v342
      %v348 = vmul.f32 %v322, %v342
      %v349 = vmul.f32 %v323, %v342
      %v350 = vmul.f32 %v324, %v342
      %vm359 = vcmask 1046528
      %v360 = vrot.slane %v343, 1
      %v361 = vrot.slane %v344, 1
      %v362 = vsel %vm359, %v360, %v361
      %v363 = vrot.slane %v345, 1
      %v364 = vrot.slane %v346, 1
      %v365 = vsel %vm359, %v363, %v364
      %v366 = vrot.slane %v347, 1
      %v367 = vrot.slane %v348, 1
      %v368 = vsel %vm359, %v366, %v367
      %v369 = vrot.slane %v349, 1
      %v370 = vrot.slane %v350, 1
      %v371 = vsel %vm359, %v369, %v370
      %v376 = vadd.f32 %v335, %v362
      %v377 = vadd.f32 %v336, %v365
      %v378 = vadd.f32 %v337, %v368
      %v379 = vadd.f32 %v338, %v371
      %v380 = vlaneseq
      %v381 = vshrl.u32 %v380, 7
      %v382 = vsub.s32 2, %v381
      %v383 = vrot.slane %v329, %v382
      %v384 = vmul.f32 %v317, %v383
      %v385 = vmul.f32 %v318, %v383
      %v386 = vmul.f32 %v319, %v383
      %v387 = vmul.f32 %v320, %v383
      %v388 = vmul.f32 %v321, %v383
      %v389 = vmul.f32 %v322, %v383
      %v390 = vmul.f32 %v323, %v383
      %v391 = vmul.f32 %v324, %v383
      %vm400 = vcmask 1045504
      %v401 = vrot.slane %v384, 2
      %v402 = vrot.slane %v385, 2
      %v403 = vsel %vm400, %v401, %v402
      %v404 = vrot.slane %v386, 2
      %v405 = vrot.slane %v387, 2
      %v406 = vsel %vm400, %v404, %v405
      %v407 = vrot.slane %v388, 2
      %v408 = vrot.slane %v389, 2
      %v409 = vsel %vm400, %v407, %v408
      %v410 = vrot.slane %v390, 2
      %v411 = vrot.slane %v391, 2
      %v412 = vsel %vm400, %v410, %v411
      %v417 = vadd.f32 %v376, %v403
      %v418 = vadd.f32 %v377, %v406
      %v419 = vadd.f32 %v378, %v409
      %v420 = vadd.f32 %v379, %v412
      %v421 = vlaneseq
      %v422 = vshrl.u32 %v421, 7
      %v423 = vsub.s32 3, %v422
      %v424 = vrot.slane %v329, %v423
      %v425 = vmul.f32 %v319, %v424
      %v426 = vmul.f32 %v321, %v424
      %v427 = vmul.f32 %v323, %v424
      %v428 = vmul.f32 %v325, %v424
      %v429 = vadd.f32 %v417, %v425
      %v430 = vadd.f32 %v418, %v426
      %v431 = vadd.f32 %v419, %v427
      %v432 = vadd.f32 %v420, %v428
      %v433 = vlaneseq
      %v434 = vshrl.u32 %v433, 7
      %v435 = vsub.s32 4, %v434
      %v436 = vrot.slane %v329, %v435
      %v437 = vmul.f32 %v319, %v436
      %v438 = vmul.f32 %v320, %v436
      %v439 = vmul.f32 %v321, %v436
      %v440 = vmul.f32 %v322, %v436
      %v441 = vmul.f32 %v323, %v436
      %v442 = vmul.f32 %v324, %v436
      %v443 = vmul.f32 %v325, %v436
      %v444 = vmul.f32 %v326, %v436
      %v453 = vrot.slane %v437, 1
      %v454 = vrot.slane %v438, 1
      %v455 = vsel %vm359, %v453, %v454
      %v456 = vrot.slane %v439, 1
      %v457 = vrot.slane %v440, 1
      %v458 = vsel %vm359, %v456, %v457
      %v459 = vrot.slane %v441, 1
      %v460 = vrot.slane %v442, 1
      %v461 = vsel %vm359, %v459, %v460
      %v462 = vrot.slane %v443, 1
      %v463 = vrot.slane %v444, 1
      %v464 = vsel %vm359, %v462, %v463
      %v469 = vadd.f32 %v429, %v455
      %v470 = vadd.f32 %v430, %v458
      %v471 = vadd.f32 %v431, %v461
      %v472 = vadd.f32 %v432, %v464
      %v473 = vlaneseq
      %v474 = vshrl.u32 %v473, 7
      %v475 = vsub.s32 5, %v474
      %v476 = vrot.slane %v329, %v475
      %v477 = vmul.f32 %v319, %v476
      %v478 = vmul.f32 %v320, %v476
      %v479 = vmul.f32 %v321, %v476
      %v480 = vmul.f32 %v322, %v476
      %v481 = vmul.f32 %v323, %v476
      %v482 = vmul.f32 %v324, %v476
      %v483 = vmul.f32 %v325, %v476
      %v484 = vmul.f32 %v326, %v476
      %v493 = vrot.slane %v477, 2
      %v494 = vrot.slane %v478, 2
      %v495 = vsel %vm400, %v493, %v494
      %v496 = vrot.slane %v479, 2
      %v497 = vrot.slane %v480, 2
      %v498 = vsel %vm400, %v496, %v497
      %v499 = vrot.slane %v481, 2
      %v500 = vrot.slane %v482, 2
      %v501 = vsel %vm400, %v499, %v500
      %v502 = vrot.slane %v483, 2
      %v503 = vrot.slane %v484, 2
      %v504 = vsel %vm400, %v502, %v503
      %v509 = vadd.f32 %v469, %v495
      %v510 = vadd.f32 %v470, %v498
      %v511 = vadd.f32 %v471, %v501
      %v512 = vadd.f32 %v472, %v504
      %v513 = vlaneseq
      %v514 = vshrl.u32 %v513, 7
      %v515 = vsub.s32 6, %v514
      %v516 = vrot.slane %v329, %v515
      %v517 = vmul.f32 %v321, %v516
      %v518 = vmul.f32 %v323, %v516
      %v519 = vmul.f32 %v325, %v516
      %v520 = vmul.f32 %v327, %v516
      %v521 = vadd.f32 %v509, %v517
      %v522 = vadd.f32 %v510, %v518
      %v523 = vadd.f32 %v511, %v519
      %v524 = vadd.f32 %v512, %v520
      %v525 = vlaneseq
      %v526 = vshrl.u32 %v525, 7
      %v527 = vsub.s32 7, %v526
      %v528 = vrot.slane %v329, %v527
      %v529 = vmul.f32 %v321, %v528
      %v530 = vmul.f32 %v322, %v528
      %v531 = vmul.f32 %v323, %v528
      %v532 = vmul.f32 %v324, %v528
      %v533 = vmul.f32 %v325, %v528
      %v534 = vmul.f32 %v326, %v528
      %v535 = vmul.f32 %v327, %v528
      %v536 = vmul.f32 %v328, %v528
      %v545 = vrot.slane %v529, 1
      %v546 = vrot.slane %v530, 1
      %v547 = vsel %vm359, %v545, %v546
      %v548 = vrot.slane %v531, 1
      %v549 = vrot.slane %v532, 1
      %v550 = vsel %vm359, %v548, %v549
      %v551 = vrot.slane %v533, 1
      %v552 = vrot.slane %v534, 1
      %v553 = vsel %vm359, %v551, %v552
      %v554 = vrot.slane %v535, 1
      %v555 = vrot.slane %v536, 1
      %v556 = vsel %vm359, %v554, %v555
      %v561 = vadd.f32 %v521, %v547
      %v562 = vadd.f32 %v522, %v550
      %v563 = vadd.f32 %v523, %v553
      %v564 = vadd.f32 %v524, %v556
      %v565 = vlaneseq
      %v566 = vshrl.u32 %v565, 7
      %v567 = vsub.s32 0, %v566
      %v568 = vrot.slane %v330, %v567
      %v569 = vmul.f32 %v321, %v568
      %v570 = vmul.f32 %v322, %v568
      %v571 = vmul.f32 %v323, %v568
      %v572 = vmul.f32 %v324, %v568
      %v573 = vmul.f32 %v325, %v568
      %v574 = vmul.f32 %v326, %v568
      %v575 = vmul.f32 %v327, %v568
      %v576 = vmul.f32 %v328, %v568
      %v585 = vrot.slane %v569, 2
      %v586 = vrot.slane %v570, 2
      %v587 = vsel %vm400, %v585, %v586
      %v588 = vrot.slane %v571, 2
      %v589 = vrot.slane %v572, 2
      %v590 = vsel %vm400, %v588, %v589
      %v591 = vrot.slane %v573, 2
      %v592 = vrot.slane %v574, 2
      %v593 = vsel %vm400, %v591, %v592
      %v594 = vrot.slane %v575, 2
      %v595 = vrot.slane %v576, 2
      %v596 = vsel %vm400, %v594, %v595
      %v601 = vadd.f32 %v561, %v587
      %v602 = vadd.f32 %v562, %v590
      %v603 = vadd.f32 %v563, %v593
      %v604 = vadd.f32 %v564, %v596
      %v605 = vld [vmem:[%s4] sm:$0xf]
      %vm606 = vcmask 261120
      %v608 = vsel %vm606, %v605, 0
      %610 = vmatprep.subr.mxu0 0.0
      %611 = vmatpush1.msra.mxu0 %v601
      %612 = vmatprep.subr.mxu0 0.0
      %613 = vmatpush1.msra.mxu0 %v602
      %614 = vmatprep.subr.mxu0 0.0
      %615 = vmatpush1.msra.mxu0 %v603
      %616 = vmatprep.subr.mxu0 0.0
      %617 = vmatpush1.msra.mxu0 %v604
      %618 = vmatprep.subr.mxu0 0.0
      %619 = vmatpush1.msra.mxu0 0.0
      %620 = vmatprep.subr.mxu0 0.0
      %621 = vmatpush1.msra.mxu0 0.0
      %622 = vmatprep.subr.mxu0 0.0
      %623 = vmatpush1.msra.mxu0 0.0
      %624 = vmatprep.subr.mxu0 0.0
      %625 = vmatpush1.msra.mxu0 0.0
      %626 = vmatprep.subr.mxu0 0.0
      %627 = vmatpush1.msra.mxu0 0.0
      %628 = vmatprep.subr.mxu0 0.0
      %629 = vmatpush1.msra.mxu0 0.0
      %630 = vmatprep.subr.mxu0 0.0
      %631 = vmatpush1.msra.mxu0 0.0
      %632 = vmatprep.subr.mxu0 0.0
      %633 = vmatpush1.msra.mxu0 0.0
      %634 = vmatprep.subr.mxu0 0.0
      %635 = vmatpush1.msra.mxu0 0.0
      %636 = vmatprep.subr.mxu0 0.0
      %637 = vmatpush1.msra.mxu0 0.0
      %638 = vmatprep.subr.mxu0 0.0
      %639 = vmatpush1.msra.mxu0 0.0
      %640 = vmatprep.subr.mxu0 0.0
      %641 = vmatpush1.msra.mxu0 0.0
      %642 = vmatprep.subr.mxu0 0.0
      %643 = vmatpush1.msra.mxu0 0.0
      %644 = vmatprep.subr.mxu0 0.0
      %645 = vmatpush1.msra.mxu0 0.0
      %646 = vmatprep.subr.mxu0 0.0
      %647 = vmatpush1.msra.mxu0 0.0
      %648 = vmatprep.subr.mxu0 0.0
      %649 = vmatpush1.msra.mxu0 0.0
      %650 = vmatprep.subr.mxu0 0.0
      %651 = vmatpush1.msra.mxu0 0.0
      %652 = vmatprep.subr.mxu0 0.0
      %653 = vmatpush1.msra.mxu0 0.0
      %654 = vmatprep.subr.mxu0 0.0
      %655 = vmatpush1.msra.mxu0 0.0
      %656 = vmatprep.subr.mxu0 0.0
      %657 = vmatpush1.msra.mxu0 0.0
      %658 = vmatprep.subr.mxu0 0.0
      %659 = vmatpush1.msra.mxu0 0.0
      %660 = vmatprep.subr.mxu0 0.0
      %661 = vmatpush1.msra.mxu0 0.0
      %662 = vmatprep.subr.mxu0 0.0
      %663 = vmatpush1.msra.mxu0 0.0
      %664 = vmatprep.subr.mxu0 0.0
      %665 = vmatpush1.msra.mxu0 0.0
      %666 = vmatprep.subr.mxu0 0.0
      %667 = vmatpush1.msra.mxu0 0.0
      %668 = vmatprep.subr.mxu0 0.0
      %669 = vmatpush1.msra.mxu0 0.0
      %670 = vmatprep.subr.mxu0 0.0
      %671 = vmatpush1.msra.mxu0 0.0
      %672 = vmatprep.subr.mxu0 0.0
      %673 = vmatpush1.msra.mxu0 0.0
      %674 = vmatprep.mubr.f32.mxu0 0.0
      %675 = vmatmul.mubr.f32.gmra.mrb[0].mxu0 %v608
      %v676 = vpop.f32.mrb[0].mxu0
      %v677 = vadd.f32 0.0, %v676
      %v678 = vpop.f32.mrb[0].mxu0
      %679 = vdwg.mxu0
      %v680 = vld [vmem:[%s2] sm:$0x1]
      %v682 = vlaneseq
      %v683 = vshrl.u32 %v682, 7
      %v684 = vsub.s32 0, %v683
      %v685 = vrot.slane %v680, %v684
      %v687 = vmul.f32 %v677, %v685
      %v688 = vld [vmem:[%s3] sm:$0x1]
      %v690 = vlaneseq
      %v691 = vshrl.u32 %v690, 7
      %v692 = vsub.s32 0, %v691
      %v693 = vrot.slane %v688, %v692
      %v695 = vadd.f32 %v687, %v693
      %v696 = vmax.f32 %v695, 0.0
      %v697 = vpack.c.bf16 %v696, %v696
      %v698 = vld [vmem:[%s5] sm:$0xf]
      %v699 = vld [vmem:[%s5 + $0x4] sm:$0xf]
      %v700 = vld [vmem:[%s5 + $0x8] sm:$0xf]
      %v701 = vld [vmem:[%s5 + $0xc] sm:$0xf]
      %v702 = vld [vmem:[%s5 + $0x10] sm:$0xf]
      %v703 = vld [vmem:[%s5 + $0x14] sm:$0xf]
      %v704 = vld [vmem:[%s5 + $0x18] sm:$0xf]
      %v705 = vld [vmem:[%s5 + $0x1c] sm:$0xf]
      %v706 = vld [vmem:[%s5 + $0x20] sm:$0xf]
      %v707 = vld [vmem:[%s5 + $0x24] sm:$0xf]
      %v708 = vld [vmem:[%s5 + $0x28] sm:$0xf]
      %v709 = vld [vmem:[%s5 + $0x2c] sm:$0xf]
      %v710 = vld [vmem:[%s5 + $0x30] sm:$0xf]
      %v711 = vld [vmem:[%s5 + $0x34] sm:$0xf]
      %v712 = vld [vmem:[%s5 + $0x38] sm:$0xf]
      %v713 = vld [vmem:[%s5 + $0x3c] sm:$0xf]
      %v730 = vunpack.c.l.b16 %v698
      %v731 = vunpack.c.l.b16 %v699
      %v732 = vunpack.c.l.b16 %v700
      %v733 = vunpack.c.l.b16 %v701
      %v734 = vunpack.c.l.b16 %v702
      %v735 = vunpack.c.l.b16 %v703
      %v736 = vunpack.c.l.b16 %v704
      %v737 = vunpack.c.l.b16 %v705
      %v738 = vunpack.c.l.b16 %v706
      %v739 = vunpack.c.l.b16 %v707
      %v740 = vunpack.c.l.b16 %v708
      %v741 = vunpack.c.l.b16 %v709
      %v742 = vunpack.c.l.b16 %v710
      %v743 = vunpack.c.l.b16 %v711
      %v744 = vunpack.c.l.b16 %v712
      %v745 = vunpack.c.l.b16 %v713
      %v746 = vpack.c.b16 %v731, %v730
      %v747 = vpack.c.b16 %v733, %v732
      %v748 = vpack.c.b16 %v735, %v734
      %v749 = vpack.c.b16 %v737, %v736
      %v750 = vpack.c.b16 %v739, %v738
      %v751 = vpack.c.b16 %v741, %v740
      %v752 = vpack.c.b16 %v743, %v742
      %v753 = vpack.c.b16 %v745, %v744
      %762 = vmatprep.subr.bf16.mxu0 0
      %763 = vmatpush1.bf16.msra.mxu0 %v746
      %764 = vmatprep.subr.bf16.mxu0 0
      %765 = vmatpush1.bf16.msra.mxu0 %v747
      %766 = vmatprep.subr.bf16.mxu0 0
      %767 = vmatpush1.bf16.msra.mxu0 %v748
      %768 = vmatprep.subr.bf16.mxu0 0
      %769 = vmatpush1.bf16.msra.mxu0 %v749
      %770 = vmatprep.subr.bf16.mxu0 0
      %771 = vmatpush1.bf16.msra.mxu0 %v750
      %772 = vmatprep.subr.bf16.mxu0 0
      %773 = vmatpush1.bf16.msra.mxu0 %v751
      %774 = vmatprep.subr.bf16.mxu0 0
      %775 = vmatpush1.bf16.msra.mxu0 %v752
      %776 = vmatprep.subr.bf16.mxu0 0
      %777 = vmatpush1.bf16.msra.mxu0 %v753
      %778 = vmatprep.subr.bf16.mxu0 0
      %779 = vmatpush1.bf16.msra.mxu0 0
      %780 = vmatprep.subr.bf16.mxu0 0
      %781 = vmatpush1.bf16.msra.mxu0 0
      %782 = vmatprep.subr.bf16.mxu0 0
      %783 = vmatpush1.bf16.msra.mxu0 0
      %784 = vmatprep.subr.bf16.mxu0 0
      %785 = vmatpush1.bf16.msra.mxu0 0
      %786 = vmatprep.subr.bf16.mxu0 0
      %787 = vmatpush1.bf16.msra.mxu0 0
      %788 = vmatprep.subr.bf16.mxu0 0
      %789 = vmatpush1.bf16.msra.mxu0 0
      %790 = vmatprep.subr.bf16.mxu0 0
      %791 = vmatpush1.bf16.msra.mxu0 0
      %792 = vmatprep.subr.bf16.mxu0 0
      %793 = vmatpush1.bf16.msra.mxu0 0
      %794 = vmatprep.mubr.bf16.mxu0 0
      %795 = vmatmul.mubr.bf16.gmra.mrb[0].mxu0 %v697
      %v796 = vpop.f32.mrb[0].mxu0
      %v797 = vadd.f32 0.0, %v796
      %v798 = vpop.f32.mrb[0].mxu0
      %v799 = vpop.f32.mrb[0].mxu0
      %v800 = vpop.f32.mrb[0].mxu0
      %801 = vdwg.mxu0
      %v802 = vld [vmem:[%s6] sm:$0x1]
      %v804 = vlaneseq
      %v805 = vshrl.u32 %v804, 7
      %v806 = vsub.s32 0, %v805
      %v807 = vrot.slane %v802, %v806
      %v809 = vmul.f32 %v797, %v807
      %v810 = vld [vmem:[%s7] sm:$0x1]
      %v812 = vlaneseq
      %v813 = vshrl.u32 %v812, 7
      %v814 = vsub.s32 0, %v813
      %v815 = vrot.slane %v810, %v814
      %v817 = vadd.f32 %v809, %v815
      %v818 = vmax.f32 %v817, 0.0
      %v819 = vpack.c.bf16 %v818, %v818
      %820 = vst [vmem:[%s303] sm:$0x3] %v819
      %p821 = scmp.lt.s32.totalorder %s19, 1
      %s822 = scalar_select %p821, %s19, 1
      %s823 = smul.addr %s822, 2
      %s824 = scalar_lea.vmem %s8, %s823
      // Predicated region
      $region53: #{_lambda_.10} parent=51 // pred_check
        %p825 = pneg %p210
      $region54: #{_lambda_.10} parent=51 // pred_check_branch
        %827 = sbr.rel (%p825) target = $region56
      $region55: #{_lambda_.10} parent=51 // pred_region
        _
      $region56: #{_lambda_.10} parent=51 // pred_fallthru
        _
    $region52: #{_lambda_.10} parent=5 // pred_fallthru
      _
    %p828 = scmp.le.s32.totalorder 2, %s14
    // Predicated region
    $region57: #{_lambda_.10} parent=5 // pred_check
      %p829 = pneg %p828
    $region58: #{_lambda_.10} parent=5 // pred_check_branch
      %831 = sbr.rel (%p829) target = $region60
    $region59: #{_lambda_.10} parent=5 // pred_region
      %s832 = ssub.s32 %s14, 2
      // Predicated region
      $region61: #{_lambda_.10} parent=59 // pred_check
        %p833 = pneg %p216
      $region62: #{_lambda_.10} parent=59 // pred_check_branch
        %835 = sbr.rel (%p833) target = $region64
      $region63: #{_lambda_.10} parent=59 // pred_region
        %p836 = scmp.lt.s32.totalorder %s20, 1
        %s837 = scalar_select %p836, %s20, 1
        %s838 = smul.addr %s837, 2
        %s839 = scalar_lea.vmem %s8, %s838
      $region64: #{_lambda_.10} parent=59 // pred_fallthru
        _
    $region60: #{_lambda_.10} parent=5 // pred_fallthru
      _
  $region6: #{_lambda_.10} parent=0 // loop_footer
    %s18 = sadd.s32 1, %s14
  $region7: #{_lambda_.10} parent=0 // loop_footer_branch
    %13 = sbr.rel target = $region3
  $region8: #{_lambda_.10} parent=0 // loop_exit
    _

</llo_original>
